<compile_context>
chip_gen: v6e
topology: v6e:2x2x1
jax: 0.10.0
libtpu: 0.0.40
codegen_flags: <defaults>
</compile_context>

<pallas_src>
import functools
import numpy as np
import jax
import jax.numpy as jnp
from jax import lax
from jax.experimental import pallas as pl
from jax.experimental.pallas import tpu as pltpu


# ----------------------------------------------------------------------------
# helpers
# ----------------------------------------------------------------------------
def _gelu(x):
    # TODO(synk): torch nn.GELU defaults to the exact erf GELU; the tanh
    # approximation is used for guaranteed Mosaic lowering (~1e-3 abs diff).
    c = 0.7978845608028654  # sqrt(2/pi)
    return 0.5 * x * (1.0 + jnp.tanh(c * (x + 0.044715 * x * x * x)))


def _round_up(x, m):
    return (x + m - 1) // m * m


_RESIZE_TILE_CH = 64      # channels per resize+add grid step
_UPSCALE_TILE_PIX = 1024  # pixels of the base HxW grid per upscale grid step
_MASK_TILE_P = 8192       # upscaled pixels per mask-matmul grid step


def _interp_matrix_np(out_size, in_size):
    """1-D bilinear (align_corners=False, half-pixel) interpolation operator."""
    o = np.arange(out_size, dtype=np.float64)
    scale = in_size / out_size
    src = np.maximum((o + 0.5) * scale - 0.5, 0.0)
    i0 = np.minimum(np.floor(src).astype(np.int64), in_size - 1)
    i1 = np.minimum(i0 + 1, in_size - 1)
    frac = src - i0
    m = np.zeros((out_size, in_size), dtype=np.float32)
    rows = np.arange(out_size)
    m[rows, i0] += (1.0 - frac).astype(np.float32)
    m[rows, i1] += frac.astype(np.float32)
    return m


# ----------------------------------------------------------------------------
# Kernel 1: separable bilinear resize of the dense prompt + add image embedding
#   (channels stay the batch dim of two small batched matmuls; bf16 operands,
#    f32 accumulation; bf16 output -> no downstream convert pass)
# ----------------------------------------------------------------------------
def _resize_add_kernel(d_ref, x_ref, mh_ref, mw_ref, o_ref):
    dt = mh_ref.dtype
    d = d_ref[...].astype(dt)                                        # (g, Hin, Win)
    g = d.shape[0]
    mh_b = jnp.broadcast_to(mh_ref[...][None], (g,) + mh_ref.shape)  # (g, H, Hin)
    mw_b = jnp.broadcast_to(mw_ref[...][None], (g,) + mw_ref.shape)  # (g, Win, W)
    t = lax.dot_general(mh_b, d, (((2,), (1,)), ((0,), (0,))),
                        preferred_element_type=jnp.float32)          # (g, H, Win)
    y = lax.dot_general(t.astype(dt), mw_b, (((2,), (1,)), ((0,), (0,))),
                        preferred_element_type=jnp.float32)          # (g, H, W)
    o_ref[...] = (y + x_ref[...]).astype(o_ref.dtype)


def resize_add(dense, img, out_dtype=jnp.bfloat16, tile_ch=_RESIZE_TILE_CH):
    """out = bilinear_resize(dense, (H, W)) + img, returned in bf16 NCHW."""
    B, C, Hin, Win = dense.shape
    _, _, H, W = img.shape
    mh = jnp.asarray(_interp_matrix_np(H, Hin), jnp.bfloat16)        # (H, Hin)
    mw = jnp.asarray(_interp_matrix_np(W, Win).T, jnp.bfloat16)      # (Win, W)
    dense_f = dense.reshape(B * C, Hin, Win)
    img_f = img.reshape(B * C, H, W)
    g = min(B * C, min(tile_ch, max(8, (B * C) // 2)))               # keep >=2 blocks
    out = pl.pallas_call(
        _resize_add_kernel,
        out_shape=jax.ShapeDtypeStruct((B * C, H, W), out_dtype),
        grid=(pl.cdiv(B * C, g),),
        in_specs=[
            pl.BlockSpec((g, Hin, Win), lambda i: (i, 0, 0)),
            pl.BlockSpec((g, H, W), lambda i: (i, 0, 0)),
            pl.BlockSpec((H, Hin), lambda i: (0, 0)),
            pl.BlockSpec((Win, W), lambda i: (0, 0)),
        ],
        out_specs=pl.BlockSpec((g, H, W), lambda i: (i, 0, 0)),
        compiler_params=pltpu.CompilerParams(dimension_semantics=("parallel",)),
    )(dense_f, img_f, mh, mw)
    return out.reshape(B, C, H, W)


# ----------------------------------------------------------------------------
# Kernel 2: stand-in "transformer" = single cross-attention layer.
# TODO(synk): the real SAM transformer is an externally supplied TwoWay
# transformer; one cross-attention layer (no positional encodings, src not
# updated) stands in.  src stays in its native (C, L) channel-first layout;
# softmax normalization is deferred past the PV matmul (EUP reciprocal).
# ----------------------------------------------------------------------------
def _xattn_kernel(tok_ref, src_ref, w_ref, o_ref, *, scale):
    t = tok_ref[0]                                  # (Tp, C) f32
    s = src_ref[0]                                  # (C, L)  bf16
    cd = s.dtype
    q = jnp.dot(t.astype(cd), w_ref[0], preferred_element_type=jnp.float32)
    qk = lax.dot_general(q.astype(cd), w_ref[1], (((1,), (1,)), ((), ())),
                         preferred_element_type=jnp.float32)        # q @ Wk^T
    scores = jnp.dot(qk.astype(cd), s, preferred_element_type=jnp.float32) * scale
    m = jnp.max(scores, axis=-1, keepdims=True)
    p = jnp.exp(scores - m)                                         # unnormalized
    denom = jnp.sum(p, axis=-1, keepdims=True)
    ps = lax.dot_general(p.astype(cd), s, (((1,), (1,)), ((), ())),
                         preferred_element_type=jnp.float32)        # p @ s^T
    attn = jnp.dot(ps.astype(cd), w_ref[2], preferred_element_type=jnp.float32)
    attn = attn * pl.reciprocal(denom, approx=True)
    out = jnp.dot(attn.astype(cd), w_ref[3], preferred_element_type=jnp.float32)
    o_ref[0] = t + out


def cross_attention_transformer(tokens, src_cf, w_stack,
                                compute_dtype=jnp.bfloat16):
    B, Tp, C = tokens.shape
    _, _, L = src_cf.shape
    scale = 1.0 / float(np.sqrt(C))
    return pl.pallas_call(
        functools.partial(_xattn_kernel, scale=scale),
        out_shape=jax.ShapeDtypeStruct((B, Tp, C), jnp.float32),
        grid=(B,),
        in_specs=[
            pl.BlockSpec((1, Tp, C), lambda b: (b, 0, 0)),
            pl.BlockSpec((1, C, L), lambda b: (b, 0, 0)),
            pl.BlockSpec((4, C, C), lambda b: (0, 0, 0)),
        ],
        out_specs=pl.BlockSpec((1, Tp, C), lambda b: (b, 0, 0)),
        compiler_params=pltpu.CompilerParams(dimension_semantics=("parallel",)),
    )(tokens.astype(jnp.float32), src_cf.astype(compute_dtype),
      w_stack.astype(compute_dtype))


# ----------------------------------------------------------------------------
# Kernel 3: fused output_upscaling
#   ConvTranspose2d(2,2) + LayerNorm2d + GELU + ConvTranspose2d(2,2) + GELU.
#   * consumes src channel-first; the per-pixel row view is an in-VMEM
#     transpose of the (C, tile) block (no HBM relayout).
#   * LN per C4-chunk uses factored averaging operators (N,4)x(4,N).
#   * second conv-transpose is a block-diagonal kron(I4, W2) matmul so no
#     lane reshape is needed; bf16 output, columns ordered (d1, d2, c8).
# ----------------------------------------------------------------------------
def _upscale_kernel(src_ref, w1_ref, b1_ref, lnA_ref, lnB_ref, g_ref, bb_ref,
                    w2_ref, b2_ref, o_ref, *, eps):
    s = src_ref[0]                                   # (C, tp) bf16
    x_rows = s.T                                     # (tp, C) in-VMEM transpose
    y = jnp.dot(x_rows, w1_ref[...], preferred_element_type=jnp.float32)
    y = y + b1_ref[...]
    mu = jnp.dot(jnp.dot(y, lnA_ref[...], preferred_element_type=jnp.float32),
                 lnB_ref[...], preferred_element_type=jnp.float32)
    d = y - mu
    var = jnp.dot(jnp.dot(d * d, lnA_ref[...], preferred_element_type=jnp.float32),
                  lnB_ref[...], preferred_element_type=jnp.float32)
    a1 = _gelu(d * lax.rsqrt(var + eps) * g_ref[...] + bb_ref[...])
    y2 = jnp.dot(a1.astype(w2_ref.dtype), w2_ref[...],
                 preferred_element_type=jnp.float32) + b2_ref[...]
    o_ref[0] = _gelu(y2).astype(o_ref.dtype)


def upscale_fused(src_cf, ct1_w, ct1_b, ln_w, ln_b, ct2_w, ct2_b, eps=1e-6,
                  out_dtype=jnp.bfloat16, tile_pix=_UPSCALE_TILE_PIX,
                  compute_dtype=jnp.bfloat16):
    """src_cf: (B, C, HW) -> (B, HW, 16*C8), columns ordered (d1, d2, c8)."""
    B, C, HW = src_cf.shape
    C4 = ct1_w.shape[1]
    C8 = ct2_w.shape[1]
    N1, N2 = 4 * C4, 16 * C8

    w1r = jnp.transpose(ct1_w, (0, 2, 3, 1)).reshape(C, N1).astype(compute_dtype)
    b1r = jnp.tile(ct1_b, 4).reshape(1, N1).astype(jnp.float32)
    gr = jnp.tile(ln_w, 4).reshape(1, N1).astype(jnp.float32)
    br = jnp.tile(ln_b, 4).reshape(1, N1).astype(jnp.float32)
    w2r = jnp.transpose(ct2_w, (0, 2, 3, 1)).reshape(C4, 4 * C8)
    w2blk = jnp.kron(jnp.eye(4, dtype=w2r.dtype), w2r).astype(compute_dtype)
    b2r = jnp.tile(ct2_b, 16).reshape(1, N2).astype(jnp.float32)
    # factored per-chunk averaging operators (static, tiny)
    lnA = jnp.asarray(np.kron(np.eye(4, dtype=np.float32),
                              np.full((C4, 1), 1.0 / C4, np.float32)))    # (N1, 4)
    lnB = jnp.asarray(np.kron(np.eye(4, dtype=np.float32),
                              np.ones((1, C4), np.float32)))              # (4, N1)

    tp = HW if HW <= tile_pix else tile_pix
    return pl.pallas_call(
        functools.partial(_upscale_kernel, eps=eps),
        out_shape=jax.ShapeDtypeStruct((B, HW, N2), out_dtype),
        grid=(B, pl.cdiv(HW, tp)),
        in_specs=[
            pl.BlockSpec((1, C, tp), lambda b, j: (b, 0, j)),
            pl.BlockSpec((C, N1), lambda b, j: (0, 0)),
            pl.BlockSpec((1, N1), lambda b, j: (0, 0)),
            pl.BlockSpec((N1, 4), lambda b, j: (0, 0)),
            pl.BlockSpec((4, N1), lambda b, j: (0, 0)),
            pl.BlockSpec((1, N1), lambda b, j: (0, 0)),
            pl.BlockSpec((1, N1), lambda b, j: (0, 0)),
            pl.BlockSpec((N1, N2), lambda b, j: (0, 0)),
            pl.BlockSpec((1, N2), lambda b, j: (0, 0)),
        ],
        out_specs=pl.BlockSpec((1, tp, N2), lambda b, j: (b, j, 0)),
        compiler_params=pltpu.CompilerParams(
            dimension_semantics=("parallel", "parallel")),
    )(src_cf.astype(compute_dtype), w1r, b1r, lnA, lnB, gr, br, w2blk, b2r)


# ----------------------------------------------------------------------------
# Kernel 4: fused 3-layer MLP (Linear-ReLU-Linear-ReLU-Linear), batched over a
# group axis.  ONE pallas_call covers all hypernetwork MLPs AND the IoU head
# (weights padded to common dims).  bf16 weights, f32 accumulation.
# ----------------------------------------------------------------------------
def _mlp3_kernel(x_ref, w1_ref, b1_ref, w2_ref, b2_ref, w3_ref, b3_ref, o_ref):
    cd = w1_ref.dtype
    x = x_ref[0].astype(cd)
    h = jnp.dot(x, w1_ref[0], preferred_element_type=jnp.float32) + b1_ref[0]
    h = jnp.maximum(h, 0.0)
    h = jnp.dot(h.astype(cd), w2_ref[0], preferred_element_type=jnp.float32) + b2_ref[0]
    h = jnp.maximum(h, 0.0)
    o_ref[0] = jnp.dot(h.astype(cd), w3_ref[0],
                       preferred_element_type=jnp.float32) + b3_ref[0]


def fused_mlp3(x, w1, b1, w2, b2, w3, b3, compute_dtype=jnp.bfloat16):
    """x: (G, M, D0); w_i: (G, ., .); b_i: (G, 1, .) -> (G, M, D3) f32."""
    G, M, D0 = x.shape
    D1, D2, D3 = w1.shape[2], w2.shape[2], w3.shape[2]

    def spec(*shape):
        return pl.BlockSpec((1,) + shape, lambda g: (g, 0, 0))

    return pl.pallas_call(
        _mlp3_kernel,
        out_shape=jax.ShapeDtypeStruct((G, M, D3), jnp.float32),
        grid=(G,),
        in_specs=[spec(M, D0), spec(D0, D1), spec(1, D1),
                  spec(D1, D2), spec(1, D2), spec(D2, D3), spec(1, D3)],
        out_specs=spec(M, D3),
        compiler_params=pltpu.CompilerParams(dimension_semantics=("parallel",)),
    )(x.astype(jnp.float32),
      w1.astype(compute_dtype), b1.astype(jnp.float32),
      w2.astype(compute_dtype), b2.astype(jnp.float32),
      w3.astype(compute_dtype), b3.astype(jnp.float32))


# ----------------------------------------------------------------------------
# Kernel 5: masks = hyper_in @ upscaled^T   (tiled over batch and pixels)
# ----------------------------------------------------------------------------
def _mask_mm_kernel(h_ref, u_ref, o_ref):
    o_ref[0] = lax.dot_general(h_ref[0], u_ref[0], (((1,), (1,)), ((), ())),
                               preferred_element_type=jnp.float32)


def mask_batched_matmul(hyper_in, ups_flat, tile_p=_MASK_TILE_P,
                        compute_dtype=jnp.bfloat16):
    B, T, C8 = hyper_in.shape
    _, P, _ = ups_flat.shape
    tp = P if P <= tile_p else tile_p
    return pl.pallas_call(
        _mask_mm_kernel,
        out_shape=jax.ShapeDtypeStruct((B, T, P), jnp.float32),
        grid=(B, pl.cdiv(P, tp)),
        in_specs=[
            pl.BlockSpec((1, T, C8), lambda b, j: (b, 0, 0)),
            pl.BlockSpec((1, tp, C8), lambda b, j: (b, j, 0)),
        ],
        out_specs=pl.BlockSpec((1, T, tp), lambda b, j: (b, 0, j)),
        compiler_params=pltpu.CompilerParams(
            dimension_semantics=("parallel", "parallel")),
    )(hyper_in.astype(compute_dtype), ups_flat.astype(compute_dtype))


# ----------------------------------------------------------------------------
# Parameter construction (deterministic, shapes from MaskDecoder.__init__)
# ----------------------------------------------------------------------------
def init_params(key, C=32, num_multimask_outputs=3,
                iou_head_hidden_dim=256, iou_head_depth=3):
    assert iou_head_depth == 3  # fused 3-layer-MLP kernel assumes depth 3
    ntok = num_multimask_outputs + 1
    C4, C8 = C // 4, C // 8
    hid = iou_head_hidden_dim
    keys = iter(jax.random.split(key, 16))

    def nrm(shape, scale=0.02):
        return scale * jax.random.normal(next(keys), shape, jnp.float32)

    def pad_to(a, shape):
        return jnp.pad(a, [(0, s - d) for d, s in zip(a.shape, shape)])

    # hypernetwork MLPs (ntok x [C->C->C8]) and the IoU head (C->hid->ntok)
    # are padded to common dims and stacked so all run in ONE pallas_call.
    G = ntok + 1
    D1 = max(C, hid)
    D2 = max(C, hid)
    D3 = max(C8, ntok)
    hyp_w1, hyp_w2, hyp_w3 = nrm((ntok, C, C)), nrm((ntok, C, C)), nrm((ntok, C, C8))
    iou_w1, iou_w2, iou_w3 = nrm((1, C, hid)), nrm((1, hid, hid)), nrm((1, hid, ntok))
    mlp_w1 = jnp.concatenate([pad_to(hyp_w1, (ntok, C, D1)),
                              pad_to(iou_w1, (1, C, D1))], 0).astype(jnp.bfloat16)
    mlp_w2 = jnp.concatenate([pad_to(hyp_w2, (ntok, D1, D2)),
                              pad_to(iou_w2, (1, D1, D2))], 0).astype(jnp.bfloat16)
    mlp_w3 = jnp.concatenate([pad_to(hyp_w3, (ntok, D2, D3)),
                              pad_to(iou_w3, (1, D2, D3))], 0).astype(jnp.bfloat16)

    return {
        "iou_token": nrm((1, C), 1.0),
        "mask_tokens": nrm((ntok, C), 1.0),
        # stand-in single-layer cross-attention weights (wq, wk, wv, wo)
        "attn_w": nrm((4, C, C)).astype(jnp.bfloat16),
        # output_upscaling
        "ct1_w": nrm((C, C4, 2, 2)), "ct1_b": jnp.zeros((C4,), jnp.float32),
        "ln_w": jnp.ones((C4,), jnp.float32), "ln_b": jnp.zeros((C4,), jnp.float32),
        "ct2_w": nrm((C4, C8, 2, 2)), "ct2_b": jnp.zeros((C8,), jnp.float32),
        # merged hypernetwork + IoU MLPs (groups 0..ntok-1 = hyper, ntok = IoU)
        "mlp_w1": mlp_w1, "mlp_b1": jnp.zeros((G, 1, D1), jnp.float32),
        "mlp_w2": mlp_w2, "mlp_b2": jnp.zeros((G, 1, D2), jnp.float32),
        "mlp_w3": mlp_w3, "mlp_b3": jnp.zeros((G, 1, D3), jnp.float32),
    }


# ----------------------------------------------------------------------------
# MaskDecoder.forward
# ----------------------------------------------------------------------------
@functools.partial(jax.jit, static_argnames=("multimask_output",))
def mask_decoder_forward(params, image_embeddings, image_pe,
                         sparse_prompt_embeddings, dense_prompt_embeddings,
                         multimask_output=False):
    # pos_src / image_pe_resized are computed but never consumed in the
    # reference forward (its transformer call takes only (src, tokens)).
    del image_pe
    B = sparse_prompt_embeddings.shape[0]
    C, H, W = image_embeddings.shape[1:]
    ntok = params["mask_tokens"].shape[0]
    C8 = params["ct2_w"].shape[1]

    # tokens = [iou_token, mask_tokens, sparse prompts], padded to 8-sublane mult
    output_tokens = jnp.concatenate([params["iou_token"], params["mask_tokens"]], 0)
    output_tokens = jnp.broadcast_to(output_tokens[None], (B,) + output_tokens.shape)
    tokens = jnp.concatenate(
        [output_tokens, sparse_prompt_embeddings.astype(jnp.float32)], axis=1)
    T = tokens.shape[1]
    Tp = _round_up(T, 8)
    tokens = jnp.pad(tokens, ((0, 0), (0, Tp - T), (0, 0)))

    # src = image_embeddings + resize(dense_prompt); fused kernel, bf16 output,
    # kept channel-first so no HBM relayout is needed downstream.
    src = resize_add(dense_prompt_embeddings.astype(jnp.float32),
                     image_embeddings.astype(jnp.float32))          # (B,C,H,W) bf16
    src_cf = src.reshape(B, C, H * W)                               # free reshape

    # transformer stand-in (single cross-attention layer), batch-first
    hs = cross_attention_transformer(tokens, src_cf, params["attn_w"])  # (B,Tp,C) f32
    iou_token_out = hs[:, 0, :]
    mask_tokens_out = hs[:, 1:1 + ntok, :]

    # output upscaling (ConvT + LN + GELU + ConvT + GELU) fused; consumes src
    # channel-first (per-pixel rows via in-VMEM transpose, i.e. the canonical
    # transpose-then-view of the reference) and emits bf16 blocked output.
    up2 = upscale_fused(src_cf, params["ct1_w"], params["ct1_b"],
                        params["ln_w"], params["ln_b"],
                        params["ct2_w"], params["ct2_b"])           # (B,HW,16*C8)
    P = H * W * 16
    ups_flat = up2.reshape(B, P, C8)  # flat-order-preserving reshape

    # all hypernetwork MLPs + IoU head in ONE fused 3-layer-MLP kernel
    mlp_in = jnp.concatenate(
        [jnp.transpose(mask_tokens_out, (1, 0, 2)), iou_token_out[None]], axis=0)
    mlp_out = fused_mlp3(mlp_in, params["mlp_w1"], params["mlp_b1"],
                         params["mlp_w2"], params["mlp_b2"],
                         params["mlp_w3"], params["mlp_b3"])        # (ntok+1,B,D3)
    hyper_in = jnp.transpose(mlp_out[:ntok, :, :C8], (1, 0, 2))     # (B,ntok,C8)
    iou_pred = mlp_out[ntok, :, :ntok]                              # (B,ntok)

    # masks = hyper_in @ upscaled ; one de-interleave of the small final masks
    masks_raw = mask_batched_matmul(hyper_in, ups_flat)             # (B,ntok,P) f32
    masks = masks_raw.reshape(B, ntok, H, W, 2, 2, 2, 2)
    masks = jnp.transpose(masks, (0, 1, 2, 4, 6, 3, 5, 7)).reshape(
        B, ntok, 4 * H, 4 * W)

    if multimask_output:
        return masks[:, 1:, :, :], iou_pred[:, 1:]
    return masks[:, 0:1, :, :], iou_pred[:, 0:1]


# ----------------------------------------------------------------------------
if __name__ == "__main__":
    key = jax.random.PRNGKey(0)
    kp, k1, k2, k3, k4 = jax.random.split(key, 5)

    B, C, H, W = 2, 32, 8, 8      # transformer_dim = 32 -> C/4 = 8, C/8 = 4
    Ns = 8                        # number of sparse prompt tokens

    params = init_params(kp, C=C)
    image_embeddings = jax.random.normal(k1, (B, C, H, W), jnp.float32)
    image_pe = jax.random.normal(k2, (1, C, 16, 16), jnp.float32)
    sparse_prompt_embeddings = jax.random.normal(k3, (B, Ns, C), jnp.float32)
    dense_prompt_embeddings = jax.random.normal(k4, (B, C, 16, 16), jnp.float32)

    masks, iou_pred = mask_decoder_forward(
        params, image_embeddings, image_pe,
        sparse_prompt_embeddings, dense_prompt_embeddings,
        multimask_output=False,
    )
    jax.block_until_ready((masks, iou_pred))

    assert masks.shape == (B, 1, 4 * H, 4 * W), masks.shape
    assert iou_pred.shape == (B, 1), iou_pred.shape
    assert masks.dtype == jnp.float32 and iou_pred.dtype == jnp.float32
    assert bool(jnp.all(jnp.isfinite(masks))) and bool(jnp.all(jnp.isfinite(iou_pred)))
    print("KERNEL_OK")
</pallas_src>

<mosaic_0001>
module attributes {stable_mosaic.version = 11 : i64} {
  func.func @_resize_add_kernel(%arg0: i32, %arg1: memref<32x16x16xf32, #tpu.memory_space<vmem>>, %arg2: memref<32x8x8xf32, #tpu.memory_space<vmem>>, %arg3: memref<8x16xbf16, #tpu.memory_space<vmem>>, %arg4: memref<16x8xbf16, #tpu.memory_space<vmem>>, %arg5: memref<32x8x8xbf16, #tpu.memory_space<vmem>>) attributes {dimension_semantics = [#tpu.dimension_semantics<parallel>], iteration_bounds = array<i64: 2>, scalar_prefetch = 0 : i64, scratch_operands = 0 : i64, tpu.core_type = #tpu.core_type<tc>, window_params = [{transform_indices = @transform_0, window_bounds = array<i64: 32, 16, 16>}, {transform_indices = @transform_1, window_bounds = array<i64: 32, 8, 8>}, {pipeline_mode = #tpu.pipeline_mode<synchronous>, transform_indices = @transform_2, window_bounds = array<i64: 8, 16>}, {pipeline_mode = #tpu.pipeline_mode<synchronous>, transform_indices = @transform_3, window_bounds = array<i64: 16, 8>}, {transform_indices = @transform_4, window_bounds = array<i64: 32, 8, 8>}]} {
    %c0 = arith.constant 0 : index
    %c0_0 = arith.constant 0 : index
    %c0_1 = arith.constant 0 : index
    %0 = vector.load %arg1[%c0, %c0_0, %c0_1] : memref<32x16x16xf32, #tpu.memory_space<vmem>>, vector<32x16x16xf32>
    %1 = arith.truncf %0 : vector<32x16x16xf32> to vector<32x16x16xbf16>
    %c0_2 = arith.constant 0 : index
    %c0_3 = arith.constant 0 : index
    %2 = vector.load %arg3[%c0_2, %c0_3] : memref<8x16xbf16, #tpu.memory_space<vmem>>, vector<8x16xbf16>
    %3 = vector.shape_cast %2 : vector<8x16xbf16> to vector<1x8x16xbf16>
    %4 = vector.shape_cast %3 : vector<1x8x16xbf16> to vector<1x8x16xbf16>
    %5 = vector.broadcast %4 : vector<1x8x16xbf16> to vector<32x8x16xbf16>
    %c0_4 = arith.constant 0 : index
    %c0_5 = arith.constant 0 : index
    %6 = vector.load %arg4[%c0_4, %c0_5] : memref<16x8xbf16, #tpu.memory_space<vmem>>, vector<16x8xbf16>
    %7 = vector.shape_cast %6 : vector<16x8xbf16> to vector<1x16x8xbf16>
    %8 = vector.shape_cast %7 : vector<1x16x8xbf16> to vector<1x16x8xbf16>
    %9 = vector.broadcast %8 : vector<1x16x8xbf16> to vector<32x16x8xbf16>
    %cst = arith.constant dense<0.000000e+00> : vector<32x8x16xf32>
    %10 = tpu.matmul %5, %1, %cst {dimension_numbers = #tpu.dot_dimension_numbers<[2], [1], [1], [2], [0, 0, 0, 1, 1, 2], [0], [0]>} : vector<32x8x16xbf16>, vector<32x16x16xbf16>, vector<32x8x16xf32> -> vector<32x8x16xf32>
    %11 = arith.truncf %10 : vector<32x8x16xf32> to vector<32x8x16xbf16>
    %cst_6 = arith.constant dense<0.000000e+00> : vector<32x8x8xf32>
    %12 = tpu.matmul %11, %9, %cst_6 {dimension_numbers = #tpu.dot_dimension_numbers<[2], [1], [1], [2], [0, 0, 0, 1, 1, 2], [0], [0]>} : vector<32x8x16xbf16>, vector<32x16x8xbf16>, vector<32x8x8xf32> -> vector<32x8x8xf32>
    %c0_7 = arith.constant 0 : index
    %c0_8 = arith.constant 0 : index
    %c0_9 = arith.constant 0 : index
    %13 = vector.load %arg2[%c0_7, %c0_8, %c0_9] : memref<32x8x8xf32, #tpu.memory_space<vmem>>, vector<32x8x8xf32>
    %14 = arith.addf %12, %13 : vector<32x8x8xf32>
    %15 = arith.truncf %14 : vector<32x8x8xf32> to vector<32x8x8xbf16>
    %c0_10 = arith.constant 0 : index
    %c0_11 = arith.constant 0 : index
    %c0_12 = arith.constant 0 : index
    %16 = vector.load %arg5[%c0_10, %c0_11, %c0_12] : memref<32x8x8xbf16, #tpu.memory_space<vmem>>, vector<32x8x8xbf16>
    tpu.vector_store %arg5[%c0_10, %c0_11, %c0_12], %15 {strides = array<i32>} : memref<32x8x8xbf16, #tpu.memory_space<vmem>>, vector<32x8x8xbf16>,
    return
  }
  func.func @transform_0(%arg0: i32) -> (i32, i32, i32) {
    %c0_i32 = arith.constant 0 : i32
    %c0_i32_0 = arith.constant 0 : i32
    %c0_i32_1 = arith.constant 0 : i32
    return %arg0, %c0_i32, %c0_i32_0 : i32, i32, i32
  }
  func.func @transform_1(%arg0: i32) -> (i32, i32, i32) {
    %c0_i32 = arith.constant 0 : i32
    %c0_i32_0 = arith.constant 0 : i32
    %c0_i32_1 = arith.constant 0 : i32
    return %arg0, %c0_i32, %c0_i32_0 : i32, i32, i32
  }
  func.func @transform_2(%arg0: i32) -> (i32, i32) {
    %c0_i32 = arith.constant 0 : i32
    %c0_i32_0 = arith.constant 0 : i32
    %c0_i32_1 = arith.constant 0 : i32
    return %c0_i32, %c0_i32_0 : i32, i32
  }
  func.func @transform_3(%arg0: i32) -> (i32, i32) {
    %c0_i32 = arith.constant 0 : i32
    %c0_i32_0 = arith.constant 0 : i32
    %c0_i32_1 = arith.constant 0 : i32
    return %c0_i32, %c0_i32_0 : i32, i32
  }
  func.func @transform_4(%arg0: i32) -> (i32, i32, i32) {
    %c0_i32 = arith.constant 0 : i32
    %c0_i32_0 = arith.constant 0 : i32
    %c0_i32_1 = arith.constant 0 : i32
    return %arg0, %c0_i32, %c0_i32_0 : i32, i32, i32
  }
}

module attributes {stable_mosaic.version = 11 : i64} {
  func.func @_xattn_kernel(%arg0: i32, %arg1: memref<1x16x32xf32, #tpu.memory_space<vmem>>, %arg2: memref<1x32x64xbf16, #tpu.memory_space<vmem>>, %arg3: memref<4x32x32xbf16, #tpu.memory_space<vmem>>, %arg4: memref<1x16x32xf32, #tpu.memory_space<vmem>>) attributes {dimension_semantics = [#tpu.dimension_semantics<parallel>], iteration_bounds = array<i64: 2>, scalar_prefetch = 0 : i64, scratch_operands = 0 : i64, tpu.core_type = #tpu.core_type<tc>, window_params = [{transform_indices = @transform_0, window_bounds = array<i64: 1, 16, 32>}, {transform_indices = @transform_1, window_bounds = array<i64: 1, 32, 64>}, {pipeline_mode = #tpu.pipeline_mode<synchronous>, transform_indices = @transform_2, window_bounds = array<i64: 4, 32, 32>}, {transform_indices = @transform_3, window_bounds = array<i64: 1, 16, 32>}]} {
    %c0 = arith.constant 0 : index
    %c0_0 = arith.constant 0 : index
    %c0_1 = arith.constant 0 : index
    %0 = vector.load %arg1[%c0, %c0_0, %c0_1] : memref<1x16x32xf32, #tpu.memory_space<vmem>>, vector<1x16x32xf32>
    %1 = vector.shape_cast %0 : vector<1x16x32xf32> to vector<16x32xf32>
    %c0_2 = arith.constant 0 : index
    %c0_3 = arith.constant 0 : index
    %c0_4 = arith.constant 0 : index
    %2 = vector.load %arg2[%c0_2, %c0_3, %c0_4] : memref<1x32x64xbf16, #tpu.memory_space<vmem>>, vector<1x32x64xbf16>
    %3 = vector.shape_cast %2 : vector<1x32x64xbf16> to vector<32x64xbf16>
    %4 = arith.truncf %1 : vector<16x32xf32> to vector<16x32xbf16>
    %c0_5 = arith.constant 0 : index
    %c0_6 = arith.constant 0 : index
    %c0_7 = arith.constant 0 : index
    %5 = vector.load %arg3[%c0_5, %c0_6, %c0_7] : memref<4x32x32xbf16, #tpu.memory_space<vmem>>, vector<1x32x32xbf16>
    %6 = vector.shape_cast %5 : vector<1x32x32xbf16> to vector<32x32xbf16>
    %cst = arith.constant dense<0.000000e+00> : vector<16x32xf32>
    %7 = tpu.matmul %4, %6, %cst {dimension_numbers = #tpu.dot_dimension_numbers<[1], [0], [0], [1], [0, 0, 1, 1], [], []>} : vector<16x32xbf16>, vector<32x32xbf16>, vector<16x32xf32> -> vector<16x32xf32>
    %8 = arith.truncf %7 : vector<16x32xf32> to vector<16x32xbf16>
    %c1 = arith.constant 1 : index
    %c0_8 = arith.constant 0 : index
    %c0_9 = arith.constant 0 : index
    %9 = vector.load %arg3[%c1, %c0_8, %c0_9] : memref<4x32x32xbf16, #tpu.memory_space<vmem>>, vector<1x32x32xbf16>
    %10 = vector.shape_cast %9 : vector<1x32x32xbf16> to vector<32x32xbf16>
    %cst_10 = arith.constant dense<0.000000e+00> : vector<16x32xf32>
    %11 = tpu.matmul %8, %10, %cst_10 {dimension_numbers = #tpu.dot_dimension_numbers<[1], [1], [0], [0], [0, 0, 1, 0], [], []>} : vector<16x32xbf16>, vector<32x32xbf16>, vector<16x32xf32> -> vector<16x32xf32>
    %12 = arith.truncf %11 : vector<16x32xf32> to vector<16x32xbf16>
    %cst_11 = arith.constant dense<0.000000e+00> : vector<16x64xf32>
    %13 = tpu.matmul %12, %3, %cst_11 {dimension_numbers = #tpu.dot_dimension_numbers<[1], [0], [0], [1], [0, 0, 1, 1], [], []>} : vector<16x32xbf16>, vector<32x64xbf16>, vector<16x64xf32> -> vector<16x64xf32>
    %cst_12 = arith.constant 0.176776692 : f32
    %14 = vector.broadcast %cst_12 : f32 to vector<16x64xf32>
    %15 = arith.mulf %13, %14 : vector<16x64xf32>
    %cst_13 = arith.constant dense<0xFF800000> : vector<16xf32>
    %16 = vector.multi_reduction <maximumf>, %15, %cst_13 [1] : vector<16x64xf32> to vector<16xf32>
    %17 = vector.shape_cast %16 : vector<16xf32> to vector<16x1xf32>
    %18 = vector.broadcast %17 : vector<16x1xf32> to vector<16x64xf32>
    %19 = arith.subf %15, %18 : vector<16x64xf32>
    %20 = math.exp %19 : vector<16x64xf32>
    %cst_14 = arith.constant dense<0.000000e+00> : vector<16xf32>
    %21 = vector.multi_reduction <add>, %20, %cst_14 [1] : vector<16x64xf32> to vector<16xf32>
    %22 = vector.shape_cast %21 : vector<16xf32> to vector<16x1xf32>
    %23 = arith.truncf %20 : vector<16x64xf32> to vector<16x64xbf16>
    %cst_15 = arith.constant dense<0.000000e+00> : vector<16x32xf32>
    %24 = tpu.matmul %23, %3, %cst_15 {dimension_numbers = #tpu.dot_dimension_numbers<[1], [1], [0], [0], [0, 0, 1, 0], [], []>} : vector<16x64xbf16>, vector<32x64xbf16>, vector<16x32xf32> -> vector<16x32xf32>
    %25 = arith.truncf %24 : vector<16x32xf32> to vector<16x32xbf16>
    %c2 = arith.constant 2 : index
    %c0_16 = arith.constant 0 : index
    %c0_17 = arith.constant 0 : index
    %26 = vector.load %arg3[%c2, %c0_16, %c0_17] : memref<4x32x32xbf16, #tpu.memory_space<vmem>>, vector<1x32x32xbf16>
    %27 = vector.shape_cast %26 : vector<1x32x32xbf16> to vector<32x32xbf16>
    %cst_18 = arith.constant dense<0.000000e+00> : vector<16x32xf32>
    %28 = tpu.matmul %25, %27, %cst_18 {dimension_numbers = #tpu.dot_dimension_numbers<[1], [0], [0], [1], [0, 0, 1, 1], [], []>} : vector<16x32xbf16>, vector<32x32xbf16>, vector<16x32xf32> -> vector<16x32xf32>
    %29 = tpu.reciprocal %22 {approx = true} : vector<16x1xf32> -> vector<16x1xf32>
    %30 = vector.broadcast %29 : vector<16x1xf32> to vector<16x32xf32>
    %31 = arith.mulf %28, %30 : vector<16x32xf32>
    %32 = arith.truncf %31 : vector<16x32xf32> to vector<16x32xbf16>
    %c3 = arith.constant 3 : index
    %c0_19 = arith.constant 0 : index
    %c0_20 = arith.constant 0 : index
    %33 = vector.load %arg3[%c3, %c0_19, %c0_20] : memref<4x32x32xbf16, #tpu.memory_space<vmem>>, vector<1x32x32xbf16>
    %34 = vector.shape_cast %33 : vector<1x32x32xbf16> to vector<32x32xbf16>
    %cst_21 = arith.constant dense<0.000000e+00> : vector<16x32xf32>
    %35 = tpu.matmul %32, %34, %cst_21 {dimension_numbers = #tpu.dot_dimension_numbers<[1], [0], [0], [1], [0, 0, 1, 1], [], []>} : vector<16x32xbf16>, vector<32x32xbf16>, vector<16x32xf32> -> vector<16x32xf32>
    %36 = arith.addf %1, %35 : vector<16x32xf32>
    %c0_22 = arith.constant 0 : index
    %c0_23 = arith.constant 0 : index
    %c0_24 = arith.constant 0 : index
    %37 = vector.load %arg4[%c0_22, %c0_23, %c0_24] : memref<1x16x32xf32, #tpu.memory_space<vmem>>, vector<1x16x32xf32>
    %38 = vector.shape_cast %37 : vector<1x16x32xf32> to vector<16x32xf32>
    %39 = vector.shape_cast %36 : vector<16x32xf32> to vector<1x16x32xf32>
    tpu.vector_store %arg4[%c0_22, %c0_23, %c0_24], %39 {strides = array<i32>} : memref<1x16x32xf32, #tpu.memory_space<vmem>>, vector<1x16x32xf32>,
    return
  }
  func.func @transform_0(%arg0: i32) -> (i32, i32, i32) {
    %c0_i32 = arith.constant 0 : i32
    %c0_i32_0 = arith.constant 0 : i32
    %c0_i32_1 = arith.constant 0 : i32
    return %arg0, %c0_i32, %c0_i32_0 : i32, i32, i32
  }
  func.func @transform_1(%arg0: i32) -> (i32, i32, i32) {
    %c0_i32 = arith.constant 0 : i32
    %c0_i32_0 = arith.constant 0 : i32
    %c0_i32_1 = arith.constant 0 : i32
    return %arg0, %c0_i32, %c0_i32_0 : i32, i32, i32
  }
  func.func @transform_2(%arg0: i32) -> (i32, i32, i32) {
    %c0_i32 = arith.constant 0 : i32
    %c0_i32_0 = arith.constant 0 : i32
    %c0_i32_1 = arith.constant 0 : i32
    %c0_i32_2 = arith.constant 0 : i32
    return %c0_i32, %c0_i32_0, %c0_i32_1 : i32, i32, i32
  }
  func.func @transform_3(%arg0: i32) -> (i32, i32, i32) {
    %c0_i32 = arith.constant 0 : i32
    %c0_i32_0 = arith.constant 0 : i32
    %c0_i32_1 = arith.constant 0 : i32
    return %arg0, %c0_i32, %c0_i32_0 : i32, i32, i32
  }
}

module attributes {stable_mosaic.version = 11 : i64} {
  func.func @_upscale_kernel(%arg0: i32, %arg1: i32, %arg2: memref<1x32x64xbf16, #tpu.memory_space<vmem>>, %arg3: memref<32x32xbf16, #tpu.memory_space<vmem>>, %arg4: memref<1x32xf32, #tpu.memory_space<vmem>>, %arg5: memref<32x4xf32, #tpu.memory_space<vmem>>, %arg6: memref<4x32xf32, #tpu.memory_space<vmem>>, %arg7: memref<1x32xf32, #tpu.memory_space<vmem>>, %arg8: memref<1x32xf32, #tpu.memory_space<vmem>>, %arg9: memref<32x64xbf16, #tpu.memory_space<vmem>>, %arg10: memref<1x64xf32, #tpu.memory_space<vmem>>, %arg11: memref<1x64x64xbf16, #tpu.memory_space<vmem>>) attributes {dimension_semantics = [#tpu.dimension_semantics<parallel>, #tpu.dimension_semantics<parallel>], iteration_bounds = array<i64: 2, 1>, scalar_prefetch = 0 : i64, scratch_operands = 0 : i64, tpu.core_type = #tpu.core_type<tc>, window_params = [{transform_indices = @transform_0, window_bounds = array<i64: 1, 32, 64>}, {pipeline_mode = #tpu.pipeline_mode<synchronous>, transform_indices = @transform_1, window_bounds = array<i64: 32, 32>}, {pipeline_mode = #tpu.pipeline_mode<synchronous>, transform_indices = @transform_2, window_bounds = array<i64: 1, 32>}, {pipeline_mode = #tpu.pipeline_mode<synchronous>, transform_indices = @transform_3, window_bounds = array<i64: 32, 4>}, {pipeline_mode = #tpu.pipeline_mode<synchronous>, transform_indices = @transform_4, window_bounds = array<i64: 4, 32>}, {pipeline_mode = #tpu.pipeline_mode<synchronous>, transform_indices = @transform_5, window_bounds = array<i64: 1, 32>}, {pipeline_mode = #tpu.pipeline_mode<synchronous>, transform_indices = @transform_6, window_bounds = array<i64: 1, 32>}, {pipeline_mode = #tpu.pipeline_mode<synchronous>, transform_indices = @transform_7, window_bounds = array<i64: 32, 64>}, {pipeline_mode = #tpu.pipeline_mode<synchronous>, transform_indices = @transform_8, window_bounds = array<i64: 1, 64>}, {transform_indices = @transform_9, window_bounds = array<i64: 1, 64, 64>}]} {
    %c0 = arith.constant 0 : index
    %c0_0 = arith.constant 0 : index
    %c0_1 = arith.constant 0 : index
    %0 = vector.load %arg2[%c0, %c0_0, %c0_1] : memref<1x32x64xbf16, #tpu.memory_space<vmem>>, vector<1x32x64xbf16>
    %1 = vector.shape_cast %0 : vector<1x32x64xbf16> to vector<32x64xbf16>
    %2 = tpu.transpose %1, [1, 0] : vector<32x64xbf16> -> vector<64x32xbf16>
    %c0_2 = arith.constant 0 : index
    %c0_3 = arith.constant 0 : index
    %3 = vector.load %arg3[%c0_2, %c0_3] : memref<32x32xbf16, #tpu.memory_space<vmem>>, vector<32x32xbf16>
    %cst = arith.constant dense<0.000000e+00> : vector<64x32xf32>
    %4 = tpu.matmul %2, %3, %cst {dimension_numbers = #tpu.dot_dimension_numbers<[1], [0], [0], [1], [0, 0, 1, 1], [], []>} : vector<64x32xbf16>, vector<32x32xbf16>, vector<64x32xf32> -> vector<64x32xf32>
    %c0_4 = arith.constant 0 : index
    %c0_5 = arith.constant 0 : index
    %5 = vector.load %arg4[%c0_4, %c0_5] : memref<1x32xf32, #tpu.memory_space<vmem>>, vector<1x32xf32>
    %6 = vector.broadcast %5 : vector<1x32xf32> to vector<64x32xf32>
    %7 = arith.addf %4, %6 : vector<64x32xf32>
    %c0_6 = arith.constant 0 : index
    %c0_7 = arith.constant 0 : index
    %8 = vector.load %arg5[%c0_6, %c0_7] : memref<32x4xf32, #tpu.memory_space<vmem>>, vector<32x4xf32>
    %cst_8 = arith.constant dense<0.000000e+00> : vector<64x4xf32>
    %9 = tpu.matmul %7, %8, %cst_8 {dimension_numbers = #tpu.dot_dimension_numbers<[1], [0], [0], [1], [0, 0, 1, 1], [], []>} : vector<64x32xf32>, vector<32x4xf32>, vector<64x4xf32> -> vector<64x4xf32>
    %c0_9 = arith.constant 0 : index
    %c0_10 = arith.constant 0 : index
    %10 = vector.load %arg6[%c0_9, %c0_10] : memref<4x32xf32, #tpu.memory_space<vmem>>, vector<4x32xf32>
    %cst_11 = arith.constant dense<0.000000e+00> : vector<64x32xf32>
    %11 = tpu.matmul %9, %10, %cst_11 {dimension_numbers = #tpu.dot_dimension_numbers<[1], [0], [0], [1], [0, 0, 1, 1], [], []>} : vector<64x4xf32>, vector<4x32xf32>, vector<64x32xf32> -> vector<64x32xf32>
    %12 = arith.subf %7, %11 : vector<64x32xf32>
    %13 = arith.mulf %12, %12 : vector<64x32xf32>
    %c0_12 = arith.constant 0 : index
    %c0_13 = arith.constant 0 : index
    %14 = vector.load %arg5[%c0_12, %c0_13] : memref<32x4xf32, #tpu.memory_space<vmem>>, vector<32x4xf32>
    %cst_14 = arith.constant dense<0.000000e+00> : vector<64x4xf32>
    %15 = tpu.matmul %13, %14, %cst_14 {dimension_numbers = #tpu.dot_dimension_numbers<[1], [0], [0], [1], [0, 0, 1, 1], [], []>} : vector<64x32xf32>, vector<32x4xf32>, vector<64x4xf32> -> vector<64x4xf32>
    %c0_15 = arith.constant 0 : index
    %c0_16 = arith.constant 0 : index
    %16 = vector.load %arg6[%c0_15, %c0_16] : memref<4x32xf32, #tpu.memory_space<vmem>>, vector<4x32xf32>
    %cst_17 = arith.constant dense<0.000000e+00> : vector<64x32xf32>
    %17 = tpu.matmul %15, %16, %cst_17 {dimension_numbers = #tpu.dot_dimension_numbers<[1], [0], [0], [1], [0, 0, 1, 1], [], []>} : vector<64x4xf32>, vector<4x32xf32>, vector<64x32xf32> -> vector<64x32xf32>
    %cst_18 = arith.constant 9.99999997E-7 : f32
    %18 = vector.broadcast %cst_18 : f32 to vector<64x32xf32>
    %19 = arith.addf %17, %18 : vector<64x32xf32>
    %20 = math.rsqrt %19 : vector<64x32xf32>
    %21 = arith.mulf %12, %20 : vector<64x32xf32>
    %c0_19 = arith.constant 0 : index
    %c0_20 = arith.constant 0 : index
    %22 = vector.load %arg7[%c0_19, %c0_20] : memref<1x32xf32, #tpu.memory_space<vmem>>, vector<1x32xf32>
    %23 = vector.broadcast %22 : vector<1x32xf32> to vector<64x32xf32>
    %24 = arith.mulf %21, %23 : vector<64x32xf32>
    %c0_21 = arith.constant 0 : index
    %c0_22 = arith.constant 0 : index
    %25 = vector.load %arg8[%c0_21, %c0_22] : memref<1x32xf32, #tpu.memory_space<vmem>>, vector<1x32xf32>
    %26 = vector.broadcast %25 : vector<1x32xf32> to vector<64x32xf32>
    %27 = arith.addf %24, %26 : vector<64x32xf32>
    %cst_23 = arith.constant 5.000000e-01 : f32
    %28 = vector.broadcast %cst_23 : f32 to vector<64x32xf32>
    %29 = arith.mulf %28, %27 : vector<64x32xf32>
    %cst_24 = arith.constant 4.471500e-02 : f32
    %30 = vector.broadcast %cst_24 : f32 to vector<64x32xf32>
    %31 = arith.mulf %30, %27 : vector<64x32xf32>
    %32 = arith.mulf %31, %27 : vector<64x32xf32>
    %33 = arith.mulf %32, %27 : vector<64x32xf32>
    %34 = arith.addf %27, %33 : vector<64x32xf32>
    %cst_25 = arith.constant 0.797884583 : f32
    %35 = vector.broadcast %cst_25 : f32 to vector<64x32xf32>
    %36 = arith.mulf %35, %34 : vector<64x32xf32>
    %37 = math.tanh %36 : vector<64x32xf32>
    %cst_26 = arith.constant 1.000000e+00 : f32
    %38 = vector.broadcast %cst_26 : f32 to vector<64x32xf32>
    %39 = arith.addf %38, %37 : vector<64x32xf32>
    %40 = arith.mulf %29, %39 : vector<64x32xf32>
    %41 = arith.truncf %40 : vector<64x32xf32> to vector<64x32xbf16>
    %c0_27 = arith.constant 0 : index
    %c0_28 = arith.constant 0 : index
    %42 = vector.load %arg9[%c0_27, %c0_28] : memref<32x64xbf16, #tpu.memory_space<vmem>>, vector<32x64xbf16>
    %cst_29 = arith.constant dense<0.000000e+00> : vector<64x64xf32>
    %43 = tpu.matmul %41, %42, %cst_29 {dimension_numbers = #tpu.dot_dimension_numbers<[1], [0], [0], [1], [0, 0, 1, 1], [], []>} : vector<64x32xbf16>, vector<32x64xbf16>, vector<64x64xf32> -> vector<64x64xf32>
    %c0_30 = arith.constant 0 : index
    %c0_31 = arith.constant 0 : index
    %44 = vector.load %arg10[%c0_30, %c0_31] : memref<1x64xf32, #tpu.memory_space<vmem>>, vector<1x64xf32>
    %45 = vector.broadcast %44 : vector<1x64xf32> to vector<64x64xf32>
    %46 = arith.addf %43, %45 : vector<64x64xf32>
    %cst_32 = arith.constant 5.000000e-01 : f32
    %47 = vector.broadcast %cst_32 : f32 to vector<64x64xf32>
    %48 = arith.mulf %47, %46 : vector<64x64xf32>
    %cst_33 = arith.constant 4.471500e-02 : f32
    %49 = vector.broadcast %cst_33 : f32 to vector<64x64xf32>
    %50 = arith.mulf %49, %46 : vector<64x64xf32>
    %51 = arith.mulf %50, %46 : vector<64x64xf32>
    %52 = arith.mulf %51, %46 : vector<64x64xf32>
    %53 = arith.addf %46, %52 : vector<64x64xf32>
    %cst_34 = arith.constant 0.797884583 : f32
    %54 = vector.broadcast %cst_34 : f32 to vector<64x64xf32>
    %55 = arith.mulf %54, %53 : vector<64x64xf32>
    %56 = math.tanh %55 : vector<64x64xf32>
    %cst_35 = arith.constant 1.000000e+00 : f32
    %57 = vector.broadcast %cst_35 : f32 to vector<64x64xf32>
    %58 = arith.addf %57, %56 : vector<64x64xf32>
    %59 = arith.mulf %48, %58 : vector<64x64xf32>
    %60 = arith.truncf %59 : vector<64x64xf32> to vector<64x64xbf16>
    %c0_36 = arith.constant 0 : index
    %c0_37 = arith.constant 0 : index
    %c0_38 = arith.constant 0 : index
    %61 = vector.load %arg11[%c0_36, %c0_37, %c0_38] : memref<1x64x64xbf16, #tpu.memory_space<vmem>>, vector<1x64x64xbf16>
    %62 = vector.shape_cast %61 : vector<1x64x64xbf16> to vector<64x64xbf16>
    %63 = vector.shape_cast %60 : vector<64x64xbf16> to vector<1x64x64xbf16>
    tpu.vector_store %arg11[%c0_36, %c0_37, %c0_38], %63 {strides = array<i32>} : memref<1x64x64xbf16, #tpu.memory_space<vmem>>, vector<1x64x64xbf16>,
    return
  }
  func.func @transform_0(%arg0: i32, %arg1: i32) -> (i32, i32, i32) {
    %c0_i32 = arith.constant 0 : i32
    %c0_i32_0 = arith.constant 0 : i32
    return %arg0, %c0_i32, %arg1 : i32, i32, i32
  }
  func.func @transform_1(%arg0: i32, %arg1: i32) -> (i32, i32) {
    %c0_i32 = arith.constant 0 : i32
    %c0_i32_0 = arith.constant 0 : i32
    %c0_i32_1 = arith.constant 0 : i32
    return %c0_i32, %c0_i32_0 : i32, i32
  }
  func.func @transform_2(%arg0: i32, %arg1: i32) -> (i32, i32) {
    %c0_i32 = arith.constant 0 : i32
    %c0_i32_0 = arith.constant 0 : i32
    %c0_i32_1 = arith.constant 0 : i32
    return %c0_i32, %c0_i32_0 : i32, i32
  }
  func.func @transform_3(%arg0: i32, %arg1: i32) -> (i32, i32) {
    %c0_i32 = arith.constant 0 : i32
    %c0_i32_0 = arith.constant 0 : i32
    %c0_i32_1 = arith.constant 0 : i32
    return %c0_i32, %c0_i32_0 : i32, i32
  }
  func.func @transform_4(%arg0: i32, %arg1: i32) -> (i32, i32) {
    %c0_i32 = arith.constant 0 : i32
    %c0_i32_0 = arith.constant 0 : i32
    %c0_i32_1 = arith.constant 0 : i32
    return %c0_i32, %c0_i32_0 : i32, i32
  }
  func.func @transform_5(%arg0: i32, %arg1: i32) -> (i32, i32) {
    %c0_i32 = arith.constant 0 : i32
    %c0_i32_0 = arith.constant 0 : i32
    %c0_i32_1 = arith.constant 0 : i32
    return %c0_i32, %c0_i32_0 : i32, i32
  }
  func.func @transform_6(%arg0: i32, %arg1: i32) -> (i32, i32) {
    %c0_i32 = arith.constant 0 : i32
    %c0_i32_0 = arith.constant 0 : i32
    %c0_i32_1 = arith.constant 0 : i32
    return %c0_i32, %c0_i32_0 : i32, i32
  }
  func.func @transform_7(%arg0: i32, %arg1: i32) -> (i32, i32) {
    %c0_i32 = arith.constant 0 : i32
    %c0_i32_0 = arith.constant 0 : i32
    %c0_i32_1 = arith.constant 0 : i32
    return %c0_i32, %c0_i32_0 : i32, i32
  }
  func.func @transform_8(%arg0: i32, %arg1: i32) -> (i32, i32) {
    %c0_i32 = arith.constant 0 : i32
    %c0_i32_0 = arith.constant 0 : i32
    %c0_i32_1 = arith.constant 0 : i32
    return %c0_i32, %c0_i32_0 : i32, i32
  }
  func.func @transform_9(%arg0: i32, %arg1: i32) -> (i32, i32, i32) {
    %c0_i32 = arith.constant 0 : i32
    %c0_i32_0 = arith.constant 0 : i32
    return %arg0, %arg1, %c0_i32 : i32, i32, i32
  }
}

module attributes {stable_mosaic.version = 11 : i64} {
  func.func @_mlp3_kernel(%arg0: i32, %arg1: memref<1x2x32xf32, #tpu.memory_space<vmem>>, %arg2: memref<1x32x256xbf16, #tpu.memory_space<vmem>>, %arg3: memref<1x1x256xf32, #tpu.memory_space<vmem>>, %arg4: memref<1x256x256xbf16, #tpu.memory_space<vmem>>, %arg5: memref<1x1x256xf32, #tpu.memory_space<vmem>>, %arg6: memref<1x256x4xbf16, #tpu.memory_space<vmem>>, %arg7: memref<1x1x4xf32, #tpu.memory_space<vmem>>, %arg8: memref<1x2x4xf32, #tpu.memory_space<vmem>>) attributes {dimension_semantics = [#tpu.dimension_semantics<parallel>], iteration_bounds = array<i64: 5>, scalar_prefetch = 0 : i64, scratch_operands = 0 : i64, tpu.core_type = #tpu.core_type<tc>, window_params = [{transform_indices = @transform_0, window_bounds = array<i64: 1, 2, 32>}, {transform_indices = @transform_1, window_bounds = array<i64: 1, 32, 256>}, {transform_indices = @transform_2, window_bounds = array<i64: 1, 1, 256>}, {transform_indices = @transform_3, window_bounds = array<i64: 1, 256, 256>}, {transform_indices = @transform_4, window_bounds = array<i64: 1, 1, 256>}, {transform_indices = @transform_5, window_bounds = array<i64: 1, 256, 4>}, {transform_indices = @transform_6, window_bounds = array<i64: 1, 1, 4>}, {transform_indices = @transform_7, window_bounds = array<i64: 1, 2, 4>}]} {
    %c0 = arith.constant 0 : index
    %c0_0 = arith.constant 0 : index
    %c0_1 = arith.constant 0 : index
    %0 = vector.load %arg1[%c0, %c0_0, %c0_1] : memref<1x2x32xf32, #tpu.memory_space<vmem>>, vector<1x2x32xf32>
    %1 = vector.shape_cast %0 : vector<1x2x32xf32> to vector<2x32xf32>
    %2 = arith.truncf %1 : vector<2x32xf32> to vector<2x32xbf16>
    %c0_2 = arith.constant 0 : index
    %c0_3 = arith.constant 0 : index
    %c0_4 = arith.constant 0 : index
    %3 = vector.load %arg2[%c0_2, %c0_3, %c0_4] : memref<1x32x256xbf16, #tpu.memory_space<vmem>>, vector<1x32x256xbf16>
    %4 = vector.shape_cast %3 : vector<1x32x256xbf16> to vector<32x256xbf16>
    %cst = arith.constant dense<0.000000e+00> : vector<2x256xf32>
    %5 = tpu.matmul %2, %4, %cst {dimension_numbers = #tpu.dot_dimension_numbers<[1], [0], [0], [1], [0, 0, 1, 1], [], []>} : vector<2x32xbf16>, vector<32x256xbf16>, vector<2x256xf32> -> vector<2x256xf32>
    %c0_5 = arith.constant 0 : index
    %c0_6 = arith.constant 0 : index
    %c0_7 = arith.constant 0 : index
    %6 = vector.load %arg3[%c0_5, %c0_6, %c0_7] : memref<1x1x256xf32, #tpu.memory_space<vmem>>, vector<1x1x256xf32>
    %7 = vector.shape_cast %6 : vector<1x1x256xf32> to vector<1x256xf32>
    %8 = vector.broadcast %7 : vector<1x256xf32> to vector<2x256xf32>
    %9 = arith.addf %5, %8 : vector<2x256xf32>
    %cst_8 = arith.constant 0.000000e+00 : f32
    %10 = vector.broadcast %cst_8 : f32 to vector<2x256xf32>
    %11 = arith.maximumf %9, %10 : vector<2x256xf32>
    %12 = arith.truncf %11 : vector<2x256xf32> to vector<2x256xbf16>
    %c0_9 = arith.constant 0 : index
    %c0_10 = arith.constant 0 : index
    %c0_11 = arith.constant 0 : index
    %13 = vector.load %arg4[%c0_9, %c0_10, %c0_11] : memref<1x256x256xbf16, #tpu.memory_space<vmem>>, vector<1x256x256xbf16>
    %14 = vector.shape_cast %13 : vector<1x256x256xbf16> to vector<256x256xbf16>
    %cst_12 = arith.constant dense<0.000000e+00> : vector<2x256xf32>
    %15 = tpu.matmul %12, %14, %cst_12 {dimension_numbers = #tpu.dot_dimension_numbers<[1], [0], [0], [1], [0, 0, 1, 1], [], []>} : vector<2x256xbf16>, vector<256x256xbf16>, vector<2x256xf32> -> vector<2x256xf32>
    %c0_13 = arith.constant 0 : index
    %c0_14 = arith.constant 0 : index
    %c0_15 = arith.constant 0 : index
    %16 = vector.load %arg5[%c0_13, %c0_14, %c0_15] : memref<1x1x256xf32, #tpu.memory_space<vmem>>, vector<1x1x256xf32>
    %17 = vector.shape_cast %16 : vector<1x1x256xf32> to vector<1x256xf32>
    %18 = vector.broadcast %17 : vector<1x256xf32> to vector<2x256xf32>
    %19 = arith.addf %15, %18 : vector<2x256xf32>
    %cst_16 = arith.constant 0.000000e+00 : f32
    %20 = vector.broadcast %cst_16 : f32 to vector<2x256xf32>
    %21 = arith.maximumf %19, %20 : vector<2x256xf32>
    %22 = arith.truncf %21 : vector<2x256xf32> to vector<2x256xbf16>
    %c0_17 = arith.constant 0 : index
    %c0_18 = arith.constant 0 : index
    %c0_19 = arith.constant 0 : index
    %23 = vector.load %arg6[%c0_17, %c0_18, %c0_19] : memref<1x256x4xbf16, #tpu.memory_space<vmem>>, vector<1x256x4xbf16>
    %24 = vector.shape_cast %23 : vector<1x256x4xbf16> to vector<256x4xbf16>
    %cst_20 = arith.constant dense<0.000000e+00> : vector<2x4xf32>
    %25 = tpu.matmul %22, %24, %cst_20 {dimension_numbers = #tpu.dot_dimension_numbers<[1], [0], [0], [1], [0, 0, 1, 1], [], []>} : vector<2x256xbf16>, vector<256x4xbf16>, vector<2x4xf32> -> vector<2x4xf32>
    %c0_21 = arith.constant 0 : index
    %c0_22 = arith.constant 0 : index
    %c0_23 = arith.constant 0 : index
    %26 = vector.load %arg7[%c0_21, %c0_22, %c0_23] : memref<1x1x4xf32, #tpu.memory_space<vmem>>, vector<1x1x4xf32>
    %27 = vector.shape_cast %26 : vector<1x1x4xf32> to vector<1x4xf32>
    %28 = vector.broadcast %27 : vector<1x4xf32> to vector<2x4xf32>
    %29 = arith.addf %25, %28 : vector<2x4xf32>
    %c0_24 = arith.constant 0 : index
    %c0_25 = arith.constant 0 : index
    %c0_26 = arith.constant 0 : index
    %30 = vector.load %arg8[%c0_24, %c0_25, %c0_26] : memref<1x2x4xf32, #tpu.memory_space<vmem>>, vector<1x2x4xf32>
    %31 = vector.shape_cast %30 : vector<1x2x4xf32> to vector<2x4xf32>
    %32 = vector.shape_cast %29 : vector<2x4xf32> to vector<1x2x4xf32>
    tpu.vector_store %arg8[%c0_24, %c0_25, %c0_26], %32 {strides = array<i32>} : memref<1x2x4xf32, #tpu.memory_space<vmem>>, vector<1x2x4xf32>,
    return
  }
  func.func @transform_0(%arg0: i32) -> (i32, i32, i32) {
    %c0_i32 = arith.constant 0 : i32
    %c0_i32_0 = arith.constant 0 : i32
    %c0_i32_1 = arith.constant 0 : i32
    return %arg0, %c0_i32, %c0_i32_0 : i32, i32, i32
  }
  func.func @transform_1(%arg0: i32) -> (i32, i32, i32) {
    %c0_i32 = arith.constant 0 : i32
    %c0_i32_0 = arith.constant 0 : i32
    %c0_i32_1 = arith.constant 0 : i32
    return %arg0, %c0_i32, %c0_i32_0 : i32, i32, i32
  }
  func.func @transform_2(%arg0: i32) -> (i32, i32, i32) {
    %c0_i32 = arith.constant 0 : i32
    %c0_i32_0 = arith.constant 0 : i32
    %c0_i32_1 = arith.constant 0 : i32
    return %arg0, %c0_i32, %c0_i32_0 : i32, i32, i32
  }
  func.func @transform_3(%arg0: i32) -> (i32, i32, i32) {
    %c0_i32 = arith.constant 0 : i32
    %c0_i32_0 = arith.constant 0 : i32
    %c0_i32_1 = arith.constant 0 : i32
    return %arg0, %c0_i32, %c0_i32_0 : i32, i32, i32
  }
  func.func @transform_4(%arg0: i32) -> (i32, i32, i32) {
    %c0_i32 = arith.constant 0 : i32
    %c0_i32_0 = arith.constant 0 : i32
    %c0_i32_1 = arith.constant 0 : i32
    return %arg0, %c0_i32, %c0_i32_0 : i32, i32, i32
  }
  func.func @transform_5(%arg0: i32) -> (i32, i32, i32) {
    %c0_i32 = arith.constant 0 : i32
    %c0_i32_0 = arith.constant 0 : i32
    %c0_i32_1 = arith.constant 0 : i32
    return %arg0, %c0_i32, %c0_i32_0 : i32, i32, i32
  }
  func.func @transform_6(%arg0: i32) -> (i32, i32, i32) {
    %c0_i32 = arith.constant 0 : i32
    %c0_i32_0 = arith.constant 0 : i32
    %c0_i32_1 = arith.constant 0 : i32
    return %arg0, %c0_i32, %c0_i32_0 : i32, i32, i32
  }
  func.func @transform_7(%arg0: i32) -> (i32, i32, i32) {
    %c0_i32 = arith.constant 0 : i32
    %c0_i32_0 = arith.constant 0 : i32
    %c0_i32_1 = arith.constant 0 : i32
    return %arg0, %c0_i32, %c0_i32_0 : i32, i32, i32
  }
}

module attributes {stable_mosaic.version = 11 : i64} {
  func.func @_mask_mm_kernel(%arg0: i32, %arg1: i32, %arg2: memref<1x4x4xbf16, #tpu.memory_space<vmem>>, %arg3: memref<1x1024x4xbf16, #tpu.memory_space<vmem>>, %arg4: memref<1x4x1024xf32, #tpu.memory_space<vmem>>) attributes {dimension_semantics = [#tpu.dimension_semantics<parallel>, #tpu.dimension_semantics<parallel>], iteration_bounds = array<i64: 2, 1>, scalar_prefetch = 0 : i64, scratch_operands = 0 : i64, tpu.core_type = #tpu.core_type<tc>, window_params = [{transform_indices = @transform_0, window_bounds = array<i64: 1, 4, 4>}, {transform_indices = @transform_1, window_bounds = array<i64: 1, 1024, 4>}, {transform_indices = @transform_2, window_bounds = array<i64: 1, 4, 1024>}]} {
    %c0 = arith.constant 0 : index
    %c0_0 = arith.constant 0 : index
    %c0_1 = arith.constant 0 : index
    %0 = vector.load %arg2[%c0, %c0_0, %c0_1] : memref<1x4x4xbf16, #tpu.memory_space<vmem>>, vector<1x4x4xbf16>
    %1 = vector.shape_cast %0 : vector<1x4x4xbf16> to vector<4x4xbf16>
    %c0_2 = arith.constant 0 : index
    %c0_3 = arith.constant 0 : index
    %c0_4 = arith.constant 0 : index
    %2 = vector.load %arg3[%c0_2, %c0_3, %c0_4] : memref<1x1024x4xbf16, #tpu.memory_space<vmem>>, vector<1x1024x4xbf16>
    %3 = vector.shape_cast %2 : vector<1x1024x4xbf16> to vector<1024x4xbf16>
    %cst = arith.constant dense<0.000000e+00> : vector<4x1024xf32>
    %4 = tpu.matmul %1, %3, %cst {dimension_numbers = #tpu.dot_dimension_numbers<[1], [1], [0], [0], [0, 0, 1, 0], [], []>} : vector<4x4xbf16>, vector<1024x4xbf16>, vector<4x1024xf32> -> vector<4x1024xf32>
    %c0_5 = arith.constant 0 : index
    %c0_6 = arith.constant 0 : index
    %c0_7 = arith.constant 0 : index
    %5 = vector.load %arg4[%c0_5, %c0_6, %c0_7] : memref<1x4x1024xf32, #tpu.memory_space<vmem>>, vector<1x4x1024xf32>
    %6 = vector.shape_cast %5 : vector<1x4x1024xf32> to vector<4x1024xf32>
    %7 = vector.shape_cast %4 : vector<4x1024xf32> to vector<1x4x1024xf32>
    tpu.vector_store %arg4[%c0_5, %c0_6, %c0_7], %7 {strides = array<i32>} : memref<1x4x1024xf32, #tpu.memory_space<vmem>>, vector<1x4x1024xf32>,
    return
  }
  func.func @transform_0(%arg0: i32, %arg1: i32) -> (i32, i32, i32) {
    %c0_i32 = arith.constant 0 : i32
    %c0_i32_0 = arith.constant 0 : i32
    %c0_i32_1 = arith.constant 0 : i32
    return %arg0, %c0_i32, %c0_i32_0 : i32, i32, i32
  }
  func.func @transform_1(%arg0: i32, %arg1: i32) -> (i32, i32, i32) {
    %c0_i32 = arith.constant 0 : i32
    %c0_i32_0 = arith.constant 0 : i32
    return %arg0, %arg1, %c0_i32 : i32, i32, i32
  }
  func.func @transform_2(%arg0: i32, %arg1: i32) -> (i32, i32, i32) {
    %c0_i32 = arith.constant 0 : i32
    %c0_i32_0 = arith.constant 0 : i32
    return %arg0, %c0_i32, %arg1 : i32, i32, i32
  }
}

</mosaic_0001>

<llo_original>
// kernel: tile.23
$region0: #{tile.23}
  #allocation0 [shape = 's32[1]{0}', space=sflag, size = 0x4, scoped, tag = 'scoped memory for tile.23']
  %s0 = inlined_call_operand.vmem [shape: f32[8], index: 0, kind: input, shape index: {}]
  %s1 = inlined_call_operand.vmem [shape: f32[4,8], index: 1, kind: output, shape index: {}]
  // Predicated region
  $region2: #{tile.23} parent=0 // pred_check
    _
  $region3: #{tile.23} parent=0 // pred_check_branch
    %3 = sbr.rel (0) target = $region5
  $region4: #{tile.23} parent=0 // pred_region
    _
  $region5: #{tile.23} parent=0 // pred_fallthru
    _
  %v4 = vld [vmem:[%s0] ss:$0 sm:$0xff]
  %5 = vst [vmem:[%s1] sm:$0xf] %v4

// kernel: tile.24
$region0: #{tile.24}
  %s0 = inlined_call_operand.vmem [shape: f32[4,8], index: 0, kind: input, shape index: {}]
  %s1 = inlined_call_operand.vmem [shape: f32[1,32], index: 1, kind: output, shape index: {}]
  $region1: #{tile.24} parent=0
    #allocation0 [shape = 'u8[4096]{0}', space=vmem, size = 0x1000, scoped, tag = 'scoped mem for output reshape']
    #allocation1 [shape = 'u8[4096]{0}', space=vmem, size = 0x1000, scoped, tag = 'scoped mem for input reshape']
    %s3 = sshll.u32 1, 4
    %s4 = ssub.s32 %s3, 1
    %v5 = vld [vmem:[%s0] sm:%s4]
    %6 = vst [vmem:[#allocation1] sm:%s4] %v5
    %v7 = vld [vmem:[#allocation1] sm:$0x1]
    %vm8 = vcmask 64512
    %9 = vst.msk [vmem:[#allocation0] sm:$0x1] %vm8, %v7
    %s10 = scalar_lea.vmem [#allocation1], 3
    %v11 = vld [vmem:[%s10] sm:$0x1]
    %12 = vrot.lane.b32.xlu0 %v11, 24
    %v13 = vpop.permute.xlu0 %12
    %vm14 = vcmask 261312
    %15 = vst.msk [vmem:[#allocation0] sm:$0x1] %vm14, %v13
    %s16 = scalar_lea.vmem [#allocation1], 2
    %v17 = vld [vmem:[%s16] sm:$0x1]
    %18 = vrot.lane.b32.xlu0 %v17, 16
    %v19 = vpop.permute.xlu0 %18
    %vm20 = vcmask 195712
    %21 = vst.msk [vmem:[#allocation0] sm:$0x1] %vm20, %v19
    %s22 = scalar_lea.vmem [#allocation1], 1
    %v23 = vld [vmem:[%s22] sm:$0x1]
    %24 = vrot.lane.b32.xlu0 %v23, 8
    %v25 = vpop.permute.xlu0 %24
    %vm26 = vcmask 130112
    %27 = vst.msk [vmem:[#allocation0] sm:$0x1] %vm26, %v25
    %s29 = sshll.u32 1, 1
    %s30 = ssub.s32 %s29, 1
    %v32 = vld [vmem:[#allocation0] sm:%s30]
    %s33 = sshll.u32 1, 1
    %s34 = ssub.s32 %s33, 1
    %35 = vst [vmem:[%s1] sm:%s34] %v32

// kernel: tile.38
$region0: #{tile.38}
  #allocation0 [shape = 's32[1]{0}', space=sflag, size = 0x4, scoped, tag = 'scoped memory for tile.38']
  %s0 = inlined_call_operand.vmem [shape: f32[4], index: 0, kind: input, shape index: {}]
  %s1 = inlined_call_operand.vmem [shape: f32[16,4], index: 1, kind: output, shape index: {}]
  // Predicated region
  $region2: #{tile.38} parent=0 // pred_check
    _
  $region3: #{tile.38} parent=0 // pred_check_branch
    %3 = sbr.rel (0) target = $region5
  $region4: #{tile.38} parent=0 // pred_region
    _
  $region5: #{tile.38} parent=0 // pred_fallthru
    _
  %v4 = vld [vmem:[%s0] ss:$0 sm:$0xff]
  %5 = vst [vmem:[%s1] sm:$0xff] %v4
  %s6 = scalar_lea.vmem %s1, 8
  %7 = vst [vmem:[%s6] sm:$0xff] %v4

// kernel: tile.39
$region0: #{tile.39}
  %s0 = inlined_call_operand.vmem [shape: f32[16,4], index: 0, kind: input, shape index: {}]
  %s1 = inlined_call_operand.vmem [shape: f32[1,64], index: 1, kind: output, shape index: {}]
  $region1: #{tile.39} parent=0
    #allocation0 [shape = 'u8[4096]{0}', space=vmem, size = 0x1000, scoped, tag = 'scoped mem for output reshape']
    %v2 = vld [vmem:[%s0] sm:$0x1]
    %vm3 = vcmask 31744
    %4 = vst.msk [vmem:[#allocation0] sm:$0x1] %vm3, %v2
    %s5 = scalar_lea.vmem %s0, 15
    %v6 = vld [vmem:[%s5] sm:$0x1]
    %7 = vrot.lane.b32.xlu0 %v6, 60
    %v8 = vpop.permute.xlu0 %7
    %vm9 = vcmask 523744
    %10 = vst.msk [vmem:[#allocation0] sm:$0x1] %vm9, %v8
    %s11 = scalar_lea.vmem %s0, 14
    %v12 = vld [vmem:[%s11] sm:$0x1]
    %13 = vrot.lane.b32.xlu0 %v12, 56
    %v14 = vpop.permute.xlu0 %13
    %vm15 = vcmask 490944
    %16 = vst.msk [vmem:[#allocation0] sm:$0x1] %vm15, %v14
    %s17 = scalar_lea.vmem %s0, 13
    %v18 = vld [vmem:[%s17] sm:$0x1]
    %19 = vrot.lane.b32.xlu0 %v18, 52
    %v20 = vpop.permute.xlu0 %19
    %vm21 = vcmask 458144
    %22 = vst.msk [vmem:[#allocation0] sm:$0x1] %vm21, %v20
    %s23 = scalar_lea.vmem %s0, 12
    %v24 = vld [vmem:[%s23] sm:$0x1]
    %25 = vrot.lane.b32.xlu0 %v24, 48
    %v26 = vpop.permute.xlu0 %25
    %vm27 = vcmask 425344
    %28 = vst.msk [vmem:[#allocation0] sm:$0x1] %vm27, %v26
    %s29 = scalar_lea.vmem %s0, 11
    %v30 = vld [vmem:[%s29] sm:$0x1]
    %31 = vrot.lane.b32.xlu0 %v30, 44
    %v32 = vpop.permute.xlu0 %31
    %vm33 = vcmask 392544
    %34 = vst.msk [vmem:[#allocation0] sm:$0x1] %vm33, %v32
    %s35 = scalar_lea.vmem %s0, 10
    %v36 = vld [vmem:[%s35] sm:$0x1]
    %37 = vrot.lane.b32.xlu0 %v36, 40
    %v38 = vpop.permute.xlu0 %37
    %vm39 = vcmask 359744
    %40 = vst.msk [vmem:[#allocation0] sm:$0x1] %vm39, %v38
    %s41 = scalar_lea.vmem %s0, 9
    %v42 = vld [vmem:[%s41] sm:$0x1]
    %43 = vrot.lane.b32.xlu0 %v42, 36
    %v44 = vpop.permute.xlu0 %43
    %vm45 = vcmask 326944
    %46 = vst.msk [vmem:[#allocation0] sm:$0x1] %vm45, %v44
    %s47 = scalar_lea.vmem %s0, 8
    %v48 = vld [vmem:[%s47] sm:$0x1]
    %49 = vrot.lane.b32.xlu0 %v48, 32
    %v50 = vpop.permute.xlu0 %49
    %vm51 = vcmask 294144
    %52 = vst.msk [vmem:[#allocation0] sm:$0x1] %vm51, %v50
    %s53 = scalar_lea.vmem %s0, 7
    %v54 = vld [vmem:[%s53] sm:$0x1]
    %55 = vrot.lane.b32.xlu0 %v54, 28
    %v56 = vpop.permute.xlu0 %55
    %vm57 = vcmask 261344
    %58 = vst.msk [vmem:[#allocation0] sm:$0x1] %vm57, %v56
    %s59 = scalar_lea.vmem %s0, 6
    %v60 = vld [vmem:[%s59] sm:$0x1]
    %61 = vrot.lane.b32.xlu0 %v60, 24
    %v62 = vpop.permute.xlu0 %61
    %vm63 = vcmask 228544
    %64 = vst.msk [vmem:[#allocation0] sm:$0x1] %vm63, %v62
    %s65 = scalar_lea.vmem %s0, 5
    %v66 = vld [vmem:[%s65] sm:$0x1]
    %67 = vrot.lane.b32.xlu0 %v66, 20
    %v68 = vpop.permute.xlu0 %67
    %vm69 = vcmask 195744
    %70 = vst.msk [vmem:[#allocation0] sm:$0x1] %vm69, %v68
    %s71 = scalar_lea.vmem %s0, 4
    %v72 = vld [vmem:[%s71] sm:$0x1]
    %73 = vrot.lane.b32.xlu0 %v72, 16
    %v74 = vpop.permute.xlu0 %73
    %vm75 = vcmask 162944
    %76 = vst.msk [vmem:[#allocation0] sm:$0x1] %vm75, %v74
    %s77 = scalar_lea.vmem %s0, 3
    %v78 = vld [vmem:[%s77] sm:$0x1]
    %79 = vrot.lane.b32.xlu0 %v78, 12
    %v80 = vpop.permute.xlu0 %79
    %vm81 = vcmask 130144
    %82 = vst.msk [vmem:[#allocation0] sm:$0x1] %vm81, %v80
    %s83 = scalar_lea.vmem %s0, 2
    %v84 = vld [vmem:[%s83] sm:$0x1]
    %85 = vrot.lane.b32.xlu0 %v84, 8
    %v86 = vpop.permute.xlu0 %85
    %vm87 = vcmask 97344
    %88 = vst.msk [vmem:[#allocation0] sm:$0x1] %vm87, %v86
    %s89 = scalar_lea.vmem %s0, 1
    %v90 = vld [vmem:[%s89] sm:$0x1]
    %91 = vrot.lane.b32.xlu0 %v90, 4
    %v92 = vpop.permute.xlu0 %91
    %vm93 = vcmask 64544
    %94 = vst.msk [vmem:[#allocation0] sm:$0x1] %vm93, %v92
    %s96 = sshll.u32 1, 1
    %s97 = ssub.s32 %s96, 1
    %v99 = vld [vmem:[#allocation0] sm:%s97]
    %s100 = sshll.u32 1, 1
    %s101 = ssub.s32 %s100, 1
    %102 = vst [vmem:[%s1] sm:%s101] %v99

// kernel: mask_decoder_forward.6
$region0: #{mask_decoder_forward.6}
  #allocation0 [shape = 'u32[]', space=smem, size = 0x4, offset = 0x4, fixed_abs, tag = 'smem constant byte address 0x4 - core index']
  #allocation1 [shape = 'u32[144,128]{1,0:T(1,128)}', space=vmem, size = 0x12000, scoped, tag = 'internal scratch']
  %s0 = inlined_call_operand.vmem [shape: f32[2,16,32], index: 0, kind: input, shape index: {}]
  %s1 = inlined_call_operand.vmem [shape: bf16[2,32,64], index: 1, kind: input, shape index: {}]
  %s2 = inlined_call_operand.vmem [shape: bf16[4,32,32], index: 2, kind: input, shape index: {}]
  %s3 = inlined_call_operand.vmem [shape: f32[2,16,32], index: 3, kind: output, shape index: {}]
  %s4 = sld [smem:[#allocation0]]
  $region45: #{mask_decoder_forward.6} parent=0
    _
  %s6 = ssub.s32 1, %s4
  %s7 = scalar_select 0, %s6, %s4
  loop: start=0, step=1, limit=4
  $region2: #{mask_decoder_forward.6} parent=0 // loop_pre_header
    _
  $region3: #{mask_decoder_forward.6} parent=0 // loop_header
    %s9 = sphi 0, %s13
    %p10 = scmp.ge.s32.totalorder %s9, 4
    %s19 = sphi 0, %s21
    %s22 = sphi 0, %s19
    %s23 = sphi 0, %s22
    %s39 = sphi 0, %s23
    %s45 = sphi 0, %s47
    %s48 = sphi 0, %s45
    %s49 = sphi 0, %s48
    %s65 = sphi 0, %s49
    %s69 = sphi 0, %s69
    %s71 = sphi 0, %s69
    %s72 = sphi 0, %s71
    %s86 = sphi 0, %s72
    %s92 = sphi 0, %s94
    %s95 = sphi 0, %s92
    %s96 = sphi 0, %s95
    %s112 = sphi 0, %s96
  $region4: #{mask_decoder_forward.6} parent=0 // loop_header_branch
    %12 = sbr.rel (%p10) target = $region8
  $region5: #{mask_decoder_forward.6} parent=0 // loop_body
    %s14 = ssub.s32 %s9, 1
    %s15 = ssub.s32 %s9, 2
    %s16 = sadd.s32 %s9, 1
    %s17 = ssub.s32 %s9, %s16
    %p18 = scmp.eq.s32.totalorder %s17, 0
    %s20 = sadd.s32 %s19, 1
    %s21 = scalar_select %p18, %s19, %s20
    %p24 = pneg %p18
    %p25 = scmp.eq.s32.totalorder %s9, 1
    %p26 = por %p24, %p25
    %p27 = scmp.ne.s32.totalorder %s19, %s22
    %p28 = scmp.eq.s32.totalorder %s9, 0
    %p29 = por %p27, %p28
    %p30 = scmp.ne.s32.totalorder %s19, %s22
    %p31 = scmp.eq.s32.totalorder %s14, 1
    %p32 = por %p30, %p31
    %p33 = scmp.ne.s32.totalorder %s22, %s23
    %p34 = scmp.eq.s32.totalorder %s14, 0
    %p35 = por %p33, %p34
    %p36 = scmp.ne.s32.totalorder %s22, %s23
    %p37 = scmp.eq.s32.totalorder %s15, 1
    %p38 = por %p36, %p37
    %p40 = scmp.ne.s32.totalorder %s23, %s39
    %p41 = scmp.eq.s32.totalorder %s15, 0
    %p42 = por %p40, %p41
    %s43 = ssub.s32 %s9, %s16
    %p44 = scmp.eq.s32.totalorder %s43, 0
    %s46 = sadd.s32 %s45, 1
    %s47 = scalar_select %p44, %s45, %s46
    %p50 = pneg %p44
    %p51 = scmp.eq.s32.totalorder %s9, 1
    %p52 = por %p50, %p51
    %p53 = scmp.ne.s32.totalorder %s45, %s48
    %p54 = scmp.eq.s32.totalorder %s9, 0
    %p55 = por %p53, %p54
    %p56 = scmp.ne.s32.totalorder %s45, %s48
    %p57 = scmp.eq.s32.totalorder %s14, 1
    %p58 = por %p56, %p57
    %p59 = scmp.ne.s32.totalorder %s48, %s49
    %p60 = scmp.eq.s32.totalorder %s14, 0
    %p61 = por %p59, %p60
    %p62 = scmp.ne.s32.totalorder %s48, %s49
    %p63 = scmp.eq.s32.totalorder %s15, 1
    %p64 = por %p62, %p63
    %p66 = scmp.ne.s32.totalorder %s49, %s65
    %p67 = scmp.eq.s32.totalorder %s15, 0
    %p68 = por %p66, %p67
    %s70 = sadd.s32 %s69, 1
    %p73 = scmp.eq.s32.totalorder %s9, 1
    %p74 = scmp.ne.s32.totalorder %s69, %s71
    %p75 = scmp.eq.s32.totalorder %s9, 0
    %p76 = por %p74, %p75
    %p77 = scmp.ne.s32.totalorder %s69, %s71
    %p78 = scmp.eq.s32.totalorder %s14, 1
    %p79 = por %p77, %p78
    %p80 = scmp.ne.s32.totalorder %s71, %s72
    %p81 = scmp.eq.s32.totalorder %s14, 0
    %p82 = por %p80, %p81
    %p83 = scmp.ne.s32.totalorder %s71, %s72
    %p84 = scmp.eq.s32.totalorder %s15, 1
    %p85 = por %p83, %p84
    %p87 = scmp.ne.s32.totalorder %s72, %s86
    %p88 = scmp.eq.s32.totalorder %s15, 0
    %p89 = por %p87, %p88
    %s90 = ssub.s32 %s9, %s16
    %p91 = scmp.eq.s32.totalorder %s90, 0
    %s93 = sadd.s32 %s92, 1
    %s94 = scalar_select %p91, %s92, %s93
    %p97 = pneg %p91
    %p98 = scmp.eq.s32.totalorder %s9, 1
    %p99 = por %p97, %p98
    %p100 = scmp.ne.s32.totalorder %s92, %s95
    %p101 = scmp.eq.s32.totalorder %s9, 0
    %p102 = por %p100, %p101
    %p103 = scmp.ne.s32.totalorder %s92, %s95
    %p104 = scmp.eq.s32.totalorder %s14, 1
    %p105 = por %p103, %p104
    %p106 = scmp.ne.s32.totalorder %s95, %s96
    %p107 = scmp.eq.s32.totalorder %s14, 0
    %p108 = por %p106, %p107
    %p109 = scmp.ne.s32.totalorder %s95, %s96
    %p110 = scmp.eq.s32.totalorder %s15, 1
    %p111 = por %p109, %p110
    %p113 = scmp.ne.s32.totalorder %s96, %s112
    %p114 = scmp.eq.s32.totalorder %s15, 0
    %p115 = por %p113, %p114
    %p116 = scmp.le.s32.totalorder 1, %s9
    %p117 = scmp.lt.s32.totalorder %s9, 3
    %p118 = pnand %p116, %p117
    %p119 = pneg %p118
    // Predicated region
    $region9: #{mask_decoder_forward.6} parent=5 // pred_check
      _
    $region10: #{mask_decoder_forward.6} parent=5 // pred_check_branch
      %121 = sbr.rel (%p118) target = $region12
    $region11: #{mask_decoder_forward.6} parent=5 // pred_region
      %s122 = ssub.s32 %s9, 1
      // Predicated region
      $region13: #{mask_decoder_forward.6} parent=11 // pred_check
        %p123 = pneg %p82
      $region14: #{mask_decoder_forward.6} parent=11 // pred_check_branch
        %125 = sbr.rel (%p123) target = $region16
      $region15: #{mask_decoder_forward.6} parent=11 // pred_region
        _
      $region16: #{mask_decoder_forward.6} parent=11 // pred_fallthru
        _
    $region12: #{mask_decoder_forward.6} parent=5 // pred_fallthru
      _
    %p126 = scmp.lt.s32.totalorder %s9, 2
    // Predicated region
    $region17: #{mask_decoder_forward.6} parent=5 // pred_check
      %p127 = pneg %p126
    $region18: #{mask_decoder_forward.6} parent=5 // pred_check_branch
      %129 = sbr.rel (%p127) target = $region20
    $region19: #{mask_decoder_forward.6} parent=5 // pred_region
      // Predicated region
      $region21: #{mask_decoder_forward.6} parent=19 // pred_check
        %p130 = pneg %p29
      $region22: #{mask_decoder_forward.6} parent=19 // pred_check_branch
        %132 = sbr.rel (%p130) target = $region24
      $region23: #{mask_decoder_forward.6} parent=19 // pred_region
        %p133 = scmp.lt.s32.totalorder %s9, 1
        %s134 = scalar_select %p133, %s9, 1
        %s135 = smul.addr %s134, 2
        %s136 = smul.addr %s135, 8
        %s137 = scalar_lea.vmem %s0, %s136
      $region24: #{mask_decoder_forward.6} parent=19 // pred_fallthru
        _
      // Predicated region
      $region25: #{mask_decoder_forward.6} parent=19 // pred_check
        %p138 = pneg %p55
      $region26: #{mask_decoder_forward.6} parent=19 // pred_check_branch
        %140 = sbr.rel (%p138) target = $region28
      $region27: #{mask_decoder_forward.6} parent=19 // pred_region
        %p141 = scmp.lt.s32.totalorder %s9, 1
        %s142 = scalar_select %p141, %s9, 1
        %s143 = smul.addr %s142, 4
        %s144 = smul.addr %s143, 4
        %s145 = scalar_lea.vmem %s1, %s144
      $region28: #{mask_decoder_forward.6} parent=19 // pred_fallthru
        _
    $region20: #{mask_decoder_forward.6} parent=5 // pred_fallthru
      _
    %p146 = scmp.le.s32.totalorder 1, %s9
    %p147 = scmp.lt.s32.totalorder %s9, 3
    %p148 = pnand %p146, %p147
    %p149 = pneg %p148
    // Predicated region
    $region29: #{mask_decoder_forward.6} parent=5 // pred_check
      _
    $region30: #{mask_decoder_forward.6} parent=5 // pred_check_branch
      %151 = sbr.rel (%p148) target = $region32
    $region31: #{mask_decoder_forward.6} parent=5 // pred_region
      %s152 = ssub.s32 %s9, 1
      %p153 = scmp.lt.s32.totalorder %s14, 1
      %s154 = scalar_select %p153, %s14, 1
      %s155 = smul.addr %s154, 2
      %s156 = smul.addr %s155, 8
      %s157 = scalar_lea.vmem %s0, %s156
      %p158 = pneg %p35
      %p159 = pneg %p32
      %p160 = scmp.lt.s32.totalorder %s14, 1
      %s161 = scalar_select %p160, %s14, 1
      %s162 = smul.addr %s161, 4
      %s163 = smul.addr %s162, 4
      %s164 = scalar_lea.vmem %s1, %s163
      %p165 = pneg %p61
      %p166 = pneg %p58
      %p167 = pneg %p82
      %p168 = pneg %p79
      %p169 = pneg %p108
      %p170 = pneg %p105
      %p171 = scmp.lt.s32.totalorder %s14, 1
      %s172 = scalar_select %p171, %s14, 1
      %s173 = smul.addr %s172, 2
      %s174 = smul.addr %s173, 8
      %s175 = scalar_lea.vmem %s3, %s174
      %p176 = scmp.lt.s32.totalorder %s14, 1
      %s177 = scalar_select %p176, %s14, 1
      %s178 = smul.addr %s177, 2
      %s179 = smul.addr %s178, 8
      %s180 = scalar_lea.vmem %s0, %s179
      %p181 = scmp.lt.s32.totalorder %s14, 1
      %s182 = scalar_select %p181, %s14, 1
      %s183 = smul.addr %s182, 4
      %s184 = smul.addr %s183, 4
      %s185 = scalar_lea.vmem %s1, %s184
      %p186 = scmp.lt.s32.totalorder %s14, 1
      %s187 = scalar_select %p186, %s14, 1
      %s188 = smul.addr %s187, 2
      %s189 = smul.addr %s188, 8
      %s190 = scalar_lea.vmem %s3, %s189
      %v192 = vld [vmem:[%s180] sm:$0xff]
      %v193 = vld [vmem:[%s180 + $0x8] sm:$0xff]
      %v194 = vld [vmem:[%s185] sm:$0xf]
      %v195 = vld [vmem:[%s185 + $0x4] sm:$0xf]
      %v196 = vld [vmem:[%s185 + $0x8] sm:$0xf]
      %v197 = vld [vmem:[%s185 + $0xc] sm:$0xf]
      %v198 = vpack.c.bf16 %v193, %v192
      %v199 = vld [vmem:[%s2] sm:$0xf]
      %v200 = vld [vmem:[%s2 + $0x4] sm:$0xf]
      %v201 = vld [vmem:[%s2 + $0x8] sm:$0xf]
      %v202 = vld [vmem:[%s2 + $0xc] sm:$0xf]
      %v207 = vunpack.c.l.b16 %v199
      %v208 = vunpack.c.l.b16 %v200
      %v209 = vunpack.c.l.b16 %v201
      %v210 = vunpack.c.l.b16 %v202
      %v211 = vpack.c.b16 %v208, %v207
      %v212 = vpack.c.b16 %v210, %v209
      %vm215 = vcmask 261120
      %v217 = vsel %vm215, %v198, 0
      %219 = vmatprep.subr.bf16.mxu0 0
      %220 = vmatpush1.bf16.msra.mxu0 0
      %221 = vmatprep.subr.bf16.mxu0 0
      %222 = vmatpush1.bf16.msra.mxu0 0
      %223 = vmatprep.subr.bf16.mxu0 0
      %224 = vmatpush1.bf16.msra.mxu0 0
      %225 = vmatprep.subr.bf16.mxu0 0
      %226 = vmatpush1.bf16.msra.mxu0 0
      %227 = vmatprep.subr.bf16.mxu0 0
      %228 = vmatpush1.bf16.msra.mxu0 0
      %229 = vmatprep.subr.bf16.mxu0 0
      %230 = vmatpush1.bf16.msra.mxu0 0
      %231 = vmatprep.subr.bf16.mxu0 0
      %232 = vmatpush1.bf16.msra.mxu0 %v212
      %233 = vmatprep.subr.bf16.mxu0 0
      %234 = vmatpush1.bf16.msra.mxu0 %v211
      %235 = vmatprep.subr.bf16.mxu0 0
      %236 = vmatpush2.bf16.msra.mxu0 0
      %237 = vmatprep.subr.bf16.mxu0 0
      %238 = vmatpush2.bf16.msra.mxu0 0
      %239 = vmatprep.subr.bf16.mxu0 0
      %240 = vmatpush2.bf16.msra.mxu0 0
      %241 = vmatprep.subr.bf16.mxu0 0
      %242 = vmatpush2.bf16.msra.mxu0 0
      %243 = vmatprep.subr.bf16.mxu0 0
      %244 = vmatpush2.bf16.msra.mxu0 0
      %245 = vmatprep.subr.bf16.mxu0 0
      %246 = vmatpush2.bf16.msra.mxu0 0
      %247 = vmatprep.subr.bf16.mxu0 0
      %248 = vmatpush2.bf16.msra.mxu0 0
      %249 = vmatprep.subr.bf16.mxu0 0
      %250 = vmatpush2.bf16.msra.mxu0 0
      %251 = vmatprep.mubr.bf16.mxu0 0
      %252 = vmatmul.mubr.bf16.gmra.mxu0 %v217
      %v253 = vpop.f32.mrf.mxu0
      %v254 = vadd.f32 0.0, %v253
      %v255 = vpop.f32.mrf.mxu0
      %v256 = vpop.f32.mrf.mxu0
      %v257 = vadd.f32 0.0, %v256
      %v258 = vpop.f32.mrf.mxu0
      %259 = vdwg.mxu0
      %v260 = vpack.c.bf16 %v257, %v254
      %s261 = scalar_lea.vmem %s2, 16
      %v262 = vld [vmem:[%s261] sm:$0xf]
      %v263 = vld [vmem:[%s261 + $0x4] sm:$0xf]
      %v264 = vld [vmem:[%s261 + $0x8] sm:$0xf]
      %v265 = vld [vmem:[%s261 + $0xc] sm:$0xf]
      %v270 = vunpack.c.l.b16 %v262
      %v271 = vunpack.c.l.b16 %v263
      %v272 = vunpack.c.l.b16 %v264
      %v273 = vunpack.c.l.b16 %v265
      %v274 = vpack.c.b16 %v271, %v270
      %v275 = vpack.c.b16 %v273, %v272
      %v277 = vsel %vm215, %v260, 0
      %v280 = vsel %vm215, %v274, 0
      %v283 = vsel %vm215, %v275, 0
      %285 = vmatprep.subr.bf16.mxu0 0
      %286 = vmatpush1.bf16.xpose.msra.mxu0 0
      %287 = vmatprep.subr.bf16.mxu0 0
      %288 = vmatpush1.bf16.xpose.msra.mxu0 0
      %289 = vmatprep.subr.bf16.mxu0 0
      %290 = vmatpush1.bf16.xpose.msra.mxu0 0
      %291 = vmatprep.subr.bf16.mxu0 0
      %292 = vmatpush1.bf16.xpose.msra.mxu0 0
      %293 = vmatprep.subr.bf16.mxu0 0
      %294 = vmatpush1.bf16.xpose.msra.mxu0 0
      %295 = vmatprep.subr.bf16.mxu0 0
      %296 = vmatpush1.bf16.xpose.msra.mxu0 0
      %297 = vmatprep.subr.bf16.mxu0 0
      %298 = vmatpush1.bf16.xpose.msra.mxu0 %v283
      %299 = vmatprep.subr.bf16.mxu0 0
      %300 = vmatpush1.bf16.xpose.msra.mxu0 %v280
      %301 = vmatprep.subr.bf16.mxu0 0
      %302 = vmatpush2.bf16.xpose.msra.mxu0 0
      %303 = vmatprep.subr.bf16.mxu0 0
      %304 = vmatpush2.bf16.xpose.msra.mxu0 0
      %305 = vmatprep.subr.bf16.mxu0 0
      %306 = vmatpush2.bf16.xpose.msra.mxu0 0
      %307 = vmatprep.subr.bf16.mxu0 0
      %308 = vmatpush2.bf16.xpose.msra.mxu0 0
      %309 = vmatprep.subr.bf16.mxu0 0
      %310 = vmatpush2.bf16.xpose.msra.mxu0 0
      %311 = vmatprep.subr.bf16.mxu0 0
      %312 = vmatpush2.bf16.xpose.msra.mxu0 0
      %313 = vmatprep.subr.bf16.mxu0 0
      %314 = vmatpush2.bf16.xpose.msra.mxu0 0
      %315 = vmatprep.subr.bf16.mxu0 0
      %316 = vmatpush2.bf16.xpose.msra.mxu0 0
      %317 = vmatprep.mubr.bf16.mxu0 0
      %318 = vmatmul.mubr.bf16.gmra.mxu0 %v277
      %v319 = vpop.f32.mrf.mxu0
      %v320 = vadd.f32 0.0, %v319
      %v321 = vpop.f32.mrf.mxu0
      %v322 = vpop.f32.mrf.mxu0
      %v323 = vadd.f32 0.0, %v322
      %v324 = vpop.f32.mrf.mxu0
      %325 = vdwg.mxu0
      %v326 = vpack.c.bf16 %v323, %v320
      %v331 = vunpack.c.l.b16 %v194
      %v332 = vunpack.c.l.b16 %v195
      %v333 = vunpack.c.l.b16 %v196
      %v334 = vunpack.c.l.b16 %v197
      %v335 = vpack.c.b16 %v332, %v331
      %v336 = vpack.c.b16 %v334, %v333
      %v340 = vsel %vm215, %v326, 0
      %342 = vmatprep.subr.bf16.mxu0 0
      %343 = vmatpush1.bf16.msra.mxu0 0
      %344 = vmatprep.subr.bf16.mxu0 0
      %345 = vmatpush1.bf16.msra.mxu0 0
      %346 = vmatprep.subr.bf16.mxu0 0
      %347 = vmatpush1.bf16.msra.mxu0 0
      %348 = vmatprep.subr.bf16.mxu0 0
      %349 = vmatpush1.bf16.msra.mxu0 0
      %350 = vmatprep.subr.bf16.mxu0 0
      %351 = vmatpush1.bf16.msra.mxu0 0
      %352 = vmatprep.subr.bf16.mxu0 0
      %353 = vmatpush1.bf16.msra.mxu0 0
      %354 = vmatprep.subr.bf16.mxu0 0
      %355 = vmatpush1.bf16.msra.mxu0 %v336
      %356 = vmatprep.subr.bf16.mxu0 0
      %357 = vmatpush1.bf16.msra.mxu0 %v335
      %358 = vmatprep.subr.bf16.mxu0 0
      %359 = vmatpush2.bf16.msra.mxu0 0
      %360 = vmatprep.subr.bf16.mxu0 0
      %361 = vmatpush2.bf16.msra.mxu0 0
      %362 = vmatprep.subr.bf16.mxu0 0
      %363 = vmatpush2.bf16.msra.mxu0 0
      %364 = vmatprep.subr.bf16.mxu0 0
      %365 = vmatpush2.bf16.msra.mxu0 0
      %366 = vmatprep.subr.bf16.mxu0 0
      %367 = vmatpush2.bf16.msra.mxu0 0
      %368 = vmatprep.subr.bf16.mxu0 0
      %369 = vmatpush2.bf16.msra.mxu0 0
      %370 = vmatprep.subr.bf16.mxu0 0
      %371 = vmatpush2.bf16.msra.mxu0 0
      %372 = vmatprep.subr.bf16.mxu0 0
      %373 = vmatpush2.bf16.msra.mxu0 0
      %374 = vmatprep.mubr.bf16.mxu0 0
      %375 = vmatmul.mubr.bf16.gmra.mxu0 %v340
      %v376 = vpop.f32.mrf.mxu0
      %v377 = vadd.f32 0.0, %v376
      %v378 = vpop.f32.mrf.mxu0
      %v379 = vpop.f32.mrf.mxu0
      %v380 = vadd.f32 0.0, %v379
      %v381 = vpop.f32.mrf.mxu0
      %382 = vdwg.mxu0
      %v383 = vmul.f32 %v377, 0.17677669
      %v384 = vmul.f32 %v380, 0.17677669
      %vm385 = vcmask 523264
      %v386 = vsel %vm385, %v383, -inf
      %387 = vmax.xlane.f32.xlu0 %v386
      %v388 = vpop.xlane.xlu0 %387
      %v389 = vsel %vm385, %v384, -inf
      %390 = vmax.xlane.f32.xlu0 %v389
      %v391 = vpop.xlane.xlu0 %390
      %v392 = vsub.f32 %v383, %v388
      %v393 = vsub.f32 %v384, %v391
      %v394 = vmul.f32 %v392, 1.442695
      %v395 = vpow.pop %v394
      %v396 = vmul.f32 %v393, 1.442695
      %v397 = vpow.pop %v396
      %v398 = vsel %vm385, %v395, 0.0
      %399 = vadd.xlane.f32.xlu0 %v398
      %v400 = vpop.xlane.xlu0 %399
      %v401 = vsel %vm385, %v397, 0.0
      %402 = vadd.xlane.f32.xlu0 %v401
      %v403 = vpop.xlane.xlu0 %402
      %v404 = vpack.c.bf16 %v397, %v395
      %v406 = vsel %vm385, %v404, 0
      %v409 = vsel %vm385, %v335, 0
      %v412 = vsel %vm385, %v336, 0
      %414 = vmatprep.subr.bf16.mxu0 0
      %415 = vmatpush1.bf16.xpose.msra.mxu0 0
      %416 = vmatprep.subr.bf16.mxu0 0
      %417 = vmatpush1.bf16.xpose.msra.mxu0 0
      %418 = vmatprep.subr.bf16.mxu0 0
      %419 = vmatpush1.bf16.xpose.msra.mxu0 0
      %420 = vmatprep.subr.bf16.mxu0 0
      %421 = vmatpush1.bf16.xpose.msra.mxu0 0
      %422 = vmatprep.subr.bf16.mxu0 0
      %423 = vmatpush1.bf16.xpose.msra.mxu0 0
      %424 = vmatprep.subr.bf16.mxu0 0
      %425 = vmatpush1.bf16.xpose.msra.mxu0 0
      %426 = vmatprep.subr.bf16.mxu0 0
      %427 = vmatpush1.bf16.xpose.msra.mxu0 %v412
      %428 = vmatprep.subr.bf16.mxu0 0
      %429 = vmatpush1.bf16.xpose.msra.mxu0 %v409
      %430 = vmatprep.subr.bf16.mxu0 0
      %431 = vmatpush2.bf16.xpose.msra.mxu0 0
      %432 = vmatprep.subr.bf16.mxu0 0
      %433 = vmatpush2.bf16.xpose.msra.mxu0 0
      %434 = vmatprep.subr.bf16.mxu0 0
      %435 = vmatpush2.bf16.xpose.msra.mxu0 0
      %436 = vmatprep.subr.bf16.mxu0 0
      %437 = vmatpush2.bf16.xpose.msra.mxu0 0
      %438 = vmatprep.subr.bf16.mxu0 0
      %439 = vmatpush2.bf16.xpose.msra.mxu0 0
      %440 = vmatprep.subr.bf16.mxu0 0
      %441 = vmatpush2.bf16.xpose.msra.mxu0 0
      %442 = vmatprep.subr.bf16.mxu0 0
      %443 = vmatpush2.bf16.xpose.msra.mxu0 0
      %444 = vmatprep.subr.bf16.mxu0 0
      %445 = vmatpush2.bf16.xpose.msra.mxu0 0
      %446 = vmatprep.mubr.bf16.mxu0 0
      %447 = vmatmul.mubr.bf16.gmra.mxu0 %v406
      %v448 = vpop.f32.mrf.mxu0
      %v449 = vadd.f32 0.0, %v448
      %v450 = vpop.f32.mrf.mxu0
      %v451 = vpop.f32.mrf.mxu0
      %v452 = vadd.f32 0.0, %v451
      %v453 = vpop.f32.mrf.mxu0
      %454 = vdwg.mxu0
      %v455 = vpack.c.bf16 %v452, %v449
      %s456 = scalar_lea.vmem %s2, 32
      %v457 = vld [vmem:[%s456] sm:$0xf]
      %v458 = vld [vmem:[%s456 + $0x4] sm:$0xf]
      %v459 = vld [vmem:[%s456 + $0x8] sm:$0xf]
      %v460 = vld [vmem:[%s456 + $0xc] sm:$0xf]
      %v465 = vunpack.c.l.b16 %v457
      %v466 = vunpack.c.l.b16 %v458
      %v467 = vunpack.c.l.b16 %v459
      %v468 = vunpack.c.l.b16 %v460
      %v469 = vpack.c.b16 %v466, %v465
      %v470 = vpack.c.b16 %v468, %v467
      %v474 = vsel %vm215, %v455, 0
      %476 = vmatprep.subr.bf16.mxu0 0
      %477 = vmatpush1.bf16.msra.mxu0 0
      %478 = vmatprep.subr.bf16.mxu0 0
      %479 = vmatpush1.bf16.msra.mxu0 0
      %480 = vmatprep.subr.bf16.mxu0 0
      %481 = vmatpush1.bf16.msra.mxu0 0
      %482 = vmatprep.subr.bf16.mxu0 0
      %483 = vmatpush1.bf16.msra.mxu0 0
      %484 = vmatprep.subr.bf16.mxu0 0
      %485 = vmatpush1.bf16.msra.mxu0 0
      %486 = vmatprep.subr.bf16.mxu0 0
      %487 = vmatpush1.bf16.msra.mxu0 0
      %488 = vmatprep.subr.bf16.mxu0 0
      %489 = vmatpush1.bf16.msra.mxu0 %v470
      %490 = vmatprep.subr.bf16.mxu0 0
      %491 = vmatpush1.bf16.msra.mxu0 %v469
      %492 = vmatprep.subr.bf16.mxu0 0
      %493 = vmatpush2.bf16.msra.mxu0 0
      %494 = vmatprep.subr.bf16.mxu0 0
      %495 = vmatpush2.bf16.msra.mxu0 0
      %496 = vmatprep.subr.bf16.mxu0 0
      %497 = vmatpush2.bf16.msra.mxu0 0
      %498 = vmatprep.subr.bf16.mxu0 0
      %499 = vmatpush2.bf16.msra.mxu0 0
      %500 = vmatprep.subr.bf16.mxu0 0
      %501 = vmatpush2.bf16.msra.mxu0 0
      %502 = vmatprep.subr.bf16.mxu0 0
      %503 = vmatpush2.bf16.msra.mxu0 0
      %504 = vmatprep.subr.bf16.mxu0 0
      %505 = vmatpush2.bf16.msra.mxu0 0
      %506 = vmatprep.subr.bf16.mxu0 0
      %507 = vmatpush2.bf16.msra.mxu0 0
      %508 = vmatprep.mubr.bf16.mxu0 0
      %509 = vmatmul.mubr.bf16.gmra.mxu0 %v474
      %v510 = vpop.f32.mrf.mxu0
      %v511 = vadd.f32 0.0, %v510
      %v512 = vpop.f32.mrf.mxu0
      %v513 = vpop.f32.mrf.mxu0
      %v514 = vadd.f32 0.0, %v513
      %v515 = vpop.f32.mrf.mxu0
      %516 = vdwg.mxu0
      %v517 = vrcp.pop %v400
      %v518 = vrcp.pop %v403
      %v519 = vmul.f32 %v511, %v517
      %v520 = vmul.f32 %v514, %v518
      %v521 = vpack.c.bf16 %v520, %v519
      %s522 = scalar_lea.vmem %s2, 48
      %v523 = vld [vmem:[%s522] sm:$0xf]
      %v524 = vld [vmem:[%s522 + $0x4] sm:$0xf]
      %v525 = vld [vmem:[%s522 + $0x8] sm:$0xf]
      %v526 = vld [vmem:[%s522 + $0xc] sm:$0xf]
      %v531 = vunpack.c.l.b16 %v523
      %v532 = vunpack.c.l.b16 %v524
      %v533 = vunpack.c.l.b16 %v525
      %v534 = vunpack.c.l.b16 %v526
      %v535 = vpack.c.b16 %v532, %v531
      %v536 = vpack.c.b16 %v534, %v533
      %v540 = vsel %vm215, %v521, 0
      %542 = vmatprep.subr.bf16.mxu0 0
      %543 = vmatpush1.bf16.msra.mxu0 0
      %544 = vmatprep.subr.bf16.mxu0 0
      %545 = vmatpush1.bf16.msra.mxu0 0
      %546 = vmatprep.subr.bf16.mxu0 0
      %547 = vmatpush1.bf16.msra.mxu0 0
      %548 = vmatprep.subr.bf16.mxu0 0
      %549 = vmatpush1.bf16.msra.mxu0 0
      %550 = vmatprep.subr.bf16.mxu0 0
      %551 = vmatpush1.bf16.msra.mxu0 0
      %552 = vmatprep.subr.bf16.mxu0 0
      %553 = vmatpush1.bf16.msra.mxu0 0
      %554 = vmatprep.subr.bf16.mxu0 0
      %555 = vmatpush1.bf16.msra.mxu0 %v536
      %556 = vmatprep.subr.bf16.mxu0 0
      %557 = vmatpush1.bf16.msra.mxu0 %v535
      %558 = vmatprep.subr.bf16.mxu0 0
      %559 = vmatpush2.bf16.msra.mxu0 0
      %560 = vmatprep.subr.bf16.mxu0 0
      %561 = vmatpush2.bf16.msra.mxu0 0
      %562 = vmatprep.subr.bf16.mxu0 0
      %563 = vmatpush2.bf16.msra.mxu0 0
      %564 = vmatprep.subr.bf16.mxu0 0
      %565 = vmatpush2.bf16.msra.mxu0 0
      %566 = vmatprep.subr.bf16.mxu0 0
      %567 = vmatpush2.bf16.msra.mxu0 0
      %568 = vmatprep.subr.bf16.mxu0 0
      %569 = vmatpush2.bf16.msra.mxu0 0
      %570 = vmatprep.subr.bf16.mxu0 0
      %571 = vmatpush2.bf16.msra.mxu0 0
      %572 = vmatprep.subr.bf16.mxu0 0
      %573 = vmatpush2.bf16.msra.mxu0 0
      %574 = vmatprep.mubr.bf16.mxu0 0
      %575 = vmatmul.mubr.bf16.gmra.mxu0 %v540
      %v576 = vpop.f32.mrf.mxu0
      %v577 = vadd.f32 0.0, %v576
      %v578 = vpop.f32.mrf.mxu0
      %v579 = vpop.f32.mrf.mxu0
      %v580 = vadd.f32 0.0, %v579
      %v581 = vpop.f32.mrf.mxu0
      %582 = vdwg.mxu0
      %v583 = vadd.f32 %v192, %v577
      %v584 = vadd.f32 %v193, %v580
      %585 = vst.msk [vmem:[%s190] sm:$0xff] %vm215, %v583
      %586 = vst.msk [vmem:[%s190 + $0x8] sm:$0xff] %vm215, %v584
      %p587 = scmp.lt.s32.totalorder %s14, 1
      %s588 = scalar_select %p587, %s14, 1
      %s589 = smul.addr %s588, 2
      %s590 = smul.addr %s589, 8
      %s591 = scalar_lea.vmem %s3, %s590
      // Predicated region
      $region33: #{mask_decoder_forward.6} parent=31 // pred_check
        %p592 = pneg %p105
      $region34: #{mask_decoder_forward.6} parent=31 // pred_check_branch
        %594 = sbr.rel (%p592) target = $region36
      $region35: #{mask_decoder_forward.6} parent=31 // pred_region
        _
      $region36: #{mask_decoder_forward.6} parent=31 // pred_fallthru
        _
    $region32: #{mask_decoder_forward.6} parent=5 // pred_fallthru
      _
    %p595 = scmp.le.s32.totalorder 2, %s9
    // Predicated region
    $region37: #{mask_decoder_forward.6} parent=5 // pred_check
      %p596 = pneg %p595
    $region38: #{mask_decoder_forward.6} parent=5 // pred_check_branch
      %598 = sbr.rel (%p596) target = $region40
    $region39: #{mask_decoder_forward.6} parent=5 // pred_region
      %s599 = ssub.s32 %s9, 2
      // Predicated region
      $region41: #{mask_decoder_forward.6} parent=39 // pred_check
        %p600 = pneg %p111
      $region42: #{mask_decoder_forward.6} parent=39 // pred_check_branch
        %602 = sbr.rel (%p600) target = $region44
      $region43: #{mask_decoder_forward.6} parent=39 // pred_region
        %p603 = scmp.lt.s32.totalorder %s15, 1
        %s604 = scalar_select %p603, %s15, 1
        %s605 = smul.addr %s604, 2
        %s606 = smul.addr %s605, 8
        %s607 = scalar_lea.vmem %s3, %s606
      $region44: #{mask_decoder_forward.6} parent=39 // pred_fallthru
        _
    $region40: #{mask_decoder_forward.6} parent=5 // pred_fallthru
      _
  $region6: #{mask_decoder_forward.6} parent=0 // loop_footer
    %s13 = sadd.s32 1, %s9
  $region7: #{mask_decoder_forward.6} parent=0 // loop_footer_branch
    %8 = sbr.rel target = $region3
  $region8: #{mask_decoder_forward.6} parent=0 // loop_exit
    _

// kernel: mask_decoder_forward.8
$region0: #{mask_decoder_forward.8}
  #allocation0 [shape = 'u32[]', space=smem, size = 0x4, offset = 0x4, fixed_abs, tag = 'smem constant byte address 0x4 - core index']
  #allocation1 [shape = 'u32[144,128]{1,0:T(1,128)}', space=vmem, size = 0x12000, scoped, tag = 'internal scratch']
  %s0 = inlined_call_operand.vmem [shape: f32[5,2,32], index: 0, kind: input, shape index: {}]
  %s1 = inlined_call_operand.vmem [shape: bf16[5,32,256], index: 1, kind: input, shape index: {}]
  %s2 = inlined_call_operand.vmem [shape: f32[5,1,256], index: 2, kind: input, shape index: {}]
  %s3 = inlined_call_operand.vmem [shape: bf16[5,256,256], index: 3, kind: input, shape index: {}]
  %s4 = inlined_call_operand.vmem [shape: f32[5,1,256], index: 4, kind: input, shape index: {}]
  %s5 = inlined_call_operand.vmem [shape: bf16[5,256,4], index: 5, kind: input, shape index: {}]
  %s6 = inlined_call_operand.vmem [shape: f32[5,1,4], index: 6, kind: input, shape index: {}]
  %s7 = inlined_call_operand.vmem [shape: f32[5,2,4], index: 7, kind: output, shape index: {}]
  %s8 = sld [smem:[#allocation0]]
  $region61: #{mask_decoder_forward.8} parent=0
    _
  %s10 = ssub.s32 1, %s8
  %s11 = scalar_select 0, %s10, %s8
  loop: start=0, step=1, limit=7
  $region2: #{mask_decoder_forward.8} parent=0 // loop_pre_header
    _
  $region3: #{mask_decoder_forward.8} parent=0 // loop_header
    %s13 = sphi 0, %s17
    %p14 = scmp.ge.s32.totalorder %s13, 7
    %s23 = sphi 0, %s25
    %s26 = sphi 0, %s23
    %s27 = sphi 0, %s26
    %s43 = sphi 0, %s27
    %s49 = sphi 0, %s51
    %s52 = sphi 0, %s49
    %s53 = sphi 0, %s52
    %s69 = sphi 0, %s53
    %s75 = sphi 0, %s77
    %s78 = sphi 0, %s75
    %s79 = sphi 0, %s78
    %s95 = sphi 0, %s79
    %s101 = sphi 0, %s103
    %s104 = sphi 0, %s101
    %s105 = sphi 0, %s104
    %s121 = sphi 0, %s105
    %s127 = sphi 0, %s129
    %s130 = sphi 0, %s127
    %s131 = sphi 0, %s130
    %s147 = sphi 0, %s131
    %s153 = sphi 0, %s155
    %s156 = sphi 0, %s153
    %s157 = sphi 0, %s156
    %s173 = sphi 0, %s157
    %s179 = sphi 0, %s181
    %s182 = sphi 0, %s179
    %s183 = sphi 0, %s182
    %s199 = sphi 0, %s183
    %s205 = sphi 0, %s207
    %s208 = sphi 0, %s205
    %s209 = sphi 0, %s208
    %s225 = sphi 0, %s209
  $region4: #{mask_decoder_forward.8} parent=0 // loop_header_branch
    %16 = sbr.rel (%p14) target = $region8
  $region5: #{mask_decoder_forward.8} parent=0 // loop_body
    %s18 = ssub.s32 %s13, 1
    %s19 = ssub.s32 %s13, 2
    %s20 = sadd.s32 %s13, 1
    %s21 = ssub.s32 %s13, %s20
    %p22 = scmp.eq.s32.totalorder %s21, 0
    %s24 = sadd.s32 %s23, 1
    %s25 = scalar_select %p22, %s23, %s24
    %p28 = pneg %p22
    %p29 = scmp.eq.s32.totalorder %s13, 4
    %p30 = por %p28, %p29
    %p31 = scmp.ne.s32.totalorder %s23, %s26
    %p32 = scmp.eq.s32.totalorder %s13, 0
    %p33 = por %p31, %p32
    %p34 = scmp.ne.s32.totalorder %s23, %s26
    %p35 = scmp.eq.s32.totalorder %s18, 4
    %p36 = por %p34, %p35
    %p37 = scmp.ne.s32.totalorder %s26, %s27
    %p38 = scmp.eq.s32.totalorder %s18, 0
    %p39 = por %p37, %p38
    %p40 = scmp.ne.s32.totalorder %s26, %s27
    %p41 = scmp.eq.s32.totalorder %s19, 4
    %p42 = por %p40, %p41
    %p44 = scmp.ne.s32.totalorder %s27, %s43
    %p45 = scmp.eq.s32.totalorder %s19, 0
    %p46 = por %p44, %p45
    %s47 = ssub.s32 %s13, %s20
    %p48 = scmp.eq.s32.totalorder %s47, 0
    %s50 = sadd.s32 %s49, 1
    %s51 = scalar_select %p48, %s49, %s50
    %p54 = pneg %p48
    %p55 = scmp.eq.s32.totalorder %s13, 4
    %p56 = por %p54, %p55
    %p57 = scmp.ne.s32.totalorder %s49, %s52
    %p58 = scmp.eq.s32.totalorder %s13, 0
    %p59 = por %p57, %p58
    %p60 = scmp.ne.s32.totalorder %s49, %s52
    %p61 = scmp.eq.s32.totalorder %s18, 4
    %p62 = por %p60, %p61
    %p63 = scmp.ne.s32.totalorder %s52, %s53
    %p64 = scmp.eq.s32.totalorder %s18, 0
    %p65 = por %p63, %p64
    %p66 = scmp.ne.s32.totalorder %s52, %s53
    %p67 = scmp.eq.s32.totalorder %s19, 4
    %p68 = por %p66, %p67
    %p70 = scmp.ne.s32.totalorder %s53, %s69
    %p71 = scmp.eq.s32.totalorder %s19, 0
    %p72 = por %p70, %p71
    %s73 = ssub.s32 %s13, %s20
    %p74 = scmp.eq.s32.totalorder %s73, 0
    %s76 = sadd.s32 %s75, 1
    %s77 = scalar_select %p74, %s75, %s76
    %p80 = pneg %p74
    %p81 = scmp.eq.s32.totalorder %s13, 4
    %p82 = por %p80, %p81
    %p83 = scmp.ne.s32.totalorder %s75, %s78
    %p84 = scmp.eq.s32.totalorder %s13, 0
    %p85 = por %p83, %p84
    %p86 = scmp.ne.s32.totalorder %s75, %s78
    %p87 = scmp.eq.s32.totalorder %s18, 4
    %p88 = por %p86, %p87
    %p89 = scmp.ne.s32.totalorder %s78, %s79
    %p90 = scmp.eq.s32.totalorder %s18, 0
    %p91 = por %p89, %p90
    %p92 = scmp.ne.s32.totalorder %s78, %s79
    %p93 = scmp.eq.s32.totalorder %s19, 4
    %p94 = por %p92, %p93
    %p96 = scmp.ne.s32.totalorder %s79, %s95
    %p97 = scmp.eq.s32.totalorder %s19, 0
    %p98 = por %p96, %p97
    %s99 = ssub.s32 %s13, %s20
    %p100 = scmp.eq.s32.totalorder %s99, 0
    %s102 = sadd.s32 %s101, 1
    %s103 = scalar_select %p100, %s101, %s102
    %p106 = pneg %p100
    %p107 = scmp.eq.s32.totalorder %s13, 4
    %p108 = por %p106, %p107
    %p109 = scmp.ne.s32.totalorder %s101, %s104
    %p110 = scmp.eq.s32.totalorder %s13, 0
    %p111 = por %p109, %p110
    %p112 = scmp.ne.s32.totalorder %s101, %s104
    %p113 = scmp.eq.s32.totalorder %s18, 4
    %p114 = por %p112, %p113
    %p115 = scmp.ne.s32.totalorder %s104, %s105
    %p116 = scmp.eq.s32.totalorder %s18, 0
    %p117 = por %p115, %p116
    %p118 = scmp.ne.s32.totalorder %s104, %s105
    %p119 = scmp.eq.s32.totalorder %s19, 4
    %p120 = por %p118, %p119
    %p122 = scmp.ne.s32.totalorder %s105, %s121
    %p123 = scmp.eq.s32.totalorder %s19, 0
    %p124 = por %p122, %p123
    %s125 = ssub.s32 %s13, %s20
    %p126 = scmp.eq.s32.totalorder %s125, 0
    %s128 = sadd.s32 %s127, 1
    %s129 = scalar_select %p126, %s127, %s128
    %p132 = pneg %p126
    %p133 = scmp.eq.s32.totalorder %s13, 4
    %p134 = por %p132, %p133
    %p135 = scmp.ne.s32.totalorder %s127, %s130
    %p136 = scmp.eq.s32.totalorder %s13, 0
    %p137 = por %p135, %p136
    %p138 = scmp.ne.s32.totalorder %s127, %s130
    %p139 = scmp.eq.s32.totalorder %s18, 4
    %p140 = por %p138, %p139
    %p141 = scmp.ne.s32.totalorder %s130, %s131
    %p142 = scmp.eq.s32.totalorder %s18, 0
    %p143 = por %p141, %p142
    %p144 = scmp.ne.s32.totalorder %s130, %s131
    %p145 = scmp.eq.s32.totalorder %s19, 4
    %p146 = por %p144, %p145
    %p148 = scmp.ne.s32.totalorder %s131, %s147
    %p149 = scmp.eq.s32.totalorder %s19, 0
    %p150 = por %p148, %p149
    %s151 = ssub.s32 %s13, %s20
    %p152 = scmp.eq.s32.totalorder %s151, 0
    %s154 = sadd.s32 %s153, 1
    %s155 = scalar_select %p152, %s153, %s154
    %p158 = pneg %p152
    %p159 = scmp.eq.s32.totalorder %s13, 4
    %p160 = por %p158, %p159
    %p161 = scmp.ne.s32.totalorder %s153, %s156
    %p162 = scmp.eq.s32.totalorder %s13, 0
    %p163 = por %p161, %p162
    %p164 = scmp.ne.s32.totalorder %s153, %s156
    %p165 = scmp.eq.s32.totalorder %s18, 4
    %p166 = por %p164, %p165
    %p167 = scmp.ne.s32.totalorder %s156, %s157
    %p168 = scmp.eq.s32.totalorder %s18, 0
    %p169 = por %p167, %p168
    %p170 = scmp.ne.s32.totalorder %s156, %s157
    %p171 = scmp.eq.s32.totalorder %s19, 4
    %p172 = por %p170, %p171
    %p174 = scmp.ne.s32.totalorder %s157, %s173
    %p175 = scmp.eq.s32.totalorder %s19, 0
    %p176 = por %p174, %p175
    %s177 = ssub.s32 %s13, %s20
    %p178 = scmp.eq.s32.totalorder %s177, 0
    %s180 = sadd.s32 %s179, 1
    %s181 = scalar_select %p178, %s179, %s180
    %p184 = pneg %p178
    %p185 = scmp.eq.s32.totalorder %s13, 4
    %p186 = por %p184, %p185
    %p187 = scmp.ne.s32.totalorder %s179, %s182
    %p188 = scmp.eq.s32.totalorder %s13, 0
    %p189 = por %p187, %p188
    %p190 = scmp.ne.s32.totalorder %s179, %s182
    %p191 = scmp.eq.s32.totalorder %s18, 4
    %p192 = por %p190, %p191
    %p193 = scmp.ne.s32.totalorder %s182, %s183
    %p194 = scmp.eq.s32.totalorder %s18, 0
    %p195 = por %p193, %p194
    %p196 = scmp.ne.s32.totalorder %s182, %s183
    %p197 = scmp.eq.s32.totalorder %s19, 4
    %p198 = por %p196, %p197
    %p200 = scmp.ne.s32.totalorder %s183, %s199
    %p201 = scmp.eq.s32.totalorder %s19, 0
    %p202 = por %p200, %p201
    %s203 = ssub.s32 %s13, %s20
    %p204 = scmp.eq.s32.totalorder %s203, 0
    %s206 = sadd.s32 %s205, 1
    %s207 = scalar_select %p204, %s205, %s206
    %p210 = pneg %p204
    %p211 = scmp.eq.s32.totalorder %s13, 4
    %p212 = por %p210, %p211
    %p213 = scmp.ne.s32.totalorder %s205, %s208
    %p214 = scmp.eq.s32.totalorder %s13, 0
    %p215 = por %p213, %p214
    %p216 = scmp.ne.s32.totalorder %s205, %s208
    %p217 = scmp.eq.s32.totalorder %s18, 4
    %p218 = por %p216, %p217
    %p219 = scmp.ne.s32.totalorder %s208, %s209
    %p220 = scmp.eq.s32.totalorder %s18, 0
    %p221 = por %p219, %p220
    %p222 = scmp.ne.s32.totalorder %s208, %s209
    %p223 = scmp.eq.s32.totalorder %s19, 4
    %p224 = por %p222, %p223
    %p226 = scmp.ne.s32.totalorder %s209, %s225
    %p227 = scmp.eq.s32.totalorder %s19, 0
    %p228 = por %p226, %p227
    %p229 = scmp.le.s32.totalorder 1, %s13
    %p230 = scmp.lt.s32.totalorder %s13, 6
    %p231 = pnand %p229, %p230
    %p232 = pneg %p231
    // Predicated region
    $region9: #{mask_decoder_forward.8} parent=5 // pred_check
      _
    $region10: #{mask_decoder_forward.8} parent=5 // pred_check_branch
      %234 = sbr.rel (%p231) target = $region12
    $region11: #{mask_decoder_forward.8} parent=5 // pred_region
      %s235 = ssub.s32 %s13, 1
    $region12: #{mask_decoder_forward.8} parent=5 // pred_fallthru
      _
    %p236 = scmp.lt.s32.totalorder %s13, 5
    // Predicated region
    $region13: #{mask_decoder_forward.8} parent=5 // pred_check
      %p237 = pneg %p236
    $region14: #{mask_decoder_forward.8} parent=5 // pred_check_branch
      %239 = sbr.rel (%p237) target = $region16
    $region15: #{mask_decoder_forward.8} parent=5 // pred_region
      // Predicated region
      $region17: #{mask_decoder_forward.8} parent=15 // pred_check
        %p240 = pneg %p33
      $region18: #{mask_decoder_forward.8} parent=15 // pred_check_branch
        %242 = sbr.rel (%p240) target = $region20
      $region19: #{mask_decoder_forward.8} parent=15 // pred_region
        %p243 = scmp.lt.s32.totalorder %s13, 4
        %s244 = scalar_select %p243, %s13, 4
        %s245 = smul.addr %s244, 2
        %s246 = scalar_lea.vmem %s0, %s245
      $region20: #{mask_decoder_forward.8} parent=15 // pred_fallthru
        _
      // Predicated region
      $region21: #{mask_decoder_forward.8} parent=15 // pred_check
        %p247 = pneg %p59
      $region22: #{mask_decoder_forward.8} parent=15 // pred_check_branch
        %249 = sbr.rel (%p247) target = $region24
      $region23: #{mask_decoder_forward.8} parent=15 // pred_region
        %p250 = scmp.lt.s32.totalorder %s13, 4
        %s251 = scalar_select %p250, %s13, 4
        %s252 = smul.addr %s251, 8
        %s253 = smul.addr %s252, 4
        %s254 = scalar_lea.vmem %s1, %s253
      $region24: #{mask_decoder_forward.8} parent=15 // pred_fallthru
        _
      // Predicated region
      $region25: #{mask_decoder_forward.8} parent=15 // pred_check
        %p255 = pneg %p85
      $region26: #{mask_decoder_forward.8} parent=15 // pred_check_branch
        %257 = sbr.rel (%p255) target = $region28
      $region27: #{mask_decoder_forward.8} parent=15 // pred_region
        %p258 = scmp.lt.s32.totalorder %s13, 4
        %s259 = scalar_select %p258, %s13, 4
        %s260 = smul.addr %s259, 2
        %s261 = scalar_lea.vmem %s2, %s260
      $region28: #{mask_decoder_forward.8} parent=15 // pred_fallthru
        _
      // Predicated region
      $region29: #{mask_decoder_forward.8} parent=15 // pred_check
        %p262 = pneg %p111
      $region30: #{mask_decoder_forward.8} parent=15 // pred_check_branch
        %264 = sbr.rel (%p262) target = $region32
      $region31: #{mask_decoder_forward.8} parent=15 // pred_region
        %p265 = scmp.lt.s32.totalorder %s13, 4
        %s266 = scalar_select %p265, %s13, 4
        %s267 = smul.addr %s266, 64
        %s268 = smul.addr %s267, 4
        %s269 = scalar_lea.vmem %s3, %s268
      $region32: #{mask_decoder_forward.8} parent=15 // pred_fallthru
        _
      // Predicated region
      $region33: #{mask_decoder_forward.8} parent=15 // pred_check
        %p270 = pneg %p137
      $region34: #{mask_decoder_forward.8} parent=15 // pred_check_branch
        %272 = sbr.rel (%p270) target = $region36
      $region35: #{mask_decoder_forward.8} parent=15 // pred_region
        %p273 = scmp.lt.s32.totalorder %s13, 4
        %s274 = scalar_select %p273, %s13, 4
        %s275 = smul.addr %s274, 2
        %s276 = scalar_lea.vmem %s4, %s275
      $region36: #{mask_decoder_forward.8} parent=15 // pred_fallthru
        _
      // Predicated region
      $region37: #{mask_decoder_forward.8} parent=15 // pred_check
        %p277 = pneg %p163
      $region38: #{mask_decoder_forward.8} parent=15 // pred_check_branch
        %279 = sbr.rel (%p277) target = $region40
      $region39: #{mask_decoder_forward.8} parent=15 // pred_region
        %p280 = scmp.lt.s32.totalorder %s13, 4
        %s281 = scalar_select %p280, %s13, 4
        %s282 = smul.addr %s281, 32
        %s283 = smul.addr %s282, 4
        %s284 = scalar_lea.vmem %s5, %s283
      $region40: #{mask_decoder_forward.8} parent=15 // pred_fallthru
        _
      // Predicated region
      $region41: #{mask_decoder_forward.8} parent=15 // pred_check
        %p285 = pneg %p189
      $region42: #{mask_decoder_forward.8} parent=15 // pred_check_branch
        %287 = sbr.rel (%p285) target = $region44
      $region43: #{mask_decoder_forward.8} parent=15 // pred_region
        %p288 = scmp.lt.s32.totalorder %s13, 4
        %s289 = scalar_select %p288, %s13, 4
        %s290 = scalar_lea.vmem %s6, %s289
      $region44: #{mask_decoder_forward.8} parent=15 // pred_fallthru
        _
    $region16: #{mask_decoder_forward.8} parent=5 // pred_fallthru
      _
    %p291 = scmp.le.s32.totalorder 1, %s13
    %p292 = scmp.lt.s32.totalorder %s13, 6
    %p293 = pnand %p291, %p292
    %p294 = pneg %p293
    // Predicated region
    $region45: #{mask_decoder_forward.8} parent=5 // pred_check
      _
    $region46: #{mask_decoder_forward.8} parent=5 // pred_check_branch
      %296 = sbr.rel (%p293) target = $region48
    $region47: #{mask_decoder_forward.8} parent=5 // pred_region
      %s297 = ssub.s32 %s13, 1
      %p298 = scmp.lt.s32.totalorder %s18, 4
      %s299 = scalar_select %p298, %s18, 4
      %s300 = smul.addr %s299, 2
      %s301 = scalar_lea.vmem %s0, %s300
      %p302 = pneg %p39
      %p303 = pneg %p36
      %p304 = scmp.lt.s32.totalorder %s18, 4
      %s305 = scalar_select %p304, %s18, 4
      %s306 = smul.addr %s305, 8
      %s307 = smul.addr %s306, 4
      %s308 = scalar_lea.vmem %s1, %s307
      %p309 = pneg %p65
      %p310 = pneg %p62
      %p311 = scmp.lt.s32.totalorder %s18, 4
      %s312 = scalar_select %p311, %s18, 4
      %s313 = smul.addr %s312, 2
      %s314 = scalar_lea.vmem %s2, %s313
      %p315 = pneg %p91
      %p316 = pneg %p88
      %p317 = scmp.lt.s32.totalorder %s18, 4
      %s318 = scalar_select %p317, %s18, 4
      %s319 = smul.addr %s318, 64
      %s320 = smul.addr %s319, 4
      %s321 = scalar_lea.vmem %s3, %s320
      %p322 = pneg %p117
      %p323 = pneg %p114
      %p324 = scmp.lt.s32.totalorder %s18, 4
      %s325 = scalar_select %p324, %s18, 4
      %s326 = smul.addr %s325, 2
      %s327 = scalar_lea.vmem %s4, %s326
      %p328 = pneg %p143
      %p329 = pneg %p140
      %p330 = scmp.lt.s32.totalorder %s18, 4
      %s331 = scalar_select %p330, %s18, 4
      %s332 = smul.addr %s331, 32
      %s333 = smul.addr %s332, 4
      %s334 = scalar_lea.vmem %s5, %s333
      %p335 = pneg %p169
      %p336 = pneg %p166
      %p337 = scmp.lt.s32.totalorder %s18, 4
      %s338 = scalar_select %p337, %s18, 4
      %s339 = scalar_lea.vmem %s6, %s338
      %p340 = pneg %p195
      %p341 = pneg %p192
      %p342 = pneg %p221
      %p343 = pneg %p218
      %p344 = scmp.lt.s32.totalorder %s18, 4
      %s345 = scalar_select %p344, %s18, 4
      %s346 = smul.addr %s345, 2
      %s347 = scalar_lea.vmem %s7, %s346
      %p348 = scmp.lt.s32.totalorder %s18, 4
      %s349 = scalar_select %p348, %s18, 4
      %s350 = smul.addr %s349, 2
      %s351 = scalar_lea.vmem %s0, %s350
      %p352 = scmp.lt.s32.totalorder %s18, 4
      %s353 = scalar_select %p352, %s18, 4
      %s354 = smul.addr %s353, 8
      %s355 = smul.addr %s354, 4
      %s356 = scalar_lea.vmem %s1, %s355
      %p357 = scmp.lt.s32.totalorder %s18, 4
      %s358 = scalar_select %p357, %s18, 4
      %s359 = smul.addr %s358, 2
      %s360 = scalar_lea.vmem %s2, %s359
      %p361 = scmp.lt.s32.totalorder %s18, 4
      %s362 = scalar_select %p361, %s18, 4
      %s363 = smul.addr %s362, 64
      %s364 = smul.addr %s363, 4
      %s365 = scalar_lea.vmem %s3, %s364
      %p366 = scmp.lt.s32.totalorder %s18, 4
      %s367 = scalar_select %p366, %s18, 4
      %s368 = smul.addr %s367, 2
      %s369 = scalar_lea.vmem %s4, %s368
      %p370 = scmp.lt.s32.totalorder %s18, 4
      %s371 = scalar_select %p370, %s18, 4
      %s372 = smul.addr %s371, 32
      %s373 = smul.addr %s372, 4
      %s374 = scalar_lea.vmem %s5, %s373
      %p375 = scmp.lt.s32.totalorder %s18, 4
      %s376 = scalar_select %p375, %s18, 4
      %s377 = scalar_lea.vmem %s6, %s376
      %p378 = scmp.lt.s32.totalorder %s18, 4
      %s379 = scalar_select %p378, %s18, 4
      %s380 = smul.addr %s379, 2
      %s381 = scalar_lea.vmem %s7, %s380
      %v383 = vld [vmem:[%s351] sm:$0x3]
      %v384 = vpack.c.bf16 %v383, %v383
      %v385 = vld [vmem:[%s356] sm:$0xff]
      %v386 = vld [vmem:[%s356 + $0x8] sm:$0xff]
      %v387 = vld [vmem:[%s356 + $0x10] sm:$0xff]
      %v388 = vld [vmem:[%s356 + $0x18] sm:$0xff]
      %v389 = vld [vmem:[%s360] sm:$0x3]
      %v391 = vlaneseq
      %v392 = vshrl.u32 %v391, 7
      %v393 = vsub.s32 0, %v392
      %v394 = vrot.slane %v389, %v393
      %v395 = vlaneseq
      %v396 = vshrl.u32 %v395, 7
      %v397 = vsub.s32 1, %v396
      %v398 = vrot.slane %v389, %v397
      %v405 = vunpack.c.l.b16 %v385
      %v406 = vunpack.c.h.b16 %v385
      %v407 = vunpack.c.l.b16 %v386
      %v408 = vunpack.c.h.b16 %v386
      %v409 = vunpack.c.l.b16 %v387
      %v410 = vunpack.c.h.b16 %v387
      %v411 = vunpack.c.l.b16 %v388
      %v412 = vunpack.c.h.b16 %v388
      %v413 = vpack.c.b16 %v407, %v405
      %v414 = vpack.c.b16 %v408, %v406
      %v415 = vpack.c.b16 %v411, %v409
      %v416 = vpack.c.b16 %v412, %v410
      %vm421 = vcmask 261120
      %v423 = vsel %vm421, %v384, 0
      %425 = vmatprep.subr.bf16.mxu0 0
      %426 = vmatpush1.bf16.msra.mxu0 0
      %427 = vmatprep.subr.bf16.mxu0 0
      %428 = vmatpush1.bf16.msra.mxu0 0
      %429 = vmatprep.subr.bf16.mxu0 0
      %430 = vmatpush1.bf16.msra.mxu0 0
      %431 = vmatprep.subr.bf16.mxu0 0
      %432 = vmatpush1.bf16.msra.mxu0 0
      %433 = vmatprep.subr.bf16.mxu0 0
      %434 = vmatpush1.bf16.msra.mxu0 0
      %435 = vmatprep.subr.bf16.mxu0 0
      %436 = vmatpush1.bf16.msra.mxu0 0
      %437 = vmatprep.subr.bf16.mxu0 %v416
      %438 = vmatpush1.bf16.msra.mxu0 %v415
      %439 = vmatprep.subr.bf16.mxu0 %v414
      %440 = vmatpush1.bf16.msra.mxu0 %v413
      %441 = vmatprep.subr.bf16.mxu0 0
      %442 = vmatpush2.bf16.msra.mxu0 0
      %443 = vmatprep.subr.bf16.mxu0 0
      %444 = vmatpush2.bf16.msra.mxu0 0
      %445 = vmatprep.subr.bf16.mxu0 0
      %446 = vmatpush2.bf16.msra.mxu0 0
      %447 = vmatprep.subr.bf16.mxu0 0
      %448 = vmatpush2.bf16.msra.mxu0 0
      %449 = vmatprep.subr.bf16.mxu0 0
      %450 = vmatpush2.bf16.msra.mxu0 0
      %451 = vmatprep.subr.bf16.mxu0 0
      %452 = vmatpush2.bf16.msra.mxu0 0
      %453 = vmatprep.subr.bf16.mxu0 0
      %454 = vmatpush2.bf16.msra.mxu0 0
      %455 = vmatprep.subr.bf16.mxu0 0
      %456 = vmatpush2.bf16.msra.mxu0 0
      %457 = vmatprep.mubr.bf16.mxu0 0
      %458 = vmatmul.mubr.bf16.gmra.mxu0 %v423
      %v459 = vpop.f32.mrf.mxu0
      %v460 = vadd.f32 %v394, %v459
      %v461 = vpop.f32.mrf.mxu0
      %v462 = vadd.f32 %v398, %v461
      %v463 = vpop.f32.mrf.mxu0
      %v464 = vpop.f32.mrf.mxu0
      %465 = vdwg.mxu0
      %v466 = vmax.f32 %v460, 0.0
      %v467 = vmax.f32 %v462, 0.0
      %v468 = vpack.c.bf16 %v466, %v466
      %v469 = vpack.c.bf16 %v467, %v467
      %v470 = vld [vmem:[%s365] sm:$0xff]
      %v471 = vld [vmem:[%s365 + $0x8] sm:$0xff]
      %v472 = vld [vmem:[%s365 + $0x10] sm:$0xff]
      %v473 = vld [vmem:[%s365 + $0x18] sm:$0xff]
      %v474 = vld [vmem:[%s365 + $0x20] sm:$0xff]
      %v475 = vld [vmem:[%s365 + $0x28] sm:$0xff]
      %v476 = vld [vmem:[%s365 + $0x30] sm:$0xff]
      %v477 = vld [vmem:[%s365 + $0x38] sm:$0xff]
      %v478 = vld [vmem:[%s365 + $0x40] sm:$0xff]
      %v479 = vld [vmem:[%s365 + $0x48] sm:$0xff]
      %v480 = vld [vmem:[%s365 + $0x50] sm:$0xff]
      %v481 = vld [vmem:[%s365 + $0x58] sm:$0xff]
      %v482 = vld [vmem:[%s365 + $0x60] sm:$0xff]
      %v483 = vld [vmem:[%s365 + $0x68] sm:$0xff]
      %v484 = vld [vmem:[%s365 + $0x70] sm:$0xff]
      %v485 = vld [vmem:[%s365 + $0x78] sm:$0xff]
      %v486 = vld [vmem:[%s365 + $0x80] sm:$0xff]
      %v487 = vld [vmem:[%s365 + $0x88] sm:$0xff]
      %v488 = vld [vmem:[%s365 + $0x90] sm:$0xff]
      %v489 = vld [vmem:[%s365 + $0x98] sm:$0xff]
      %v490 = vld [vmem:[%s365 + $0xa0] sm:$0xff]
      %v491 = vld [vmem:[%s365 + $0xa8] sm:$0xff]
      %v492 = vld [vmem:[%s365 + $0xb0] sm:$0xff]
      %v493 = vld [vmem:[%s365 + $0xb8] sm:$0xff]
      %v494 = vld [vmem:[%s365 + $0xc0] sm:$0xff]
      %v495 = vld [vmem:[%s365 + $0xc8] sm:$0xff]
      %v496 = vld [vmem:[%s365 + $0xd0] sm:$0xff]
      %v497 = vld [vmem:[%s365 + $0xd8] sm:$0xff]
      %v498 = vld [vmem:[%s365 + $0xe0] sm:$0xff]
      %v499 = vld [vmem:[%s365 + $0xe8] sm:$0xff]
      %v500 = vld [vmem:[%s365 + $0xf0] sm:$0xff]
      %v501 = vld [vmem:[%s365 + $0xf8] sm:$0xff]
      %v502 = vld [vmem:[%s369] sm:$0x3]
      %v504 = vlaneseq
      %v505 = vshrl.u32 %v504, 7
      %v506 = vsub.s32 0, %v505
      %v507 = vrot.slane %v502, %v506
      %v508 = vlaneseq
      %v509 = vshrl.u32 %v508, 7
      %v510 = vsub.s32 1, %v509
      %v511 = vrot.slane %v502, %v510
      %v546 = vunpack.c.l.b16 %v470
      %v547 = vunpack.c.h.b16 %v470
      %v548 = vunpack.c.l.b16 %v471
      %v549 = vunpack.c.h.b16 %v471
      %v550 = vunpack.c.l.b16 %v472
      %v551 = vunpack.c.h.b16 %v472
      %v552 = vunpack.c.l.b16 %v473
      %v553 = vunpack.c.h.b16 %v473
      %v554 = vunpack.c.l.b16 %v474
      %v555 = vunpack.c.h.b16 %v474
      %v556 = vunpack.c.l.b16 %v475
      %v557 = vunpack.c.h.b16 %v475
      %v558 = vunpack.c.l.b16 %v476
      %v559 = vunpack.c.h.b16 %v476
      %v560 = vunpack.c.l.b16 %v477
      %v561 = vunpack.c.h.b16 %v477
      %v562 = vunpack.c.l.b16 %v478
      %v563 = vunpack.c.h.b16 %v478
      %v564 = vunpack.c.l.b16 %v479
      %v565 = vunpack.c.h.b16 %v479
      %v566 = vunpack.c.l.b16 %v480
      %v567 = vunpack.c.h.b16 %v480
      %v568 = vunpack.c.l.b16 %v481
      %v569 = vunpack.c.h.b16 %v481
      %v570 = vunpack.c.l.b16 %v482
      %v571 = vunpack.c.h.b16 %v482
      %v572 = vunpack.c.l.b16 %v483
      %v573 = vunpack.c.h.b16 %v483
      %v574 = vunpack.c.l.b16 %v484
      %v575 = vunpack.c.h.b16 %v484
      %v576 = vunpack.c.l.b16 %v485
      %v577 = vunpack.c.h.b16 %v485
      %v578 = vunpack.c.l.b16 %v486
      %v579 = vunpack.c.h.b16 %v486
      %v580 = vunpack.c.l.b16 %v487
      %v581 = vunpack.c.h.b16 %v487
      %v582 = vunpack.c.l.b16 %v488
      %v583 = vunpack.c.h.b16 %v488
      %v584 = vunpack.c.l.b16 %v489
      %v585 = vunpack.c.h.b16 %v489
      %v586 = vunpack.c.l.b16 %v490
      %v587 = vunpack.c.h.b16 %v490
      %v588 = vunpack.c.l.b16 %v491
      %v589 = vunpack.c.h.b16 %v491
      %v590 = vunpack.c.l.b16 %v492
      %v591 = vunpack.c.h.b16 %v492
      %v592 = vunpack.c.l.b16 %v493
      %v593 = vunpack.c.h.b16 %v493
      %v594 = vunpack.c.l.b16 %v494
      %v595 = vunpack.c.h.b16 %v494
      %v596 = vunpack.c.l.b16 %v495
      %v597 = vunpack.c.h.b16 %v495
      %v598 = vunpack.c.l.b16 %v496
      %v599 = vunpack.c.h.b16 %v496
      %v600 = vunpack.c.l.b16 %v497
      %v601 = vunpack.c.h.b16 %v497
      %v602 = vunpack.c.l.b16 %v498
      %v603 = vunpack.c.h.b16 %v498
      %v604 = vunpack.c.l.b16 %v499
      %v605 = vunpack.c.h.b16 %v499
      %v606 = vunpack.c.l.b16 %v500
      %v607 = vunpack.c.h.b16 %v500
      %v608 = vunpack.c.l.b16 %v501
      %v609 = vunpack.c.h.b16 %v501
      %v610 = vpack.c.b16 %v548, %v546
      %v611 = vpack.c.b16 %v549, %v547
      %v612 = vpack.c.b16 %v552, %v550
      %v613 = vpack.c.b16 %v553, %v551
      %v614 = vpack.c.b16 %v556, %v554
      %v615 = vpack.c.b16 %v557, %v555
      %v616 = vpack.c.b16 %v560, %v558
      %v617 = vpack.c.b16 %v561, %v559
      %v618 = vpack.c.b16 %v564, %v562
      %v619 = vpack.c.b16 %v565, %v563
      %v620 = vpack.c.b16 %v568, %v566
      %v621 = vpack.c.b16 %v569, %v567
      %v622 = vpack.c.b16 %v572, %v570
      %v623 = vpack.c.b16 %v573, %v571
      %v624 = vpack.c.b16 %v576, %v574
      %v625 = vpack.c.b16 %v577, %v575
      %v626 = vpack.c.b16 %v580, %v578
      %v627 = vpack.c.b16 %v581, %v579
      %v628 = vpack.c.b16 %v584, %v582
      %v629 = vpack.c.b16 %v585, %v583
      %v630 = vpack.c.b16 %v588, %v586
      %v631 = vpack.c.b16 %v589, %v587
      %v632 = vpack.c.b16 %v592, %v590
      %v633 = vpack.c.b16 %v593, %v591
      %v634 = vpack.c.b16 %v596, %v594
      %v635 = vpack.c.b16 %v597, %v595
      %v636 = vpack.c.b16 %v600, %v598
      %v637 = vpack.c.b16 %v601, %v599
      %v638 = vpack.c.b16 %v604, %v602
      %v639 = vpack.c.b16 %v605, %v603
      %v640 = vpack.c.b16 %v608, %v606
      %v641 = vpack.c.b16 %v609, %v607
      %674 = vmatprep.subr.bf16.mxu0 %v625
      %675 = vmatpush1.bf16.msra.mxu0 %v624
      %676 = vmatprep.subr.bf16.mxu0 %v623
      %677 = vmatpush1.bf16.msra.mxu0 %v622
      %678 = vmatprep.subr.bf16.mxu0 %v621
      %679 = vmatpush1.bf16.msra.mxu0 %v620
      %680 = vmatprep.subr.bf16.mxu0 %v619
      %681 = vmatpush1.bf16.msra.mxu0 %v618
      %682 = vmatprep.subr.bf16.mxu0 %v617
      %683 = vmatpush1.bf16.msra.mxu0 %v616
      %684 = vmatprep.subr.bf16.mxu0 %v615
      %685 = vmatpush1.bf16.msra.mxu0 %v614
      %686 = vmatprep.subr.bf16.mxu0 %v613
      %687 = vmatpush1.bf16.msra.mxu0 %v612
      %688 = vmatprep.subr.bf16.mxu0 %v611
      %689 = vmatpush1.bf16.msra.mxu0 %v610
      %690 = vmatprep.subr.bf16.mxu0 %v641
      %691 = vmatpush2.bf16.msra.mxu0 %v640
      %692 = vmatprep.subr.bf16.mxu0 %v639
      %693 = vmatpush2.bf16.msra.mxu0 %v638
      %694 = vmatprep.subr.bf16.mxu0 %v637
      %695 = vmatpush2.bf16.msra.mxu0 %v636
      %696 = vmatprep.subr.bf16.mxu0 %v635
      %697 = vmatpush2.bf16.msra.mxu0 %v634
      %698 = vmatprep.subr.bf16.mxu0 %v633
      %699 = vmatpush2.bf16.msra.mxu0 %v632
      %700 = vmatprep.subr.bf16.mxu0 %v631
      %701 = vmatpush2.bf16.msra.mxu0 %v630
      %702 = vmatprep.subr.bf16.mxu0 %v629
      %703 = vmatpush2.bf16.msra.mxu0 %v628
      %704 = vmatprep.subr.bf16.mxu0 %v627
      %705 = vmatpush2.bf16.msra.mxu0 %v626
      %706 = vmatprep.mubr.bf16.mxu0 %v469
      %707 = vmatmul.mubr.bf16.gmra.mxu0 %v468
      %v708 = vpop.f32.mrf.mxu0
      %v709 = vadd.f32 %v507, %v708
      %v710 = vpop.f32.mrf.mxu0
      %v711 = vadd.f32 %v511, %v710
      %v712 = vpop.f32.mrf.mxu0
      %v713 = vpop.f32.mrf.mxu0
      %714 = vdwg.mxu0
      %v715 = vmax.f32 %v709, 0.0
      %v716 = vmax.f32 %v711, 0.0
      %v717 = vpack.c.bf16 %v715, %v715
      %v718 = vpack.c.bf16 %v716, %v716
      %v719 = vld [vmem:[%s374] sm:$0xf]
      %v720 = vld [vmem:[%s374 + $0x4] sm:$0xf]
      %v721 = vld [vmem:[%s374 + $0x8] sm:$0xf]
      %v722 = vld [vmem:[%s374 + $0xc] sm:$0xf]
      %v723 = vld [vmem:[%s374 + $0x10] sm:$0xf]
      %v724 = vld [vmem:[%s374 + $0x14] sm:$0xf]
      %v725 = vld [vmem:[%s374 + $0x18] sm:$0xf]
      %v726 = vld [vmem:[%s374 + $0x1c] sm:$0xf]
      %v727 = vld [vmem:[%s374 + $0x20] sm:$0xf]
      %v728 = vld [vmem:[%s374 + $0x24] sm:$0xf]
      %v729 = vld [vmem:[%s374 + $0x28] sm:$0xf]
      %v730 = vld [vmem:[%s374 + $0x2c] sm:$0xf]
      %v731 = vld [vmem:[%s374 + $0x30] sm:$0xf]
      %v732 = vld [vmem:[%s374 + $0x34] sm:$0xf]
      %v733 = vld [vmem:[%s374 + $0x38] sm:$0xf]
      %v734 = vld [vmem:[%s374 + $0x3c] sm:$0xf]
      %v735 = vld [vmem:[%s374 + $0x40] sm:$0xf]
      %v736 = vld [vmem:[%s374 + $0x44] sm:$0xf]
      %v737 = vld [vmem:[%s374 + $0x48] sm:$0xf]
      %v738 = vld [vmem:[%s374 + $0x4c] sm:$0xf]
      %v739 = vld [vmem:[%s374 + $0x50] sm:$0xf]
      %v740 = vld [vmem:[%s374 + $0x54] sm:$0xf]
      %v741 = vld [vmem:[%s374 + $0x58] sm:$0xf]
      %v742 = vld [vmem:[%s374 + $0x5c] sm:$0xf]
      %v743 = vld [vmem:[%s374 + $0x60] sm:$0xf]
      %v744 = vld [vmem:[%s374 + $0x64] sm:$0xf]
      %v745 = vld [vmem:[%s374 + $0x68] sm:$0xf]
      %v746 = vld [vmem:[%s374 + $0x6c] sm:$0xf]
      %v747 = vld [vmem:[%s374 + $0x70] sm:$0xf]
      %v748 = vld [vmem:[%s374 + $0x74] sm:$0xf]
      %v749 = vld [vmem:[%s374 + $0x78] sm:$0xf]
      %v750 = vld [vmem:[%s374 + $0x7c] sm:$0xf]
      %v751 = vld [vmem:[%s377] sm:$0x1]
      %v753 = vlaneseq
      %v754 = vshrl.u32 %v753, 7
      %v755 = vsub.s32 0, %v754
      %v756 = vrot.slane %v751, %v755
      %v790 = vunpack.c.l.b16 %v719
      %v791 = vunpack.c.l.b16 %v720
      %v792 = vunpack.c.l.b16 %v721
      %v793 = vunpack.c.l.b16 %v722
      %v794 = vunpack.c.l.b16 %v723
      %v795 = vunpack.c.l.b16 %v724
      %v796 = vunpack.c.l.b16 %v725
      %v797 = vunpack.c.l.b16 %v726
      %v798 = vunpack.c.l.b16 %v727
      %v799 = vunpack.c.l.b16 %v728
      %v800 = vunpack.c.l.b16 %v729
      %v801 = vunpack.c.l.b16 %v730
      %v802 = vunpack.c.l.b16 %v731
      %v803 = vunpack.c.l.b16 %v732
      %v804 = vunpack.c.l.b16 %v733
      %v805 = vunpack.c.l.b16 %v734
      %v806 = vunpack.c.l.b16 %v735
      %v807 = vunpack.c.l.b16 %v736
      %v808 = vunpack.c.l.b16 %v737
      %v809 = vunpack.c.l.b16 %v738
      %v810 = vunpack.c.l.b16 %v739
      %v811 = vunpack.c.l.b16 %v740
      %v812 = vunpack.c.l.b16 %v741
      %v813 = vunpack.c.l.b16 %v742
      %v814 = vunpack.c.l.b16 %v743
      %v815 = vunpack.c.l.b16 %v744
      %v816 = vunpack.c.l.b16 %v745
      %v817 = vunpack.c.l.b16 %v746
      %v818 = vunpack.c.l.b16 %v747
      %v819 = vunpack.c.l.b16 %v748
      %v820 = vunpack.c.l.b16 %v749
      %v821 = vunpack.c.l.b16 %v750
      %v822 = vpack.c.b16 %v791, %v790
      %v823 = vpack.c.b16 %v793, %v792
      %v824 = vpack.c.b16 %v795, %v794
      %v825 = vpack.c.b16 %v797, %v796
      %v826 = vpack.c.b16 %v799, %v798
      %v827 = vpack.c.b16 %v801, %v800
      %v828 = vpack.c.b16 %v803, %v802
      %v829 = vpack.c.b16 %v805, %v804
      %v830 = vpack.c.b16 %v807, %v806
      %v831 = vpack.c.b16 %v809, %v808
      %v832 = vpack.c.b16 %v811, %v810
      %v833 = vpack.c.b16 %v813, %v812
      %v834 = vpack.c.b16 %v815, %v814
      %v835 = vpack.c.b16 %v817, %v816
      %v836 = vpack.c.b16 %v819, %v818
      %v837 = vpack.c.b16 %v821, %v820
      %854 = vmatprep.subr.bf16.mxu0 0
      %855 = vmatpush1.bf16.msra.mxu0 %v829
      %856 = vmatprep.subr.bf16.mxu0 0
      %857 = vmatpush1.bf16.msra.mxu0 %v828
      %858 = vmatprep.subr.bf16.mxu0 0
      %859 = vmatpush1.bf16.msra.mxu0 %v827
      %860 = vmatprep.subr.bf16.mxu0 0
      %861 = vmatpush1.bf16.msra.mxu0 %v826
      %862 = vmatprep.subr.bf16.mxu0 0
      %863 = vmatpush1.bf16.msra.mxu0 %v825
      %864 = vmatprep.subr.bf16.mxu0 0
      %865 = vmatpush1.bf16.msra.mxu0 %v824
      %866 = vmatprep.subr.bf16.mxu0 0
      %867 = vmatpush1.bf16.msra.mxu0 %v823
      %868 = vmatprep.subr.bf16.mxu0 0
      %869 = vmatpush1.bf16.msra.mxu0 %v822
      %870 = vmatprep.subr.bf16.mxu0 0
      %871 = vmatpush2.bf16.msra.mxu0 %v837
      %872 = vmatprep.subr.bf16.mxu0 0
      %873 = vmatpush2.bf16.msra.mxu0 %v836
      %874 = vmatprep.subr.bf16.mxu0 0
      %875 = vmatpush2.bf16.msra.mxu0 %v835
      %876 = vmatprep.subr.bf16.mxu0 0
      %877 = vmatpush2.bf16.msra.mxu0 %v834
      %878 = vmatprep.subr.bf16.mxu0 0
      %879 = vmatpush2.bf16.msra.mxu0 %v833
      %880 = vmatprep.subr.bf16.mxu0 0
      %881 = vmatpush2.bf16.msra.mxu0 %v832
      %882 = vmatprep.subr.bf16.mxu0 0
      %883 = vmatpush2.bf16.msra.mxu0 %v831
      %884 = vmatprep.subr.bf16.mxu0 0
      %885 = vmatpush2.bf16.msra.mxu0 %v830
      %886 = vmatprep.mubr.bf16.mxu0 %v718
      %887 = vmatmul.mubr.bf16.gmra.mxu0 %v717
      %v888 = vpop.f32.mrf.mxu0
      %v889 = vadd.f32 %v756, %v888
      %v890 = vpop.f32.mrf.mxu0
      %v891 = vpop.f32.mrf.mxu0
      %v892 = vpop.f32.mrf.mxu0
      %893 = vdwg.mxu0
      %vm894 = vcmask 25600
      %895 = vst.msk [vmem:[%s381] sm:$0x3] %vm894, %v889
      %p896 = scmp.lt.s32.totalorder %s18, 4
      %s897 = scalar_select %p896, %s18, 4
      %s898 = smul.addr %s897, 2
      %s899 = scalar_lea.vmem %s7, %s898
      // Predicated region
      $region49: #{mask_decoder_forward.8} parent=47 // pred_check
        %p900 = pneg %p218
      $region50: #{mask_decoder_forward.8} parent=47 // pred_check_branch
        %902 = sbr.rel (%p900) target = $region52
      $region51: #{mask_decoder_forward.8} parent=47 // pred_region
        _
      $region52: #{mask_decoder_forward.8} parent=47 // pred_fallthru
        _
    $region48: #{mask_decoder_forward.8} parent=5 // pred_fallthru
      _
    %p903 = scmp.le.s32.totalorder 2, %s13
    // Predicated region
    $region53: #{mask_decoder_forward.8} parent=5 // pred_check
      %p904 = pneg %p903
    $region54: #{mask_decoder_forward.8} parent=5 // pred_check_branch
      %906 = sbr.rel (%p904) target = $region56
    $region55: #{mask_decoder_forward.8} parent=5 // pred_region
      %s907 = ssub.s32 %s13, 2
      // Predicated region
      $region57: #{mask_decoder_forward.8} parent=55 // pred_check
        %p908 = pneg %p224
      $region58: #{mask_decoder_forward.8} parent=55 // pred_check_branch
        %910 = sbr.rel (%p908) target = $region60
      $region59: #{mask_decoder_forward.8} parent=55 // pred_region
        %p911 = scmp.lt.s32.totalorder %s19, 4
        %s912 = scalar_select %p911, %s19, 4
        %s913 = smul.addr %s912, 2
        %s914 = scalar_lea.vmem %s7, %s913
      $region60: #{mask_decoder_forward.8} parent=55 // pred_fallthru
        _
    $region56: #{mask_decoder_forward.8} parent=5 // pred_fallthru
      _
  $region6: #{mask_decoder_forward.8} parent=0 // loop_footer
    %s17 = sadd.s32 1, %s13
  $region7: #{mask_decoder_forward.8} parent=0 // loop_footer_branch
    %12 = sbr.rel target = $region3
  $region8: #{mask_decoder_forward.8} parent=0 // loop_exit
    _

// kernel: mask_decoder_forward.7
$region0: #{mask_decoder_forward.7}
  #allocation0 [shape = 'u32[]', space=smem, size = 0x4, offset = 0x4, fixed_abs, tag = 'smem constant byte address 0x4 - core index']
  #allocation1 [shape = 'u32[144,128]{1,0:T(1,128)}', space=vmem, size = 0x12000, scoped, tag = 'internal scratch']
  %s0 = inlined_call_operand.vmem [shape: bf16[2,32,64], index: 0, kind: input, shape index: {}]
  %s1 = inlined_call_operand.vmem [shape: bf16[32,32], index: 1, kind: input, shape index: {}]
  %s2 = inlined_call_operand.vmem [shape: f32[1,32], index: 2, kind: input, shape index: {}]
  %s3 = inlined_call_operand.vmem [shape: f32[32,4], index: 3, kind: input, shape index: {}]
  %s4 = inlined_call_operand.vmem [shape: f32[4,32], index: 4, kind: input, shape index: {}]
  %s5 = inlined_call_operand.vmem [shape: f32[1,32], index: 5, kind: input, shape index: {}]
  %s6 = inlined_call_operand.vmem [shape: f32[1,32], index: 6, kind: input, shape index: {}]
  %s7 = inlined_call_operand.vmem [shape: bf16[32,64], index: 7, kind: input, shape index: {}]
  %s8 = inlined_call_operand.vmem [shape: f32[1,64], index: 8, kind: input, shape index: {}]
  %s9 = inlined_call_operand.vmem [shape: bf16[2,64,64], index: 9, kind: output, shape index: {}]
  %s10 = sld [smem:[#allocation0]]
  $region69: #{mask_decoder_forward.7} parent=0
    _
  %s12 = ssub.s32 1, %s10
  %s13 = scalar_select 0, %s12, %s10
  loop: start=0, step=1, limit=4
  $region2: #{mask_decoder_forward.7} parent=0 // loop_pre_header
    _
  $region3: #{mask_decoder_forward.7} parent=0 // loop_header
    %s15 = sphi 0, %s19
    %p16 = scmp.ge.s32.totalorder %s15, 4
    %s22 = sphi 0, %s34
    %s23 = sphi 0, %s30
    %s24 = sphi 0, %s22
    %s25 = sphi 0, %s23
    %s26 = sphi 0, %s24
    %s27 = sphi 0, %s25
    %s39 = sphi 0, %s41
    %s42 = sphi 0, %s39
    %s43 = sphi 0, %s42
    %s59 = sphi 0, %s43
    %s63 = sphi 0, %s63
    %s65 = sphi 0, %s63
    %s66 = sphi 0, %s65
    %s80 = sphi 0, %s66
    %s84 = sphi 0, %s84
    %s86 = sphi 0, %s84
    %s87 = sphi 0, %s86
    %s101 = sphi 0, %s87
    %s105 = sphi 0, %s105
    %s107 = sphi 0, %s105
    %s108 = sphi 0, %s107
    %s122 = sphi 0, %s108
    %s126 = sphi 0, %s126
    %s128 = sphi 0, %s126
    %s129 = sphi 0, %s128
    %s143 = sphi 0, %s129
    %s147 = sphi 0, %s147
    %s149 = sphi 0, %s147
    %s150 = sphi 0, %s149
    %s164 = sphi 0, %s150
    %s168 = sphi 0, %s168
    %s170 = sphi 0, %s168
    %s171 = sphi 0, %s170
    %s185 = sphi 0, %s171
    %s189 = sphi 0, %s189
    %s191 = sphi 0, %s189
    %s192 = sphi 0, %s191
    %s206 = sphi 0, %s192
    %s210 = sphi 0, %s210
    %s212 = sphi 0, %s210
    %s213 = sphi 0, %s212
    %s227 = sphi 0, %s213
    %s235 = sphi 0, %s237
    %s238 = sphi 0, %s235
    %s239 = sphi 0, %s238
    %s255 = sphi 0, %s239
  $region4: #{mask_decoder_forward.7} parent=0 // loop_header_branch
    %18 = sbr.rel (%p16) target = $region8
  $region5: #{mask_decoder_forward.7} parent=0 // loop_body
    %s20 = ssub.s32 %s15, 1
    %s21 = ssub.s32 %s15, 2
    %s28 = sadd.s32 1, %s23
    %p29 = scmp.ge.s32.totalorder %s28, 1
    %s30 = scalar_select %p29, 0, %s28
    %s31 = sadd.s32 1, %s22
    %s32 = scalar_select %p29, %s31, %s22
    %p33 = scmp.ge.s32.totalorder %s32, 2
    %s34 = scalar_select %p33, 0, %s32
    %s35 = ssub.s32 %s22, %s34
    %s36 = ssub.s32 %s23, %s30
    %s37 = sor.u32 %s35, %s36
    %p38 = scmp.eq.s32.totalorder %s37, 0
    %s40 = sadd.s32 %s39, 1
    %s41 = scalar_select %p38, %s39, %s40
    %p44 = pneg %p38
    %p45 = scmp.eq.s32.totalorder %s15, 1
    %p46 = por %p44, %p45
    %p47 = scmp.ne.s32.totalorder %s39, %s42
    %p48 = scmp.eq.s32.totalorder %s15, 0
    %p49 = por %p47, %p48
    %p50 = scmp.ne.s32.totalorder %s39, %s42
    %p51 = scmp.eq.s32.totalorder %s20, 1
    %p52 = por %p50, %p51
    %p53 = scmp.ne.s32.totalorder %s42, %s43
    %p54 = scmp.eq.s32.totalorder %s20, 0
    %p55 = por %p53, %p54
    %p56 = scmp.ne.s32.totalorder %s42, %s43
    %p57 = scmp.eq.s32.totalorder %s21, 1
    %p58 = por %p56, %p57
    %p60 = scmp.ne.s32.totalorder %s43, %s59
    %p61 = scmp.eq.s32.totalorder %s21, 0
    %p62 = por %p60, %p61
    %s64 = sadd.s32 %s63, 1
    %p67 = scmp.eq.s32.totalorder %s15, 1
    %p68 = scmp.ne.s32.totalorder %s63, %s65
    %p69 = scmp.eq.s32.totalorder %s15, 0
    %p70 = por %p68, %p69
    %p71 = scmp.ne.s32.totalorder %s63, %s65
    %p72 = scmp.eq.s32.totalorder %s20, 1
    %p73 = por %p71, %p72
    %p74 = scmp.ne.s32.totalorder %s65, %s66
    %p75 = scmp.eq.s32.totalorder %s20, 0
    %p76 = por %p74, %p75
    %p77 = scmp.ne.s32.totalorder %s65, %s66
    %p78 = scmp.eq.s32.totalorder %s21, 1
    %p79 = por %p77, %p78
    %p81 = scmp.ne.s32.totalorder %s66, %s80
    %p82 = scmp.eq.s32.totalorder %s21, 0
    %p83 = por %p81, %p82
    %s85 = sadd.s32 %s84, 1
    %p88 = scmp.eq.s32.totalorder %s15, 1
    %p89 = scmp.ne.s32.totalorder %s84, %s86
    %p90 = scmp.eq.s32.totalorder %s15, 0
    %p91 = por %p89, %p90
    %p92 = scmp.ne.s32.totalorder %s84, %s86
    %p93 = scmp.eq.s32.totalorder %s20, 1
    %p94 = por %p92, %p93
    %p95 = scmp.ne.s32.totalorder %s86, %s87
    %p96 = scmp.eq.s32.totalorder %s20, 0
    %p97 = por %p95, %p96
    %p98 = scmp.ne.s32.totalorder %s86, %s87
    %p99 = scmp.eq.s32.totalorder %s21, 1
    %p100 = por %p98, %p99
    %p102 = scmp.ne.s32.totalorder %s87, %s101
    %p103 = scmp.eq.s32.totalorder %s21, 0
    %p104 = por %p102, %p103
    %s106 = sadd.s32 %s105, 1
    %p109 = scmp.eq.s32.totalorder %s15, 1
    %p110 = scmp.ne.s32.totalorder %s105, %s107
    %p111 = scmp.eq.s32.totalorder %s15, 0
    %p112 = por %p110, %p111
    %p113 = scmp.ne.s32.totalorder %s105, %s107
    %p114 = scmp.eq.s32.totalorder %s20, 1
    %p115 = por %p113, %p114
    %p116 = scmp.ne.s32.totalorder %s107, %s108
    %p117 = scmp.eq.s32.totalorder %s20, 0
    %p118 = por %p116, %p117
    %p119 = scmp.ne.s32.totalorder %s107, %s108
    %p120 = scmp.eq.s32.totalorder %s21, 1
    %p121 = por %p119, %p120
    %p123 = scmp.ne.s32.totalorder %s108, %s122
    %p124 = scmp.eq.s32.totalorder %s21, 0
    %p125 = por %p123, %p124
    %s127 = sadd.s32 %s126, 1
    %p130 = scmp.eq.s32.totalorder %s15, 1
    %p131 = scmp.ne.s32.totalorder %s126, %s128
    %p132 = scmp.eq.s32.totalorder %s15, 0
    %p133 = por %p131, %p132
    %p134 = scmp.ne.s32.totalorder %s126, %s128
    %p135 = scmp.eq.s32.totalorder %s20, 1
    %p136 = por %p134, %p135
    %p137 = scmp.ne.s32.totalorder %s128, %s129
    %p138 = scmp.eq.s32.totalorder %s20, 0
    %p139 = por %p137, %p138
    %p140 = scmp.ne.s32.totalorder %s128, %s129
    %p141 = scmp.eq.s32.totalorder %s21, 1
    %p142 = por %p140, %p141
    %p144 = scmp.ne.s32.totalorder %s129, %s143
    %p145 = scmp.eq.s32.totalorder %s21, 0
    %p146 = por %p144, %p145
    %s148 = sadd.s32 %s147, 1
    %p151 = scmp.eq.s32.totalorder %s15, 1
    %p152 = scmp.ne.s32.totalorder %s147, %s149
    %p153 = scmp.eq.s32.totalorder %s15, 0
    %p154 = por %p152, %p153
    %p155 = scmp.ne.s32.totalorder %s147, %s149
    %p156 = scmp.eq.s32.totalorder %s20, 1
    %p157 = por %p155, %p156
    %p158 = scmp.ne.s32.totalorder %s149, %s150
    %p159 = scmp.eq.s32.totalorder %s20, 0
    %p160 = por %p158, %p159
    %p161 = scmp.ne.s32.totalorder %s149, %s150
    %p162 = scmp.eq.s32.totalorder %s21, 1
    %p163 = por %p161, %p162
    %p165 = scmp.ne.s32.totalorder %s150, %s164
    %p166 = scmp.eq.s32.totalorder %s21, 0
    %p167 = por %p165, %p166
    %s169 = sadd.s32 %s168, 1
    %p172 = scmp.eq.s32.totalorder %s15, 1
    %p173 = scmp.ne.s32.totalorder %s168, %s170
    %p174 = scmp.eq.s32.totalorder %s15, 0
    %p175 = por %p173, %p174
    %p176 = scmp.ne.s32.totalorder %s168, %s170
    %p177 = scmp.eq.s32.totalorder %s20, 1
    %p178 = por %p176, %p177
    %p179 = scmp.ne.s32.totalorder %s170, %s171
    %p180 = scmp.eq.s32.totalorder %s20, 0
    %p181 = por %p179, %p180
    %p182 = scmp.ne.s32.totalorder %s170, %s171
    %p183 = scmp.eq.s32.totalorder %s21, 1
    %p184 = por %p182, %p183
    %p186 = scmp.ne.s32.totalorder %s171, %s185
    %p187 = scmp.eq.s32.totalorder %s21, 0
    %p188 = por %p186, %p187
    %s190 = sadd.s32 %s189, 1
    %p193 = scmp.eq.s32.totalorder %s15, 1
    %p194 = scmp.ne.s32.totalorder %s189, %s191
    %p195 = scmp.eq.s32.totalorder %s15, 0
    %p196 = por %p194, %p195
    %p197 = scmp.ne.s32.totalorder %s189, %s191
    %p198 = scmp.eq.s32.totalorder %s20, 1
    %p199 = por %p197, %p198
    %p200 = scmp.ne.s32.totalorder %s191, %s192
    %p201 = scmp.eq.s32.totalorder %s20, 0
    %p202 = por %p200, %p201
    %p203 = scmp.ne.s32.totalorder %s191, %s192
    %p204 = scmp.eq.s32.totalorder %s21, 1
    %p205 = por %p203, %p204
    %p207 = scmp.ne.s32.totalorder %s192, %s206
    %p208 = scmp.eq.s32.totalorder %s21, 0
    %p209 = por %p207, %p208
    %s211 = sadd.s32 %s210, 1
    %p214 = scmp.eq.s32.totalorder %s15, 1
    %p215 = scmp.ne.s32.totalorder %s210, %s212
    %p216 = scmp.eq.s32.totalorder %s15, 0
    %p217 = por %p215, %p216
    %p218 = scmp.ne.s32.totalorder %s210, %s212
    %p219 = scmp.eq.s32.totalorder %s20, 1
    %p220 = por %p218, %p219
    %p221 = scmp.ne.s32.totalorder %s212, %s213
    %p222 = scmp.eq.s32.totalorder %s20, 0
    %p223 = por %p221, %p222
    %p224 = scmp.ne.s32.totalorder %s212, %s213
    %p225 = scmp.eq.s32.totalorder %s21, 1
    %p226 = por %p224, %p225
    %p228 = scmp.ne.s32.totalorder %s213, %s227
    %p229 = scmp.eq.s32.totalorder %s21, 0
    %p230 = por %p228, %p229
    %s231 = ssub.s32 %s22, %s34
    %s232 = ssub.s32 %s23, %s30
    %s233 = sor.u32 %s231, %s232
    %p234 = scmp.eq.s32.totalorder %s233, 0
    %s236 = sadd.s32 %s235, 1
    %s237 = scalar_select %p234, %s235, %s236
    %p240 = pneg %p234
    %p241 = scmp.eq.s32.totalorder %s15, 1
    %p242 = por %p240, %p241
    %p243 = scmp.ne.s32.totalorder %s235, %s238
    %p244 = scmp.eq.s32.totalorder %s15, 0
    %p245 = por %p243, %p244
    %p246 = scmp.ne.s32.totalorder %s235, %s238
    %p247 = scmp.eq.s32.totalorder %s20, 1
    %p248 = por %p246, %p247
    %p249 = scmp.ne.s32.totalorder %s238, %s239
    %p250 = scmp.eq.s32.totalorder %s20, 0
    %p251 = por %p249, %p250
    %p252 = scmp.ne.s32.totalorder %s238, %s239
    %p253 = scmp.eq.s32.totalorder %s21, 1
    %p254 = por %p252, %p253
    %p256 = scmp.ne.s32.totalorder %s239, %s255
    %p257 = scmp.eq.s32.totalorder %s21, 0
    %p258 = por %p256, %p257
    %p259 = scmp.le.s32.totalorder 1, %s15
    %p260 = scmp.lt.s32.totalorder %s15, 3
    %p261 = pnand %p259, %p260
    %p262 = pneg %p261
    // Predicated region
    $region9: #{mask_decoder_forward.7} parent=5 // pred_check
      _
    $region10: #{mask_decoder_forward.7} parent=5 // pred_check_branch
      %264 = sbr.rel (%p261) target = $region12
    $region11: #{mask_decoder_forward.7} parent=5 // pred_region
      %s265 = ssub.s32 %s15, 1
      // Predicated region
      $region13: #{mask_decoder_forward.7} parent=11 // pred_check
        %p266 = pneg %p76
      $region14: #{mask_decoder_forward.7} parent=11 // pred_check_branch
        %268 = sbr.rel (%p266) target = $region16
      $region15: #{mask_decoder_forward.7} parent=11 // pred_region
        _
      $region16: #{mask_decoder_forward.7} parent=11 // pred_fallthru
        _
      // Predicated region
      $region17: #{mask_decoder_forward.7} parent=11 // pred_check
        %p269 = pneg %p97
      $region18: #{mask_decoder_forward.7} parent=11 // pred_check_branch
        %271 = sbr.rel (%p269) target = $region20
      $region19: #{mask_decoder_forward.7} parent=11 // pred_region
        _
      $region20: #{mask_decoder_forward.7} parent=11 // pred_fallthru
        _
      // Predicated region
      $region21: #{mask_decoder_forward.7} parent=11 // pred_check
        %p272 = pneg %p118
      $region22: #{mask_decoder_forward.7} parent=11 // pred_check_branch
        %274 = sbr.rel (%p272) target = $region24
      $region23: #{mask_decoder_forward.7} parent=11 // pred_region
        _
      $region24: #{mask_decoder_forward.7} parent=11 // pred_fallthru
        _
      // Predicated region
      $region25: #{mask_decoder_forward.7} parent=11 // pred_check
        %p275 = pneg %p139
      $region26: #{mask_decoder_forward.7} parent=11 // pred_check_branch
        %277 = sbr.rel (%p275) target = $region28
      $region27: #{mask_decoder_forward.7} parent=11 // pred_region
        _
      $region28: #{mask_decoder_forward.7} parent=11 // pred_fallthru
        _
      // Predicated region
      $region29: #{mask_decoder_forward.7} parent=11 // pred_check
        %p278 = pneg %p160
      $region30: #{mask_decoder_forward.7} parent=11 // pred_check_branch
        %280 = sbr.rel (%p278) target = $region32
      $region31: #{mask_decoder_forward.7} parent=11 // pred_region
        _
      $region32: #{mask_decoder_forward.7} parent=11 // pred_fallthru
        _
      // Predicated region
      $region33: #{mask_decoder_forward.7} parent=11 // pred_check
        %p281 = pneg %p181
      $region34: #{mask_decoder_forward.7} parent=11 // pred_check_branch
        %283 = sbr.rel (%p281) target = $region36
      $region35: #{mask_decoder_forward.7} parent=11 // pred_region
        _
      $region36: #{mask_decoder_forward.7} parent=11 // pred_fallthru
        _
      // Predicated region
      $region37: #{mask_decoder_forward.7} parent=11 // pred_check
        %p284 = pneg %p202
      $region38: #{mask_decoder_forward.7} parent=11 // pred_check_branch
        %286 = sbr.rel (%p284) target = $region40
      $region39: #{mask_decoder_forward.7} parent=11 // pred_region
        _
      $region40: #{mask_decoder_forward.7} parent=11 // pred_fallthru
        _
      // Predicated region
      $region41: #{mask_decoder_forward.7} parent=11 // pred_check
        %p287 = pneg %p223
      $region42: #{mask_decoder_forward.7} parent=11 // pred_check_branch
        %289 = sbr.rel (%p287) target = $region44
      $region43: #{mask_decoder_forward.7} parent=11 // pred_region
        _
      $region44: #{mask_decoder_forward.7} parent=11 // pred_fallthru
        _
    $region12: #{mask_decoder_forward.7} parent=5 // pred_fallthru
      _
    %p290 = scmp.lt.s32.totalorder %s15, 2
    // Predicated region
    $region45: #{mask_decoder_forward.7} parent=5 // pred_check
      %p291 = pneg %p290
    $region46: #{mask_decoder_forward.7} parent=5 // pred_check_branch
      %293 = sbr.rel (%p291) target = $region48
    $region47: #{mask_decoder_forward.7} parent=5 // pred_region
      // Predicated region
      $region49: #{mask_decoder_forward.7} parent=47 // pred_check
        %p294 = pneg %p49
      $region50: #{mask_decoder_forward.7} parent=47 // pred_check_branch
        %296 = sbr.rel (%p294) target = $region52
      $region51: #{mask_decoder_forward.7} parent=47 // pred_region
        %p297 = scmp.lt.s32.totalorder %s22, 1
        %s298 = scalar_select %p297, %s22, 1
        %p299 = scmp.lt.s32.totalorder %s23, 0
        %s300 = scalar_select %p299, %s23, 0
        %s301 = smul.addr %s298, 4
        %s302 = sadd.s32 %s300, %s301
        %s303 = smul.addr %s302, 4
        %s304 = scalar_lea.vmem %s0, %s303
      $region52: #{mask_decoder_forward.7} parent=47 // pred_fallthru
        _
    $region48: #{mask_decoder_forward.7} parent=5 // pred_fallthru
      _
    %p305 = scmp.le.s32.totalorder 1, %s15
    %p306 = scmp.lt.s32.totalorder %s15, 3
    %p307 = pnand %p305, %p306
    %p308 = pneg %p307
    // Predicated region
    $region53: #{mask_decoder_forward.7} parent=5 // pred_check
      _
    $region54: #{mask_decoder_forward.7} parent=5 // pred_check_branch
      %310 = sbr.rel (%p307) target = $region56
    $region55: #{mask_decoder_forward.7} parent=5 // pred_region
      %s311 = ssub.s32 %s15, 1
      %p312 = scmp.lt.s32.totalorder %s24, 1
      %s313 = scalar_select %p312, %s24, 1
      %p314 = scmp.lt.s32.totalorder %s25, 0
      %s315 = scalar_select %p314, %s25, 0
      %s316 = smul.addr %s313, 4
      %s317 = sadd.s32 %s315, %s316
      %s318 = smul.addr %s317, 4
      %s319 = scalar_lea.vmem %s0, %s318
      %p320 = pneg %p55
      %p321 = pneg %p52
      %p322 = pneg %p76
      %p323 = pneg %p73
      %p324 = pneg %p97
      %p325 = pneg %p94
      %p326 = pneg %p118
      %p327 = pneg %p115
      %p328 = pneg %p139
      %p329 = pneg %p136
      %p330 = pneg %p160
      %p331 = pneg %p157
      %p332 = pneg %p181
      %p333 = pneg %p178
      %p334 = pneg %p202
      %p335 = pneg %p199
      %p336 = pneg %p223
      %p337 = pneg %p220
      %p338 = pneg %p251
      %p339 = pneg %p248
      %s340 = smul.u32 8, %s25
      %p341 = scmp.lt.s32.totalorder %s24, 1
      %s342 = scalar_select %p341, %s24, 1
      %p343 = scmp.lt.s32.totalorder %s340, 7
      %s344 = scalar_select %p343, %s340, 7
      %s345 = smul.addr %s342, 8
      %s346 = sadd.s32 %s344, %s345
      %s347 = smul.addr %s346, 4
      %s348 = scalar_lea.vmem %s9, %s347
      %p349 = scmp.lt.s32.totalorder %s24, 1
      %s350 = scalar_select %p349, %s24, 1
      %p351 = scmp.lt.s32.totalorder %s25, 0
      %s352 = scalar_select %p351, %s25, 0
      %s353 = smul.addr %s350, 4
      %s354 = sadd.s32 %s352, %s353
      %s355 = smul.addr %s354, 4
      %s356 = scalar_lea.vmem %s0, %s355
      %s357 = smul.u32 8, %s25
      %p358 = scmp.lt.s32.totalorder %s24, 1
      %s359 = scalar_select %p358, %s24, 1
      %p360 = scmp.lt.s32.totalorder %s357, 7
      %s361 = scalar_select %p360, %s357, 7
      %s362 = smul.addr %s359, 8
      %s363 = sadd.s32 %s361, %s362
      %s364 = smul.addr %s363, 4
      %s365 = scalar_lea.vmem %s9, %s364
      %s366 = smul.u32 8, %s25
      %v368 = vld [vmem:[%s356] sm:$0xf]
      %v369 = vld [vmem:[%s356 + $0x4] sm:$0xf]
      %v370 = vld [vmem:[%s356 + $0x8] sm:$0xf]
      %v371 = vld [vmem:[%s356 + $0xc] sm:$0xf]
      %v376 = vunpack.c.l.b16 %v368
      %v377 = vunpack.c.l.b16 %v369
      %v378 = vunpack.c.l.b16 %v370
      %v379 = vunpack.c.l.b16 %v371
      %v380 = vpack.c.b16 %v377, %v376
      %v381 = vpack.c.b16 %v379, %v378
      %384 = vxpose.xlu0.c.b16.start [1/8] %v380, 128
      %385 = vxpose.xlu0.c.b16.cont [2/8] %v381, 128
      %386 = vxpose.xlu0.c.b16.cont [3/8] 0, 128
      %387 = vxpose.xlu0.c.b16.cont [4/8] 0, 128
      %388 = vxpose.xlu0.c.b16.cont [5/8] 0, 128
      %389 = vxpose.xlu0.c.b16.cont [6/8] 0, 128
      %390 = vxpose.xlu0.c.b16.cont [7/8] 0, 128
      %391 = vxpose.xlu0.c.b16.end [8/8] 0, 128
      %v392 = vpop.trf.xlu0
      %v393 = vpop.trf.xlu0
      %v394 = vpop.trf.xlu0
      %v395 = vpop.trf.xlu0
      %v396 = vpop.trf.xlu0
      %v397 = vpop.trf.xlu0
      %v398 = vpop.trf.xlu0
      %v399 = vpop.trf.xlu0
      %v400 = vld [vmem:[%s1] sm:$0xf]
      %v401 = vld [vmem:[%s1 + $0x4] sm:$0xf]
      %v402 = vld [vmem:[%s1 + $0x8] sm:$0xf]
      %v403 = vld [vmem:[%s1 + $0xc] sm:$0xf]
      %v404 = vld [vmem:[%s2] sm:$0x1]
      %v406 = vlaneseq
      %v407 = vshrl.u32 %v406, 7
      %v408 = vsub.s32 0, %v407
      %v409 = vrot.slane %v404, %v408
      %v415 = vunpack.c.l.b16 %v400
      %v416 = vunpack.c.l.b16 %v401
      %v417 = vunpack.c.l.b16 %v402
      %v418 = vunpack.c.l.b16 %v403
      %v419 = vpack.c.b16 %v416, %v415
      %v420 = vpack.c.b16 %v418, %v417
      %vm423 = vcmask 261120
      %v425 = vsel %vm423, %v392, 0
      %v428 = vsel %vm423, %v393, 0
      %v431 = vsel %vm423, %v394, 0
      %v434 = vsel %vm423, %v395, 0
      %436 = vmatprep.subr.bf16.mxu0 0
      %437 = vmatpush1.bf16.msra.mxu0 0
      %438 = vmatprep.subr.bf16.mxu0 0
      %439 = vmatpush1.bf16.msra.mxu0 0
      %440 = vmatprep.subr.bf16.mxu0 0
      %441 = vmatpush1.bf16.msra.mxu0 0
      %442 = vmatprep.subr.bf16.mxu0 0
      %443 = vmatpush1.bf16.msra.mxu0 0
      %444 = vmatprep.subr.bf16.mxu0 0
      %445 = vmatpush1.bf16.msra.mxu0 0
      %446 = vmatprep.subr.bf16.mxu0 0
      %447 = vmatpush1.bf16.msra.mxu0 0
      %448 = vmatprep.subr.bf16.mxu0 0
      %449 = vmatpush1.bf16.msra.mxu0 %v420
      %450 = vmatprep.subr.bf16.mxu0 0
      %451 = vmatpush1.bf16.msra.mxu0 %v419
      %452 = vmatprep.subr.bf16.mxu0 0
      %453 = vmatpush2.bf16.msra.mxu0 0
      %454 = vmatprep.subr.bf16.mxu0 0
      %455 = vmatpush2.bf16.msra.mxu0 0
      %456 = vmatprep.subr.bf16.mxu0 0
      %457 = vmatpush2.bf16.msra.mxu0 0
      %458 = vmatprep.subr.bf16.mxu0 0
      %459 = vmatpush2.bf16.msra.mxu0 0
      %460 = vmatprep.subr.bf16.mxu0 0
      %461 = vmatpush2.bf16.msra.mxu0 0
      %462 = vmatprep.subr.bf16.mxu0 0
      %463 = vmatpush2.bf16.msra.mxu0 0
      %464 = vmatprep.subr.bf16.mxu0 0
      %465 = vmatpush2.bf16.msra.mxu0 0
      %466 = vmatprep.subr.bf16.mxu0 0
      %467 = vmatpush2.bf16.msra.mxu0 0
      %468 = vmatprep.mubr.bf16.mxu0 0
      %469 = vmatmul.mubr.bf16.gmra.mxu0 %v425
      %v470 = vpop.f32.mrf.mxu0
      %v471 = vadd.f32 %v409, %v470
      %v472 = vpop.f32.mrf.mxu0
      %v473 = vpop.f32.mrf.mxu0
      %v474 = vadd.f32 %v409, %v473
      %v475 = vpop.f32.mrf.mxu0
      %476 = vmatprep.mubr.bf16.mxu0 0
      %477 = vmatmul.mubr.bf16.gmra.mxu0 %v428
      %v478 = vpop.f32.mrf.mxu0
      %v479 = vadd.f32 %v409, %v478
      %v480 = vpop.f32.mrf.mxu0
      %v481 = vpop.f32.mrf.mxu0
      %v482 = vadd.f32 %v409, %v481
      %v483 = vpop.f32.mrf.mxu0
      %484 = vmatprep.mubr.bf16.mxu0 0
      %485 = vmatmul.mubr.bf16.gmra.mxu0 %v431
      %v486 = vpop.f32.mrf.mxu0
      %v487 = vadd.f32 %v409, %v486
      %v488 = vpop.f32.mrf.mxu0
      %v489 = vpop.f32.mrf.mxu0
      %v490 = vadd.f32 %v409, %v489
      %v491 = vpop.f32.mrf.mxu0
      %492 = vmatprep.mubr.bf16.mxu0 0
      %493 = vmatmul.mubr.bf16.gmra.mxu0 %v434
      %v494 = vpop.f32.mrf.mxu0
      %v495 = vadd.f32 %v409, %v494
      %v496 = vpop.f32.mrf.mxu0
      %v497 = vpop.f32.mrf.mxu0
      %v498 = vadd.f32 %v409, %v497
      %v499 = vpop.f32.mrf.mxu0
      %500 = vdwg.mxu0
      %v501 = vld [vmem:[%s3] sm:$0xff]
      %v502 = vld [vmem:[%s3 + $0x8] sm:$0xff]
      %v503 = vld [vmem:[%s3 + $0x10] sm:$0xff]
      %v504 = vld [vmem:[%s3 + $0x18] sm:$0xff]
      %v506 = vsel %vm423, %v471, 0
      %v509 = vsel %vm423, %v474, 0
      %v512 = vsel %vm423, %v479, 0
      %v515 = vsel %vm423, %v482, 0
      %v518 = vsel %vm423, %v487, 0
      %v521 = vsel %vm423, %v490, 0
      %v524 = vsel %vm423, %v495, 0
      %v527 = vsel %vm423, %v498, 0
      %529 = vmatprep.subr.mxu0 0.0
      %530 = vmatpush1.msra.mxu0 0.0
      %531 = vmatprep.subr.mxu0 0.0
      %532 = vmatpush1.msra.mxu0 0.0
      %533 = vmatprep.subr.mxu0 0.0
      %534 = vmatpush1.msra.mxu0 0.0
      %535 = vmatprep.subr.mxu0 0.0
      %536 = vmatpush1.msra.mxu0 0.0
      %537 = vmatprep.subr.mxu0 0.0
      %538 = vmatpush1.msra.mxu0 0.0
      %539 = vmatprep.subr.mxu0 0.0
      %540 = vmatpush1.msra.mxu0 0.0
      %541 = vmatprep.subr.mxu0 0.0
      %542 = vmatpush1.msra.mxu0 0.0
      %543 = vmatprep.subr.mxu0 0.0
      %544 = vmatpush1.msra.mxu0 0.0
      %545 = vmatprep.subr.mxu0 0.0
      %546 = vmatpush1.msra.mxu0 0.0
      %547 = vmatprep.subr.mxu0 0.0
      %548 = vmatpush1.msra.mxu0 0.0
      %549 = vmatprep.subr.mxu0 0.0
      %550 = vmatpush1.msra.mxu0 0.0
      %551 = vmatprep.subr.mxu0 0.0
      %552 = vmatpush1.msra.mxu0 0.0
      %553 = vmatprep.subr.mxu0 0.0
      %554 = vmatpush1.msra.mxu0 %v504
      %555 = vmatprep.subr.mxu0 0.0
      %556 = vmatpush1.msra.mxu0 %v503
      %557 = vmatprep.subr.mxu0 0.0
      %558 = vmatpush1.msra.mxu0 %v502
      %559 = vmatprep.subr.mxu0 0.0
      %560 = vmatpush1.msra.mxu0 %v501
      %561 = vmatprep.subr.mxu0 0.0
      %562 = vmatpush2.msra.mxu0 0.0
      %563 = vmatprep.subr.mxu0 0.0
      %564 = vmatpush2.msra.mxu0 0.0
      %565 = vmatprep.subr.mxu0 0.0
      %566 = vmatpush2.msra.mxu0 0.0
      %567 = vmatprep.subr.mxu0 0.0
      %568 = vmatpush2.msra.mxu0 0.0
      %569 = vmatprep.subr.mxu0 0.0
      %570 = vmatpush2.msra.mxu0 0.0
      %571 = vmatprep.subr.mxu0 0.0
      %572 = vmatpush2.msra.mxu0 0.0
      %573 = vmatprep.subr.mxu0 0.0
      %574 = vmatpush2.msra.mxu0 0.0
      %575 = vmatprep.subr.mxu0 0.0
      %576 = vmatpush2.msra.mxu0 0.0
      %577 = vmatprep.subr.mxu0 0.0
      %578 = vmatpush2.msra.mxu0 0.0
      %579 = vmatprep.subr.mxu0 0.0
      %580 = vmatpush2.msra.mxu0 0.0
      %581 = vmatprep.subr.mxu0 0.0
      %582 = vmatpush2.msra.mxu0 0.0
      %583 = vmatprep.subr.mxu0 0.0
      %584 = vmatpush2.msra.mxu0 0.0
      %585 = vmatprep.subr.mxu0 0.0
      %586 = vmatpush2.msra.mxu0 0.0
      %587 = vmatprep.subr.mxu0 0.0
      %588 = vmatpush2.msra.mxu0 0.0
      %589 = vmatprep.subr.mxu0 0.0
      %590 = vmatpush2.msra.mxu0 0.0
      %591 = vmatprep.subr.mxu0 0.0
      %592 = vmatpush2.msra.mxu0 0.0
      %593 = vmatprep.mubr.f32.mxu0 0.0
      %594 = vmatmul.mubr.f32.gmra.mxu0 %v506
      %v595 = vpop.f32.mrf.mxu0
      %v596 = vadd.f32 0.0, %v595
      %v597 = vpop.f32.mrf.mxu0
      %598 = vmatprep.mubr.f32.mxu0 0.0
      %599 = vmatmul.mubr.f32.gmra.mxu0 %v509
      %v600 = vpop.f32.mrf.mxu0
      %v601 = vadd.f32 0.0, %v600
      %v602 = vpop.f32.mrf.mxu0
      %603 = vmatprep.mubr.f32.mxu0 0.0
      %604 = vmatmul.mubr.f32.gmra.mxu0 %v512
      %v605 = vpop.f32.mrf.mxu0
      %v606 = vadd.f32 0.0, %v605
      %v607 = vpop.f32.mrf.mxu0
      %608 = vmatprep.mubr.f32.mxu0 0.0
      %609 = vmatmul.mubr.f32.gmra.mxu0 %v515
      %v610 = vpop.f32.mrf.mxu0
      %v611 = vadd.f32 0.0, %v610
      %v612 = vpop.f32.mrf.mxu0
      %613 = vmatprep.mubr.f32.mxu0 0.0
      %614 = vmatmul.mubr.f32.gmra.mxu0 %v518
      %v615 = vpop.f32.mrf.mxu0
      %v616 = vadd.f32 0.0, %v615
      %v617 = vpop.f32.mrf.mxu0
      %618 = vmatprep.mubr.f32.mxu0 0.0
      %619 = vmatmul.mubr.f32.gmra.mxu0 %v521
      %v620 = vpop.f32.mrf.mxu0
      %v621 = vadd.f32 0.0, %v620
      %v622 = vpop.f32.mrf.mxu0
      %623 = vmatprep.mubr.f32.mxu0 0.0
      %624 = vmatmul.mubr.f32.gmra.mxu0 %v524
      %v625 = vpop.f32.mrf.mxu0
      %v626 = vadd.f32 0.0, %v625
      %v627 = vpop.f32.mrf.mxu0
      %628 = vmatprep.mubr.f32.mxu0 0.0
      %629 = vmatmul.mubr.f32.gmra.mxu0 %v527
      %v630 = vpop.f32.mrf.mxu0
      %v631 = vadd.f32 0.0, %v630
      %v632 = vpop.f32.mrf.mxu0
      %633 = vdwg.mxu0
      %v634 = vld [vmem:[%s4] sm:$0xf]
      %vm635 = vcmask 31744
      %v637 = vsel %vm635, %v596, 0
      %v640 = vsel %vm635, %v601, 0
      %v643 = vsel %vm635, %v606, 0
      %v646 = vsel %vm635, %v611, 0
      %v649 = vsel %vm635, %v616, 0
      %v652 = vsel %vm635, %v621, 0
      %v655 = vsel %vm635, %v626, 0
      %v658 = vsel %vm635, %v631, 0
      %vm660 = vcmask 1043456
      %v662 = vsel %vm660, %v634, 0
      %664 = vmatprep.subr.mxu0 0.0
      %665 = vmatpush1.msra.mxu0 0.0
      %666 = vmatprep.subr.mxu0 0.0
      %667 = vmatpush1.msra.mxu0 0.0
      %668 = vmatprep.subr.mxu0 0.0
      %669 = vmatpush1.msra.mxu0 0.0
      %670 = vmatprep.subr.mxu0 0.0
      %671 = vmatpush1.msra.mxu0 0.0
      %672 = vmatprep.subr.mxu0 0.0
      %673 = vmatpush1.msra.mxu0 0.0
      %674 = vmatprep.subr.mxu0 0.0
      %675 = vmatpush1.msra.mxu0 0.0
      %676 = vmatprep.subr.mxu0 0.0
      %677 = vmatpush1.msra.mxu0 0.0
      %678 = vmatprep.subr.mxu0 0.0
      %679 = vmatpush1.msra.mxu0 0.0
      %680 = vmatprep.subr.mxu0 0.0
      %681 = vmatpush1.msra.mxu0 0.0
      %682 = vmatprep.subr.mxu0 0.0
      %683 = vmatpush1.msra.mxu0 0.0
      %684 = vmatprep.subr.mxu0 0.0
      %685 = vmatpush1.msra.mxu0 0.0
      %686 = vmatprep.subr.mxu0 0.0
      %687 = vmatpush1.msra.mxu0 0.0
      %688 = vmatprep.subr.mxu0 0.0
      %689 = vmatpush1.msra.mxu0 0.0
      %690 = vmatprep.subr.mxu0 0.0
      %691 = vmatpush1.msra.mxu0 0.0
      %692 = vmatprep.subr.mxu0 0.0
      %693 = vmatpush1.msra.mxu0 0.0
      %694 = vmatprep.subr.mxu0 0.0
      %695 = vmatpush1.msra.mxu0 %v662
      %696 = vmatprep.subr.mxu0 0.0
      %697 = vmatpush2.msra.mxu0 0.0
      %698 = vmatprep.subr.mxu0 0.0
      %699 = vmatpush2.msra.mxu0 0.0
      %700 = vmatprep.subr.mxu0 0.0
      %701 = vmatpush2.msra.mxu0 0.0
      %702 = vmatprep.subr.mxu0 0.0
      %703 = vmatpush2.msra.mxu0 0.0
      %704 = vmatprep.subr.mxu0 0.0
      %705 = vmatpush2.msra.mxu0 0.0
      %706 = vmatprep.subr.mxu0 0.0
      %707 = vmatpush2.msra.mxu0 0.0
      %708 = vmatprep.subr.mxu0 0.0
      %709 = vmatpush2.msra.mxu0 0.0
      %710 = vmatprep.subr.mxu0 0.0
      %711 = vmatpush2.msra.mxu0 0.0
      %712 = vmatprep.subr.mxu0 0.0
      %713 = vmatpush2.msra.mxu0 0.0
      %714 = vmatprep.subr.mxu0 0.0
      %715 = vmatpush2.msra.mxu0 0.0
      %716 = vmatprep.subr.mxu0 0.0
      %717 = vmatpush2.msra.mxu0 0.0
      %718 = vmatprep.subr.mxu0 0.0
      %719 = vmatpush2.msra.mxu0 0.0
      %720 = vmatprep.subr.mxu0 0.0
      %721 = vmatpush2.msra.mxu0 0.0
      %722 = vmatprep.subr.mxu0 0.0
      %723 = vmatpush2.msra.mxu0 0.0
      %724 = vmatprep.subr.mxu0 0.0
      %725 = vmatpush2.msra.mxu0 0.0
      %726 = vmatprep.subr.mxu0 0.0
      %727 = vmatpush2.msra.mxu0 0.0
      %728 = vmatprep.mubr.f32.mxu0 0.0
      %729 = vmatmul.mubr.f32.gmra.mxu0 %v637
      %v730 = vpop.f32.mrf.mxu0
      %v731 = vadd.f32 0.0, %v730
      %v732 = vpop.f32.mrf.mxu0
      %733 = vmatprep.mubr.f32.mxu0 0.0
      %734 = vmatmul.mubr.f32.gmra.mxu0 %v640
      %v735 = vpop.f32.mrf.mxu0
      %v736 = vadd.f32 0.0, %v735
      %v737 = vpop.f32.mrf.mxu0
      %738 = vmatprep.mubr.f32.mxu0 0.0
      %739 = vmatmul.mubr.f32.gmra.mxu0 %v643
      %v740 = vpop.f32.mrf.mxu0
      %v741 = vadd.f32 0.0, %v740
      %v742 = vpop.f32.mrf.mxu0
      %743 = vmatprep.mubr.f32.mxu0 0.0
      %744 = vmatmul.mubr.f32.gmra.mxu0 %v646
      %v745 = vpop.f32.mrf.mxu0
      %v746 = vadd.f32 0.0, %v745
      %v747 = vpop.f32.mrf.mxu0
      %748 = vmatprep.mubr.f32.mxu0 0.0
      %749 = vmatmul.mubr.f32.gmra.mxu0 %v649
      %v750 = vpop.f32.mrf.mxu0
      %v751 = vadd.f32 0.0, %v750
      %v752 = vpop.f32.mrf.mxu0
      %753 = vmatprep.mubr.f32.mxu0 0.0
      %754 = vmatmul.mubr.f32.gmra.mxu0 %v652
      %v755 = vpop.f32.mrf.mxu0
      %v756 = vadd.f32 0.0, %v755
      %v757 = vpop.f32.mrf.mxu0
      %758 = vmatprep.mubr.f32.mxu0 0.0
      %759 = vmatmul.mubr.f32.gmra.mxu0 %v655
      %v760 = vpop.f32.mrf.mxu0
      %v761 = vadd.f32 0.0, %v760
      %v762 = vpop.f32.mrf.mxu0
      %763 = vmatprep.mubr.f32.mxu0 0.0
      %764 = vmatmul.mubr.f32.gmra.mxu0 %v658
      %v765 = vpop.f32.mrf.mxu0
      %v766 = vadd.f32 0.0, %v765
      %v767 = vpop.f32.mrf.mxu0
      %768 = vdwg.mxu0
      %v769 = vsub.f32 %v471, %v731
      %v770 = vsub.f32 %v474, %v736
      %v771 = vsub.f32 %v479, %v741
      %v772 = vsub.f32 %v482, %v746
      %v773 = vsub.f32 %v487, %v751
      %v774 = vsub.f32 %v490, %v756
      %v775 = vsub.f32 %v495, %v761
      %v776 = vsub.f32 %v498, %v766
      %v777 = vmul.f32 %v769, %v769
      %v778 = vmul.f32 %v770, %v770
      %v779 = vmul.f32 %v771, %v771
      %v780 = vmul.f32 %v772, %v772
      %v781 = vmul.f32 %v773, %v773
      %v782 = vmul.f32 %v774, %v774
      %v783 = vmul.f32 %v775, %v775
      %v784 = vmul.f32 %v776, %v776
      %v786 = vsel %vm423, %v777, 0
      %v789 = vsel %vm423, %v778, 0
      %v792 = vsel %vm423, %v779, 0
      %v795 = vsel %vm423, %v780, 0
      %v798 = vsel %vm423, %v781, 0
      %v801 = vsel %vm423, %v782, 0
      %v804 = vsel %vm423, %v783, 0
      %v807 = vsel %vm423, %v784, 0
      %809 = vmatprep.subr.mxu0 0.0
      %810 = vmatpush1.msra.mxu0 0.0
      %811 = vmatprep.subr.mxu0 0.0
      %812 = vmatpush1.msra.mxu0 0.0
      %813 = vmatprep.subr.mxu0 0.0
      %814 = vmatpush1.msra.mxu0 0.0
      %815 = vmatprep.subr.mxu0 0.0
      %816 = vmatpush1.msra.mxu0 0.0
      %817 = vmatprep.subr.mxu0 0.0
      %818 = vmatpush1.msra.mxu0 0.0
      %819 = vmatprep.subr.mxu0 0.0
      %820 = vmatpush1.msra.mxu0 0.0
      %821 = vmatprep.subr.mxu0 0.0
      %822 = vmatpush1.msra.mxu0 0.0
      %823 = vmatprep.subr.mxu0 0.0
      %824 = vmatpush1.msra.mxu0 0.0
      %825 = vmatprep.subr.mxu0 0.0
      %826 = vmatpush1.msra.mxu0 0.0
      %827 = vmatprep.subr.mxu0 0.0
      %828 = vmatpush1.msra.mxu0 0.0
      %829 = vmatprep.subr.mxu0 0.0
      %830 = vmatpush1.msra.mxu0 0.0
      %831 = vmatprep.subr.mxu0 0.0
      %832 = vmatpush1.msra.mxu0 0.0
      %833 = vmatprep.subr.mxu0 0.0
      %834 = vmatpush1.msra.mxu0 %v504
      %835 = vmatprep.subr.mxu0 0.0
      %836 = vmatpush1.msra.mxu0 %v503
      %837 = vmatprep.subr.mxu0 0.0
      %838 = vmatpush1.msra.mxu0 %v502
      %839 = vmatprep.subr.mxu0 0.0
      %840 = vmatpush1.msra.mxu0 %v501
      %841 = vmatprep.subr.mxu0 0.0
      %842 = vmatpush2.msra.mxu0 0.0
      %843 = vmatprep.subr.mxu0 0.0
      %844 = vmatpush2.msra.mxu0 0.0
      %845 = vmatprep.subr.mxu0 0.0
      %846 = vmatpush2.msra.mxu0 0.0
      %847 = vmatprep.subr.mxu0 0.0
      %848 = vmatpush2.msra.mxu0 0.0
      %849 = vmatprep.subr.mxu0 0.0
      %850 = vmatpush2.msra.mxu0 0.0
      %851 = vmatprep.subr.mxu0 0.0
      %852 = vmatpush2.msra.mxu0 0.0
      %853 = vmatprep.subr.mxu0 0.0
      %854 = vmatpush2.msra.mxu0 0.0
      %855 = vmatprep.subr.mxu0 0.0
      %856 = vmatpush2.msra.mxu0 0.0
      %857 = vmatprep.subr.mxu0 0.0
      %858 = vmatpush2.msra.mxu0 0.0
      %859 = vmatprep.subr.mxu0 0.0
      %860 = vmatpush2.msra.mxu0 0.0
      %861 = vmatprep.subr.mxu0 0.0
      %862 = vmatpush2.msra.mxu0 0.0
      %863 = vmatprep.subr.mxu0 0.0
      %864 = vmatpush2.msra.mxu0 0.0
      %865 = vmatprep.subr.mxu0 0.0
      %866 = vmatpush2.msra.mxu0 0.0
      %867 = vmatprep.subr.mxu0 0.0
      %868 = vmatpush2.msra.mxu0 0.0
      %869 = vmatprep.subr.mxu0 0.0
      %870 = vmatpush2.msra.mxu0 0.0
      %871 = vmatprep.subr.mxu0 0.0
      %872 = vmatpush2.msra.mxu0 0.0
      %873 = vmatprep.mubr.f32.mxu0 0.0
      %874 = vmatmul.mubr.f32.gmra.mxu0 %v786
      %v875 = vpop.f32.mrf.mxu0
      %v876 = vadd.f32 0.0, %v875
      %v877 = vpop.f32.mrf.mxu0
      %878 = vmatprep.mubr.f32.mxu0 0.0
      %879 = vmatmul.mubr.f32.gmra.mxu0 %v789
      %v880 = vpop.f32.mrf.mxu0
      %v881 = vadd.f32 0.0, %v880
      %v882 = vpop.f32.mrf.mxu0
      %883 = vmatprep.mubr.f32.mxu0 0.0
      %884 = vmatmul.mubr.f32.gmra.mxu0 %v792
      %v885 = vpop.f32.mrf.mxu0
      %v886 = vadd.f32 0.0, %v885
      %v887 = vpop.f32.mrf.mxu0
      %888 = vmatprep.mubr.f32.mxu0 0.0
      %889 = vmatmul.mubr.f32.gmra.mxu0 %v795
      %v890 = vpop.f32.mrf.mxu0
      %v891 = vadd.f32 0.0, %v890
      %v892 = vpop.f32.mrf.mxu0
      %893 = vmatprep.mubr.f32.mxu0 0.0
      %894 = vmatmul.mubr.f32.gmra.mxu0 %v798
      %v895 = vpop.f32.mrf.mxu0
      %v896 = vadd.f32 0.0, %v895
      %v897 = vpop.f32.mrf.mxu0
      %898 = vmatprep.mubr.f32.mxu0 0.0
      %899 = vmatmul.mubr.f32.gmra.mxu0 %v801
      %v900 = vpop.f32.mrf.mxu0
      %v901 = vadd.f32 0.0, %v900
      %v902 = vpop.f32.mrf.mxu0
      %903 = vmatprep.mubr.f32.mxu0 0.0
      %904 = vmatmul.mubr.f32.gmra.mxu0 %v804
      %v905 = vpop.f32.mrf.mxu0
      %v906 = vadd.f32 0.0, %v905
      %v907 = vpop.f32.mrf.mxu0
      %908 = vmatprep.mubr.f32.mxu0 0.0
      %909 = vmatmul.mubr.f32.gmra.mxu0 %v807
      %v910 = vpop.f32.mrf.mxu0
      %v911 = vadd.f32 0.0, %v910
      %v912 = vpop.f32.mrf.mxu0
      %913 = vdwg.mxu0
      %v915 = vsel %vm635, %v876, 0
      %v918 = vsel %vm635, %v881, 0
      %v921 = vsel %vm635, %v886, 0
      %v924 = vsel %vm635, %v891, 0
      %v927 = vsel %vm635, %v896, 0
      %v930 = vsel %vm635, %v901, 0
      %v933 = vsel %vm635, %v906, 0
      %v936 = vsel %vm635, %v911, 0
      %938 = vmatprep.subr.mxu0 0.0
      %939 = vmatpush1.msra.mxu0 0.0
      %940 = vmatprep.subr.mxu0 0.0
      %941 = vmatpush1.msra.mxu0 0.0
      %942 = vmatprep.subr.mxu0 0.0
      %943 = vmatpush1.msra.mxu0 0.0
      %944 = vmatprep.subr.mxu0 0.0
      %945 = vmatpush1.msra.mxu0 0.0
      %946 = vmatprep.subr.mxu0 0.0
      %947 = vmatpush1.msra.mxu0 0.0
      %948 = vmatprep.subr.mxu0 0.0
      %949 = vmatpush1.msra.mxu0 0.0
      %950 = vmatprep.subr.mxu0 0.0
      %951 = vmatpush1.msra.mxu0 0.0
      %952 = vmatprep.subr.mxu0 0.0
      %953 = vmatpush1.msra.mxu0 0.0
      %954 = vmatprep.subr.mxu0 0.0
      %955 = vmatpush1.msra.mxu0 0.0
      %956 = vmatprep.subr.mxu0 0.0
      %957 = vmatpush1.msra.mxu0 0.0
      %958 = vmatprep.subr.mxu0 0.0
      %959 = vmatpush1.msra.mxu0 0.0
      %960 = vmatprep.subr.mxu0 0.0
      %961 = vmatpush1.msra.mxu0 0.0
      %962 = vmatprep.subr.mxu0 0.0
      %963 = vmatpush1.msra.mxu0 0.0
      %964 = vmatprep.subr.mxu0 0.0
      %965 = vmatpush1.msra.mxu0 0.0
      %966 = vmatprep.subr.mxu0 0.0
      %967 = vmatpush1.msra.mxu0 0.0
      %968 = vmatprep.subr.mxu0 0.0
      %969 = vmatpush1.msra.mxu0 %v662
      %970 = vmatprep.subr.mxu0 0.0
      %971 = vmatpush2.msra.mxu0 0.0
      %972 = vmatprep.subr.mxu0 0.0
      %973 = vmatpush2.msra.mxu0 0.0
      %974 = vmatprep.subr.mxu0 0.0
      %975 = vmatpush2.msra.mxu0 0.0
      %976 = vmatprep.subr.mxu0 0.0
      %977 = vmatpush2.msra.mxu0 0.0
      %978 = vmatprep.subr.mxu0 0.0
      %979 = vmatpush2.msra.mxu0 0.0
      %980 = vmatprep.subr.mxu0 0.0
      %981 = vmatpush2.msra.mxu0 0.0
      %982 = vmatprep.subr.mxu0 0.0
      %983 = vmatpush2.msra.mxu0 0.0
      %984 = vmatprep.subr.mxu0 0.0
      %985 = vmatpush2.msra.mxu0 0.0
      %986 = vmatprep.subr.mxu0 0.0
      %987 = vmatpush2.msra.mxu0 0.0
      %988 = vmatprep.subr.mxu0 0.0
      %989 = vmatpush2.msra.mxu0 0.0
      %990 = vmatprep.subr.mxu0 0.0
      %991 = vmatpush2.msra.mxu0 0.0
      %992 = vmatprep.subr.mxu0 0.0
      %993 = vmatpush2.msra.mxu0 0.0
      %994 = vmatprep.subr.mxu0 0.0
      %995 = vmatpush2.msra.mxu0 0.0
      %996 = vmatprep.subr.mxu0 0.0
      %997 = vmatpush2.msra.mxu0 0.0
      %998 = vmatprep.subr.mxu0 0.0
      %999 = vmatpush2.msra.mxu0 0.0
      %1000 = vmatprep.subr.mxu0 0.0
      %1001 = vmatpush2.msra.mxu0 0.0
      %1002 = vmatprep.mubr.f32.mxu0 0.0
      %1003 = vmatmul.mubr.f32.gmra.mxu0 %v915
      %v1004 = vpop.f32.mrf.mxu0
      %v1005 = vadd.f32 1e-06, %v1004
      %v1006 = vpop.f32.mrf.mxu0
      %1007 = vmatprep.mubr.f32.mxu0 0.0
      %1008 = vmatmul.mubr.f32.gmra.mxu0 %v918
      %v1009 = vpop.f32.mrf.mxu0
      %v1010 = vadd.f32 1e-06, %v1009
      %v1011 = vpop.f32.mrf.mxu0
      %1012 = vmatprep.mubr.f32.mxu0 0.0
      %1013 = vmatmul.mubr.f32.gmra.mxu0 %v921
      %v1014 = vpop.f32.mrf.mxu0
      %v1015 = vadd.f32 1e-06, %v1014
      %v1016 = vpop.f32.mrf.mxu0
      %1017 = vmatprep.mubr.f32.mxu0 0.0
      %1018 = vmatmul.mubr.f32.gmra.mxu0 %v924
      %v1019 = vpop.f32.mrf.mxu0
      %v1020 = vadd.f32 1e-06, %v1019
      %v1021 = vpop.f32.mrf.mxu0
      %1022 = vmatprep.mubr.f32.mxu0 0.0
      %1023 = vmatmul.mubr.f32.gmra.mxu0 %v927
      %v1024 = vpop.f32.mrf.mxu0
      %v1025 = vadd.f32 1e-06, %v1024
      %v1026 = vpop.f32.mrf.mxu0
      %1027 = vmatprep.mubr.f32.mxu0 0.0
      %1028 = vmatmul.mubr.f32.gmra.mxu0 %v930
      %v1029 = vpop.f32.mrf.mxu0
      %v1030 = vadd.f32 1e-06, %v1029
      %v1031 = vpop.f32.mrf.mxu0
      %1032 = vmatprep.mubr.f32.mxu0 0.0
      %1033 = vmatmul.mubr.f32.gmra.mxu0 %v933
      %v1034 = vpop.f32.mrf.mxu0
      %v1035 = vadd.f32 1e-06, %v1034
      %v1036 = vpop.f32.mrf.mxu0
      %1037 = vmatprep.mubr.f32.mxu0 0.0
      %1038 = vmatmul.mubr.f32.gmra.mxu0 %v936
      %v1039 = vpop.f32.mrf.mxu0
      %v1040 = vadd.f32 1e-06, %v1039
      %v1041 = vpop.f32.mrf.mxu0
      %1042 = vdwg.mxu0
      %v1043 = vrsqrt.pop %v1005
      %v1044 = vrsqrt.pop %v1010
      %v1045 = vrsqrt.pop %v1015
      %v1046 = vrsqrt.pop %v1020
      %v1047 = vrsqrt.pop %v1025
      %v1048 = vrsqrt.pop %v1030
      %v1049 = vrsqrt.pop %v1035
      %v1050 = vrsqrt.pop %v1040
      %v1051 = vmul.f32 %v769, %v1043
      %v1052 = vmul.f32 %v770, %v1044
      %v1053 = vmul.f32 %v771, %v1045
      %v1054 = vmul.f32 %v772, %v1046
      %v1055 = vmul.f32 %v773, %v1047
      %v1056 = vmul.f32 %v774, %v1048
      %v1057 = vmul.f32 %v775, %v1049
      %v1058 = vmul.f32 %v776, %v1050
      %v1059 = vld [vmem:[%s5] sm:$0x1]
      %v1061 = vlaneseq
      %v1062 = vshrl.u32 %v1061, 7
      %v1063 = vsub.s32 0, %v1062
      %v1064 = vrot.slane %v1059, %v1063
      %v1066 = vmul.f32 %v1051, %v1064
      %v1067 = vmul.f32 %v1052, %v1064
      %v1068 = vmul.f32 %v1053, %v1064
      %v1069 = vmul.f32 %v1054, %v1064
      %v1070 = vmul.f32 %v1055, %v1064
      %v1071 = vmul.f32 %v1056, %v1064
      %v1072 = vmul.f32 %v1057, %v1064
      %v1073 = vmul.f32 %v1058, %v1064
      %v1074 = vld [vmem:[%s6] sm:$0x1]
      %v1076 = vlaneseq
      %v1077 = vshrl.u32 %v1076, 7
      %v1078 = vsub.s32 0, %v1077
      %v1079 = vrot.slane %v1074, %v1078
      %v1081 = vadd.f32 %v1066, %v1079
      %v1082 = vadd.f32 %v1067, %v1079
      %v1083 = vadd.f32 %v1068, %v1079
      %v1084 = vadd.f32 %v1069, %v1079
      %v1085 = vadd.f32 %v1070, %v1079
      %v1086 = vadd.f32 %v1071, %v1079
      %v1087 = vadd.f32 %v1072, %v1079
      %v1088 = vadd.f32 %v1073, %v1079
      %v1089 = vmul.f32 %v1081, 0.5
      %v1090 = vmul.f32 %v1082, 0.5
      %v1091 = vmul.f32 %v1083, 0.5
      %v1092 = vmul.f32 %v1084, 0.5
      %v1093 = vmul.f32 %v1085, 0.5
      %v1094 = vmul.f32 %v1086, 0.5
      %v1095 = vmul.f32 %v1087, 0.5
      %v1096 = vmul.f32 %v1088, 0.5
      %v1097 = vmul.f32 %v1081, 0.044715
      %v1098 = vmul.f32 %v1082, 0.044715
      %v1099 = vmul.f32 %v1083, 0.044715
      %v1100 = vmul.f32 %v1084, 0.044715
      %v1101 = vmul.f32 %v1085, 0.044715
      %v1102 = vmul.f32 %v1086, 0.044715
      %v1103 = vmul.f32 %v1087, 0.044715
      %v1104 = vmul.f32 %v1088, 0.044715
      %v1105 = vmul.f32 %v1097, %v1081
      %v1106 = vmul.f32 %v1098, %v1082
      %v1107 = vmul.f32 %v1099, %v1083
      %v1108 = vmul.f32 %v1100, %v1084
      %v1109 = vmul.f32 %v1101, %v1085
      %v1110 = vmul.f32 %v1102, %v1086
      %v1111 = vmul.f32 %v1103, %v1087
      %v1112 = vmul.f32 %v1104, %v1088
      %v1113 = vmul.f32 %v1105, %v1081
      %v1114 = vmul.f32 %v1106, %v1082
      %v1115 = vmul.f32 %v1107, %v1083
      %v1116 = vmul.f32 %v1108, %v1084
      %v1117 = vmul.f32 %v1109, %v1085
      %v1118 = vmul.f32 %v1110, %v1086
      %v1119 = vmul.f32 %v1111, %v1087
      %v1120 = vmul.f32 %v1112, %v1088
      %v1121 = vadd.f32 %v1081, %v1113
      %v1122 = vadd.f32 %v1082, %v1114
      %v1123 = vadd.f32 %v1083, %v1115
      %v1124 = vadd.f32 %v1084, %v1116
      %v1125 = vadd.f32 %v1085, %v1117
      %v1126 = vadd.f32 %v1086, %v1118
      %v1127 = vadd.f32 %v1087, %v1119
      %v1128 = vadd.f32 %v1088, %v1120
      %v1129 = vmul.f32 %v1121, 0.7978846
      %v1130 = vmul.f32 %v1122, 0.7978846
      %v1131 = vmul.f32 %v1123, 0.7978846
      %v1132 = vmul.f32 %v1124, 0.7978846
      %v1133 = vmul.f32 %v1125, 0.7978846
      %v1134 = vmul.f32 %v1126, 0.7978846
      %v1135 = vmul.f32 %v1127, 0.7978846
      %v1136 = vmul.f32 %v1128, 0.7978846
      %v1137 = vtanh.pop %v1129
      %v1138 = vtanh.pop %v1130
      %v1139 = vtanh.pop %v1131
      %v1140 = vtanh.pop %v1132
      %v1141 = vtanh.pop %v1133
      %v1142 = vtanh.pop %v1134
      %v1143 = vtanh.pop %v1135
      %v1144 = vtanh.pop %v1136
      %v1145 = vadd.f32 %v1137, 1.0
      %v1146 = vadd.f32 %v1138, 1.0
      %v1147 = vadd.f32 %v1139, 1.0
      %v1148 = vadd.f32 %v1140, 1.0
      %v1149 = vadd.f32 %v1141, 1.0
      %v1150 = vadd.f32 %v1142, 1.0
      %v1151 = vadd.f32 %v1143, 1.0
      %v1152 = vadd.f32 %v1144, 1.0
      %v1153 = vmul.f32 %v1089, %v1145
      %v1154 = vmul.f32 %v1090, %v1146
      %v1155 = vmul.f32 %v1091, %v1147
      %v1156 = vmul.f32 %v1092, %v1148
      %v1157 = vmul.f32 %v1093, %v1149
      %v1158 = vmul.f32 %v1094, %v1150
      %v1159 = vmul.f32 %v1095, %v1151
      %v1160 = vmul.f32 %v1096, %v1152
      %v1161 = vpack.c.bf16 %v1154, %v1153
      %v1162 = vpack.c.bf16 %v1156, %v1155
      %v1163 = vpack.c.bf16 %v1158, %v1157
      %v1164 = vpack.c.bf16 %v1160, %v1159
      %v1165 = vld [vmem:[%s7] sm:$0xf]
      %v1166 = vld [vmem:[%s7 + $0x4] sm:$0xf]
      %v1167 = vld [vmem:[%s7 + $0x8] sm:$0xf]
      %v1168 = vld [vmem:[%s7 + $0xc] sm:$0xf]
      %v1169 = vld [vmem:[%s8] sm:$0x1]
      %v1171 = vlaneseq
      %v1172 = vshrl.u32 %v1171, 7
      %v1173 = vsub.s32 0, %v1172
      %v1174 = vrot.slane %v1169, %v1173
      %v1180 = vunpack.c.l.b16 %v1165
      %v1181 = vunpack.c.l.b16 %v1166
      %v1182 = vunpack.c.l.b16 %v1167
      %v1183 = vunpack.c.l.b16 %v1168
      %v1184 = vpack.c.b16 %v1181, %v1180
      %v1185 = vpack.c.b16 %v1183, %v1182
      %v1189 = vsel %vm423, %v1161, 0
      %v1192 = vsel %vm423, %v1162, 0
      %v1195 = vsel %vm423, %v1163, 0
      %v1198 = vsel %vm423, %v1164, 0
      %1200 = vmatprep.subr.bf16.mxu0 0
      %1201 = vmatpush1.bf16.msra.mxu0 0
      %1202 = vmatprep.subr.bf16.mxu0 0
      %1203 = vmatpush1.bf16.msra.mxu0 0
      %1204 = vmatprep.subr.bf16.mxu0 0
      %1205 = vmatpush1.bf16.msra.mxu0 0
      %1206 = vmatprep.subr.bf16.mxu0 0
      %1207 = vmatpush1.bf16.msra.mxu0 0
      %1208 = vmatprep.subr.bf16.mxu0 0
      %1209 = vmatpush1.bf16.msra.mxu0 0
      %1210 = vmatprep.subr.bf16.mxu0 0
      %1211 = vmatpush1.bf16.msra.mxu0 0
      %1212 = vmatprep.subr.bf16.mxu0 0
      %1213 = vmatpush1.bf16.msra.mxu0 %v1185
      %1214 = vmatprep.subr.bf16.mxu0 0
      %1215 = vmatpush1.bf16.msra.mxu0 %v1184
      %1216 = vmatprep.subr.bf16.mxu0 0
      %1217 = vmatpush2.bf16.msra.mxu0 0
      %1218 = vmatprep.subr.bf16.mxu0 0
      %1219 = vmatpush2.bf16.msra.mxu0 0
      %1220 = vmatprep.subr.bf16.mxu0 0
      %1221 = vmatpush2.bf16.msra.mxu0 0
      %1222 = vmatprep.subr.bf16.mxu0 0
      %1223 = vmatpush2.bf16.msra.mxu0 0
      %1224 = vmatprep.subr.bf16.mxu0 0
      %1225 = vmatpush2.bf16.msra.mxu0 0
      %1226 = vmatprep.subr.bf16.mxu0 0
      %1227 = vmatpush2.bf16.msra.mxu0 0
      %1228 = vmatprep.subr.bf16.mxu0 0
      %1229 = vmatpush2.bf16.msra.mxu0 0
      %1230 = vmatprep.subr.bf16.mxu0 0
      %1231 = vmatpush2.bf16.msra.mxu0 0
      %1232 = vmatprep.mubr.bf16.mxu0 0
      %1233 = vmatmul.mubr.bf16.gmra.mxu0 %v1189
      %v1234 = vpop.f32.mrf.mxu0
      %v1235 = vadd.f32 %v1174, %v1234
      %v1236 = vpop.f32.mrf.mxu0
      %v1237 = vpop.f32.mrf.mxu0
      %v1238 = vadd.f32 %v1174, %v1237
      %v1239 = vpop.f32.mrf.mxu0
      %1240 = vmatprep.mubr.bf16.mxu0 0
      %1241 = vmatmul.mubr.bf16.gmra.mxu0 %v1192
      %v1242 = vpop.f32.mrf.mxu0
      %v1243 = vadd.f32 %v1174, %v1242
      %v1244 = vpop.f32.mrf.mxu0
      %v1245 = vpop.f32.mrf.mxu0
      %v1246 = vadd.f32 %v1174, %v1245
      %v1247 = vpop.f32.mrf.mxu0
      %1248 = vmatprep.mubr.bf16.mxu0 0
      %1249 = vmatmul.mubr.bf16.gmra.mxu0 %v1195
      %v1250 = vpop.f32.mrf.mxu0
      %v1251 = vadd.f32 %v1174, %v1250
      %v1252 = vpop.f32.mrf.mxu0
      %v1253 = vpop.f32.mrf.mxu0
      %v1254 = vadd.f32 %v1174, %v1253
      %v1255 = vpop.f32.mrf.mxu0
      %1256 = vmatprep.mubr.bf16.mxu0 0
      %1257 = vmatmul.mubr.bf16.gmra.mxu0 %v1198
      %v1258 = vpop.f32.mrf.mxu0
      %v1259 = vadd.f32 %v1174, %v1258
      %v1260 = vpop.f32.mrf.mxu0
      %v1261 = vpop.f32.mrf.mxu0
      %v1262 = vadd.f32 %v1174, %v1261
      %v1263 = vpop.f32.mrf.mxu0
      %1264 = vdwg.mxu0
      %v1265 = vmul.f32 %v1235, 0.5
      %v1266 = vmul.f32 %v1238, 0.5
      %v1267 = vmul.f32 %v1243, 0.5
      %v1268 = vmul.f32 %v1246, 0.5
      %v1269 = vmul.f32 %v1251, 0.5
      %v1270 = vmul.f32 %v1254, 0.5
      %v1271 = vmul.f32 %v1259, 0.5
      %v1272 = vmul.f32 %v1262, 0.5
      %v1273 = vmul.f32 %v1235, 0.044715
      %v1274 = vmul.f32 %v1238, 0.044715
      %v1275 = vmul.f32 %v1243, 0.044715
      %v1276 = vmul.f32 %v1246, 0.044715
      %v1277 = vmul.f32 %v1251, 0.044715
      %v1278 = vmul.f32 %v1254, 0.044715
      %v1279 = vmul.f32 %v1259, 0.044715
      %v1280 = vmul.f32 %v1262, 0.044715
      %v1281 = vmul.f32 %v1273, %v1235
      %v1282 = vmul.f32 %v1274, %v1238
      %v1283 = vmul.f32 %v1275, %v1243
      %v1284 = vmul.f32 %v1276, %v1246
      %v1285 = vmul.f32 %v1277, %v1251
      %v1286 = vmul.f32 %v1278, %v1254
      %v1287 = vmul.f32 %v1279, %v1259
      %v1288 = vmul.f32 %v1280, %v1262
      %v1289 = vmul.f32 %v1281, %v1235
      %v1290 = vmul.f32 %v1282, %v1238
      %v1291 = vmul.f32 %v1283, %v1243
      %v1292 = vmul.f32 %v1284, %v1246
      %v1293 = vmul.f32 %v1285, %v1251
      %v1294 = vmul.f32 %v1286, %v1254
      %v1295 = vmul.f32 %v1287, %v1259
      %v1296 = vmul.f32 %v1288, %v1262
      %v1297 = vadd.f32 %v1235, %v1289
      %v1298 = vadd.f32 %v1238, %v1290
      %v1299 = vadd.f32 %v1243, %v1291
      %v1300 = vadd.f32 %v1246, %v1292
      %v1301 = vadd.f32 %v1251, %v1293
      %v1302 = vadd.f32 %v1254, %v1294
      %v1303 = vadd.f32 %v1259, %v1295
      %v1304 = vadd.f32 %v1262, %v1296
      %v1305 = vmul.f32 %v1297, 0.7978846
      %v1306 = vmul.f32 %v1298, 0.7978846
      %v1307 = vmul.f32 %v1299, 0.7978846
      %v1308 = vmul.f32 %v1300, 0.7978846
      %v1309 = vmul.f32 %v1301, 0.7978846
      %v1310 = vmul.f32 %v1302, 0.7978846
      %v1311 = vmul.f32 %v1303, 0.7978846
      %v1312 = vmul.f32 %v1304, 0.7978846
      %v1313 = vtanh.pop %v1305
      %v1314 = vtanh.pop %v1306
      %v1315 = vtanh.pop %v1307
      %v1316 = vtanh.pop %v1308
      %v1317 = vtanh.pop %v1309
      %v1318 = vtanh.pop %v1310
      %v1319 = vtanh.pop %v1311
      %v1320 = vtanh.pop %v1312
      %v1321 = vadd.f32 %v1313, 1.0
      %v1322 = vadd.f32 %v1314, 1.0
      %v1323 = vadd.f32 %v1315, 1.0
      %v1324 = vadd.f32 %v1316, 1.0
      %v1325 = vadd.f32 %v1317, 1.0
      %v1326 = vadd.f32 %v1318, 1.0
      %v1327 = vadd.f32 %v1319, 1.0
      %v1328 = vadd.f32 %v1320, 1.0
      %v1329 = vmul.f32 %v1265, %v1321
      %v1330 = vmul.f32 %v1266, %v1322
      %v1331 = vmul.f32 %v1267, %v1323
      %v1332 = vmul.f32 %v1268, %v1324
      %v1333 = vmul.f32 %v1269, %v1325
      %v1334 = vmul.f32 %v1270, %v1326
      %v1335 = vmul.f32 %v1271, %v1327
      %v1336 = vmul.f32 %v1272, %v1328
      %v1337 = vpack.c.bf16 %v1330, %v1329
      %v1338 = vpack.c.bf16 %v1332, %v1331
      %v1339 = vpack.c.bf16 %v1334, %v1333
      %v1340 = vpack.c.bf16 %v1336, %v1335
      %v1345 = vunpack.c.l.b16 %v1337
      %v1346 = vunpack.c.h.b16 %v1337
      %v1347 = vunpack.c.l.b16 %v1338
      %v1348 = vunpack.c.h.b16 %v1338
      %v1349 = vunpack.c.l.b16 %v1339
      %v1350 = vunpack.c.h.b16 %v1339
      %v1351 = vunpack.c.l.b16 %v1340
      %v1352 = vunpack.c.h.b16 %v1340
      %v1353 = vpack.c.b16 %v1345, %v1345
      %v1354 = vpack.c.b16 %v1346, %v1346
      %v1355 = vpack.c.b16 %v1347, %v1347
      %v1356 = vpack.c.b16 %v1348, %v1348
      %v1357 = vpack.c.b16 %v1349, %v1349
      %v1358 = vpack.c.b16 %v1350, %v1350
      %v1359 = vpack.c.b16 %v1351, %v1351
      %v1360 = vpack.c.b16 %v1352, %v1352
      %vm1369 = vcmask 519168
      %1370 = vst.msk [vmem:[%s365] sm:$0xf] %vm1369, %v1353
      %1371 = vst.msk [vmem:[%s365 + $0x4] sm:$0xf] %vm1369, %v1354
      %1372 = vst.msk [vmem:[%s365 + $0x8] sm:$0xf] %vm1369, %v1355
      %1373 = vst.msk [vmem:[%s365 + $0xc] sm:$0xf] %vm1369, %v1356
      %1374 = vst.msk [vmem:[%s365 + $0x10] sm:$0xf] %vm1369, %v1357
      %1375 = vst.msk [vmem:[%s365 + $0x14] sm:$0xf] %vm1369, %v1358
      %1376 = vst.msk [vmem:[%s365 + $0x18] sm:$0xf] %vm1369, %v1359
      %1377 = vst.msk [vmem:[%s365 + $0x1c] sm:$0xf] %vm1369, %v1360
      %s1378 = smul.u32 8, %s25
      %p1379 = scmp.lt.s32.totalorder %s24, 1
      %s1380 = scalar_select %p1379, %s24, 1
      %p1381 = scmp.lt.s32.totalorder %s1378, 7
      %s1382 = scalar_select %p1381, %s1378, 7
      %s1383 = smul.addr %s1380, 8
      %s1384 = sadd.s32 %s1382, %s1383
      %s1385 = smul.addr %s1384, 4
      %s1386 = scalar_lea.vmem %s9, %s1385
      // Predicated region
      $region57: #{mask_decoder_forward.7} parent=55 // pred_check
        %p1387 = pneg %p248
      $region58: #{mask_decoder_forward.7} parent=55 // pred_check_branch
        %1389 = sbr.rel (%p1387) target = $region60
      $region59: #{mask_decoder_forward.7} parent=55 // pred_region
        %s1390 = smul.u32 8, %s25
      $region60: #{mask_decoder_forward.7} parent=55 // pred_fallthru
        _
    $region56: #{mask_decoder_forward.7} parent=5 // pred_fallthru
      _
    %p1391 = scmp.le.s32.totalorder 2, %s15
    // Predicated region
    $region61: #{mask_decoder_forward.7} parent=5 // pred_check
      %p1392 = pneg %p1391
    $region62: #{mask_decoder_forward.7} parent=5 // pred_check_branch
      %1394 = sbr.rel (%p1392) target = $region64
    $region63: #{mask_decoder_forward.7} parent=5 // pred_region
      %s1395 = ssub.s32 %s15, 2
      // Predicated region
      $region65: #{mask_decoder_forward.7} parent=63 // pred_check
        %p1396 = pneg %p254
      $region66: #{mask_decoder_forward.7} parent=63 // pred_check_branch
        %1398 = sbr.rel (%p1396) target = $region68
      $region67: #{mask_decoder_forward.7} parent=63 // pred_region
        %s1399 = smul.u32 8, %s27
        %p1400 = scmp.lt.s32.totalorder %s26, 1
        %s1401 = scalar_select %p1400, %s26, 1
        %p1402 = scmp.lt.s32.totalorder %s1399, 7
        %s1403 = scalar_select %p1402, %s1399, 7
        %s1404 = smul.addr %s1401, 8
        %s1405 = sadd.s32 %s1403, %s1404
        %s1406 = smul.addr %s1405, 4
        %s1407 = scalar_lea.vmem %s9, %s1406
      $region68: #{mask_decoder_forward.7} parent=63 // pred_fallthru
        _
    $region64: #{mask_decoder_forward.7} parent=5 // pred_fallthru
      _
  $region6: #{mask_decoder_forward.7} parent=0 // loop_footer
    %s19 = sadd.s32 1, %s15
  $region7: #{mask_decoder_forward.7} parent=0 // loop_footer_branch
    %14 = sbr.rel target = $region3
  $region8: #{mask_decoder_forward.7} parent=0 // loop_exit
    _

// kernel: mask_decoder_forward.5
$region0: #{mask_decoder_forward.5}
  #allocation0 [shape = 'u32[]', space=smem, size = 0x4, offset = 0x4, fixed_abs, tag = 'smem constant byte address 0x4 - core index']
  #allocation1 [shape = 'u32[144,128]{1,0:T(1,128)}', space=vmem, size = 0x12000, scoped, tag = 'internal scratch']
  %s0 = inlined_call_operand.vmem [shape: f32[64,16,16], index: 0, kind: input, shape index: {}]
  %s1 = inlined_call_operand.vmem [shape: f32[64,8,8], index: 1, kind: input, shape index: {}]
  %s2 = inlined_call_operand.vmem [shape: bf16[8,16], index: 2, kind: input, shape index: {}]
  %s3 = inlined_call_operand.vmem [shape: bf16[16,8], index: 3, kind: input, shape index: {}]
  %s4 = inlined_call_operand.vmem [shape: bf16[64,8,8], index: 4, kind: output, shape index: {}]
  %s5 = sld [smem:[#allocation0]]
  $region49: #{mask_decoder_forward.5} parent=0
    _
  %s7 = ssub.s32 1, %s5
  %s8 = scalar_select 0, %s7, %s5
  loop: start=0, step=1, limit=4
  $region2: #{mask_decoder_forward.5} parent=0 // loop_pre_header
    _
  $region3: #{mask_decoder_forward.5} parent=0 // loop_header
    %s10 = sphi 0, %s14
    %p11 = scmp.ge.s32.totalorder %s10, 4
    %s20 = sphi 0, %s22
    %s23 = sphi 0, %s20
    %s24 = sphi 0, %s23
    %s40 = sphi 0, %s24
    %s46 = sphi 0, %s48
    %s49 = sphi 0, %s46
    %s50 = sphi 0, %s49
    %s66 = sphi 0, %s50
    %s70 = sphi 0, %s70
    %s72 = sphi 0, %s70
    %s73 = sphi 0, %s72
    %s87 = sphi 0, %s73
    %s91 = sphi 0, %s91
    %s93 = sphi 0, %s91
    %s94 = sphi 0, %s93
    %s108 = sphi 0, %s94
    %s114 = sphi 0, %s116
    %s117 = sphi 0, %s114
    %s118 = sphi 0, %s117
    %s134 = sphi 0, %s118
  $region4: #{mask_decoder_forward.5} parent=0 // loop_header_branch
    %13 = sbr.rel (%p11) target = $region8
  $region5: #{mask_decoder_forward.5} parent=0 // loop_body
    %s15 = ssub.s32 %s10, 1
    %s16 = ssub.s32 %s10, 2
    %s17 = sadd.s32 %s10, 1
    %s18 = ssub.s32 %s10, %s17
    %p19 = scmp.eq.s32.totalorder %s18, 0
    %s21 = sadd.s32 %s20, 1
    %s22 = scalar_select %p19, %s20, %s21
    %p25 = pneg %p19
    %p26 = scmp.eq.s32.totalorder %s10, 1
    %p27 = por %p25, %p26
    %p28 = scmp.ne.s32.totalorder %s20, %s23
    %p29 = scmp.eq.s32.totalorder %s10, 0
    %p30 = por %p28, %p29
    %p31 = scmp.ne.s32.totalorder %s20, %s23
    %p32 = scmp.eq.s32.totalorder %s15, 1
    %p33 = por %p31, %p32
    %p34 = scmp.ne.s32.totalorder %s23, %s24
    %p35 = scmp.eq.s32.totalorder %s15, 0
    %p36 = por %p34, %p35
    %p37 = scmp.ne.s32.totalorder %s23, %s24
    %p38 = scmp.eq.s32.totalorder %s16, 1
    %p39 = por %p37, %p38
    %p41 = scmp.ne.s32.totalorder %s24, %s40
    %p42 = scmp.eq.s32.totalorder %s16, 0
    %p43 = por %p41, %p42
    %s44 = ssub.s32 %s10, %s17
    %p45 = scmp.eq.s32.totalorder %s44, 0
    %s47 = sadd.s32 %s46, 1
    %s48 = scalar_select %p45, %s46, %s47
    %p51 = pneg %p45
    %p52 = scmp.eq.s32.totalorder %s10, 1
    %p53 = por %p51, %p52
    %p54 = scmp.ne.s32.totalorder %s46, %s49
    %p55 = scmp.eq.s32.totalorder %s10, 0
    %p56 = por %p54, %p55
    %p57 = scmp.ne.s32.totalorder %s46, %s49
    %p58 = scmp.eq.s32.totalorder %s15, 1
    %p59 = por %p57, %p58
    %p60 = scmp.ne.s32.totalorder %s49, %s50
    %p61 = scmp.eq.s32.totalorder %s15, 0
    %p62 = por %p60, %p61
    %p63 = scmp.ne.s32.totalorder %s49, %s50
    %p64 = scmp.eq.s32.totalorder %s16, 1
    %p65 = por %p63, %p64
    %p67 = scmp.ne.s32.totalorder %s50, %s66
    %p68 = scmp.eq.s32.totalorder %s16, 0
    %p69 = por %p67, %p68
    %s71 = sadd.s32 %s70, 1
    %p74 = scmp.eq.s32.totalorder %s10, 1
    %p75 = scmp.ne.s32.totalorder %s70, %s72
    %p76 = scmp.eq.s32.totalorder %s10, 0
    %p77 = por %p75, %p76
    %p78 = scmp.ne.s32.totalorder %s70, %s72
    %p79 = scmp.eq.s32.totalorder %s15, 1
    %p80 = por %p78, %p79
    %p81 = scmp.ne.s32.totalorder %s72, %s73
    %p82 = scmp.eq.s32.totalorder %s15, 0
    %p83 = por %p81, %p82
    %p84 = scmp.ne.s32.totalorder %s72, %s73
    %p85 = scmp.eq.s32.totalorder %s16, 1
    %p86 = por %p84, %p85
    %p88 = scmp.ne.s32.totalorder %s73, %s87
    %p89 = scmp.eq.s32.totalorder %s16, 0
    %p90 = por %p88, %p89
    %s92 = sadd.s32 %s91, 1
    %p95 = scmp.eq.s32.totalorder %s10, 1
    %p96 = scmp.ne.s32.totalorder %s91, %s93
    %p97 = scmp.eq.s32.totalorder %s10, 0
    %p98 = por %p96, %p97
    %p99 = scmp.ne.s32.totalorder %s91, %s93
    %p100 = scmp.eq.s32.totalorder %s15, 1
    %p101 = por %p99, %p100
    %p102 = scmp.ne.s32.totalorder %s93, %s94
    %p103 = scmp.eq.s32.totalorder %s15, 0
    %p104 = por %p102, %p103
    %p105 = scmp.ne.s32.totalorder %s93, %s94
    %p106 = scmp.eq.s32.totalorder %s16, 1
    %p107 = por %p105, %p106
    %p109 = scmp.ne.s32.totalorder %s94, %s108
    %p110 = scmp.eq.s32.totalorder %s16, 0
    %p111 = por %p109, %p110
    %s112 = ssub.s32 %s10, %s17
    %p113 = scmp.eq.s32.totalorder %s112, 0
    %s115 = sadd.s32 %s114, 1
    %s116 = scalar_select %p113, %s114, %s115
    %p119 = pneg %p113
    %p120 = scmp.eq.s32.totalorder %s10, 1
    %p121 = por %p119, %p120
    %p122 = scmp.ne.s32.totalorder %s114, %s117
    %p123 = scmp.eq.s32.totalorder %s10, 0
    %p124 = por %p122, %p123
    %p125 = scmp.ne.s32.totalorder %s114, %s117
    %p126 = scmp.eq.s32.totalorder %s15, 1
    %p127 = por %p125, %p126
    %p128 = scmp.ne.s32.totalorder %s117, %s118
    %p129 = scmp.eq.s32.totalorder %s15, 0
    %p130 = por %p128, %p129
    %p131 = scmp.ne.s32.totalorder %s117, %s118
    %p132 = scmp.eq.s32.totalorder %s16, 1
    %p133 = por %p131, %p132
    %p135 = scmp.ne.s32.totalorder %s118, %s134
    %p136 = scmp.eq.s32.totalorder %s16, 0
    %p137 = por %p135, %p136
    %p138 = scmp.le.s32.totalorder 1, %s10
    %p139 = scmp.lt.s32.totalorder %s10, 3
    %p140 = pnand %p138, %p139
    %p141 = pneg %p140
    // Predicated region
    $region9: #{mask_decoder_forward.5} parent=5 // pred_check
      _
    $region10: #{mask_decoder_forward.5} parent=5 // pred_check_branch
      %143 = sbr.rel (%p140) target = $region12
    $region11: #{mask_decoder_forward.5} parent=5 // pred_region
      %s144 = ssub.s32 %s10, 1
      // Predicated region
      $region13: #{mask_decoder_forward.5} parent=11 // pred_check
        %p145 = pneg %p83
      $region14: #{mask_decoder_forward.5} parent=11 // pred_check_branch
        %147 = sbr.rel (%p145) target = $region16
      $region15: #{mask_decoder_forward.5} parent=11 // pred_region
        _
      $region16: #{mask_decoder_forward.5} parent=11 // pred_fallthru
        _
      // Predicated region
      $region17: #{mask_decoder_forward.5} parent=11 // pred_check
        %p148 = pneg %p104
      $region18: #{mask_decoder_forward.5} parent=11 // pred_check_branch
        %150 = sbr.rel (%p148) target = $region20
      $region19: #{mask_decoder_forward.5} parent=11 // pred_region
        _
      $region20: #{mask_decoder_forward.5} parent=11 // pred_fallthru
        _
    $region12: #{mask_decoder_forward.5} parent=5 // pred_fallthru
      _
    %p151 = scmp.lt.s32.totalorder %s10, 2
    // Predicated region
    $region21: #{mask_decoder_forward.5} parent=5 // pred_check
      %p152 = pneg %p151
    $region22: #{mask_decoder_forward.5} parent=5 // pred_check_branch
      %154 = sbr.rel (%p152) target = $region24
    $region23: #{mask_decoder_forward.5} parent=5 // pred_region
      // Predicated region
      $region25: #{mask_decoder_forward.5} parent=23 // pred_check
        %p155 = pneg %p30
      $region26: #{mask_decoder_forward.5} parent=23 // pred_check_branch
        %157 = sbr.rel (%p155) target = $region28
      $region27: #{mask_decoder_forward.5} parent=23 // pred_region
        %s158 = smul.u32 32, %s10
        %p159 = scmp.lt.s32.totalorder %s158, 63
        %s160 = scalar_select %p159, %s158, 63
        %s161 = smul.addr %s160, 2
        %s162 = smul.addr %s161, 8
        %s163 = scalar_lea.vmem %s0, %s162
        %s164 = smul.u32 32, %s10
      $region28: #{mask_decoder_forward.5} parent=23 // pred_fallthru
        _
      // Predicated region
      $region29: #{mask_decoder_forward.5} parent=23 // pred_check
        %p165 = pneg %p56
      $region30: #{mask_decoder_forward.5} parent=23 // pred_check_branch
        %167 = sbr.rel (%p165) target = $region32
      $region31: #{mask_decoder_forward.5} parent=23 // pred_region
        %s168 = smul.u32 32, %s10
        %p169 = scmp.lt.s32.totalorder %s168, 63
        %s170 = scalar_select %p169, %s168, 63
        %s171 = smul.addr %s170, 8
        %s172 = scalar_lea.vmem %s1, %s171
        %s173 = smul.u32 32, %s10
      $region32: #{mask_decoder_forward.5} parent=23 // pred_fallthru
        _
    $region24: #{mask_decoder_forward.5} parent=5 // pred_fallthru
      _
    %p174 = scmp.le.s32.totalorder 1, %s10
    %p175 = scmp.lt.s32.totalorder %s10, 3
    %p176 = pnand %p174, %p175
    %p177 = pneg %p176
    // Predicated region
    $region33: #{mask_decoder_forward.5} parent=5 // pred_check
      _
    $region34: #{mask_decoder_forward.5} parent=5 // pred_check_branch
      %179 = sbr.rel (%p176) target = $region36
    $region35: #{mask_decoder_forward.5} parent=5 // pred_region
      %s180 = ssub.s32 %s10, 1
      %s181 = smul.u32 32, %s15
      %p182 = scmp.lt.s32.totalorder %s181, 63
      %s183 = scalar_select %p182, %s181, 63
      %s184 = smul.addr %s183, 2
      %s185 = smul.addr %s184, 8
      %s186 = scalar_lea.vmem %s0, %s185
      %p187 = pneg %p36
      %p188 = pneg %p33
      %s189 = smul.u32 32, %s15
      %p190 = scmp.lt.s32.totalorder %s189, 63
      %s191 = scalar_select %p190, %s189, 63
      %s192 = smul.addr %s191, 8
      %s193 = scalar_lea.vmem %s1, %s192
      %p194 = pneg %p62
      %p195 = pneg %p59
      %p196 = pneg %p83
      %p197 = pneg %p80
      %p198 = pneg %p104
      %p199 = pneg %p101
      %p200 = pneg %p130
      %p201 = pneg %p127
      %s202 = smul.u32 32, %s15
      %p203 = scmp.lt.s32.totalorder %s202, 63
      %s204 = scalar_select %p203, %s202, 63
      %s205 = smul.addr %s204, 4
      %s206 = scalar_lea.vmem %s4, %s205
      %s207 = smul.u32 32, %s15
      %p208 = scmp.lt.s32.totalorder %s207, 63
      %s209 = scalar_select %p208, %s207, 63
      %s210 = smul.addr %s209, 2
      %s211 = smul.addr %s210, 8
      %s212 = scalar_lea.vmem %s0, %s211
      %s213 = smul.u32 32, %s15
      %s214 = smul.u32 32, %s15
      %p215 = scmp.lt.s32.totalorder %s214, 63
      %s216 = scalar_select %p215, %s214, 63
      %s217 = smul.addr %s216, 8
      %s218 = scalar_lea.vmem %s1, %s217
      %s219 = smul.u32 32, %s15
      %s220 = smul.u32 32, %s15
      %p221 = scmp.lt.s32.totalorder %s220, 63
      %s222 = scalar_select %p221, %s220, 63
      %s223 = smul.addr %s222, 4
      %s224 = scalar_lea.vmem %s4, %s223
      %s225 = smul.u32 32, %s15
      %v227 = vld [vmem:[%s212] sm:$0xff]
      %v228 = vld [vmem:[%s212 + $0x8] sm:$0xff]
      %v229 = vld [vmem:[%s212 + $0x10] sm:$0xff]
      %v230 = vld [vmem:[%s212 + $0x18] sm:$0xff]
      %v231 = vld [vmem:[%s212 + $0x20] sm:$0xff]
      %v232 = vld [vmem:[%s212 + $0x28] sm:$0xff]
      %v233 = vld [vmem:[%s212 + $0x30] sm:$0xff]
      %v234 = vld [vmem:[%s212 + $0x38] sm:$0xff]
      %v235 = vld [vmem:[%s212 + $0x40] sm:$0xff]
      %v236 = vld [vmem:[%s212 + $0x48] sm:$0xff]
      %v237 = vld [vmem:[%s212 + $0x50] sm:$0xff]
      %v238 = vld [vmem:[%s212 + $0x58] sm:$0xff]
      %v239 = vld [vmem:[%s212 + $0x60] sm:$0xff]
      %v240 = vld [vmem:[%s212 + $0x68] sm:$0xff]
      %v241 = vld [vmem:[%s212 + $0x70] sm:$0xff]
      %v242 = vld [vmem:[%s212 + $0x78] sm:$0xff]
      %v243 = vld [vmem:[%s212 + $0x80] sm:$0xff]
      %v244 = vld [vmem:[%s212 + $0x88] sm:$0xff]
      %v245 = vld [vmem:[%s212 + $0x90] sm:$0xff]
      %v246 = vld [vmem:[%s212 + $0x98] sm:$0xff]
      %v247 = vld [vmem:[%s212 + $0xa0] sm:$0xff]
      %v248 = vld [vmem:[%s212 + $0xa8] sm:$0xff]
      %v249 = vld [vmem:[%s212 + $0xb0] sm:$0xff]
      %v250 = vld [vmem:[%s212 + $0xb8] sm:$0xff]
      %v251 = vld [vmem:[%s212 + $0xc0] sm:$0xff]
      %v252 = vld [vmem:[%s212 + $0xc8] sm:$0xff]
      %v253 = vld [vmem:[%s212 + $0xd0] sm:$0xff]
      %v254 = vld [vmem:[%s212 + $0xd8] sm:$0xff]
      %v255 = vld [vmem:[%s212 + $0xe0] sm:$0xff]
      %v256 = vld [vmem:[%s212 + $0xe8] sm:$0xff]
      %v257 = vld [vmem:[%s212 + $0xf0] sm:$0xff]
      %v258 = vld [vmem:[%s212 + $0xf8] sm:$0xff]
      %v259 = vld [vmem:[%s212 + $0x100] sm:$0xff]
      %v260 = vld [vmem:[%s212 + $0x108] sm:$0xff]
      %v261 = vld [vmem:[%s212 + $0x110] sm:$0xff]
      %v262 = vld [vmem:[%s212 + $0x118] sm:$0xff]
      %v263 = vld [vmem:[%s212 + $0x120] sm:$0xff]
      %v264 = vld [vmem:[%s212 + $0x128] sm:$0xff]
      %v265 = vld [vmem:[%s212 + $0x130] sm:$0xff]
      %v266 = vld [vmem:[%s212 + $0x138] sm:$0xff]
      %v267 = vld [vmem:[%s212 + $0x140] sm:$0xff]
      %v268 = vld [vmem:[%s212 + $0x148] sm:$0xff]
      %v269 = vld [vmem:[%s212 + $0x150] sm:$0xff]
      %v270 = vld [vmem:[%s212 + $0x158] sm:$0xff]
      %v271 = vld [vmem:[%s212 + $0x160] sm:$0xff]
      %v272 = vld [vmem:[%s212 + $0x168] sm:$0xff]
      %v273 = vld [vmem:[%s212 + $0x170] sm:$0xff]
      %v274 = vld [vmem:[%s212 + $0x178] sm:$0xff]
      %v275 = vld [vmem:[%s212 + $0x180] sm:$0xff]
      %v276 = vld [vmem:[%s212 + $0x188] sm:$0xff]
      %v277 = vld [vmem:[%s212 + $0x190] sm:$0xff]
      %v278 = vld [vmem:[%s212 + $0x198] sm:$0xff]
      %v279 = vld [vmem:[%s212 + $0x1a0] sm:$0xff]
      %v280 = vld [vmem:[%s212 + $0x1a8] sm:$0xff]
      %v281 = vld [vmem:[%s212 + $0x1b0] sm:$0xff]
      %v282 = vld [vmem:[%s212 + $0x1b8] sm:$0xff]
      %v283 = vld [vmem:[%s212 + $0x1c0] sm:$0xff]
      %v284 = vld [vmem:[%s212 + $0x1c8] sm:$0xff]
      %v285 = vld [vmem:[%s212 + $0x1d0] sm:$0xff]
      %v286 = vld [vmem:[%s212 + $0x1d8] sm:$0xff]
      %v287 = vld [vmem:[%s212 + $0x1e0] sm:$0xff]
      %v288 = vld [vmem:[%s212 + $0x1e8] sm:$0xff]
      %v289 = vld [vmem:[%s212 + $0x1f0] sm:$0xff]
      %v290 = vld [vmem:[%s212 + $0x1f8] sm:$0xff]
      %v291 = vpack.c.bf16 %v228, %v227
      %v292 = vpack.c.bf16 %v230, %v229
      %v293 = vpack.c.bf16 %v232, %v231
      %v294 = vpack.c.bf16 %v234, %v233
      %v295 = vpack.c.bf16 %v236, %v235
      %v296 = vpack.c.bf16 %v238, %v237
      %v297 = vpack.c.bf16 %v240, %v239
      %v298 = vpack.c.bf16 %v242, %v241
      %v299 = vpack.c.bf16 %v244, %v243
      %v300 = vpack.c.bf16 %v246, %v245
      %v301 = vpack.c.bf16 %v248, %v247
      %v302 = vpack.c.bf16 %v250, %v249
      %v303 = vpack.c.bf16 %v252, %v251
      %v304 = vpack.c.bf16 %v254, %v253
      %v305 = vpack.c.bf16 %v256, %v255
      %v306 = vpack.c.bf16 %v258, %v257
      %v307 = vpack.c.bf16 %v260, %v259
      %v308 = vpack.c.bf16 %v262, %v261
      %v309 = vpack.c.bf16 %v264, %v263
      %v310 = vpack.c.bf16 %v266, %v265
      %v311 = vpack.c.bf16 %v268, %v267
      %v312 = vpack.c.bf16 %v270, %v269
      %v313 = vpack.c.bf16 %v272, %v271
      %v314 = vpack.c.bf16 %v274, %v273
      %v315 = vpack.c.bf16 %v276, %v275
      %v316 = vpack.c.bf16 %v278, %v277
      %v317 = vpack.c.bf16 %v280, %v279
      %v318 = vpack.c.bf16 %v282, %v281
      %v319 = vpack.c.bf16 %v284, %v283
      %v320 = vpack.c.bf16 %v286, %v285
      %v321 = vpack.c.bf16 %v288, %v287
      %v322 = vpack.c.bf16 %v290, %v289
      %v323 = vld [vmem:[%s2] sm:$0xf]
      %v324 = vld [vmem:[%s3] sm:$0xf]
      %v325 = vld [vmem:[%s3 + $0x4] sm:$0xf]
      %vm326 = vcmask 130048
      %v328 = vsel %vm326, %v323, 0
      %330 = vmatprep.subr.bf16.mxu0 0
      %331 = vmatpush1.bf16.msra.mxu0 0
      %332 = vmatprep.subr.bf16.mxu0 0
      %333 = vmatpush1.bf16.msra.mxu0 0
      %334 = vmatprep.subr.bf16.mxu0 0
      %335 = vmatpush1.bf16.msra.mxu0 0
      %336 = vmatprep.subr.bf16.mxu0 0
      %337 = vmatpush1.bf16.msra.mxu0 0
      %338 = vmatprep.subr.bf16.mxu0 0
      %339 = vmatpush1.bf16.msra.mxu0 0
      %340 = vmatprep.subr.bf16.mxu0 0
      %341 = vmatpush1.bf16.msra.mxu0 0
      %342 = vmatprep.subr.bf16.mxu0 0
      %343 = vmatpush1.bf16.msra.mxu0 0
      %344 = vmatprep.subr.bf16.mxu0 0
      %345 = vmatpush1.bf16.msra.mxu0 %v291
      %346 = vmatprep.subr.bf16.mxu0 0
      %347 = vmatpush2.bf16.msra.mxu0 0
      %348 = vmatprep.subr.bf16.mxu0 0
      %349 = vmatpush2.bf16.msra.mxu0 0
      %350 = vmatprep.subr.bf16.mxu0 0
      %351 = vmatpush2.bf16.msra.mxu0 0
      %352 = vmatprep.subr.bf16.mxu0 0
      %353 = vmatpush2.bf16.msra.mxu0 0
      %354 = vmatprep.subr.bf16.mxu0 0
      %355 = vmatpush2.bf16.msra.mxu0 0
      %356 = vmatprep.subr.bf16.mxu0 0
      %357 = vmatpush2.bf16.msra.mxu0 0
      %358 = vmatprep.subr.bf16.mxu0 0
      %359 = vmatpush2.bf16.msra.mxu0 0
      %360 = vmatprep.subr.bf16.mxu0 0
      %361 = vmatpush2.bf16.msra.mxu0 0
      %362 = vmatprep.mubr.bf16.mxu0 0
      %363 = vmatmul.mubr.bf16.gmra.mxu0 %v328
      %v364 = vpop.f32.mrf.mxu0
      %v365 = vadd.f32 0.0, %v364
      %v366 = vpop.f32.mrf.mxu0
      %v367 = vpop.f32.mrf.mxu0
      %v368 = vpop.f32.mrf.mxu0
      %369 = vdwg.mxu0
      %370 = vmatprep.subr.bf16.mxu0 0
      %371 = vmatpush1.bf16.msra.mxu0 0
      %372 = vmatprep.subr.bf16.mxu0 0
      %373 = vmatpush1.bf16.msra.mxu0 0
      %374 = vmatprep.subr.bf16.mxu0 0
      %375 = vmatpush1.bf16.msra.mxu0 0
      %376 = vmatprep.subr.bf16.mxu0 0
      %377 = vmatpush1.bf16.msra.mxu0 0
      %378 = vmatprep.subr.bf16.mxu0 0
      %379 = vmatpush1.bf16.msra.mxu0 0
      %380 = vmatprep.subr.bf16.mxu0 0
      %381 = vmatpush1.bf16.msra.mxu0 0
      %382 = vmatprep.subr.bf16.mxu0 0
      %383 = vmatpush1.bf16.msra.mxu0 0
      %384 = vmatprep.subr.bf16.mxu0 0
      %385 = vmatpush1.bf16.msra.mxu0 %v292
      %386 = vmatprep.subr.bf16.mxu0 0
      %387 = vmatpush2.bf16.msra.mxu0 0
      %388 = vmatprep.subr.bf16.mxu0 0
      %389 = vmatpush2.bf16.msra.mxu0 0
      %390 = vmatprep.subr.bf16.mxu0 0
      %391 = vmatpush2.bf16.msra.mxu0 0
      %392 = vmatprep.subr.bf16.mxu0 0
      %393 = vmatpush2.bf16.msra.mxu0 0
      %394 = vmatprep.subr.bf16.mxu0 0
      %395 = vmatpush2.bf16.msra.mxu0 0
      %396 = vmatprep.subr.bf16.mxu0 0
      %397 = vmatpush2.bf16.msra.mxu0 0
      %398 = vmatprep.subr.bf16.mxu0 0
      %399 = vmatpush2.bf16.msra.mxu0 0
      %400 = vmatprep.subr.bf16.mxu0 0
      %401 = vmatpush2.bf16.msra.mxu0 0
      %402 = vmatprep.mubr.bf16.mxu0 0
      %403 = vmatmul.mubr.bf16.gmra.mxu0 %v328
      %v404 = vpop.f32.mrf.mxu0
      %v405 = vadd.f32 0.0, %v404
      %v406 = vpop.f32.mrf.mxu0
      %v407 = vpop.f32.mrf.mxu0
      %v408 = vpop.f32.mrf.mxu0
      %409 = vdwg.mxu0
      %410 = vmatprep.subr.bf16.mxu0 0
      %411 = vmatpush1.bf16.msra.mxu0 0
      %412 = vmatprep.subr.bf16.mxu0 0
      %413 = vmatpush1.bf16.msra.mxu0 0
      %414 = vmatprep.subr.bf16.mxu0 0
      %415 = vmatpush1.bf16.msra.mxu0 0
      %416 = vmatprep.subr.bf16.mxu0 0
      %417 = vmatpush1.bf16.msra.mxu0 0
      %418 = vmatprep.subr.bf16.mxu0 0
      %419 = vmatpush1.bf16.msra.mxu0 0
      %420 = vmatprep.subr.bf16.mxu0 0
      %421 = vmatpush1.bf16.msra.mxu0 0
      %422 = vmatprep.subr.bf16.mxu0 0
      %423 = vmatpush1.bf16.msra.mxu0 0
      %424 = vmatprep.subr.bf16.mxu0 0
      %425 = vmatpush1.bf16.msra.mxu0 %v293
      %426 = vmatprep.subr.bf16.mxu0 0
      %427 = vmatpush2.bf16.msra.mxu0 0
      %428 = vmatprep.subr.bf16.mxu0 0
      %429 = vmatpush2.bf16.msra.mxu0 0
      %430 = vmatprep.subr.bf16.mxu0 0
      %431 = vmatpush2.bf16.msra.mxu0 0
      %432 = vmatprep.subr.bf16.mxu0 0
      %433 = vmatpush2.bf16.msra.mxu0 0
      %434 = vmatprep.subr.bf16.mxu0 0
      %435 = vmatpush2.bf16.msra.mxu0 0
      %436 = vmatprep.subr.bf16.mxu0 0
      %437 = vmatpush2.bf16.msra.mxu0 0
      %438 = vmatprep.subr.bf16.mxu0 0
      %439 = vmatpush2.bf16.msra.mxu0 0
      %440 = vmatprep.subr.bf16.mxu0 0
      %441 = vmatpush2.bf16.msra.mxu0 0
      %442 = vmatprep.mubr.bf16.mxu0 0
      %443 = vmatmul.mubr.bf16.gmra.mxu0 %v328
      %v444 = vpop.f32.mrf.mxu0
      %v445 = vadd.f32 0.0, %v444
      %v446 = vpop.f32.mrf.mxu0
      %v447 = vpop.f32.mrf.mxu0
      %v448 = vpop.f32.mrf.mxu0
      %449 = vdwg.mxu0
      %450 = vmatprep.subr.bf16.mxu0 0
      %451 = vmatpush1.bf16.msra.mxu0 0
      %452 = vmatprep.subr.bf16.mxu0 0
      %453 = vmatpush1.bf16.msra.mxu0 0
      %454 = vmatprep.subr.bf16.mxu0 0
      %455 = vmatpush1.bf16.msra.mxu0 0
      %456 = vmatprep.subr.bf16.mxu0 0
      %457 = vmatpush1.bf16.msra.mxu0 0
      %458 = vmatprep.subr.bf16.mxu0 0
      %459 = vmatpush1.bf16.msra.mxu0 0
      %460 = vmatprep.subr.bf16.mxu0 0
      %461 = vmatpush1.bf16.msra.mxu0 0
      %462 = vmatprep.subr.bf16.mxu0 0
      %463 = vmatpush1.bf16.msra.mxu0 0
      %464 = vmatprep.subr.bf16.mxu0 0
      %465 = vmatpush1.bf16.msra.mxu0 %v294
      %466 = vmatprep.subr.bf16.mxu0 0
      %467 = vmatpush2.bf16.msra.mxu0 0
      %468 = vmatprep.subr.bf16.mxu0 0
      %469 = vmatpush2.bf16.msra.mxu0 0
      %470 = vmatprep.subr.bf16.mxu0 0
      %471 = vmatpush2.bf16.msra.mxu0 0
      %472 = vmatprep.subr.bf16.mxu0 0
      %473 = vmatpush2.bf16.msra.mxu0 0
      %474 = vmatprep.subr.bf16.mxu0 0
      %475 = vmatpush2.bf16.msra.mxu0 0
      %476 = vmatprep.subr.bf16.mxu0 0
      %477 = vmatpush2.bf16.msra.mxu0 0
      %478 = vmatprep.subr.bf16.mxu0 0
      %479 = vmatpush2.bf16.msra.mxu0 0
      %480 = vmatprep.subr.bf16.mxu0 0
      %481 = vmatpush2.bf16.msra.mxu0 0
      %482 = vmatprep.mubr.bf16.mxu0 0
      %483 = vmatmul.mubr.bf16.gmra.mxu0 %v328
      %v484 = vpop.f32.mrf.mxu0
      %v485 = vadd.f32 0.0, %v484
      %v486 = vpop.f32.mrf.mxu0
      %v487 = vpop.f32.mrf.mxu0
      %v488 = vpop.f32.mrf.mxu0
      %489 = vdwg.mxu0
      %490 = vmatprep.subr.bf16.mxu0 0
      %491 = vmatpush1.bf16.msra.mxu0 0
      %492 = vmatprep.subr.bf16.mxu0 0
      %493 = vmatpush1.bf16.msra.mxu0 0
      %494 = vmatprep.subr.bf16.mxu0 0
      %495 = vmatpush1.bf16.msra.mxu0 0
      %496 = vmatprep.subr.bf16.mxu0 0
      %497 = vmatpush1.bf16.msra.mxu0 0
      %498 = vmatprep.subr.bf16.mxu0 0
      %499 = vmatpush1.bf16.msra.mxu0 0
      %500 = vmatprep.subr.bf16.mxu0 0
      %501 = vmatpush1.bf16.msra.mxu0 0
      %502 = vmatprep.subr.bf16.mxu0 0
      %503 = vmatpush1.bf16.msra.mxu0 0
      %504 = vmatprep.subr.bf16.mxu0 0
      %505 = vmatpush1.bf16.msra.mxu0 %v295
      %506 = vmatprep.subr.bf16.mxu0 0
      %507 = vmatpush2.bf16.msra.mxu0 0
      %508 = vmatprep.subr.bf16.mxu0 0
      %509 = vmatpush2.bf16.msra.mxu0 0
      %510 = vmatprep.subr.bf16.mxu0 0
      %511 = vmatpush2.bf16.msra.mxu0 0
      %512 = vmatprep.subr.bf16.mxu0 0
      %513 = vmatpush2.bf16.msra.mxu0 0
      %514 = vmatprep.subr.bf16.mxu0 0
      %515 = vmatpush2.bf16.msra.mxu0 0
      %516 = vmatprep.subr.bf16.mxu0 0
      %517 = vmatpush2.bf16.msra.mxu0 0
      %518 = vmatprep.subr.bf16.mxu0 0
      %519 = vmatpush2.bf16.msra.mxu0 0
      %520 = vmatprep.subr.bf16.mxu0 0
      %521 = vmatpush2.bf16.msra.mxu0 0
      %522 = vmatprep.mubr.bf16.mxu0 0
      %523 = vmatmul.mubr.bf16.gmra.mxu0 %v328
      %v524 = vpop.f32.mrf.mxu0
      %v525 = vadd.f32 0.0, %v524
      %v526 = vpop.f32.mrf.mxu0
      %v527 = vpop.f32.mrf.mxu0
      %v528 = vpop.f32.mrf.mxu0
      %529 = vdwg.mxu0
      %530 = vmatprep.subr.bf16.mxu0 0
      %531 = vmatpush1.bf16.msra.mxu0 0
      %532 = vmatprep.subr.bf16.mxu0 0
      %533 = vmatpush1.bf16.msra.mxu0 0
      %534 = vmatprep.subr.bf16.mxu0 0
      %535 = vmatpush1.bf16.msra.mxu0 0
      %536 = vmatprep.subr.bf16.mxu0 0
      %537 = vmatpush1.bf16.msra.mxu0 0
      %538 = vmatprep.subr.bf16.mxu0 0
      %539 = vmatpush1.bf16.msra.mxu0 0
      %540 = vmatprep.subr.bf16.mxu0 0
      %541 = vmatpush1.bf16.msra.mxu0 0
      %542 = vmatprep.subr.bf16.mxu0 0
      %543 = vmatpush1.bf16.msra.mxu0 0
      %544 = vmatprep.subr.bf16.mxu0 0
      %545 = vmatpush1.bf16.msra.mxu0 %v296
      %546 = vmatprep.subr.bf16.mxu0 0
      %547 = vmatpush2.bf16.msra.mxu0 0
      %548 = vmatprep.subr.bf16.mxu0 0
      %549 = vmatpush2.bf16.msra.mxu0 0
      %550 = vmatprep.subr.bf16.mxu0 0
      %551 = vmatpush2.bf16.msra.mxu0 0
      %552 = vmatprep.subr.bf16.mxu0 0
      %553 = vmatpush2.bf16.msra.mxu0 0
      %554 = vmatprep.subr.bf16.mxu0 0
      %555 = vmatpush2.bf16.msra.mxu0 0
      %556 = vmatprep.subr.bf16.mxu0 0
      %557 = vmatpush2.bf16.msra.mxu0 0
      %558 = vmatprep.subr.bf16.mxu0 0
      %559 = vmatpush2.bf16.msra.mxu0 0
      %560 = vmatprep.subr.bf16.mxu0 0
      %561 = vmatpush2.bf16.msra.mxu0 0
      %562 = vmatprep.mubr.bf16.mxu0 0
      %563 = vmatmul.mubr.bf16.gmra.mxu0 %v328
      %v564 = vpop.f32.mrf.mxu0
      %v565 = vadd.f32 0.0, %v564
      %v566 = vpop.f32.mrf.mxu0
      %v567 = vpop.f32.mrf.mxu0
      %v568 = vpop.f32.mrf.mxu0
      %569 = vdwg.mxu0
      %570 = vmatprep.subr.bf16.mxu0 0
      %571 = vmatpush1.bf16.msra.mxu0 0
      %572 = vmatprep.subr.bf16.mxu0 0
      %573 = vmatpush1.bf16.msra.mxu0 0
      %574 = vmatprep.subr.bf16.mxu0 0
      %575 = vmatpush1.bf16.msra.mxu0 0
      %576 = vmatprep.subr.bf16.mxu0 0
      %577 = vmatpush1.bf16.msra.mxu0 0
      %578 = vmatprep.subr.bf16.mxu0 0
      %579 = vmatpush1.bf16.msra.mxu0 0
      %580 = vmatprep.subr.bf16.mxu0 0
      %581 = vmatpush1.bf16.msra.mxu0 0
      %582 = vmatprep.subr.bf16.mxu0 0
      %583 = vmatpush1.bf16.msra.mxu0 0
      %584 = vmatprep.subr.bf16.mxu0 0
      %585 = vmatpush1.bf16.msra.mxu0 %v297
      %586 = vmatprep.subr.bf16.mxu0 0
      %587 = vmatpush2.bf16.msra.mxu0 0
      %588 = vmatprep.subr.bf16.mxu0 0
      %589 = vmatpush2.bf16.msra.mxu0 0
      %590 = vmatprep.subr.bf16.mxu0 0
      %591 = vmatpush2.bf16.msra.mxu0 0
      %592 = vmatprep.subr.bf16.mxu0 0
      %593 = vmatpush2.bf16.msra.mxu0 0
      %594 = vmatprep.subr.bf16.mxu0 0
      %595 = vmatpush2.bf16.msra.mxu0 0
      %596 = vmatprep.subr.bf16.mxu0 0
      %597 = vmatpush2.bf16.msra.mxu0 0
      %598 = vmatprep.subr.bf16.mxu0 0
      %599 = vmatpush2.bf16.msra.mxu0 0
      %600 = vmatprep.subr.bf16.mxu0 0
      %601 = vmatpush2.bf16.msra.mxu0 0
      %602 = vmatprep.mubr.bf16.mxu0 0
      %603 = vmatmul.mubr.bf16.gmra.mxu0 %v328
      %v604 = vpop.f32.mrf.mxu0
      %v605 = vadd.f32 0.0, %v604
      %v606 = vpop.f32.mrf.mxu0
      %v607 = vpop.f32.mrf.mxu0
      %v608 = vpop.f32.mrf.mxu0
      %609 = vdwg.mxu0
      %610 = vmatprep.subr.bf16.mxu0 0
      %611 = vmatpush1.bf16.msra.mxu0 0
      %612 = vmatprep.subr.bf16.mxu0 0
      %613 = vmatpush1.bf16.msra.mxu0 0
      %614 = vmatprep.subr.bf16.mxu0 0
      %615 = vmatpush1.bf16.msra.mxu0 0
      %616 = vmatprep.subr.bf16.mxu0 0
      %617 = vmatpush1.bf16.msra.mxu0 0
      %618 = vmatprep.subr.bf16.mxu0 0
      %619 = vmatpush1.bf16.msra.mxu0 0
      %620 = vmatprep.subr.bf16.mxu0 0
      %621 = vmatpush1.bf16.msra.mxu0 0
      %622 = vmatprep.subr.bf16.mxu0 0
      %623 = vmatpush1.bf16.msra.mxu0 0
      %624 = vmatprep.subr.bf16.mxu0 0
      %625 = vmatpush1.bf16.msra.mxu0 %v298
      %626 = vmatprep.subr.bf16.mxu0 0
      %627 = vmatpush2.bf16.msra.mxu0 0
      %628 = vmatprep.subr.bf16.mxu0 0
      %629 = vmatpush2.bf16.msra.mxu0 0
      %630 = vmatprep.subr.bf16.mxu0 0
      %631 = vmatpush2.bf16.msra.mxu0 0
      %632 = vmatprep.subr.bf16.mxu0 0
      %633 = vmatpush2.bf16.msra.mxu0 0
      %634 = vmatprep.subr.bf16.mxu0 0
      %635 = vmatpush2.bf16.msra.mxu0 0
      %636 = vmatprep.subr.bf16.mxu0 0
      %637 = vmatpush2.bf16.msra.mxu0 0
      %638 = vmatprep.subr.bf16.mxu0 0
      %639 = vmatpush2.bf16.msra.mxu0 0
      %640 = vmatprep.subr.bf16.mxu0 0
      %641 = vmatpush2.bf16.msra.mxu0 0
      %642 = vmatprep.mubr.bf16.mxu0 0
      %643 = vmatmul.mubr.bf16.gmra.mxu0 %v328
      %v644 = vpop.f32.mrf.mxu0
      %v645 = vadd.f32 0.0, %v644
      %v646 = vpop.f32.mrf.mxu0
      %v647 = vpop.f32.mrf.mxu0
      %v648 = vpop.f32.mrf.mxu0
      %649 = vdwg.mxu0
      %650 = vmatprep.subr.bf16.mxu0 0
      %651 = vmatpush1.bf16.msra.mxu0 0
      %652 = vmatprep.subr.bf16.mxu0 0
      %653 = vmatpush1.bf16.msra.mxu0 0
      %654 = vmatprep.subr.bf16.mxu0 0
      %655 = vmatpush1.bf16.msra.mxu0 0
      %656 = vmatprep.subr.bf16.mxu0 0
      %657 = vmatpush1.bf16.msra.mxu0 0
      %658 = vmatprep.subr.bf16.mxu0 0
      %659 = vmatpush1.bf16.msra.mxu0 0
      %660 = vmatprep.subr.bf16.mxu0 0
      %661 = vmatpush1.bf16.msra.mxu0 0
      %662 = vmatprep.subr.bf16.mxu0 0
      %663 = vmatpush1.bf16.msra.mxu0 0
      %664 = vmatprep.subr.bf16.mxu0 0
      %665 = vmatpush1.bf16.msra.mxu0 %v299
      %666 = vmatprep.subr.bf16.mxu0 0
      %667 = vmatpush2.bf16.msra.mxu0 0
      %668 = vmatprep.subr.bf16.mxu0 0
      %669 = vmatpush2.bf16.msra.mxu0 0
      %670 = vmatprep.subr.bf16.mxu0 0
      %671 = vmatpush2.bf16.msra.mxu0 0
      %672 = vmatprep.subr.bf16.mxu0 0
      %673 = vmatpush2.bf16.msra.mxu0 0
      %674 = vmatprep.subr.bf16.mxu0 0
      %675 = vmatpush2.bf16.msra.mxu0 0
      %676 = vmatprep.subr.bf16.mxu0 0
      %677 = vmatpush2.bf16.msra.mxu0 0
      %678 = vmatprep.subr.bf16.mxu0 0
      %679 = vmatpush2.bf16.msra.mxu0 0
      %680 = vmatprep.subr.bf16.mxu0 0
      %681 = vmatpush2.bf16.msra.mxu0 0
      %682 = vmatprep.mubr.bf16.mxu0 0
      %683 = vmatmul.mubr.bf16.gmra.mxu0 %v328
      %v684 = vpop.f32.mrf.mxu0
      %v685 = vadd.f32 0.0, %v684
      %v686 = vpop.f32.mrf.mxu0
      %v687 = vpop.f32.mrf.mxu0
      %v688 = vpop.f32.mrf.mxu0
      %689 = vdwg.mxu0
      %690 = vmatprep.subr.bf16.mxu0 0
      %691 = vmatpush1.bf16.msra.mxu0 0
      %692 = vmatprep.subr.bf16.mxu0 0
      %693 = vmatpush1.bf16.msra.mxu0 0
      %694 = vmatprep.subr.bf16.mxu0 0
      %695 = vmatpush1.bf16.msra.mxu0 0
      %696 = vmatprep.subr.bf16.mxu0 0
      %697 = vmatpush1.bf16.msra.mxu0 0
      %698 = vmatprep.subr.bf16.mxu0 0
      %699 = vmatpush1.bf16.msra.mxu0 0
      %700 = vmatprep.subr.bf16.mxu0 0
      %701 = vmatpush1.bf16.msra.mxu0 0
      %702 = vmatprep.subr.bf16.mxu0 0
      %703 = vmatpush1.bf16.msra.mxu0 0
      %704 = vmatprep.subr.bf16.mxu0 0
      %705 = vmatpush1.bf16.msra.mxu0 %v300
      %706 = vmatprep.subr.bf16.mxu0 0
      %707 = vmatpush2.bf16.msra.mxu0 0
      %708 = vmatprep.subr.bf16.mxu0 0
      %709 = vmatpush2.bf16.msra.mxu0 0
      %710 = vmatprep.subr.bf16.mxu0 0
      %711 = vmatpush2.bf16.msra.mxu0 0
      %712 = vmatprep.subr.bf16.mxu0 0
      %713 = vmatpush2.bf16.msra.mxu0 0
      %714 = vmatprep.subr.bf16.mxu0 0
      %715 = vmatpush2.bf16.msra.mxu0 0
      %716 = vmatprep.subr.bf16.mxu0 0
      %717 = vmatpush2.bf16.msra.mxu0 0
      %718 = vmatprep.subr.bf16.mxu0 0
      %719 = vmatpush2.bf16.msra.mxu0 0
      %720 = vmatprep.subr.bf16.mxu0 0
      %721 = vmatpush2.bf16.msra.mxu0 0
      %722 = vmatprep.mubr.bf16.mxu0 0
      %723 = vmatmul.mubr.bf16.gmra.mxu0 %v328
      %v724 = vpop.f32.mrf.mxu0
      %v725 = vadd.f32 0.0, %v724
      %v726 = vpop.f32.mrf.mxu0
      %v727 = vpop.f32.mrf.mxu0
      %v728 = vpop.f32.mrf.mxu0
      %729 = vdwg.mxu0
      %730 = vmatprep.subr.bf16.mxu0 0
      %731 = vmatpush1.bf16.msra.mxu0 0
      %732 = vmatprep.subr.bf16.mxu0 0
      %733 = vmatpush1.bf16.msra.mxu0 0
      %734 = vmatprep.subr.bf16.mxu0 0
      %735 = vmatpush1.bf16.msra.mxu0 0
      %736 = vmatprep.subr.bf16.mxu0 0
      %737 = vmatpush1.bf16.msra.mxu0 0
      %738 = vmatprep.subr.bf16.mxu0 0
      %739 = vmatpush1.bf16.msra.mxu0 0
      %740 = vmatprep.subr.bf16.mxu0 0
      %741 = vmatpush1.bf16.msra.mxu0 0
      %742 = vmatprep.subr.bf16.mxu0 0
      %743 = vmatpush1.bf16.msra.mxu0 0
      %744 = vmatprep.subr.bf16.mxu0 0
      %745 = vmatpush1.bf16.msra.mxu0 %v301
      %746 = vmatprep.subr.bf16.mxu0 0
      %747 = vmatpush2.bf16.msra.mxu0 0
      %748 = vmatprep.subr.bf16.mxu0 0
      %749 = vmatpush2.bf16.msra.mxu0 0
      %750 = vmatprep.subr.bf16.mxu0 0
      %751 = vmatpush2.bf16.msra.mxu0 0
      %752 = vmatprep.subr.bf16.mxu0 0
      %753 = vmatpush2.bf16.msra.mxu0 0
      %754 = vmatprep.subr.bf16.mxu0 0
      %755 = vmatpush2.bf16.msra.mxu0 0
      %756 = vmatprep.subr.bf16.mxu0 0
      %757 = vmatpush2.bf16.msra.mxu0 0
      %758 = vmatprep.subr.bf16.mxu0 0
      %759 = vmatpush2.bf16.msra.mxu0 0
      %760 = vmatprep.subr.bf16.mxu0 0
      %761 = vmatpush2.bf16.msra.mxu0 0
      %762 = vmatprep.mubr.bf16.mxu0 0
      %763 = vmatmul.mubr.bf16.gmra.mxu0 %v328
      %v764 = vpop.f32.mrf.mxu0
      %v765 = vadd.f32 0.0, %v764
      %v766 = vpop.f32.mrf.mxu0
      %v767 = vpop.f32.mrf.mxu0
      %v768 = vpop.f32.mrf.mxu0
      %769 = vdwg.mxu0
      %770 = vmatprep.subr.bf16.mxu0 0
      %771 = vmatpush1.bf16.msra.mxu0 0
      %772 = vmatprep.subr.bf16.mxu0 0
      %773 = vmatpush1.bf16.msra.mxu0 0
      %774 = vmatprep.subr.bf16.mxu0 0
      %775 = vmatpush1.bf16.msra.mxu0 0
      %776 = vmatprep.subr.bf16.mxu0 0
      %777 = vmatpush1.bf16.msra.mxu0 0
      %778 = vmatprep.subr.bf16.mxu0 0
      %779 = vmatpush1.bf16.msra.mxu0 0
      %780 = vmatprep.subr.bf16.mxu0 0
      %781 = vmatpush1.bf16.msra.mxu0 0
      %782 = vmatprep.subr.bf16.mxu0 0
      %783 = vmatpush1.bf16.msra.mxu0 0
      %784 = vmatprep.subr.bf16.mxu0 0
      %785 = vmatpush1.bf16.msra.mxu0 %v302
      %786 = vmatprep.subr.bf16.mxu0 0
      %787 = vmatpush2.bf16.msra.mxu0 0
      %788 = vmatprep.subr.bf16.mxu0 0
      %789 = vmatpush2.bf16.msra.mxu0 0
      %790 = vmatprep.subr.bf16.mxu0 0
      %791 = vmatpush2.bf16.msra.mxu0 0
      %792 = vmatprep.subr.bf16.mxu0 0
      %793 = vmatpush2.bf16.msra.mxu0 0
      %794 = vmatprep.subr.bf16.mxu0 0
      %795 = vmatpush2.bf16.msra.mxu0 0
      %796 = vmatprep.subr.bf16.mxu0 0
      %797 = vmatpush2.bf16.msra.mxu0 0
      %798 = vmatprep.subr.bf16.mxu0 0
      %799 = vmatpush2.bf16.msra.mxu0 0
      %800 = vmatprep.subr.bf16.mxu0 0
      %801 = vmatpush2.bf16.msra.mxu0 0
      %802 = vmatprep.mubr.bf16.mxu0 0
      %803 = vmatmul.mubr.bf16.gmra.mxu0 %v328
      %v804 = vpop.f32.mrf.mxu0
      %v805 = vadd.f32 0.0, %v804
      %v806 = vpop.f32.mrf.mxu0
      %v807 = vpop.f32.mrf.mxu0
      %v808 = vpop.f32.mrf.mxu0
      %809 = vdwg.mxu0
      %810 = vmatprep.subr.bf16.mxu0 0
      %811 = vmatpush1.bf16.msra.mxu0 0
      %812 = vmatprep.subr.bf16.mxu0 0
      %813 = vmatpush1.bf16.msra.mxu0 0
      %814 = vmatprep.subr.bf16.mxu0 0
      %815 = vmatpush1.bf16.msra.mxu0 0
      %816 = vmatprep.subr.bf16.mxu0 0
      %817 = vmatpush1.bf16.msra.mxu0 0
      %818 = vmatprep.subr.bf16.mxu0 0
      %819 = vmatpush1.bf16.msra.mxu0 0
      %820 = vmatprep.subr.bf16.mxu0 0
      %821 = vmatpush1.bf16.msra.mxu0 0
      %822 = vmatprep.subr.bf16.mxu0 0
      %823 = vmatpush1.bf16.msra.mxu0 0
      %824 = vmatprep.subr.bf16.mxu0 0
      %825 = vmatpush1.bf16.msra.mxu0 %v303
      %826 = vmatprep.subr.bf16.mxu0 0
      %827 = vmatpush2.bf16.msra.mxu0 0
      %828 = vmatprep.subr.bf16.mxu0 0
      %829 = vmatpush2.bf16.msra.mxu0 0
      %830 = vmatprep.subr.bf16.mxu0 0
      %831 = vmatpush2.bf16.msra.mxu0 0
      %832 = vmatprep.subr.bf16.mxu0 0
      %833 = vmatpush2.bf16.msra.mxu0 0
      %834 = vmatprep.subr.bf16.mxu0 0
      %835 = vmatpush2.bf16.msra.mxu0 0
      %836 = vmatprep.subr.bf16.mxu0 0
      %837 = vmatpush2.bf16.msra.mxu0 0
      %838 = vmatprep.subr.bf16.mxu0 0
      %839 = vmatpush2.bf16.msra.mxu0 0
      %840 = vmatprep.subr.bf16.mxu0 0
      %841 = vmatpush2.bf16.msra.mxu0 0
      %842 = vmatprep.mubr.bf16.mxu0 0
      %843 = vmatmul.mubr.bf16.gmra.mxu0 %v328
      %v844 = vpop.f32.mrf.mxu0
      %v845 = vadd.f32 0.0, %v844
      %v846 = vpop.f32.mrf.mxu0
      %v847 = vpop.f32.mrf.mxu0
      %v848 = vpop.f32.mrf.mxu0
      %849 = vdwg.mxu0
      %850 = vmatprep.subr.bf16.mxu0 0
      %851 = vmatpush1.bf16.msra.mxu0 0
      %852 = vmatprep.subr.bf16.mxu0 0
      %853 = vmatpush1.bf16.msra.mxu0 0
      %854 = vmatprep.subr.bf16.mxu0 0
      %855 = vmatpush1.bf16.msra.mxu0 0
      %856 = vmatprep.subr.bf16.mxu0 0
      %857 = vmatpush1.bf16.msra.mxu0 0
      %858 = vmatprep.subr.bf16.mxu0 0
      %859 = vmatpush1.bf16.msra.mxu0 0
      %860 = vmatprep.subr.bf16.mxu0 0
      %861 = vmatpush1.bf16.msra.mxu0 0
      %862 = vmatprep.subr.bf16.mxu0 0
      %863 = vmatpush1.bf16.msra.mxu0 0
      %864 = vmatprep.subr.bf16.mxu0 0
      %865 = vmatpush1.bf16.msra.mxu0 %v304
      %866 = vmatprep.subr.bf16.mxu0 0
      %867 = vmatpush2.bf16.msra.mxu0 0
      %868 = vmatprep.subr.bf16.mxu0 0
      %869 = vmatpush2.bf16.msra.mxu0 0
      %870 = vmatprep.subr.bf16.mxu0 0
      %871 = vmatpush2.bf16.msra.mxu0 0
      %872 = vmatprep.subr.bf16.mxu0 0
      %873 = vmatpush2.bf16.msra.mxu0 0
      %874 = vmatprep.subr.bf16.mxu0 0
      %875 = vmatpush2.bf16.msra.mxu0 0
      %876 = vmatprep.subr.bf16.mxu0 0
      %877 = vmatpush2.bf16.msra.mxu0 0
      %878 = vmatprep.subr.bf16.mxu0 0
      %879 = vmatpush2.bf16.msra.mxu0 0
      %880 = vmatprep.subr.bf16.mxu0 0
      %881 = vmatpush2.bf16.msra.mxu0 0
      %882 = vmatprep.mubr.bf16.mxu0 0
      %883 = vmatmul.mubr.bf16.gmra.mxu0 %v328
      %v884 = vpop.f32.mrf.mxu0
      %v885 = vadd.f32 0.0, %v884
      %v886 = vpop.f32.mrf.mxu0
      %v887 = vpop.f32.mrf.mxu0
      %v888 = vpop.f32.mrf.mxu0
      %889 = vdwg.mxu0
      %890 = vmatprep.subr.bf16.mxu0 0
      %891 = vmatpush1.bf16.msra.mxu0 0
      %892 = vmatprep.subr.bf16.mxu0 0
      %893 = vmatpush1.bf16.msra.mxu0 0
      %894 = vmatprep.subr.bf16.mxu0 0
      %895 = vmatpush1.bf16.msra.mxu0 0
      %896 = vmatprep.subr.bf16.mxu0 0
      %897 = vmatpush1.bf16.msra.mxu0 0
      %898 = vmatprep.subr.bf16.mxu0 0
      %899 = vmatpush1.bf16.msra.mxu0 0
      %900 = vmatprep.subr.bf16.mxu0 0
      %901 = vmatpush1.bf16.msra.mxu0 0
      %902 = vmatprep.subr.bf16.mxu0 0
      %903 = vmatpush1.bf16.msra.mxu0 0
      %904 = vmatprep.subr.bf16.mxu0 0
      %905 = vmatpush1.bf16.msra.mxu0 %v305
      %906 = vmatprep.subr.bf16.mxu0 0
      %907 = vmatpush2.bf16.msra.mxu0 0
      %908 = vmatprep.subr.bf16.mxu0 0
      %909 = vmatpush2.bf16.msra.mxu0 0
      %910 = vmatprep.subr.bf16.mxu0 0
      %911 = vmatpush2.bf16.msra.mxu0 0
      %912 = vmatprep.subr.bf16.mxu0 0
      %913 = vmatpush2.bf16.msra.mxu0 0
      %914 = vmatprep.subr.bf16.mxu0 0
      %915 = vmatpush2.bf16.msra.mxu0 0
      %916 = vmatprep.subr.bf16.mxu0 0
      %917 = vmatpush2.bf16.msra.mxu0 0
      %918 = vmatprep.subr.bf16.mxu0 0
      %919 = vmatpush2.bf16.msra.mxu0 0
      %920 = vmatprep.subr.bf16.mxu0 0
      %921 = vmatpush2.bf16.msra.mxu0 0
      %922 = vmatprep.mubr.bf16.mxu0 0
      %923 = vmatmul.mubr.bf16.gmra.mxu0 %v328
      %v924 = vpop.f32.mrf.mxu0
      %v925 = vadd.f32 0.0, %v924
      %v926 = vpop.f32.mrf.mxu0
      %v927 = vpop.f32.mrf.mxu0
      %v928 = vpop.f32.mrf.mxu0
      %929 = vdwg.mxu0
      %930 = vmatprep.subr.bf16.mxu0 0
      %931 = vmatpush1.bf16.msra.mxu0 0
      %932 = vmatprep.subr.bf16.mxu0 0
      %933 = vmatpush1.bf16.msra.mxu0 0
      %934 = vmatprep.subr.bf16.mxu0 0
      %935 = vmatpush1.bf16.msra.mxu0 0
      %936 = vmatprep.subr.bf16.mxu0 0
      %937 = vmatpush1.bf16.msra.mxu0 0
      %938 = vmatprep.subr.bf16.mxu0 0
      %939 = vmatpush1.bf16.msra.mxu0 0
      %940 = vmatprep.subr.bf16.mxu0 0
      %941 = vmatpush1.bf16.msra.mxu0 0
      %942 = vmatprep.subr.bf16.mxu0 0
      %943 = vmatpush1.bf16.msra.mxu0 0
      %944 = vmatprep.subr.bf16.mxu0 0
      %945 = vmatpush1.bf16.msra.mxu0 %v306
      %946 = vmatprep.subr.bf16.mxu0 0
      %947 = vmatpush2.bf16.msra.mxu0 0
      %948 = vmatprep.subr.bf16.mxu0 0
      %949 = vmatpush2.bf16.msra.mxu0 0
      %950 = vmatprep.subr.bf16.mxu0 0
      %951 = vmatpush2.bf16.msra.mxu0 0
      %952 = vmatprep.subr.bf16.mxu0 0
      %953 = vmatpush2.bf16.msra.mxu0 0
      %954 = vmatprep.subr.bf16.mxu0 0
      %955 = vmatpush2.bf16.msra.mxu0 0
      %956 = vmatprep.subr.bf16.mxu0 0
      %957 = vmatpush2.bf16.msra.mxu0 0
      %958 = vmatprep.subr.bf16.mxu0 0
      %959 = vmatpush2.bf16.msra.mxu0 0
      %960 = vmatprep.subr.bf16.mxu0 0
      %961 = vmatpush2.bf16.msra.mxu0 0
      %962 = vmatprep.mubr.bf16.mxu0 0
      %963 = vmatmul.mubr.bf16.gmra.mxu0 %v328
      %v964 = vpop.f32.mrf.mxu0
      %v965 = vadd.f32 0.0, %v964
      %v966 = vpop.f32.mrf.mxu0
      %v967 = vpop.f32.mrf.mxu0
      %v968 = vpop.f32.mrf.mxu0
      %969 = vdwg.mxu0
      %970 = vmatprep.subr.bf16.mxu0 0
      %971 = vmatpush1.bf16.msra.mxu0 0
      %972 = vmatprep.subr.bf16.mxu0 0
      %973 = vmatpush1.bf16.msra.mxu0 0
      %974 = vmatprep.subr.bf16.mxu0 0
      %975 = vmatpush1.bf16.msra.mxu0 0
      %976 = vmatprep.subr.bf16.mxu0 0
      %977 = vmatpush1.bf16.msra.mxu0 0
      %978 = vmatprep.subr.bf16.mxu0 0
      %979 = vmatpush1.bf16.msra.mxu0 0
      %980 = vmatprep.subr.bf16.mxu0 0
      %981 = vmatpush1.bf16.msra.mxu0 0
      %982 = vmatprep.subr.bf16.mxu0 0
      %983 = vmatpush1.bf16.msra.mxu0 0
      %984 = vmatprep.subr.bf16.mxu0 0
      %985 = vmatpush1.bf16.msra.mxu0 %v307
      %986 = vmatprep.subr.bf16.mxu0 0
      %987 = vmatpush2.bf16.msra.mxu0 0
      %988 = vmatprep.subr.bf16.mxu0 0
      %989 = vmatpush2.bf16.msra.mxu0 0
      %990 = vmatprep.subr.bf16.mxu0 0
      %991 = vmatpush2.bf16.msra.mxu0 0
      %992 = vmatprep.subr.bf16.mxu0 0
      %993 = vmatpush2.bf16.msra.mxu0 0
      %994 = vmatprep.subr.bf16.mxu0 0
      %995 = vmatpush2.bf16.msra.mxu0 0
      %996 = vmatprep.subr.bf16.mxu0 0
      %997 = vmatpush2.bf16.msra.mxu0 0
      %998 = vmatprep.subr.bf16.mxu0 0
      %999 = vmatpush2.bf16.msra.mxu0 0
      %1000 = vmatprep.subr.bf16.mxu0 0
      %1001 = vmatpush2.bf16.msra.mxu0 0
      %1002 = vmatprep.mubr.bf16.mxu0 0
      %1003 = vmatmul.mubr.bf16.gmra.mxu0 %v328
      %v1004 = vpop.f32.mrf.mxu0
      %v1005 = vadd.f32 0.0, %v1004
      %v1006 = vpop.f32.mrf.mxu0
      %v1007 = vpop.f32.mrf.mxu0
      %v1008 = vpop.f32.mrf.mxu0
      %1009 = vdwg.mxu0
      %1010 = vmatprep.subr.bf16.mxu0 0
      %1011 = vmatpush1.bf16.msra.mxu0 0
      %1012 = vmatprep.subr.bf16.mxu0 0
      %1013 = vmatpush1.bf16.msra.mxu0 0
      %1014 = vmatprep.subr.bf16.mxu0 0
      %1015 = vmatpush1.bf16.msra.mxu0 0
      %1016 = vmatprep.subr.bf16.mxu0 0
      %1017 = vmatpush1.bf16.msra.mxu0 0
      %1018 = vmatprep.subr.bf16.mxu0 0
      %1019 = vmatpush1.bf16.msra.mxu0 0
      %1020 = vmatprep.subr.bf16.mxu0 0
      %1021 = vmatpush1.bf16.msra.mxu0 0
      %1022 = vmatprep.subr.bf16.mxu0 0
      %1023 = vmatpush1.bf16.msra.mxu0 0
      %1024 = vmatprep.subr.bf16.mxu0 0
      %1025 = vmatpush1.bf16.msra.mxu0 %v308
      %1026 = vmatprep.subr.bf16.mxu0 0
      %1027 = vmatpush2.bf16.msra.mxu0 0
      %1028 = vmatprep.subr.bf16.mxu0 0
      %1029 = vmatpush2.bf16.msra.mxu0 0
      %1030 = vmatprep.subr.bf16.mxu0 0
      %1031 = vmatpush2.bf16.msra.mxu0 0
      %1032 = vmatprep.subr.bf16.mxu0 0
      %1033 = vmatpush2.bf16.msra.mxu0 0
      %1034 = vmatprep.subr.bf16.mxu0 0
      %1035 = vmatpush2.bf16.msra.mxu0 0
      %1036 = vmatprep.subr.bf16.mxu0 0
      %1037 = vmatpush2.bf16.msra.mxu0 0
      %1038 = vmatprep.subr.bf16.mxu0 0
      %1039 = vmatpush2.bf16.msra.mxu0 0
      %1040 = vmatprep.subr.bf16.mxu0 0
      %1041 = vmatpush2.bf16.msra.mxu0 0
      %1042 = vmatprep.mubr.bf16.mxu0 0
      %1043 = vmatmul.mubr.bf16.gmra.mxu0 %v328
      %v1044 = vpop.f32.mrf.mxu0
      %v1045 = vadd.f32 0.0, %v1044
      %v1046 = vpop.f32.mrf.mxu0
      %v1047 = vpop.f32.mrf.mxu0
      %v1048 = vpop.f32.mrf.mxu0
      %1049 = vdwg.mxu0
      %1050 = vmatprep.subr.bf16.mxu0 0
      %1051 = vmatpush1.bf16.msra.mxu0 0
      %1052 = vmatprep.subr.bf16.mxu0 0
      %1053 = vmatpush1.bf16.msra.mxu0 0
      %1054 = vmatprep.subr.bf16.mxu0 0
      %1055 = vmatpush1.bf16.msra.mxu0 0
      %1056 = vmatprep.subr.bf16.mxu0 0
      %1057 = vmatpush1.bf16.msra.mxu0 0
      %1058 = vmatprep.subr.bf16.mxu0 0
      %1059 = vmatpush1.bf16.msra.mxu0 0
      %1060 = vmatprep.subr.bf16.mxu0 0
      %1061 = vmatpush1.bf16.msra.mxu0 0
      %1062 = vmatprep.subr.bf16.mxu0 0
      %1063 = vmatpush1.bf16.msra.mxu0 0
      %1064 = vmatprep.subr.bf16.mxu0 0
      %1065 = vmatpush1.bf16.msra.mxu0 %v309
      %1066 = vmatprep.subr.bf16.mxu0 0
      %1067 = vmatpush2.bf16.msra.mxu0 0
      %1068 = vmatprep.subr.bf16.mxu0 0
      %1069 = vmatpush2.bf16.msra.mxu0 0
      %1070 = vmatprep.subr.bf16.mxu0 0
      %1071 = vmatpush2.bf16.msra.mxu0 0
      %1072 = vmatprep.subr.bf16.mxu0 0
      %1073 = vmatpush2.bf16.msra.mxu0 0
      %1074 = vmatprep.subr.bf16.mxu0 0
      %1075 = vmatpush2.bf16.msra.mxu0 0
      %1076 = vmatprep.subr.bf16.mxu0 0
      %1077 = vmatpush2.bf16.msra.mxu0 0
      %1078 = vmatprep.subr.bf16.mxu0 0
      %1079 = vmatpush2.bf16.msra.mxu0 0
      %1080 = vmatprep.subr.bf16.mxu0 0
      %1081 = vmatpush2.bf16.msra.mxu0 0
      %1082 = vmatprep.mubr.bf16.mxu0 0
      %1083 = vmatmul.mubr.bf16.gmra.mxu0 %v328
      %v1084 = vpop.f32.mrf.mxu0
      %v1085 = vadd.f32 0.0, %v1084
      %v1086 = vpop.f32.mrf.mxu0
      %v1087 = vpop.f32.mrf.mxu0
      %v1088 = vpop.f32.mrf.mxu0
      %1089 = vdwg.mxu0
      %1090 = vmatprep.subr.bf16.mxu0 0
      %1091 = vmatpush1.bf16.msra.mxu0 0
      %1092 = vmatprep.subr.bf16.mxu0 0
      %1093 = vmatpush1.bf16.msra.mxu0 0
      %1094 = vmatprep.subr.bf16.mxu0 0
      %1095 = vmatpush1.bf16.msra.mxu0 0
      %1096 = vmatprep.subr.bf16.mxu0 0
      %1097 = vmatpush1.bf16.msra.mxu0 0
      %1098 = vmatprep.subr.bf16.mxu0 0
      %1099 = vmatpush1.bf16.msra.mxu0 0
      %1100 = vmatprep.subr.bf16.mxu0 0
      %1101 = vmatpush1.bf16.msra.mxu0 0
      %1102 = vmatprep.subr.bf16.mxu0 0
      %1103 = vmatpush1.bf16.msra.mxu0 0
      %1104 = vmatprep.subr.bf16.mxu0 0
      %1105 = vmatpush1.bf16.msra.mxu0 %v310
      %1106 = vmatprep.subr.bf16.mxu0 0
      %1107 = vmatpush2.bf16.msra.mxu0 0
      %1108 = vmatprep.subr.bf16.mxu0 0
      %1109 = vmatpush2.bf16.msra.mxu0 0
      %1110 = vmatprep.subr.bf16.mxu0 0
      %1111 = vmatpush2.bf16.msra.mxu0 0
      %1112 = vmatprep.subr.bf16.mxu0 0
      %1113 = vmatpush2.bf16.msra.mxu0 0
      %1114 = vmatprep.subr.bf16.mxu0 0
      %1115 = vmatpush2.bf16.msra.mxu0 0
      %1116 = vmatprep.subr.bf16.mxu0 0
      %1117 = vmatpush2.bf16.msra.mxu0 0
      %1118 = vmatprep.subr.bf16.mxu0 0
      %1119 = vmatpush2.bf16.msra.mxu0 0
      %1120 = vmatprep.subr.bf16.mxu0 0
      %1121 = vmatpush2.bf16.msra.mxu0 0
      %1122 = vmatprep.mubr.bf16.mxu0 0
      %1123 = vmatmul.mubr.bf16.gmra.mxu0 %v328
      %v1124 = vpop.f32.mrf.mxu0
      %v1125 = vadd.f32 0.0, %v1124
      %v1126 = vpop.f32.mrf.mxu0
      %v1127 = vpop.f32.mrf.mxu0
      %v1128 = vpop.f32.mrf.mxu0
      %1129 = vdwg.mxu0
      %1130 = vmatprep.subr.bf16.mxu0 0
      %1131 = vmatpush1.bf16.msra.mxu0 0
      %1132 = vmatprep.subr.bf16.mxu0 0
      %1133 = vmatpush1.bf16.msra.mxu0 0
      %1134 = vmatprep.subr.bf16.mxu0 0
      %1135 = vmatpush1.bf16.msra.mxu0 0
      %1136 = vmatprep.subr.bf16.mxu0 0
      %1137 = vmatpush1.bf16.msra.mxu0 0
      %1138 = vmatprep.subr.bf16.mxu0 0
      %1139 = vmatpush1.bf16.msra.mxu0 0
      %1140 = vmatprep.subr.bf16.mxu0 0
      %1141 = vmatpush1.bf16.msra.mxu0 0
      %1142 = vmatprep.subr.bf16.mxu0 0
      %1143 = vmatpush1.bf16.msra.mxu0 0
      %1144 = vmatprep.subr.bf16.mxu0 0
      %1145 = vmatpush1.bf16.msra.mxu0 %v311
      %1146 = vmatprep.subr.bf16.mxu0 0
      %1147 = vmatpush2.bf16.msra.mxu0 0
      %1148 = vmatprep.subr.bf16.mxu0 0
      %1149 = vmatpush2.bf16.msra.mxu0 0
      %1150 = vmatprep.subr.bf16.mxu0 0
      %1151 = vmatpush2.bf16.msra.mxu0 0
      %1152 = vmatprep.subr.bf16.mxu0 0
      %1153 = vmatpush2.bf16.msra.mxu0 0
      %1154 = vmatprep.subr.bf16.mxu0 0
      %1155 = vmatpush2.bf16.msra.mxu0 0
      %1156 = vmatprep.subr.bf16.mxu0 0
      %1157 = vmatpush2.bf16.msra.mxu0 0
      %1158 = vmatprep.subr.bf16.mxu0 0
      %1159 = vmatpush2.bf16.msra.mxu0 0
      %1160 = vmatprep.subr.bf16.mxu0 0
      %1161 = vmatpush2.bf16.msra.mxu0 0
      %1162 = vmatprep.mubr.bf16.mxu0 0
      %1163 = vmatmul.mubr.bf16.gmra.mxu0 %v328
      %v1164 = vpop.f32.mrf.mxu0
      %v1165 = vadd.f32 0.0, %v1164
      %v1166 = vpop.f32.mrf.mxu0
      %v1167 = vpop.f32.mrf.mxu0
      %v1168 = vpop.f32.mrf.mxu0
      %1169 = vdwg.mxu0
      %1170 = vmatprep.subr.bf16.mxu0 0
      %1171 = vmatpush1.bf16.msra.mxu0 0
      %1172 = vmatprep.subr.bf16.mxu0 0
      %1173 = vmatpush1.bf16.msra.mxu0 0
      %1174 = vmatprep.subr.bf16.mxu0 0
      %1175 = vmatpush1.bf16.msra.mxu0 0
      %1176 = vmatprep.subr.bf16.mxu0 0
      %1177 = vmatpush1.bf16.msra.mxu0 0
      %1178 = vmatprep.subr.bf16.mxu0 0
      %1179 = vmatpush1.bf16.msra.mxu0 0
      %1180 = vmatprep.subr.bf16.mxu0 0
      %1181 = vmatpush1.bf16.msra.mxu0 0
      %1182 = vmatprep.subr.bf16.mxu0 0
      %1183 = vmatpush1.bf16.msra.mxu0 0
      %1184 = vmatprep.subr.bf16.mxu0 0
      %1185 = vmatpush1.bf16.msra.mxu0 %v312
      %1186 = vmatprep.subr.bf16.mxu0 0
      %1187 = vmatpush2.bf16.msra.mxu0 0
      %1188 = vmatprep.subr.bf16.mxu0 0
      %1189 = vmatpush2.bf16.msra.mxu0 0
      %1190 = vmatprep.subr.bf16.mxu0 0
      %1191 = vmatpush2.bf16.msra.mxu0 0
      %1192 = vmatprep.subr.bf16.mxu0 0
      %1193 = vmatpush2.bf16.msra.mxu0 0
      %1194 = vmatprep.subr.bf16.mxu0 0
      %1195 = vmatpush2.bf16.msra.mxu0 0
      %1196 = vmatprep.subr.bf16.mxu0 0
      %1197 = vmatpush2.bf16.msra.mxu0 0
      %1198 = vmatprep.subr.bf16.mxu0 0
      %1199 = vmatpush2.bf16.msra.mxu0 0
      %1200 = vmatprep.subr.bf16.mxu0 0
      %1201 = vmatpush2.bf16.msra.mxu0 0
      %1202 = vmatprep.mubr.bf16.mxu0 0
      %1203 = vmatmul.mubr.bf16.gmra.mxu0 %v328
      %v1204 = vpop.f32.mrf.mxu0
      %v1205 = vadd.f32 0.0, %v1204
      %v1206 = vpop.f32.mrf.mxu0
      %v1207 = vpop.f32.mrf.mxu0
      %v1208 = vpop.f32.mrf.mxu0
      %1209 = vdwg.mxu0
      %1210 = vmatprep.subr.bf16.mxu0 0
      %1211 = vmatpush1.bf16.msra.mxu0 0
      %1212 = vmatprep.subr.bf16.mxu0 0
      %1213 = vmatpush1.bf16.msra.mxu0 0
      %1214 = vmatprep.subr.bf16.mxu0 0
      %1215 = vmatpush1.bf16.msra.mxu0 0
      %1216 = vmatprep.subr.bf16.mxu0 0
      %1217 = vmatpush1.bf16.msra.mxu0 0
      %1218 = vmatprep.subr.bf16.mxu0 0
      %1219 = vmatpush1.bf16.msra.mxu0 0
      %1220 = vmatprep.subr.bf16.mxu0 0
      %1221 = vmatpush1.bf16.msra.mxu0 0
      %1222 = vmatprep.subr.bf16.mxu0 0
      %1223 = vmatpush1.bf16.msra.mxu0 0
      %1224 = vmatprep.subr.bf16.mxu0 0
      %1225 = vmatpush1.bf16.msra.mxu0 %v313
      %1226 = vmatprep.subr.bf16.mxu0 0
      %1227 = vmatpush2.bf16.msra.mxu0 0
      %1228 = vmatprep.subr.bf16.mxu0 0
      %1229 = vmatpush2.bf16.msra.mxu0 0
      %1230 = vmatprep.subr.bf16.mxu0 0
      %1231 = vmatpush2.bf16.msra.mxu0 0
      %1232 = vmatprep.subr.bf16.mxu0 0
      %1233 = vmatpush2.bf16.msra.mxu0 0
      %1234 = vmatprep.subr.bf16.mxu0 0
      %1235 = vmatpush2.bf16.msra.mxu0 0
      %1236 = vmatprep.subr.bf16.mxu0 0
      %1237 = vmatpush2.bf16.msra.mxu0 0
      %1238 = vmatprep.subr.bf16.mxu0 0
      %1239 = vmatpush2.bf16.msra.mxu0 0
      %1240 = vmatprep.subr.bf16.mxu0 0
      %1241 = vmatpush2.bf16.msra.mxu0 0
      %1242 = vmatprep.mubr.bf16.mxu0 0
      %1243 = vmatmul.mubr.bf16.gmra.mxu0 %v328
      %v1244 = vpop.f32.mrf.mxu0
      %v1245 = vadd.f32 0.0, %v1244
      %v1246 = vpop.f32.mrf.mxu0
      %v1247 = vpop.f32.mrf.mxu0
      %v1248 = vpop.f32.mrf.mxu0
      %1249 = vdwg.mxu0
      %1250 = vmatprep.subr.bf16.mxu0 0
      %1251 = vmatpush1.bf16.msra.mxu0 0
      %1252 = vmatprep.subr.bf16.mxu0 0
      %1253 = vmatpush1.bf16.msra.mxu0 0
      %1254 = vmatprep.subr.bf16.mxu0 0
      %1255 = vmatpush1.bf16.msra.mxu0 0
      %1256 = vmatprep.subr.bf16.mxu0 0
      %1257 = vmatpush1.bf16.msra.mxu0 0
      %1258 = vmatprep.subr.bf16.mxu0 0
      %1259 = vmatpush1.bf16.msra.mxu0 0
      %1260 = vmatprep.subr.bf16.mxu0 0
      %1261 = vmatpush1.bf16.msra.mxu0 0
      %1262 = vmatprep.subr.bf16.mxu0 0
      %1263 = vmatpush1.bf16.msra.mxu0 0
      %1264 = vmatprep.subr.bf16.mxu0 0
      %1265 = vmatpush1.bf16.msra.mxu0 %v314
      %1266 = vmatprep.subr.bf16.mxu0 0
      %1267 = vmatpush2.bf16.msra.mxu0 0
      %1268 = vmatprep.subr.bf16.mxu0 0
      %1269 = vmatpush2.bf16.msra.mxu0 0
      %1270 = vmatprep.subr.bf16.mxu0 0
      %1271 = vmatpush2.bf16.msra.mxu0 0
      %1272 = vmatprep.subr.bf16.mxu0 0
      %1273 = vmatpush2.bf16.msra.mxu0 0
      %1274 = vmatprep.subr.bf16.mxu0 0
      %1275 = vmatpush2.bf16.msra.mxu0 0
      %1276 = vmatprep.subr.bf16.mxu0 0
      %1277 = vmatpush2.bf16.msra.mxu0 0
      %1278 = vmatprep.subr.bf16.mxu0 0
      %1279 = vmatpush2.bf16.msra.mxu0 0
      %1280 = vmatprep.subr.bf16.mxu0 0
      %1281 = vmatpush2.bf16.msra.mxu0 0
      %1282 = vmatprep.mubr.bf16.mxu0 0
      %1283 = vmatmul.mubr.bf16.gmra.mxu0 %v328
      %v1284 = vpop.f32.mrf.mxu0
      %v1285 = vadd.f32 0.0, %v1284
      %v1286 = vpop.f32.mrf.mxu0
      %v1287 = vpop.f32.mrf.mxu0
      %v1288 = vpop.f32.mrf.mxu0
      %1289 = vdwg.mxu0
      %1290 = vmatprep.subr.bf16.mxu0 0
      %1291 = vmatpush1.bf16.msra.mxu0 0
      %1292 = vmatprep.subr.bf16.mxu0 0
      %1293 = vmatpush1.bf16.msra.mxu0 0
      %1294 = vmatprep.subr.bf16.mxu0 0
      %1295 = vmatpush1.bf16.msra.mxu0 0
      %1296 = vmatprep.subr.bf16.mxu0 0
      %1297 = vmatpush1.bf16.msra.mxu0 0
      %1298 = vmatprep.subr.bf16.mxu0 0
      %1299 = vmatpush1.bf16.msra.mxu0 0
      %1300 = vmatprep.subr.bf16.mxu0 0
      %1301 = vmatpush1.bf16.msra.mxu0 0
      %1302 = vmatprep.subr.bf16.mxu0 0
      %1303 = vmatpush1.bf16.msra.mxu0 0
      %1304 = vmatprep.subr.bf16.mxu0 0
      %1305 = vmatpush1.bf16.msra.mxu0 %v315
      %1306 = vmatprep.subr.bf16.mxu0 0
      %1307 = vmatpush2.bf16.msra.mxu0 0
      %1308 = vmatprep.subr.bf16.mxu0 0
      %1309 = vmatpush2.bf16.msra.mxu0 0
      %1310 = vmatprep.subr.bf16.mxu0 0
      %1311 = vmatpush2.bf16.msra.mxu0 0
      %1312 = vmatprep.subr.bf16.mxu0 0
      %1313 = vmatpush2.bf16.msra.mxu0 0
      %1314 = vmatprep.subr.bf16.mxu0 0
      %1315 = vmatpush2.bf16.msra.mxu0 0
      %1316 = vmatprep.subr.bf16.mxu0 0
      %1317 = vmatpush2.bf16.msra.mxu0 0
      %1318 = vmatprep.subr.bf16.mxu0 0
      %1319 = vmatpush2.bf16.msra.mxu0 0
      %1320 = vmatprep.subr.bf16.mxu0 0
      %1321 = vmatpush2.bf16.msra.mxu0 0
      %1322 = vmatprep.mubr.bf16.mxu0 0
      %1323 = vmatmul.mubr.bf16.gmra.mxu0 %v328
      %v1324 = vpop.f32.mrf.mxu0
      %v1325 = vadd.f32 0.0, %v1324
      %v1326 = vpop.f32.mrf.mxu0
      %v1327 = vpop.f32.mrf.mxu0
      %v1328 = vpop.f32.mrf.mxu0
      %1329 = vdwg.mxu0
      %1330 = vmatprep.subr.bf16.mxu0 0
      %1331 = vmatpush1.bf16.msra.mxu0 0
      %1332 = vmatprep.subr.bf16.mxu0 0
      %1333 = vmatpush1.bf16.msra.mxu0 0
      %1334 = vmatprep.subr.bf16.mxu0 0
      %1335 = vmatpush1.bf16.msra.mxu0 0
      %1336 = vmatprep.subr.bf16.mxu0 0
      %1337 = vmatpush1.bf16.msra.mxu0 0
      %1338 = vmatprep.subr.bf16.mxu0 0
      %1339 = vmatpush1.bf16.msra.mxu0 0
      %1340 = vmatprep.subr.bf16.mxu0 0
      %1341 = vmatpush1.bf16.msra.mxu0 0
      %1342 = vmatprep.subr.bf16.mxu0 0
      %1343 = vmatpush1.bf16.msra.mxu0 0
      %1344 = vmatprep.subr.bf16.mxu0 0
      %1345 = vmatpush1.bf16.msra.mxu0 %v316
      %1346 = vmatprep.subr.bf16.mxu0 0
      %1347 = vmatpush2.bf16.msra.mxu0 0
      %1348 = vmatprep.subr.bf16.mxu0 0
      %1349 = vmatpush2.bf16.msra.mxu0 0
      %1350 = vmatprep.subr.bf16.mxu0 0
      %1351 = vmatpush2.bf16.msra.mxu0 0
      %1352 = vmatprep.subr.bf16.mxu0 0
      %1353 = vmatpush2.bf16.msra.mxu0 0
      %1354 = vmatprep.subr.bf16.mxu0 0
      %1355 = vmatpush2.bf16.msra.mxu0 0
      %1356 = vmatprep.subr.bf16.mxu0 0
      %1357 = vmatpush2.bf16.msra.mxu0 0
      %1358 = vmatprep.subr.bf16.mxu0 0
      %1359 = vmatpush2.bf16.msra.mxu0 0
      %1360 = vmatprep.subr.bf16.mxu0 0
      %1361 = vmatpush2.bf16.msra.mxu0 0
      %1362 = vmatprep.mubr.bf16.mxu0 0
      %1363 = vmatmul.mubr.bf16.gmra.mxu0 %v328
      %v1364 = vpop.f32.mrf.mxu0
      %v1365 = vadd.f32 0.0, %v1364
      %v1366 = vpop.f32.mrf.mxu0
      %v1367 = vpop.f32.mrf.mxu0
      %v1368 = vpop.f32.mrf.mxu0
      %1369 = vdwg.mxu0
      %1370 = vmatprep.subr.bf16.mxu0 0
      %1371 = vmatpush1.bf16.msra.mxu0 0
      %1372 = vmatprep.subr.bf16.mxu0 0
      %1373 = vmatpush1.bf16.msra.mxu0 0
      %1374 = vmatprep.subr.bf16.mxu0 0
      %1375 = vmatpush1.bf16.msra.mxu0 0
      %1376 = vmatprep.subr.bf16.mxu0 0
      %1377 = vmatpush1.bf16.msra.mxu0 0
      %1378 = vmatprep.subr.bf16.mxu0 0
      %1379 = vmatpush1.bf16.msra.mxu0 0
      %1380 = vmatprep.subr.bf16.mxu0 0
      %1381 = vmatpush1.bf16.msra.mxu0 0
      %1382 = vmatprep.subr.bf16.mxu0 0
      %1383 = vmatpush1.bf16.msra.mxu0 0
      %1384 = vmatprep.subr.bf16.mxu0 0
      %1385 = vmatpush1.bf16.msra.mxu0 %v317
      %1386 = vmatprep.subr.bf16.mxu0 0
      %1387 = vmatpush2.bf16.msra.mxu0 0
      %1388 = vmatprep.subr.bf16.mxu0 0
      %1389 = vmatpush2.bf16.msra.mxu0 0
      %1390 = vmatprep.subr.bf16.mxu0 0
      %1391 = vmatpush2.bf16.msra.mxu0 0
      %1392 = vmatprep.subr.bf16.mxu0 0
      %1393 = vmatpush2.bf16.msra.mxu0 0
      %1394 = vmatprep.subr.bf16.mxu0 0
      %1395 = vmatpush2.bf16.msra.mxu0 0
      %1396 = vmatprep.subr.bf16.mxu0 0
      %1397 = vmatpush2.bf16.msra.mxu0 0
      %1398 = vmatprep.subr.bf16.mxu0 0
      %1399 = vmatpush2.bf16.msra.mxu0 0
      %1400 = vmatprep.subr.bf16.mxu0 0
      %1401 = vmatpush2.bf16.msra.mxu0 0
      %1402 = vmatprep.mubr.bf16.mxu0 0
      %1403 = vmatmul.mubr.bf16.gmra.mxu0 %v328
      %v1404 = vpop.f32.mrf.mxu0
      %v1405 = vadd.f32 0.0, %v1404
      %v1406 = vpop.f32.mrf.mxu0
      %v1407 = vpop.f32.mrf.mxu0
      %v1408 = vpop.f32.mrf.mxu0
      %1409 = vdwg.mxu0
      %1410 = vmatprep.subr.bf16.mxu0 0
      %1411 = vmatpush1.bf16.msra.mxu0 0
      %1412 = vmatprep.subr.bf16.mxu0 0
      %1413 = vmatpush1.bf16.msra.mxu0 0
      %1414 = vmatprep.subr.bf16.mxu0 0
      %1415 = vmatpush1.bf16.msra.mxu0 0
      %1416 = vmatprep.subr.bf16.mxu0 0
      %1417 = vmatpush1.bf16.msra.mxu0 0
      %1418 = vmatprep.subr.bf16.mxu0 0
      %1419 = vmatpush1.bf16.msra.mxu0 0
      %1420 = vmatprep.subr.bf16.mxu0 0
      %1421 = vmatpush1.bf16.msra.mxu0 0
      %1422 = vmatprep.subr.bf16.mxu0 0
      %1423 = vmatpush1.bf16.msra.mxu0 0
      %1424 = vmatprep.subr.bf16.mxu0 0
      %1425 = vmatpush1.bf16.msra.mxu0 %v318
      %1426 = vmatprep.subr.bf16.mxu0 0
      %1427 = vmatpush2.bf16.msra.mxu0 0
      %1428 = vmatprep.subr.bf16.mxu0 0
      %1429 = vmatpush2.bf16.msra.mxu0 0
      %1430 = vmatprep.subr.bf16.mxu0 0
      %1431 = vmatpush2.bf16.msra.mxu0 0
      %1432 = vmatprep.subr.bf16.mxu0 0
      %1433 = vmatpush2.bf16.msra.mxu0 0
      %1434 = vmatprep.subr.bf16.mxu0 0
      %1435 = vmatpush2.bf16.msra.mxu0 0
      %1436 = vmatprep.subr.bf16.mxu0 0
      %1437 = vmatpush2.bf16.msra.mxu0 0
      %1438 = vmatprep.subr.bf16.mxu0 0
      %1439 = vmatpush2.bf16.msra.mxu0 0
      %1440 = vmatprep.subr.bf16.mxu0 0
      %1441 = vmatpush2.bf16.msra.mxu0 0
      %1442 = vmatprep.mubr.bf16.mxu0 0
      %1443 = vmatmul.mubr.bf16.gmra.mxu0 %v328
      %v1444 = vpop.f32.mrf.mxu0
      %v1445 = vadd.f32 0.0, %v1444
      %v1446 = vpop.f32.mrf.mxu0
      %v1447 = vpop.f32.mrf.mxu0
      %v1448 = vpop.f32.mrf.mxu0
      %1449 = vdwg.mxu0
      %1450 = vmatprep.subr.bf16.mxu0 0
      %1451 = vmatpush1.bf16.msra.mxu0 0
      %1452 = vmatprep.subr.bf16.mxu0 0
      %1453 = vmatpush1.bf16.msra.mxu0 0
      %1454 = vmatprep.subr.bf16.mxu0 0
      %1455 = vmatpush1.bf16.msra.mxu0 0
      %1456 = vmatprep.subr.bf16.mxu0 0
      %1457 = vmatpush1.bf16.msra.mxu0 0
      %1458 = vmatprep.subr.bf16.mxu0 0
      %1459 = vmatpush1.bf16.msra.mxu0 0
      %1460 = vmatprep.subr.bf16.mxu0 0
      %1461 = vmatpush1.bf16.msra.mxu0 0
      %1462 = vmatprep.subr.bf16.mxu0 0
      %1463 = vmatpush1.bf16.msra.mxu0 0
      %1464 = vmatprep.subr.bf16.mxu0 0
      %1465 = vmatpush1.bf16.msra.mxu0 %v319
      %1466 = vmatprep.subr.bf16.mxu0 0
      %1467 = vmatpush2.bf16.msra.mxu0 0
      %1468 = vmatprep.subr.bf16.mxu0 0
      %1469 = vmatpush2.bf16.msra.mxu0 0
      %1470 = vmatprep.subr.bf16.mxu0 0
      %1471 = vmatpush2.bf16.msra.mxu0 0
      %1472 = vmatprep.subr.bf16.mxu0 0
      %1473 = vmatpush2.bf16.msra.mxu0 0
      %1474 = vmatprep.subr.bf16.mxu0 0
      %1475 = vmatpush2.bf16.msra.mxu0 0
      %1476 = vmatprep.subr.bf16.mxu0 0
      %1477 = vmatpush2.bf16.msra.mxu0 0
      %1478 = vmatprep.subr.bf16.mxu0 0
      %1479 = vmatpush2.bf16.msra.mxu0 0
      %1480 = vmatprep.subr.bf16.mxu0 0
      %1481 = vmatpush2.bf16.msra.mxu0 0
      %1482 = vmatprep.mubr.bf16.mxu0 0
      %1483 = vmatmul.mubr.bf16.gmra.mxu0 %v328
      %v1484 = vpop.f32.mrf.mxu0
      %v1485 = vadd.f32 0.0, %v1484
      %v1486 = vpop.f32.mrf.mxu0
      %v1487 = vpop.f32.mrf.mxu0
      %v1488 = vpop.f32.mrf.mxu0
      %1489 = vdwg.mxu0
      %1490 = vmatprep.subr.bf16.mxu0 0
      %1491 = vmatpush1.bf16.msra.mxu0 0
      %1492 = vmatprep.subr.bf16.mxu0 0
      %1493 = vmatpush1.bf16.msra.mxu0 0
      %1494 = vmatprep.subr.bf16.mxu0 0
      %1495 = vmatpush1.bf16.msra.mxu0 0
      %1496 = vmatprep.subr.bf16.mxu0 0
      %1497 = vmatpush1.bf16.msra.mxu0 0
      %1498 = vmatprep.subr.bf16.mxu0 0
      %1499 = vmatpush1.bf16.msra.mxu0 0
      %1500 = vmatprep.subr.bf16.mxu0 0
      %1501 = vmatpush1.bf16.msra.mxu0 0
      %1502 = vmatprep.subr.bf16.mxu0 0
      %1503 = vmatpush1.bf16.msra.mxu0 0
      %1504 = vmatprep.subr.bf16.mxu0 0
      %1505 = vmatpush1.bf16.msra.mxu0 %v320
      %1506 = vmatprep.subr.bf16.mxu0 0
      %1507 = vmatpush2.bf16.msra.mxu0 0
      %1508 = vmatprep.subr.bf16.mxu0 0
      %1509 = vmatpush2.bf16.msra.mxu0 0
      %1510 = vmatprep.subr.bf16.mxu0 0
      %1511 = vmatpush2.bf16.msra.mxu0 0
      %1512 = vmatprep.subr.bf16.mxu0 0
      %1513 = vmatpush2.bf16.msra.mxu0 0
      %1514 = vmatprep.subr.bf16.mxu0 0
      %1515 = vmatpush2.bf16.msra.mxu0 0
      %1516 = vmatprep.subr.bf16.mxu0 0
      %1517 = vmatpush2.bf16.msra.mxu0 0
      %1518 = vmatprep.subr.bf16.mxu0 0
      %1519 = vmatpush2.bf16.msra.mxu0 0
      %1520 = vmatprep.subr.bf16.mxu0 0
      %1521 = vmatpush2.bf16.msra.mxu0 0
      %1522 = vmatprep.mubr.bf16.mxu0 0
      %1523 = vmatmul.mubr.bf16.gmra.mxu0 %v328
      %v1524 = vpop.f32.mrf.mxu0
      %v1525 = vadd.f32 0.0, %v1524
      %v1526 = vpop.f32.mrf.mxu0
      %v1527 = vpop.f32.mrf.mxu0
      %v1528 = vpop.f32.mrf.mxu0
      %1529 = vdwg.mxu0
      %1530 = vmatprep.subr.bf16.mxu0 0
      %1531 = vmatpush1.bf16.msra.mxu0 0
      %1532 = vmatprep.subr.bf16.mxu0 0
      %1533 = vmatpush1.bf16.msra.mxu0 0
      %1534 = vmatprep.subr.bf16.mxu0 0
      %1535 = vmatpush1.bf16.msra.mxu0 0
      %1536 = vmatprep.subr.bf16.mxu0 0
      %1537 = vmatpush1.bf16.msra.mxu0 0
      %1538 = vmatprep.subr.bf16.mxu0 0
      %1539 = vmatpush1.bf16.msra.mxu0 0
      %1540 = vmatprep.subr.bf16.mxu0 0
      %1541 = vmatpush1.bf16.msra.mxu0 0
      %1542 = vmatprep.subr.bf16.mxu0 0
      %1543 = vmatpush1.bf16.msra.mxu0 0
      %1544 = vmatprep.subr.bf16.mxu0 0
      %1545 = vmatpush1.bf16.msra.mxu0 %v321
      %1546 = vmatprep.subr.bf16.mxu0 0
      %1547 = vmatpush2.bf16.msra.mxu0 0
      %1548 = vmatprep.subr.bf16.mxu0 0
      %1549 = vmatpush2.bf16.msra.mxu0 0
      %1550 = vmatprep.subr.bf16.mxu0 0
      %1551 = vmatpush2.bf16.msra.mxu0 0
      %1552 = vmatprep.subr.bf16.mxu0 0
      %1553 = vmatpush2.bf16.msra.mxu0 0
      %1554 = vmatprep.subr.bf16.mxu0 0
      %1555 = vmatpush2.bf16.msra.mxu0 0
      %1556 = vmatprep.subr.bf16.mxu0 0
      %1557 = vmatpush2.bf16.msra.mxu0 0
      %1558 = vmatprep.subr.bf16.mxu0 0
      %1559 = vmatpush2.bf16.msra.mxu0 0
      %1560 = vmatprep.subr.bf16.mxu0 0
      %1561 = vmatpush2.bf16.msra.mxu0 0
      %1562 = vmatprep.mubr.bf16.mxu0 0
      %1563 = vmatmul.mubr.bf16.gmra.mxu0 %v328
      %v1564 = vpop.f32.mrf.mxu0
      %v1565 = vadd.f32 0.0, %v1564
      %v1566 = vpop.f32.mrf.mxu0
      %v1567 = vpop.f32.mrf.mxu0
      %v1568 = vpop.f32.mrf.mxu0
      %1569 = vdwg.mxu0
      %1570 = vmatprep.subr.bf16.mxu0 0
      %1571 = vmatpush1.bf16.msra.mxu0 0
      %1572 = vmatprep.subr.bf16.mxu0 0
      %1573 = vmatpush1.bf16.msra.mxu0 0
      %1574 = vmatprep.subr.bf16.mxu0 0
      %1575 = vmatpush1.bf16.msra.mxu0 0
      %1576 = vmatprep.subr.bf16.mxu0 0
      %1577 = vmatpush1.bf16.msra.mxu0 0
      %1578 = vmatprep.subr.bf16.mxu0 0
      %1579 = vmatpush1.bf16.msra.mxu0 0
      %1580 = vmatprep.subr.bf16.mxu0 0
      %1581 = vmatpush1.bf16.msra.mxu0 0
      %1582 = vmatprep.subr.bf16.mxu0 0
      %1583 = vmatpush1.bf16.msra.mxu0 0
      %1584 = vmatprep.subr.bf16.mxu0 0
      %1585 = vmatpush1.bf16.msra.mxu0 %v322
      %1586 = vmatprep.subr.bf16.mxu0 0
      %1587 = vmatpush2.bf16.msra.mxu0 0
      %1588 = vmatprep.subr.bf16.mxu0 0
      %1589 = vmatpush2.bf16.msra.mxu0 0
      %1590 = vmatprep.subr.bf16.mxu0 0
      %1591 = vmatpush2.bf16.msra.mxu0 0
      %1592 = vmatprep.subr.bf16.mxu0 0
      %1593 = vmatpush2.bf16.msra.mxu0 0
      %1594 = vmatprep.subr.bf16.mxu0 0
      %1595 = vmatpush2.bf16.msra.mxu0 0
      %1596 = vmatprep.subr.bf16.mxu0 0
      %1597 = vmatpush2.bf16.msra.mxu0 0
      %1598 = vmatprep.subr.bf16.mxu0 0
      %1599 = vmatpush2.bf16.msra.mxu0 0
      %1600 = vmatprep.subr.bf16.mxu0 0
      %1601 = vmatpush2.bf16.msra.mxu0 0
      %1602 = vmatprep.mubr.bf16.mxu0 0
      %1603 = vmatmul.mubr.bf16.gmra.mxu0 %v328
      %v1604 = vpop.f32.mrf.mxu0
      %v1605 = vadd.f32 0.0, %v1604
      %v1606 = vpop.f32.mrf.mxu0
      %v1607 = vpop.f32.mrf.mxu0
      %v1608 = vpop.f32.mrf.mxu0
      %1609 = vdwg.mxu0
      %v1610 = vpack.c.bf16 %v365, %v365
      %v1611 = vpack.c.bf16 %v405, %v405
      %v1612 = vpack.c.bf16 %v445, %v445
      %v1613 = vpack.c.bf16 %v485, %v485
      %v1614 = vpack.c.bf16 %v525, %v525
      %v1615 = vpack.c.bf16 %v565, %v565
      %v1616 = vpack.c.bf16 %v605, %v605
      %v1617 = vpack.c.bf16 %v645, %v645
      %v1618 = vpack.c.bf16 %v685, %v685
      %v1619 = vpack.c.bf16 %v725, %v725
      %v1620 = vpack.c.bf16 %v765, %v765
      %v1621 = vpack.c.bf16 %v805, %v805
      %v1622 = vpack.c.bf16 %v845, %v845
      %v1623 = vpack.c.bf16 %v885, %v885
      %v1624 = vpack.c.bf16 %v925, %v925
      %v1625 = vpack.c.bf16 %v965, %v965
      %v1626 = vpack.c.bf16 %v1005, %v1005
      %v1627 = vpack.c.bf16 %v1045, %v1045
      %v1628 = vpack.c.bf16 %v1085, %v1085
      %v1629 = vpack.c.bf16 %v1125, %v1125
      %v1630 = vpack.c.bf16 %v1165, %v1165
      %v1631 = vpack.c.bf16 %v1205, %v1205
      %v1632 = vpack.c.bf16 %v1245, %v1245
      %v1633 = vpack.c.bf16 %v1285, %v1285
      %v1634 = vpack.c.bf16 %v1325, %v1325
      %v1635 = vpack.c.bf16 %v1365, %v1365
      %v1636 = vpack.c.bf16 %v1405, %v1405
      %v1637 = vpack.c.bf16 %v1445, %v1445
      %v1638 = vpack.c.bf16 %v1485, %v1485
      %v1639 = vpack.c.bf16 %v1525, %v1525
      %v1640 = vpack.c.bf16 %v1565, %v1565
      %v1641 = vpack.c.bf16 %v1605, %v1605
      %v1642 = vld [vmem:[%s218] sm:$0xff]
      %v1643 = vld [vmem:[%s218 + $0x8] sm:$0xff]
      %v1644 = vld [vmem:[%s218 + $0x10] sm:$0xff]
      %v1645 = vld [vmem:[%s218 + $0x18] sm:$0xff]
      %v1646 = vld [vmem:[%s218 + $0x20] sm:$0xff]
      %v1647 = vld [vmem:[%s218 + $0x28] sm:$0xff]
      %v1648 = vld [vmem:[%s218 + $0x30] sm:$0xff]
      %v1649 = vld [vmem:[%s218 + $0x38] sm:$0xff]
      %v1650 = vld [vmem:[%s218 + $0x40] sm:$0xff]
      %v1651 = vld [vmem:[%s218 + $0x48] sm:$0xff]
      %v1652 = vld [vmem:[%s218 + $0x50] sm:$0xff]
      %v1653 = vld [vmem:[%s218 + $0x58] sm:$0xff]
      %v1654 = vld [vmem:[%s218 + $0x60] sm:$0xff]
      %v1655 = vld [vmem:[%s218 + $0x68] sm:$0xff]
      %v1656 = vld [vmem:[%s218 + $0x70] sm:$0xff]
      %v1657 = vld [vmem:[%s218 + $0x78] sm:$0xff]
      %v1658 = vld [vmem:[%s218 + $0x80] sm:$0xff]
      %v1659 = vld [vmem:[%s218 + $0x88] sm:$0xff]
      %v1660 = vld [vmem:[%s218 + $0x90] sm:$0xff]
      %v1661 = vld [vmem:[%s218 + $0x98] sm:$0xff]
      %v1662 = vld [vmem:[%s218 + $0xa0] sm:$0xff]
      %v1663 = vld [vmem:[%s218 + $0xa8] sm:$0xff]
      %v1664 = vld [vmem:[%s218 + $0xb0] sm:$0xff]
      %v1665 = vld [vmem:[%s218 + $0xb8] sm:$0xff]
      %v1666 = vld [vmem:[%s218 + $0xc0] sm:$0xff]
      %v1667 = vld [vmem:[%s218 + $0xc8] sm:$0xff]
      %v1668 = vld [vmem:[%s218 + $0xd0] sm:$0xff]
      %v1669 = vld [vmem:[%s218 + $0xd8] sm:$0xff]
      %v1670 = vld [vmem:[%s218 + $0xe0] sm:$0xff]
      %v1671 = vld [vmem:[%s218 + $0xe8] sm:$0xff]
      %v1672 = vld [vmem:[%s218 + $0xf0] sm:$0xff]
      %v1673 = vld [vmem:[%s218 + $0xf8] sm:$0xff]
      %v1676 = vunpack.c.l.b16 %v324
      %v1677 = vunpack.c.l.b16 %v325
      %v1678 = vpack.c.b16 %v1677, %v1676
      %v1681 = vsel %vm326, %v1610, 0
      %1683 = vmatprep.subr.bf16.mxu0 0
      %1684 = vmatpush1.bf16.msra.mxu0 0
      %1685 = vmatprep.subr.bf16.mxu0 0
      %1686 = vmatpush1.bf16.msra.mxu0 0
      %1687 = vmatprep.subr.bf16.mxu0 0
      %1688 = vmatpush1.bf16.msra.mxu0 0
      %1689 = vmatprep.subr.bf16.mxu0 0
      %1690 = vmatpush1.bf16.msra.mxu0 0
      %1691 = vmatprep.subr.bf16.mxu0 0
      %1692 = vmatpush1.bf16.msra.mxu0 0
      %1693 = vmatprep.subr.bf16.mxu0 0
      %1694 = vmatpush1.bf16.msra.mxu0 0
      %1695 = vmatprep.subr.bf16.mxu0 0
      %1696 = vmatpush1.bf16.msra.mxu0 0
      %1697 = vmatprep.subr.bf16.mxu0 0
      %1698 = vmatpush1.bf16.msra.mxu0 %v1678
      %1699 = vmatprep.subr.bf16.mxu0 0
      %1700 = vmatpush2.bf16.msra.mxu0 0
      %1701 = vmatprep.subr.bf16.mxu0 0
      %1702 = vmatpush2.bf16.msra.mxu0 0
      %1703 = vmatprep.subr.bf16.mxu0 0
      %1704 = vmatpush2.bf16.msra.mxu0 0
      %1705 = vmatprep.subr.bf16.mxu0 0
      %1706 = vmatpush2.bf16.msra.mxu0 0
      %1707 = vmatprep.subr.bf16.mxu0 0
      %1708 = vmatpush2.bf16.msra.mxu0 0
      %1709 = vmatprep.subr.bf16.mxu0 0
      %1710 = vmatpush2.bf16.msra.mxu0 0
      %1711 = vmatprep.subr.bf16.mxu0 0
      %1712 = vmatpush2.bf16.msra.mxu0 0
      %1713 = vmatprep.subr.bf16.mxu0 0
      %1714 = vmatpush2.bf16.msra.mxu0 0
      %1715 = vmatprep.mubr.bf16.mxu0 0
      %1716 = vmatmul.mubr.bf16.gmra.mxu0 %v1681
      %v1717 = vpop.f32.mrf.mxu0
      %v1718 = vadd.f32 %v1642, %v1717
      %v1719 = vpop.f32.mrf.mxu0
      %v1720 = vpop.f32.mrf.mxu0
      %v1721 = vpop.f32.mrf.mxu0
      %1722 = vdwg.mxu0
      %v1724 = vsel %vm326, %v1611, 0
      %1726 = vmatprep.subr.bf16.mxu0 0
      %1727 = vmatpush1.bf16.msra.mxu0 0
      %1728 = vmatprep.subr.bf16.mxu0 0
      %1729 = vmatpush1.bf16.msra.mxu0 0
      %1730 = vmatprep.subr.bf16.mxu0 0
      %1731 = vmatpush1.bf16.msra.mxu0 0
      %1732 = vmatprep.subr.bf16.mxu0 0
      %1733 = vmatpush1.bf16.msra.mxu0 0
      %1734 = vmatprep.subr.bf16.mxu0 0
      %1735 = vmatpush1.bf16.msra.mxu0 0
      %1736 = vmatprep.subr.bf16.mxu0 0
      %1737 = vmatpush1.bf16.msra.mxu0 0
      %1738 = vmatprep.subr.bf16.mxu0 0
      %1739 = vmatpush1.bf16.msra.mxu0 0
      %1740 = vmatprep.subr.bf16.mxu0 0
      %1741 = vmatpush1.bf16.msra.mxu0 %v1678
      %1742 = vmatprep.subr.bf16.mxu0 0
      %1743 = vmatpush2.bf16.msra.mxu0 0
      %1744 = vmatprep.subr.bf16.mxu0 0
      %1745 = vmatpush2.bf16.msra.mxu0 0
      %1746 = vmatprep.subr.bf16.mxu0 0
      %1747 = vmatpush2.bf16.msra.mxu0 0
      %1748 = vmatprep.subr.bf16.mxu0 0
      %1749 = vmatpush2.bf16.msra.mxu0 0
      %1750 = vmatprep.subr.bf16.mxu0 0
      %1751 = vmatpush2.bf16.msra.mxu0 0
      %1752 = vmatprep.subr.bf16.mxu0 0
      %1753 = vmatpush2.bf16.msra.mxu0 0
      %1754 = vmatprep.subr.bf16.mxu0 0
      %1755 = vmatpush2.bf16.msra.mxu0 0
      %1756 = vmatprep.subr.bf16.mxu0 0
      %1757 = vmatpush2.bf16.msra.mxu0 0
      %1758 = vmatprep.mubr.bf16.mxu0 0
      %1759 = vmatmul.mubr.bf16.gmra.mxu0 %v1724
      %v1760 = vpop.f32.mrf.mxu0
      %v1761 = vadd.f32 %v1643, %v1760
      %v1762 = vpop.f32.mrf.mxu0
      %v1763 = vpop.f32.mrf.mxu0
      %v1764 = vpop.f32.mrf.mxu0
      %1765 = vdwg.mxu0
      %v1767 = vsel %vm326, %v1612, 0
      %1769 = vmatprep.subr.bf16.mxu0 0
      %1770 = vmatpush1.bf16.msra.mxu0 0
      %1771 = vmatprep.subr.bf16.mxu0 0
      %1772 = vmatpush1.bf16.msra.mxu0 0
      %1773 = vmatprep.subr.bf16.mxu0 0
      %1774 = vmatpush1.bf16.msra.mxu0 0
      %1775 = vmatprep.subr.bf16.mxu0 0
      %1776 = vmatpush1.bf16.msra.mxu0 0
      %1777 = vmatprep.subr.bf16.mxu0 0
      %1778 = vmatpush1.bf16.msra.mxu0 0
      %1779 = vmatprep.subr.bf16.mxu0 0
      %1780 = vmatpush1.bf16.msra.mxu0 0
      %1781 = vmatprep.subr.bf16.mxu0 0
      %1782 = vmatpush1.bf16.msra.mxu0 0
      %1783 = vmatprep.subr.bf16.mxu0 0
      %1784 = vmatpush1.bf16.msra.mxu0 %v1678
      %1785 = vmatprep.subr.bf16.mxu0 0
      %1786 = vmatpush2.bf16.msra.mxu0 0
      %1787 = vmatprep.subr.bf16.mxu0 0
      %1788 = vmatpush2.bf16.msra.mxu0 0
      %1789 = vmatprep.subr.bf16.mxu0 0
      %1790 = vmatpush2.bf16.msra.mxu0 0
      %1791 = vmatprep.subr.bf16.mxu0 0
      %1792 = vmatpush2.bf16.msra.mxu0 0
      %1793 = vmatprep.subr.bf16.mxu0 0
      %1794 = vmatpush2.bf16.msra.mxu0 0
      %1795 = vmatprep.subr.bf16.mxu0 0
      %1796 = vmatpush2.bf16.msra.mxu0 0
      %1797 = vmatprep.subr.bf16.mxu0 0
      %1798 = vmatpush2.bf16.msra.mxu0 0
      %1799 = vmatprep.subr.bf16.mxu0 0
      %1800 = vmatpush2.bf16.msra.mxu0 0
      %1801 = vmatprep.mubr.bf16.mxu0 0
      %1802 = vmatmul.mubr.bf16.gmra.mxu0 %v1767
      %v1803 = vpop.f32.mrf.mxu0
      %v1804 = vadd.f32 %v1644, %v1803
      %v1805 = vpop.f32.mrf.mxu0
      %v1806 = vpop.f32.mrf.mxu0
      %v1807 = vpop.f32.mrf.mxu0
      %1808 = vdwg.mxu0
      %v1810 = vsel %vm326, %v1613, 0
      %1812 = vmatprep.subr.bf16.mxu0 0
      %1813 = vmatpush1.bf16.msra.mxu0 0
      %1814 = vmatprep.subr.bf16.mxu0 0
      %1815 = vmatpush1.bf16.msra.mxu0 0
      %1816 = vmatprep.subr.bf16.mxu0 0
      %1817 = vmatpush1.bf16.msra.mxu0 0
      %1818 = vmatprep.subr.bf16.mxu0 0
      %1819 = vmatpush1.bf16.msra.mxu0 0
      %1820 = vmatprep.subr.bf16.mxu0 0
      %1821 = vmatpush1.bf16.msra.mxu0 0
      %1822 = vmatprep.subr.bf16.mxu0 0
      %1823 = vmatpush1.bf16.msra.mxu0 0
      %1824 = vmatprep.subr.bf16.mxu0 0
      %1825 = vmatpush1.bf16.msra.mxu0 0
      %1826 = vmatprep.subr.bf16.mxu0 0
      %1827 = vmatpush1.bf16.msra.mxu0 %v1678
      %1828 = vmatprep.subr.bf16.mxu0 0
      %1829 = vmatpush2.bf16.msra.mxu0 0
      %1830 = vmatprep.subr.bf16.mxu0 0
      %1831 = vmatpush2.bf16.msra.mxu0 0
      %1832 = vmatprep.subr.bf16.mxu0 0
      %1833 = vmatpush2.bf16.msra.mxu0 0
      %1834 = vmatprep.subr.bf16.mxu0 0
      %1835 = vmatpush2.bf16.msra.mxu0 0
      %1836 = vmatprep.subr.bf16.mxu0 0
      %1837 = vmatpush2.bf16.msra.mxu0 0
      %1838 = vmatprep.subr.bf16.mxu0 0
      %1839 = vmatpush2.bf16.msra.mxu0 0
      %1840 = vmatprep.subr.bf16.mxu0 0
      %1841 = vmatpush2.bf16.msra.mxu0 0
      %1842 = vmatprep.subr.bf16.mxu0 0
      %1843 = vmatpush2.bf16.msra.mxu0 0
      %1844 = vmatprep.mubr.bf16.mxu0 0
      %1845 = vmatmul.mubr.bf16.gmra.mxu0 %v1810
      %v1846 = vpop.f32.mrf.mxu0
      %v1847 = vadd.f32 %v1645, %v1846
      %v1848 = vpop.f32.mrf.mxu0
      %v1849 = vpop.f32.mrf.mxu0
      %v1850 = vpop.f32.mrf.mxu0
      %1851 = vdwg.mxu0
      %v1853 = vsel %vm326, %v1614, 0
      %1855 = vmatprep.subr.bf16.mxu0 0
      %1856 = vmatpush1.bf16.msra.mxu0 0
      %1857 = vmatprep.subr.bf16.mxu0 0
      %1858 = vmatpush1.bf16.msra.mxu0 0
      %1859 = vmatprep.subr.bf16.mxu0 0
      %1860 = vmatpush1.bf16.msra.mxu0 0
      %1861 = vmatprep.subr.bf16.mxu0 0
      %1862 = vmatpush1.bf16.msra.mxu0 0
      %1863 = vmatprep.subr.bf16.mxu0 0
      %1864 = vmatpush1.bf16.msra.mxu0 0
      %1865 = vmatprep.subr.bf16.mxu0 0
      %1866 = vmatpush1.bf16.msra.mxu0 0
      %1867 = vmatprep.subr.bf16.mxu0 0
      %1868 = vmatpush1.bf16.msra.mxu0 0
      %1869 = vmatprep.subr.bf16.mxu0 0
      %1870 = vmatpush1.bf16.msra.mxu0 %v1678
      %1871 = vmatprep.subr.bf16.mxu0 0
      %1872 = vmatpush2.bf16.msra.mxu0 0
      %1873 = vmatprep.subr.bf16.mxu0 0
      %1874 = vmatpush2.bf16.msra.mxu0 0
      %1875 = vmatprep.subr.bf16.mxu0 0
      %1876 = vmatpush2.bf16.msra.mxu0 0
      %1877 = vmatprep.subr.bf16.mxu0 0
      %1878 = vmatpush2.bf16.msra.mxu0 0
      %1879 = vmatprep.subr.bf16.mxu0 0
      %1880 = vmatpush2.bf16.msra.mxu0 0
      %1881 = vmatprep.subr.bf16.mxu0 0
      %1882 = vmatpush2.bf16.msra.mxu0 0
      %1883 = vmatprep.subr.bf16.mxu0 0
      %1884 = vmatpush2.bf16.msra.mxu0 0
      %1885 = vmatprep.subr.bf16.mxu0 0
      %1886 = vmatpush2.bf16.msra.mxu0 0
      %1887 = vmatprep.mubr.bf16.mxu0 0
      %1888 = vmatmul.mubr.bf16.gmra.mxu0 %v1853
      %v1889 = vpop.f32.mrf.mxu0
      %v1890 = vadd.f32 %v1646, %v1889
      %v1891 = vpop.f32.mrf.mxu0
      %v1892 = vpop.f32.mrf.mxu0
      %v1893 = vpop.f32.mrf.mxu0
      %1894 = vdwg.mxu0
      %v1896 = vsel %vm326, %v1615, 0
      %1898 = vmatprep.subr.bf16.mxu0 0
      %1899 = vmatpush1.bf16.msra.mxu0 0
      %1900 = vmatprep.subr.bf16.mxu0 0
      %1901 = vmatpush1.bf16.msra.mxu0 0
      %1902 = vmatprep.subr.bf16.mxu0 0
      %1903 = vmatpush1.bf16.msra.mxu0 0
      %1904 = vmatprep.subr.bf16.mxu0 0
      %1905 = vmatpush1.bf16.msra.mxu0 0
      %1906 = vmatprep.subr.bf16.mxu0 0
      %1907 = vmatpush1.bf16.msra.mxu0 0
      %1908 = vmatprep.subr.bf16.mxu0 0
      %1909 = vmatpush1.bf16.msra.mxu0 0
      %1910 = vmatprep.subr.bf16.mxu0 0
      %1911 = vmatpush1.bf16.msra.mxu0 0
      %1912 = vmatprep.subr.bf16.mxu0 0
      %1913 = vmatpush1.bf16.msra.mxu0 %v1678
      %1914 = vmatprep.subr.bf16.mxu0 0
      %1915 = vmatpush2.bf16.msra.mxu0 0
      %1916 = vmatprep.subr.bf16.mxu0 0
      %1917 = vmatpush2.bf16.msra.mxu0 0
      %1918 = vmatprep.subr.bf16.mxu0 0
      %1919 = vmatpush2.bf16.msra.mxu0 0
      %1920 = vmatprep.subr.bf16.mxu0 0
      %1921 = vmatpush2.bf16.msra.mxu0 0
      %1922 = vmatprep.subr.bf16.mxu0 0
      %1923 = vmatpush2.bf16.msra.mxu0 0
      %1924 = vmatprep.subr.bf16.mxu0 0
      %1925 = vmatpush2.bf16.msra.mxu0 0
      %1926 = vmatprep.subr.bf16.mxu0 0
      %1927 = vmatpush2.bf16.msra.mxu0 0
      %1928 = vmatprep.subr.bf16.mxu0 0
      %1929 = vmatpush2.bf16.msra.mxu0 0
      %1930 = vmatprep.mubr.bf16.mxu0 0
      %1931 = vmatmul.mubr.bf16.gmra.mxu0 %v1896
      %v1932 = vpop.f32.mrf.mxu0
      %v1933 = vadd.f32 %v1647, %v1932
      %v1934 = vpop.f32.mrf.mxu0
      %v1935 = vpop.f32.mrf.mxu0
      %v1936 = vpop.f32.mrf.mxu0
      %1937 = vdwg.mxu0
      %v1939 = vsel %vm326, %v1616, 0
      %1941 = vmatprep.subr.bf16.mxu0 0
      %1942 = vmatpush1.bf16.msra.mxu0 0
      %1943 = vmatprep.subr.bf16.mxu0 0
      %1944 = vmatpush1.bf16.msra.mxu0 0
      %1945 = vmatprep.subr.bf16.mxu0 0
      %1946 = vmatpush1.bf16.msra.mxu0 0
      %1947 = vmatprep.subr.bf16.mxu0 0
      %1948 = vmatpush1.bf16.msra.mxu0 0
      %1949 = vmatprep.subr.bf16.mxu0 0
      %1950 = vmatpush1.bf16.msra.mxu0 0
      %1951 = vmatprep.subr.bf16.mxu0 0
      %1952 = vmatpush1.bf16.msra.mxu0 0
      %1953 = vmatprep.subr.bf16.mxu0 0
      %1954 = vmatpush1.bf16.msra.mxu0 0
      %1955 = vmatprep.subr.bf16.mxu0 0
      %1956 = vmatpush1.bf16.msra.mxu0 %v1678
      %1957 = vmatprep.subr.bf16.mxu0 0
      %1958 = vmatpush2.bf16.msra.mxu0 0
      %1959 = vmatprep.subr.bf16.mxu0 0
      %1960 = vmatpush2.bf16.msra.mxu0 0
      %1961 = vmatprep.subr.bf16.mxu0 0
      %1962 = vmatpush2.bf16.msra.mxu0 0
      %1963 = vmatprep.subr.bf16.mxu0 0
      %1964 = vmatpush2.bf16.msra.mxu0 0
      %1965 = vmatprep.subr.bf16.mxu0 0
      %1966 = vmatpush2.bf16.msra.mxu0 0
      %1967 = vmatprep.subr.bf16.mxu0 0
      %1968 = vmatpush2.bf16.msra.mxu0 0
      %1969 = vmatprep.subr.bf16.mxu0 0
      %1970 = vmatpush2.bf16.msra.mxu0 0
      %1971 = vmatprep.subr.bf16.mxu0 0
      %1972 = vmatpush2.bf16.msra.mxu0 0
      %1973 = vmatprep.mubr.bf16.mxu0 0
      %1974 = vmatmul.mubr.bf16.gmra.mxu0 %v1939
      %v1975 = vpop.f32.mrf.mxu0
      %v1976 = vadd.f32 %v1648, %v1975
      %v1977 = vpop.f32.mrf.mxu0
      %v1978 = vpop.f32.mrf.mxu0
      %v1979 = vpop.f32.mrf.mxu0
      %1980 = vdwg.mxu0
      %v1982 = vsel %vm326, %v1617, 0
      %1984 = vmatprep.subr.bf16.mxu0 0
      %1985 = vmatpush1.bf16.msra.mxu0 0
      %1986 = vmatprep.subr.bf16.mxu0 0
      %1987 = vmatpush1.bf16.msra.mxu0 0
      %1988 = vmatprep.subr.bf16.mxu0 0
      %1989 = vmatpush1.bf16.msra.mxu0 0
      %1990 = vmatprep.subr.bf16.mxu0 0
      %1991 = vmatpush1.bf16.msra.mxu0 0
      %1992 = vmatprep.subr.bf16.mxu0 0
      %1993 = vmatpush1.bf16.msra.mxu0 0
      %1994 = vmatprep.subr.bf16.mxu0 0
      %1995 = vmatpush1.bf16.msra.mxu0 0
      %1996 = vmatprep.subr.bf16.mxu0 0
      %1997 = vmatpush1.bf16.msra.mxu0 0
      %1998 = vmatprep.subr.bf16.mxu0 0
      %1999 = vmatpush1.bf16.msra.mxu0 %v1678
      %2000 = vmatprep.subr.bf16.mxu0 0
      %2001 = vmatpush2.bf16.msra.mxu0 0
      %2002 = vmatprep.subr.bf16.mxu0 0
      %2003 = vmatpush2.bf16.msra.mxu0 0
      %2004 = vmatprep.subr.bf16.mxu0 0
      %2005 = vmatpush2.bf16.msra.mxu0 0
      %2006 = vmatprep.subr.bf16.mxu0 0
      %2007 = vmatpush2.bf16.msra.mxu0 0
      %2008 = vmatprep.subr.bf16.mxu0 0
      %2009 = vmatpush2.bf16.msra.mxu0 0
      %2010 = vmatprep.subr.bf16.mxu0 0
      %2011 = vmatpush2.bf16.msra.mxu0 0
      %2012 = vmatprep.subr.bf16.mxu0 0
      %2013 = vmatpush2.bf16.msra.mxu0 0
      %2014 = vmatprep.subr.bf16.mxu0 0
      %2015 = vmatpush2.bf16.msra.mxu0 0
      %2016 = vmatprep.mubr.bf16.mxu0 0
      %2017 = vmatmul.mubr.bf16.gmra.mxu0 %v1982
      %v2018 = vpop.f32.mrf.mxu0
      %v2019 = vadd.f32 %v1649, %v2018
      %v2020 = vpop.f32.mrf.mxu0
      %v2021 = vpop.f32.mrf.mxu0
      %v2022 = vpop.f32.mrf.mxu0
      %2023 = vdwg.mxu0
      %v2025 = vsel %vm326, %v1618, 0
      %2027 = vmatprep.subr.bf16.mxu0 0
      %2028 = vmatpush1.bf16.msra.mxu0 0
      %2029 = vmatprep.subr.bf16.mxu0 0
      %2030 = vmatpush1.bf16.msra.mxu0 0
      %2031 = vmatprep.subr.bf16.mxu0 0
      %2032 = vmatpush1.bf16.msra.mxu0 0
      %2033 = vmatprep.subr.bf16.mxu0 0
      %2034 = vmatpush1.bf16.msra.mxu0 0
      %2035 = vmatprep.subr.bf16.mxu0 0
      %2036 = vmatpush1.bf16.msra.mxu0 0
      %2037 = vmatprep.subr.bf16.mxu0 0
      %2038 = vmatpush1.bf16.msra.mxu0 0
      %2039 = vmatprep.subr.bf16.mxu0 0
      %2040 = vmatpush1.bf16.msra.mxu0 0
      %2041 = vmatprep.subr.bf16.mxu0 0
      %2042 = vmatpush1.bf16.msra.mxu0 %v1678
      %2043 = vmatprep.subr.bf16.mxu0 0
      %2044 = vmatpush2.bf16.msra.mxu0 0
      %2045 = vmatprep.subr.bf16.mxu0 0
      %2046 = vmatpush2.bf16.msra.mxu0 0
      %2047 = vmatprep.subr.bf16.mxu0 0
      %2048 = vmatpush2.bf16.msra.mxu0 0
      %2049 = vmatprep.subr.bf16.mxu0 0
      %2050 = vmatpush2.bf16.msra.mxu0 0
      %2051 = vmatprep.subr.bf16.mxu0 0
      %2052 = vmatpush2.bf16.msra.mxu0 0
      %2053 = vmatprep.subr.bf16.mxu0 0
      %2054 = vmatpush2.bf16.msra.mxu0 0
      %2055 = vmatprep.subr.bf16.mxu0 0
      %2056 = vmatpush2.bf16.msra.mxu0 0
      %2057 = vmatprep.subr.bf16.mxu0 0
      %2058 = vmatpush2.bf16.msra.mxu0 0
      %2059 = vmatprep.mubr.bf16.mxu0 0
      %2060 = vmatmul.mubr.bf16.gmra.mxu0 %v2025
      %v2061 = vpop.f32.mrf.mxu0
      %v2062 = vadd.f32 %v1650, %v2061
      %v2063 = vpop.f32.mrf.mxu0
      %v2064 = vpop.f32.mrf.mxu0
      %v2065 = vpop.f32.mrf.mxu0
      %2066 = vdwg.mxu0
      %v2068 = vsel %vm326, %v1619, 0
      %2070 = vmatprep.subr.bf16.mxu0 0
      %2071 = vmatpush1.bf16.msra.mxu0 0
      %2072 = vmatprep.subr.bf16.mxu0 0
      %2073 = vmatpush1.bf16.msra.mxu0 0
      %2074 = vmatprep.subr.bf16.mxu0 0
      %2075 = vmatpush1.bf16.msra.mxu0 0
      %2076 = vmatprep.subr.bf16.mxu0 0
      %2077 = vmatpush1.bf16.msra.mxu0 0
      %2078 = vmatprep.subr.bf16.mxu0 0
      %2079 = vmatpush1.bf16.msra.mxu0 0
      %2080 = vmatprep.subr.bf16.mxu0 0
      %2081 = vmatpush1.bf16.msra.mxu0 0
      %2082 = vmatprep.subr.bf16.mxu0 0
      %2083 = vmatpush1.bf16.msra.mxu0 0
      %2084 = vmatprep.subr.bf16.mxu0 0
      %2085 = vmatpush1.bf16.msra.mxu0 %v1678
      %2086 = vmatprep.subr.bf16.mxu0 0
      %2087 = vmatpush2.bf16.msra.mxu0 0
      %2088 = vmatprep.subr.bf16.mxu0 0
      %2089 = vmatpush2.bf16.msra.mxu0 0
      %2090 = vmatprep.subr.bf16.mxu0 0
      %2091 = vmatpush2.bf16.msra.mxu0 0
      %2092 = vmatprep.subr.bf16.mxu0 0
      %2093 = vmatpush2.bf16.msra.mxu0 0
      %2094 = vmatprep.subr.bf16.mxu0 0
      %2095 = vmatpush2.bf16.msra.mxu0 0
      %2096 = vmatprep.subr.bf16.mxu0 0
      %2097 = vmatpush2.bf16.msra.mxu0 0
      %2098 = vmatprep.subr.bf16.mxu0 0
      %2099 = vmatpush2.bf16.msra.mxu0 0
      %2100 = vmatprep.subr.bf16.mxu0 0
      %2101 = vmatpush2.bf16.msra.mxu0 0
      %2102 = vmatprep.mubr.bf16.mxu0 0
      %2103 = vmatmul.mubr.bf16.gmra.mxu0 %v2068
      %v2104 = vpop.f32.mrf.mxu0
      %v2105 = vadd.f32 %v1651, %v2104
      %v2106 = vpop.f32.mrf.mxu0
      %v2107 = vpop.f32.mrf.mxu0
      %v2108 = vpop.f32.mrf.mxu0
      %2109 = vdwg.mxu0
      %v2111 = vsel %vm326, %v1620, 0
      %2113 = vmatprep.subr.bf16.mxu0 0
      %2114 = vmatpush1.bf16.msra.mxu0 0
      %2115 = vmatprep.subr.bf16.mxu0 0
      %2116 = vmatpush1.bf16.msra.mxu0 0
      %2117 = vmatprep.subr.bf16.mxu0 0
      %2118 = vmatpush1.bf16.msra.mxu0 0
      %2119 = vmatprep.subr.bf16.mxu0 0
      %2120 = vmatpush1.bf16.msra.mxu0 0
      %2121 = vmatprep.subr.bf16.mxu0 0
      %2122 = vmatpush1.bf16.msra.mxu0 0
      %2123 = vmatprep.subr.bf16.mxu0 0
      %2124 = vmatpush1.bf16.msra.mxu0 0
      %2125 = vmatprep.subr.bf16.mxu0 0
      %2126 = vmatpush1.bf16.msra.mxu0 0
      %2127 = vmatprep.subr.bf16.mxu0 0
      %2128 = vmatpush1.bf16.msra.mxu0 %v1678
      %2129 = vmatprep.subr.bf16.mxu0 0
      %2130 = vmatpush2.bf16.msra.mxu0 0
      %2131 = vmatprep.subr.bf16.mxu0 0
      %2132 = vmatpush2.bf16.msra.mxu0 0
      %2133 = vmatprep.subr.bf16.mxu0 0
      %2134 = vmatpush2.bf16.msra.mxu0 0
      %2135 = vmatprep.subr.bf16.mxu0 0
      %2136 = vmatpush2.bf16.msra.mxu0 0
      %2137 = vmatprep.subr.bf16.mxu0 0
      %2138 = vmatpush2.bf16.msra.mxu0 0
      %2139 = vmatprep.subr.bf16.mxu0 0
      %2140 = vmatpush2.bf16.msra.mxu0 0
      %2141 = vmatprep.subr.bf16.mxu0 0
      %2142 = vmatpush2.bf16.msra.mxu0 0
      %2143 = vmatprep.subr.bf16.mxu0 0
      %2144 = vmatpush2.bf16.msra.mxu0 0
      %2145 = vmatprep.mubr.bf16.mxu0 0
      %2146 = vmatmul.mubr.bf16.gmra.mxu0 %v2111
      %v2147 = vpop.f32.mrf.mxu0
      %v2148 = vadd.f32 %v1652, %v2147
      %v2149 = vpop.f32.mrf.mxu0
      %v2150 = vpop.f32.mrf.mxu0
      %v2151 = vpop.f32.mrf.mxu0
      %2152 = vdwg.mxu0
      %v2154 = vsel %vm326, %v1621, 0
      %2156 = vmatprep.subr.bf16.mxu0 0
      %2157 = vmatpush1.bf16.msra.mxu0 0
      %2158 = vmatprep.subr.bf16.mxu0 0
      %2159 = vmatpush1.bf16.msra.mxu0 0
      %2160 = vmatprep.subr.bf16.mxu0 0
      %2161 = vmatpush1.bf16.msra.mxu0 0
      %2162 = vmatprep.subr.bf16.mxu0 0
      %2163 = vmatpush1.bf16.msra.mxu0 0
      %2164 = vmatprep.subr.bf16.mxu0 0
      %2165 = vmatpush1.bf16.msra.mxu0 0
      %2166 = vmatprep.subr.bf16.mxu0 0
      %2167 = vmatpush1.bf16.msra.mxu0 0
      %2168 = vmatprep.subr.bf16.mxu0 0
      %2169 = vmatpush1.bf16.msra.mxu0 0
      %2170 = vmatprep.subr.bf16.mxu0 0
      %2171 = vmatpush1.bf16.msra.mxu0 %v1678
      %2172 = vmatprep.subr.bf16.mxu0 0
      %2173 = vmatpush2.bf16.msra.mxu0 0
      %2174 = vmatprep.subr.bf16.mxu0 0
      %2175 = vmatpush2.bf16.msra.mxu0 0
      %2176 = vmatprep.subr.bf16.mxu0 0
      %2177 = vmatpush2.bf16.msra.mxu0 0
      %2178 = vmatprep.subr.bf16.mxu0 0
      %2179 = vmatpush2.bf16.msra.mxu0 0
      %2180 = vmatprep.subr.bf16.mxu0 0
      %2181 = vmatpush2.bf16.msra.mxu0 0
      %2182 = vmatprep.subr.bf16.mxu0 0
      %2183 = vmatpush2.bf16.msra.mxu0 0
      %2184 = vmatprep.subr.bf16.mxu0 0
      %2185 = vmatpush2.bf16.msra.mxu0 0
      %2186 = vmatprep.subr.bf16.mxu0 0
      %2187 = vmatpush2.bf16.msra.mxu0 0
      %2188 = vmatprep.mubr.bf16.mxu0 0
      %2189 = vmatmul.mubr.bf16.gmra.mxu0 %v2154
      %v2190 = vpop.f32.mrf.mxu0
      %v2191 = vadd.f32 %v1653, %v2190
      %v2192 = vpop.f32.mrf.mxu0
      %v2193 = vpop.f32.mrf.mxu0
      %v2194 = vpop.f32.mrf.mxu0
      %2195 = vdwg.mxu0
      %v2197 = vsel %vm326, %v1622, 0
      %2199 = vmatprep.subr.bf16.mxu0 0
      %2200 = vmatpush1.bf16.msra.mxu0 0
      %2201 = vmatprep.subr.bf16.mxu0 0
      %2202 = vmatpush1.bf16.msra.mxu0 0
      %2203 = vmatprep.subr.bf16.mxu0 0
      %2204 = vmatpush1.bf16.msra.mxu0 0
      %2205 = vmatprep.subr.bf16.mxu0 0
      %2206 = vmatpush1.bf16.msra.mxu0 0
      %2207 = vmatprep.subr.bf16.mxu0 0
      %2208 = vmatpush1.bf16.msra.mxu0 0
      %2209 = vmatprep.subr.bf16.mxu0 0
      %2210 = vmatpush1.bf16.msra.mxu0 0
      %2211 = vmatprep.subr.bf16.mxu0 0
      %2212 = vmatpush1.bf16.msra.mxu0 0
      %2213 = vmatprep.subr.bf16.mxu0 0
      %2214 = vmatpush1.bf16.msra.mxu0 %v1678
      %2215 = vmatprep.subr.bf16.mxu0 0
      %2216 = vmatpush2.bf16.msra.mxu0 0
      %2217 = vmatprep.subr.bf16.mxu0 0
      %2218 = vmatpush2.bf16.msra.mxu0 0
      %2219 = vmatprep.subr.bf16.mxu0 0
      %2220 = vmatpush2.bf16.msra.mxu0 0
      %2221 = vmatprep.subr.bf16.mxu0 0
      %2222 = vmatpush2.bf16.msra.mxu0 0
      %2223 = vmatprep.subr.bf16.mxu0 0
      %2224 = vmatpush2.bf16.msra.mxu0 0
      %2225 = vmatprep.subr.bf16.mxu0 0
      %2226 = vmatpush2.bf16.msra.mxu0 0
      %2227 = vmatprep.subr.bf16.mxu0 0
      %2228 = vmatpush2.bf16.msra.mxu0 0
      %2229 = vmatprep.subr.bf16.mxu0 0
      %2230 = vmatpush2.bf16.msra.mxu0 0
      %2231 = vmatprep.mubr.bf16.mxu0 0
      %2232 = vmatmul.mubr.bf16.gmra.mxu0 %v2197
      %v2233 = vpop.f32.mrf.mxu0
      %v2234 = vadd.f32 %v1654, %v2233
      %v2235 = vpop.f32.mrf.mxu0
      %v2236 = vpop.f32.mrf.mxu0
      %v2237 = vpop.f32.mrf.mxu0
      %2238 = vdwg.mxu0
      %v2240 = vsel %vm326, %v1623, 0
      %2242 = vmatprep.subr.bf16.mxu0 0
      %2243 = vmatpush1.bf16.msra.mxu0 0
      %2244 = vmatprep.subr.bf16.mxu0 0
      %2245 = vmatpush1.bf16.msra.mxu0 0
      %2246 = vmatprep.subr.bf16.mxu0 0
      %2247 = vmatpush1.bf16.msra.mxu0 0
      %2248 = vmatprep.subr.bf16.mxu0 0
      %2249 = vmatpush1.bf16.msra.mxu0 0
      %2250 = vmatprep.subr.bf16.mxu0 0
      %2251 = vmatpush1.bf16.msra.mxu0 0
      %2252 = vmatprep.subr.bf16.mxu0 0
      %2253 = vmatpush1.bf16.msra.mxu0 0
      %2254 = vmatprep.subr.bf16.mxu0 0
      %2255 = vmatpush1.bf16.msra.mxu0 0
      %2256 = vmatprep.subr.bf16.mxu0 0
      %2257 = vmatpush1.bf16.msra.mxu0 %v1678
      %2258 = vmatprep.subr.bf16.mxu0 0
      %2259 = vmatpush2.bf16.msra.mxu0 0
      %2260 = vmatprep.subr.bf16.mxu0 0
      %2261 = vmatpush2.bf16.msra.mxu0 0
      %2262 = vmatprep.subr.bf16.mxu0 0
      %2263 = vmatpush2.bf16.msra.mxu0 0
      %2264 = vmatprep.subr.bf16.mxu0 0
      %2265 = vmatpush2.bf16.msra.mxu0 0
      %2266 = vmatprep.subr.bf16.mxu0 0
      %2267 = vmatpush2.bf16.msra.mxu0 0
      %2268 = vmatprep.subr.bf16.mxu0 0
      %2269 = vmatpush2.bf16.msra.mxu0 0
      %2270 = vmatprep.subr.bf16.mxu0 0
      %2271 = vmatpush2.bf16.msra.mxu0 0
      %2272 = vmatprep.subr.bf16.mxu0 0
      %2273 = vmatpush2.bf16.msra.mxu0 0
      %2274 = vmatprep.mubr.bf16.mxu0 0
      %2275 = vmatmul.mubr.bf16.gmra.mxu0 %v2240
      %v2276 = vpop.f32.mrf.mxu0
      %v2277 = vadd.f32 %v1655, %v2276
      %v2278 = vpop.f32.mrf.mxu0
      %v2279 = vpop.f32.mrf.mxu0
      %v2280 = vpop.f32.mrf.mxu0
      %2281 = vdwg.mxu0
      %v2283 = vsel %vm326, %v1624, 0
      %2285 = vmatprep.subr.bf16.mxu0 0
      %2286 = vmatpush1.bf16.msra.mxu0 0
      %2287 = vmatprep.subr.bf16.mxu0 0
      %2288 = vmatpush1.bf16.msra.mxu0 0
      %2289 = vmatprep.subr.bf16.mxu0 0
      %2290 = vmatpush1.bf16.msra.mxu0 0
      %2291 = vmatprep.subr.bf16.mxu0 0
      %2292 = vmatpush1.bf16.msra.mxu0 0
      %2293 = vmatprep.subr.bf16.mxu0 0
      %2294 = vmatpush1.bf16.msra.mxu0 0
      %2295 = vmatprep.subr.bf16.mxu0 0
      %2296 = vmatpush1.bf16.msra.mxu0 0
      %2297 = vmatprep.subr.bf16.mxu0 0
      %2298 = vmatpush1.bf16.msra.mxu0 0
      %2299 = vmatprep.subr.bf16.mxu0 0
      %2300 = vmatpush1.bf16.msra.mxu0 %v1678
      %2301 = vmatprep.subr.bf16.mxu0 0
      %2302 = vmatpush2.bf16.msra.mxu0 0
      %2303 = vmatprep.subr.bf16.mxu0 0
      %2304 = vmatpush2.bf16.msra.mxu0 0
      %2305 = vmatprep.subr.bf16.mxu0 0
      %2306 = vmatpush2.bf16.msra.mxu0 0
      %2307 = vmatprep.subr.bf16.mxu0 0
      %2308 = vmatpush2.bf16.msra.mxu0 0
      %2309 = vmatprep.subr.bf16.mxu0 0
      %2310 = vmatpush2.bf16.msra.mxu0 0
      %2311 = vmatprep.subr.bf16.mxu0 0
      %2312 = vmatpush2.bf16.msra.mxu0 0
      %2313 = vmatprep.subr.bf16.mxu0 0
      %2314 = vmatpush2.bf16.msra.mxu0 0
      %2315 = vmatprep.subr.bf16.mxu0 0
      %2316 = vmatpush2.bf16.msra.mxu0 0
      %2317 = vmatprep.mubr.bf16.mxu0 0
      %2318 = vmatmul.mubr.bf16.gmra.mxu0 %v2283
      %v2319 = vpop.f32.mrf.mxu0
      %v2320 = vadd.f32 %v1656, %v2319
      %v2321 = vpop.f32.mrf.mxu0
      %v2322 = vpop.f32.mrf.mxu0
      %v2323 = vpop.f32.mrf.mxu0
      %2324 = vdwg.mxu0
      %v2326 = vsel %vm326, %v1625, 0
      %2328 = vmatprep.subr.bf16.mxu0 0
      %2329 = vmatpush1.bf16.msra.mxu0 0
      %2330 = vmatprep.subr.bf16.mxu0 0
      %2331 = vmatpush1.bf16.msra.mxu0 0
      %2332 = vmatprep.subr.bf16.mxu0 0
      %2333 = vmatpush1.bf16.msra.mxu0 0
      %2334 = vmatprep.subr.bf16.mxu0 0
      %2335 = vmatpush1.bf16.msra.mxu0 0
      %2336 = vmatprep.subr.bf16.mxu0 0
      %2337 = vmatpush1.bf16.msra.mxu0 0
      %2338 = vmatprep.subr.bf16.mxu0 0
      %2339 = vmatpush1.bf16.msra.mxu0 0
      %2340 = vmatprep.subr.bf16.mxu0 0
      %2341 = vmatpush1.bf16.msra.mxu0 0
      %2342 = vmatprep.subr.bf16.mxu0 0
      %2343 = vmatpush1.bf16.msra.mxu0 %v1678
      %2344 = vmatprep.subr.bf16.mxu0 0
      %2345 = vmatpush2.bf16.msra.mxu0 0
      %2346 = vmatprep.subr.bf16.mxu0 0
      %2347 = vmatpush2.bf16.msra.mxu0 0
      %2348 = vmatprep.subr.bf16.mxu0 0
      %2349 = vmatpush2.bf16.msra.mxu0 0
      %2350 = vmatprep.subr.bf16.mxu0 0
      %2351 = vmatpush2.bf16.msra.mxu0 0
      %2352 = vmatprep.subr.bf16.mxu0 0
      %2353 = vmatpush2.bf16.msra.mxu0 0
      %2354 = vmatprep.subr.bf16.mxu0 0
      %2355 = vmatpush2.bf16.msra.mxu0 0
      %2356 = vmatprep.subr.bf16.mxu0 0
      %2357 = vmatpush2.bf16.msra.mxu0 0
      %2358 = vmatprep.subr.bf16.mxu0 0
      %2359 = vmatpush2.bf16.msra.mxu0 0
      %2360 = vmatprep.mubr.bf16.mxu0 0
      %2361 = vmatmul.mubr.bf16.gmra.mxu0 %v2326
      %v2362 = vpop.f32.mrf.mxu0
      %v2363 = vadd.f32 %v1657, %v2362
      %v2364 = vpop.f32.mrf.mxu0
      %v2365 = vpop.f32.mrf.mxu0
      %v2366 = vpop.f32.mrf.mxu0
      %2367 = vdwg.mxu0
      %v2369 = vsel %vm326, %v1626, 0
      %2371 = vmatprep.subr.bf16.mxu0 0
      %2372 = vmatpush1.bf16.msra.mxu0 0
      %2373 = vmatprep.subr.bf16.mxu0 0
      %2374 = vmatpush1.bf16.msra.mxu0 0
      %2375 = vmatprep.subr.bf16.mxu0 0
      %2376 = vmatpush1.bf16.msra.mxu0 0
      %2377 = vmatprep.subr.bf16.mxu0 0
      %2378 = vmatpush1.bf16.msra.mxu0 0
      %2379 = vmatprep.subr.bf16.mxu0 0
      %2380 = vmatpush1.bf16.msra.mxu0 0
      %2381 = vmatprep.subr.bf16.mxu0 0
      %2382 = vmatpush1.bf16.msra.mxu0 0
      %2383 = vmatprep.subr.bf16.mxu0 0
      %2384 = vmatpush1.bf16.msra.mxu0 0
      %2385 = vmatprep.subr.bf16.mxu0 0
      %2386 = vmatpush1.bf16.msra.mxu0 %v1678
      %2387 = vmatprep.subr.bf16.mxu0 0
      %2388 = vmatpush2.bf16.msra.mxu0 0
      %2389 = vmatprep.subr.bf16.mxu0 0
      %2390 = vmatpush2.bf16.msra.mxu0 0
      %2391 = vmatprep.subr.bf16.mxu0 0
      %2392 = vmatpush2.bf16.msra.mxu0 0
      %2393 = vmatprep.subr.bf16.mxu0 0
      %2394 = vmatpush2.bf16.msra.mxu0 0
      %2395 = vmatprep.subr.bf16.mxu0 0
      %2396 = vmatpush2.bf16.msra.mxu0 0
      %2397 = vmatprep.subr.bf16.mxu0 0
      %2398 = vmatpush2.bf16.msra.mxu0 0
      %2399 = vmatprep.subr.bf16.mxu0 0
      %2400 = vmatpush2.bf16.msra.mxu0 0
      %2401 = vmatprep.subr.bf16.mxu0 0
      %2402 = vmatpush2.bf16.msra.mxu0 0
      %2403 = vmatprep.mubr.bf16.mxu0 0
      %2404 = vmatmul.mubr.bf16.gmra.mxu0 %v2369
      %v2405 = vpop.f32.mrf.mxu0
      %v2406 = vadd.f32 %v1658, %v2405
      %v2407 = vpop.f32.mrf.mxu0
      %v2408 = vpop.f32.mrf.mxu0
      %v2409 = vpop.f32.mrf.mxu0
      %2410 = vdwg.mxu0
      %v2412 = vsel %vm326, %v1627, 0
      %2414 = vmatprep.subr.bf16.mxu0 0
      %2415 = vmatpush1.bf16.msra.mxu0 0
      %2416 = vmatprep.subr.bf16.mxu0 0
      %2417 = vmatpush1.bf16.msra.mxu0 0
      %2418 = vmatprep.subr.bf16.mxu0 0
      %2419 = vmatpush1.bf16.msra.mxu0 0
      %2420 = vmatprep.subr.bf16.mxu0 0
      %2421 = vmatpush1.bf16.msra.mxu0 0
      %2422 = vmatprep.subr.bf16.mxu0 0
      %2423 = vmatpush1.bf16.msra.mxu0 0
      %2424 = vmatprep.subr.bf16.mxu0 0
      %2425 = vmatpush1.bf16.msra.mxu0 0
      %2426 = vmatprep.subr.bf16.mxu0 0
      %2427 = vmatpush1.bf16.msra.mxu0 0
      %2428 = vmatprep.subr.bf16.mxu0 0
      %2429 = vmatpush1.bf16.msra.mxu0 %v1678
      %2430 = vmatprep.subr.bf16.mxu0 0
      %2431 = vmatpush2.bf16.msra.mxu0 0
      %2432 = vmatprep.subr.bf16.mxu0 0
      %2433 = vmatpush2.bf16.msra.mxu0 0
      %2434 = vmatprep.subr.bf16.mxu0 0
      %2435 = vmatpush2.bf16.msra.mxu0 0
      %2436 = vmatprep.subr.bf16.mxu0 0
      %2437 = vmatpush2.bf16.msra.mxu0 0
      %2438 = vmatprep.subr.bf16.mxu0 0
      %2439 = vmatpush2.bf16.msra.mxu0 0
      %2440 = vmatprep.subr.bf16.mxu0 0
      %2441 = vmatpush2.bf16.msra.mxu0 0
      %2442 = vmatprep.subr.bf16.mxu0 0
      %2443 = vmatpush2.bf16.msra.mxu0 0
      %2444 = vmatprep.subr.bf16.mxu0 0
      %2445 = vmatpush2.bf16.msra.mxu0 0
      %2446 = vmatprep.mubr.bf16.mxu0 0
      %2447 = vmatmul.mubr.bf16.gmra.mxu0 %v2412
      %v2448 = vpop.f32.mrf.mxu0
      %v2449 = vadd.f32 %v1659, %v2448
      %v2450 = vpop.f32.mrf.mxu0
      %v2451 = vpop.f32.mrf.mxu0
      %v2452 = vpop.f32.mrf.mxu0
      %2453 = vdwg.mxu0
      %v2455 = vsel %vm326, %v1628, 0
      %2457 = vmatprep.subr.bf16.mxu0 0
      %2458 = vmatpush1.bf16.msra.mxu0 0
      %2459 = vmatprep.subr.bf16.mxu0 0
      %2460 = vmatpush1.bf16.msra.mxu0 0
      %2461 = vmatprep.subr.bf16.mxu0 0
      %2462 = vmatpush1.bf16.msra.mxu0 0
      %2463 = vmatprep.subr.bf16.mxu0 0
      %2464 = vmatpush1.bf16.msra.mxu0 0
      %2465 = vmatprep.subr.bf16.mxu0 0
      %2466 = vmatpush1.bf16.msra.mxu0 0
      %2467 = vmatprep.subr.bf16.mxu0 0
      %2468 = vmatpush1.bf16.msra.mxu0 0
      %2469 = vmatprep.subr.bf16.mxu0 0
      %2470 = vmatpush1.bf16.msra.mxu0 0
      %2471 = vmatprep.subr.bf16.mxu0 0
      %2472 = vmatpush1.bf16.msra.mxu0 %v1678
      %2473 = vmatprep.subr.bf16.mxu0 0
      %2474 = vmatpush2.bf16.msra.mxu0 0
      %2475 = vmatprep.subr.bf16.mxu0 0
      %2476 = vmatpush2.bf16.msra.mxu0 0
      %2477 = vmatprep.subr.bf16.mxu0 0
      %2478 = vmatpush2.bf16.msra.mxu0 0
      %2479 = vmatprep.subr.bf16.mxu0 0
      %2480 = vmatpush2.bf16.msra.mxu0 0
      %2481 = vmatprep.subr.bf16.mxu0 0
      %2482 = vmatpush2.bf16.msra.mxu0 0
      %2483 = vmatprep.subr.bf16.mxu0 0
      %2484 = vmatpush2.bf16.msra.mxu0 0
      %2485 = vmatprep.subr.bf16.mxu0 0
      %2486 = vmatpush2.bf16.msra.mxu0 0
      %2487 = vmatprep.subr.bf16.mxu0 0
      %2488 = vmatpush2.bf16.msra.mxu0 0
      %2489 = vmatprep.mubr.bf16.mxu0 0
      %2490 = vmatmul.mubr.bf16.gmra.mxu0 %v2455
      %v2491 = vpop.f32.mrf.mxu0
      %v2492 = vadd.f32 %v1660, %v2491
      %v2493 = vpop.f32.mrf.mxu0
      %v2494 = vpop.f32.mrf.mxu0
      %v2495 = vpop.f32.mrf.mxu0
      %2496 = vdwg.mxu0
      %v2498 = vsel %vm326, %v1629, 0
      %2500 = vmatprep.subr.bf16.mxu0 0
      %2501 = vmatpush1.bf16.msra.mxu0 0
      %2502 = vmatprep.subr.bf16.mxu0 0
      %2503 = vmatpush1.bf16.msra.mxu0 0
      %2504 = vmatprep.subr.bf16.mxu0 0
      %2505 = vmatpush1.bf16.msra.mxu0 0
      %2506 = vmatprep.subr.bf16.mxu0 0
      %2507 = vmatpush1.bf16.msra.mxu0 0
      %2508 = vmatprep.subr.bf16.mxu0 0
      %2509 = vmatpush1.bf16.msra.mxu0 0
      %2510 = vmatprep.subr.bf16.mxu0 0
      %2511 = vmatpush1.bf16.msra.mxu0 0
      %2512 = vmatprep.subr.bf16.mxu0 0
      %2513 = vmatpush1.bf16.msra.mxu0 0
      %2514 = vmatprep.subr.bf16.mxu0 0
      %2515 = vmatpush1.bf16.msra.mxu0 %v1678
      %2516 = vmatprep.subr.bf16.mxu0 0
      %2517 = vmatpush2.bf16.msra.mxu0 0
      %2518 = vmatprep.subr.bf16.mxu0 0
      %2519 = vmatpush2.bf16.msra.mxu0 0
      %2520 = vmatprep.subr.bf16.mxu0 0
      %2521 = vmatpush2.bf16.msra.mxu0 0
      %2522 = vmatprep.subr.bf16.mxu0 0
      %2523 = vmatpush2.bf16.msra.mxu0 0
      %2524 = vmatprep.subr.bf16.mxu0 0
      %2525 = vmatpush2.bf16.msra.mxu0 0
      %2526 = vmatprep.subr.bf16.mxu0 0
      %2527 = vmatpush2.bf16.msra.mxu0 0
      %2528 = vmatprep.subr.bf16.mxu0 0
      %2529 = vmatpush2.bf16.msra.mxu0 0
      %2530 = vmatprep.subr.bf16.mxu0 0
      %2531 = vmatpush2.bf16.msra.mxu0 0
      %2532 = vmatprep.mubr.bf16.mxu0 0
      %2533 = vmatmul.mubr.bf16.gmra.mxu0 %v2498
      %v2534 = vpop.f32.mrf.mxu0
      %v2535 = vadd.f32 %v1661, %v2534
      %v2536 = vpop.f32.mrf.mxu0
      %v2537 = vpop.f32.mrf.mxu0
      %v2538 = vpop.f32.mrf.mxu0
      %2539 = vdwg.mxu0
      %v2541 = vsel %vm326, %v1630, 0
      %2543 = vmatprep.subr.bf16.mxu0 0
      %2544 = vmatpush1.bf16.msra.mxu0 0
      %2545 = vmatprep.subr.bf16.mxu0 0
      %2546 = vmatpush1.bf16.msra.mxu0 0
      %2547 = vmatprep.subr.bf16.mxu0 0
      %2548 = vmatpush1.bf16.msra.mxu0 0
      %2549 = vmatprep.subr.bf16.mxu0 0
      %2550 = vmatpush1.bf16.msra.mxu0 0
      %2551 = vmatprep.subr.bf16.mxu0 0
      %2552 = vmatpush1.bf16.msra.mxu0 0
      %2553 = vmatprep.subr.bf16.mxu0 0
      %2554 = vmatpush1.bf16.msra.mxu0 0
      %2555 = vmatprep.subr.bf16.mxu0 0
      %2556 = vmatpush1.bf16.msra.mxu0 0
      %2557 = vmatprep.subr.bf16.mxu0 0
      %2558 = vmatpush1.bf16.msra.mxu0 %v1678
      %2559 = vmatprep.subr.bf16.mxu0 0
      %2560 = vmatpush2.bf16.msra.mxu0 0
      %2561 = vmatprep.subr.bf16.mxu0 0
      %2562 = vmatpush2.bf16.msra.mxu0 0
      %2563 = vmatprep.subr.bf16.mxu0 0
      %2564 = vmatpush2.bf16.msra.mxu0 0
      %2565 = vmatprep.subr.bf16.mxu0 0
      %2566 = vmatpush2.bf16.msra.mxu0 0
      %2567 = vmatprep.subr.bf16.mxu0 0
      %2568 = vmatpush2.bf16.msra.mxu0 0
      %2569 = vmatprep.subr.bf16.mxu0 0
      %2570 = vmatpush2.bf16.msra.mxu0 0
      %2571 = vmatprep.subr.bf16.mxu0 0
      %2572 = vmatpush2.bf16.msra.mxu0 0
      %2573 = vmatprep.subr.bf16.mxu0 0
      %2574 = vmatpush2.bf16.msra.mxu0 0
      %2575 = vmatprep.mubr.bf16.mxu0 0
      %2576 = vmatmul.mubr.bf16.gmra.mxu0 %v2541
      %v2577 = vpop.f32.mrf.mxu0
      %v2578 = vadd.f32 %v1662, %v2577
      %v2579 = vpop.f32.mrf.mxu0
      %v2580 = vpop.f32.mrf.mxu0
      %v2581 = vpop.f32.mrf.mxu0
      %2582 = vdwg.mxu0
      %v2584 = vsel %vm326, %v1631, 0
      %2586 = vmatprep.subr.bf16.mxu0 0
      %2587 = vmatpush1.bf16.msra.mxu0 0
      %2588 = vmatprep.subr.bf16.mxu0 0
      %2589 = vmatpush1.bf16.msra.mxu0 0
      %2590 = vmatprep.subr.bf16.mxu0 0
      %2591 = vmatpush1.bf16.msra.mxu0 0
      %2592 = vmatprep.subr.bf16.mxu0 0
      %2593 = vmatpush1.bf16.msra.mxu0 0
      %2594 = vmatprep.subr.bf16.mxu0 0
      %2595 = vmatpush1.bf16.msra.mxu0 0
      %2596 = vmatprep.subr.bf16.mxu0 0
      %2597 = vmatpush1.bf16.msra.mxu0 0
      %2598 = vmatprep.subr.bf16.mxu0 0
      %2599 = vmatpush1.bf16.msra.mxu0 0
      %2600 = vmatprep.subr.bf16.mxu0 0
      %2601 = vmatpush1.bf16.msra.mxu0 %v1678
      %2602 = vmatprep.subr.bf16.mxu0 0
      %2603 = vmatpush2.bf16.msra.mxu0 0
      %2604 = vmatprep.subr.bf16.mxu0 0
      %2605 = vmatpush2.bf16.msra.mxu0 0
      %2606 = vmatprep.subr.bf16.mxu0 0
      %2607 = vmatpush2.bf16.msra.mxu0 0
      %2608 = vmatprep.subr.bf16.mxu0 0
      %2609 = vmatpush2.bf16.msra.mxu0 0
      %2610 = vmatprep.subr.bf16.mxu0 0
      %2611 = vmatpush2.bf16.msra.mxu0 0
      %2612 = vmatprep.subr.bf16.mxu0 0
      %2613 = vmatpush2.bf16.msra.mxu0 0
      %2614 = vmatprep.subr.bf16.mxu0 0
      %2615 = vmatpush2.bf16.msra.mxu0 0
      %2616 = vmatprep.subr.bf16.mxu0 0
      %2617 = vmatpush2.bf16.msra.mxu0 0
      %2618 = vmatprep.mubr.bf16.mxu0 0
      %2619 = vmatmul.mubr.bf16.gmra.mxu0 %v2584
      %v2620 = vpop.f32.mrf.mxu0
      %v2621 = vadd.f32 %v1663, %v2620
      %v2622 = vpop.f32.mrf.mxu0
      %v2623 = vpop.f32.mrf.mxu0
      %v2624 = vpop.f32.mrf.mxu0
      %2625 = vdwg.mxu0
      %v2627 = vsel %vm326, %v1632, 0
      %2629 = vmatprep.subr.bf16.mxu0 0
      %2630 = vmatpush1.bf16.msra.mxu0 0
      %2631 = vmatprep.subr.bf16.mxu0 0
      %2632 = vmatpush1.bf16.msra.mxu0 0
      %2633 = vmatprep.subr.bf16.mxu0 0
      %2634 = vmatpush1.bf16.msra.mxu0 0
      %2635 = vmatprep.subr.bf16.mxu0 0
      %2636 = vmatpush1.bf16.msra.mxu0 0
      %2637 = vmatprep.subr.bf16.mxu0 0
      %2638 = vmatpush1.bf16.msra.mxu0 0
      %2639 = vmatprep.subr.bf16.mxu0 0
      %2640 = vmatpush1.bf16.msra.mxu0 0
      %2641 = vmatprep.subr.bf16.mxu0 0
      %2642 = vmatpush1.bf16.msra.mxu0 0
      %2643 = vmatprep.subr.bf16.mxu0 0
      %2644 = vmatpush1.bf16.msra.mxu0 %v1678
      %2645 = vmatprep.subr.bf16.mxu0 0
      %2646 = vmatpush2.bf16.msra.mxu0 0
      %2647 = vmatprep.subr.bf16.mxu0 0
      %2648 = vmatpush2.bf16.msra.mxu0 0
      %2649 = vmatprep.subr.bf16.mxu0 0
      %2650 = vmatpush2.bf16.msra.mxu0 0
      %2651 = vmatprep.subr.bf16.mxu0 0
      %2652 = vmatpush2.bf16.msra.mxu0 0
      %2653 = vmatprep.subr.bf16.mxu0 0
      %2654 = vmatpush2.bf16.msra.mxu0 0
      %2655 = vmatprep.subr.bf16.mxu0 0
      %2656 = vmatpush2.bf16.msra.mxu0 0
      %2657 = vmatprep.subr.bf16.mxu0 0
      %2658 = vmatpush2.bf16.msra.mxu0 0
      %2659 = vmatprep.subr.bf16.mxu0 0
      %2660 = vmatpush2.bf16.msra.mxu0 0
      %2661 = vmatprep.mubr.bf16.mxu0 0
      %2662 = vmatmul.mubr.bf16.gmra.mxu0 %v2627
      %v2663 = vpop.f32.mrf.mxu0
      %v2664 = vadd.f32 %v1664, %v2663
      %v2665 = vpop.f32.mrf.mxu0
      %v2666 = vpop.f32.mrf.mxu0
      %v2667 = vpop.f32.mrf.mxu0
      %2668 = vdwg.mxu0
      %v2670 = vsel %vm326, %v1633, 0
      %2672 = vmatprep.subr.bf16.mxu0 0
      %2673 = vmatpush1.bf16.msra.mxu0 0
      %2674 = vmatprep.subr.bf16.mxu0 0
      %2675 = vmatpush1.bf16.msra.mxu0 0
      %2676 = vmatprep.subr.bf16.mxu0 0
      %2677 = vmatpush1.bf16.msra.mxu0 0
      %2678 = vmatprep.subr.bf16.mxu0 0
      %2679 = vmatpush1.bf16.msra.mxu0 0
      %2680 = vmatprep.subr.bf16.mxu0 0
      %2681 = vmatpush1.bf16.msra.mxu0 0
      %2682 = vmatprep.subr.bf16.mxu0 0
      %2683 = vmatpush1.bf16.msra.mxu0 0
      %2684 = vmatprep.subr.bf16.mxu0 0
      %2685 = vmatpush1.bf16.msra.mxu0 0
      %2686 = vmatprep.subr.bf16.mxu0 0
      %2687 = vmatpush1.bf16.msra.mxu0 %v1678
      %2688 = vmatprep.subr.bf16.mxu0 0
      %2689 = vmatpush2.bf16.msra.mxu0 0
      %2690 = vmatprep.subr.bf16.mxu0 0
      %2691 = vmatpush2.bf16.msra.mxu0 0
      %2692 = vmatprep.subr.bf16.mxu0 0
      %2693 = vmatpush2.bf16.msra.mxu0 0
      %2694 = vmatprep.subr.bf16.mxu0 0
      %2695 = vmatpush2.bf16.msra.mxu0 0
      %2696 = vmatprep.subr.bf16.mxu0 0
      %2697 = vmatpush2.bf16.msra.mxu0 0
      %2698 = vmatprep.subr.bf16.mxu0 0
      %2699 = vmatpush2.bf16.msra.mxu0 0
      %2700 = vmatprep.subr.bf16.mxu0 0
      %2701 = vmatpush2.bf16.msra.mxu0 0
      %2702 = vmatprep.subr.bf16.mxu0 0
      %2703 = vmatpush2.bf16.msra.mxu0 0
      %2704 = vmatprep.mubr.bf16.mxu0 0
      %2705 = vmatmul.mubr.bf16.gmra.mxu0 %v2670
      %v2706 = vpop.f32.mrf.mxu0
      %v2707 = vadd.f32 %v1665, %v2706
      %v2708 = vpop.f32.mrf.mxu0
      %v2709 = vpop.f32.mrf.mxu0
      %v2710 = vpop.f32.mrf.mxu0
      %2711 = vdwg.mxu0
      %v2713 = vsel %vm326, %v1634, 0
      %2715 = vmatprep.subr.bf16.mxu0 0
      %2716 = vmatpush1.bf16.msra.mxu0 0
      %2717 = vmatprep.subr.bf16.mxu0 0
      %2718 = vmatpush1.bf16.msra.mxu0 0
      %2719 = vmatprep.subr.bf16.mxu0 0
      %2720 = vmatpush1.bf16.msra.mxu0 0
      %2721 = vmatprep.subr.bf16.mxu0 0
      %2722 = vmatpush1.bf16.msra.mxu0 0
      %2723 = vmatprep.subr.bf16.mxu0 0
      %2724 = vmatpush1.bf16.msra.mxu0 0
      %2725 = vmatprep.subr.bf16.mxu0 0
      %2726 = vmatpush1.bf16.msra.mxu0 0
      %2727 = vmatprep.subr.bf16.mxu0 0
      %2728 = vmatpush1.bf16.msra.mxu0 0
      %2729 = vmatprep.subr.bf16.mxu0 0
      %2730 = vmatpush1.bf16.msra.mxu0 %v1678
      %2731 = vmatprep.subr.bf16.mxu0 0
      %2732 = vmatpush2.bf16.msra.mxu0 0
      %2733 = vmatprep.subr.bf16.mxu0 0
      %2734 = vmatpush2.bf16.msra.mxu0 0
      %2735 = vmatprep.subr.bf16.mxu0 0
      %2736 = vmatpush2.bf16.msra.mxu0 0
      %2737 = vmatprep.subr.bf16.mxu0 0
      %2738 = vmatpush2.bf16.msra.mxu0 0
      %2739 = vmatprep.subr.bf16.mxu0 0
      %2740 = vmatpush2.bf16.msra.mxu0 0
      %2741 = vmatprep.subr.bf16.mxu0 0
      %2742 = vmatpush2.bf16.msra.mxu0 0
      %2743 = vmatprep.subr.bf16.mxu0 0
      %2744 = vmatpush2.bf16.msra.mxu0 0
      %2745 = vmatprep.subr.bf16.mxu0 0
      %2746 = vmatpush2.bf16.msra.mxu0 0
      %2747 = vmatprep.mubr.bf16.mxu0 0
      %2748 = vmatmul.mubr.bf16.gmra.mxu0 %v2713
      %v2749 = vpop.f32.mrf.mxu0
      %v2750 = vadd.f32 %v1666, %v2749
      %v2751 = vpop.f32.mrf.mxu0
      %v2752 = vpop.f32.mrf.mxu0
      %v2753 = vpop.f32.mrf.mxu0
      %2754 = vdwg.mxu0
      %v2756 = vsel %vm326, %v1635, 0
      %2758 = vmatprep.subr.bf16.mxu0 0
      %2759 = vmatpush1.bf16.msra.mxu0 0
      %2760 = vmatprep.subr.bf16.mxu0 0
      %2761 = vmatpush1.bf16.msra.mxu0 0
      %2762 = vmatprep.subr.bf16.mxu0 0
      %2763 = vmatpush1.bf16.msra.mxu0 0
      %2764 = vmatprep.subr.bf16.mxu0 0
      %2765 = vmatpush1.bf16.msra.mxu0 0
      %2766 = vmatprep.subr.bf16.mxu0 0
      %2767 = vmatpush1.bf16.msra.mxu0 0
      %2768 = vmatprep.subr.bf16.mxu0 0
      %2769 = vmatpush1.bf16.msra.mxu0 0
      %2770 = vmatprep.subr.bf16.mxu0 0
      %2771 = vmatpush1.bf16.msra.mxu0 0
      %2772 = vmatprep.subr.bf16.mxu0 0
      %2773 = vmatpush1.bf16.msra.mxu0 %v1678
      %2774 = vmatprep.subr.bf16.mxu0 0
      %2775 = vmatpush2.bf16.msra.mxu0 0
      %2776 = vmatprep.subr.bf16.mxu0 0
      %2777 = vmatpush2.bf16.msra.mxu0 0
      %2778 = vmatprep.subr.bf16.mxu0 0
      %2779 = vmatpush2.bf16.msra.mxu0 0
      %2780 = vmatprep.subr.bf16.mxu0 0
      %2781 = vmatpush2.bf16.msra.mxu0 0
      %2782 = vmatprep.subr.bf16.mxu0 0
      %2783 = vmatpush2.bf16.msra.mxu0 0
      %2784 = vmatprep.subr.bf16.mxu0 0
      %2785 = vmatpush2.bf16.msra.mxu0 0
      %2786 = vmatprep.subr.bf16.mxu0 0
      %2787 = vmatpush2.bf16.msra.mxu0 0
      %2788 = vmatprep.subr.bf16.mxu0 0
      %2789 = vmatpush2.bf16.msra.mxu0 0
      %2790 = vmatprep.mubr.bf16.mxu0 0
      %2791 = vmatmul.mubr.bf16.gmra.mxu0 %v2756
      %v2792 = vpop.f32.mrf.mxu0
      %v2793 = vadd.f32 %v1667, %v2792
      %v2794 = vpop.f32.mrf.mxu0
      %v2795 = vpop.f32.mrf.mxu0
      %v2796 = vpop.f32.mrf.mxu0
      %2797 = vdwg.mxu0
      %v2799 = vsel %vm326, %v1636, 0
      %2801 = vmatprep.subr.bf16.mxu0 0
      %2802 = vmatpush1.bf16.msra.mxu0 0
      %2803 = vmatprep.subr.bf16.mxu0 0
      %2804 = vmatpush1.bf16.msra.mxu0 0
      %2805 = vmatprep.subr.bf16.mxu0 0
      %2806 = vmatpush1.bf16.msra.mxu0 0
      %2807 = vmatprep.subr.bf16.mxu0 0
      %2808 = vmatpush1.bf16.msra.mxu0 0
      %2809 = vmatprep.subr.bf16.mxu0 0
      %2810 = vmatpush1.bf16.msra.mxu0 0
      %2811 = vmatprep.subr.bf16.mxu0 0
      %2812 = vmatpush1.bf16.msra.mxu0 0
      %2813 = vmatprep.subr.bf16.mxu0 0
      %2814 = vmatpush1.bf16.msra.mxu0 0
      %2815 = vmatprep.subr.bf16.mxu0 0
      %2816 = vmatpush1.bf16.msra.mxu0 %v1678
      %2817 = vmatprep.subr.bf16.mxu0 0
      %2818 = vmatpush2.bf16.msra.mxu0 0
      %2819 = vmatprep.subr.bf16.mxu0 0
      %2820 = vmatpush2.bf16.msra.mxu0 0
      %2821 = vmatprep.subr.bf16.mxu0 0
      %2822 = vmatpush2.bf16.msra.mxu0 0
      %2823 = vmatprep.subr.bf16.mxu0 0
      %2824 = vmatpush2.bf16.msra.mxu0 0
      %2825 = vmatprep.subr.bf16.mxu0 0
      %2826 = vmatpush2.bf16.msra.mxu0 0
      %2827 = vmatprep.subr.bf16.mxu0 0
      %2828 = vmatpush2.bf16.msra.mxu0 0
      %2829 = vmatprep.subr.bf16.mxu0 0
      %2830 = vmatpush2.bf16.msra.mxu0 0
      %2831 = vmatprep.subr.bf16.mxu0 0
      %2832 = vmatpush2.bf16.msra.mxu0 0
      %2833 = vmatprep.mubr.bf16.mxu0 0
      %2834 = vmatmul.mubr.bf16.gmra.mxu0 %v2799
      %v2835 = vpop.f32.mrf.mxu0
      %v2836 = vadd.f32 %v1668, %v2835
      %v2837 = vpop.f32.mrf.mxu0
      %v2838 = vpop.f32.mrf.mxu0
      %v2839 = vpop.f32.mrf.mxu0
      %2840 = vdwg.mxu0
      %v2842 = vsel %vm326, %v1637, 0
      %2844 = vmatprep.subr.bf16.mxu0 0
      %2845 = vmatpush1.bf16.msra.mxu0 0
      %2846 = vmatprep.subr.bf16.mxu0 0
      %2847 = vmatpush1.bf16.msra.mxu0 0
      %2848 = vmatprep.subr.bf16.mxu0 0
      %2849 = vmatpush1.bf16.msra.mxu0 0
      %2850 = vmatprep.subr.bf16.mxu0 0
      %2851 = vmatpush1.bf16.msra.mxu0 0
      %2852 = vmatprep.subr.bf16.mxu0 0
      %2853 = vmatpush1.bf16.msra.mxu0 0
      %2854 = vmatprep.subr.bf16.mxu0 0
      %2855 = vmatpush1.bf16.msra.mxu0 0
      %2856 = vmatprep.subr.bf16.mxu0 0
      %2857 = vmatpush1.bf16.msra.mxu0 0
      %2858 = vmatprep.subr.bf16.mxu0 0
      %2859 = vmatpush1.bf16.msra.mxu0 %v1678
      %2860 = vmatprep.subr.bf16.mxu0 0
      %2861 = vmatpush2.bf16.msra.mxu0 0
      %2862 = vmatprep.subr.bf16.mxu0 0
      %2863 = vmatpush2.bf16.msra.mxu0 0
      %2864 = vmatprep.subr.bf16.mxu0 0
      %2865 = vmatpush2.bf16.msra.mxu0 0
      %2866 = vmatprep.subr.bf16.mxu0 0
      %2867 = vmatpush2.bf16.msra.mxu0 0
      %2868 = vmatprep.subr.bf16.mxu0 0
      %2869 = vmatpush2.bf16.msra.mxu0 0
      %2870 = vmatprep.subr.bf16.mxu0 0
      %2871 = vmatpush2.bf16.msra.mxu0 0
      %2872 = vmatprep.subr.bf16.mxu0 0
      %2873 = vmatpush2.bf16.msra.mxu0 0
      %2874 = vmatprep.subr.bf16.mxu0 0
      %2875 = vmatpush2.bf16.msra.mxu0 0
      %2876 = vmatprep.mubr.bf16.mxu0 0
      %2877 = vmatmul.mubr.bf16.gmra.mxu0 %v2842
      %v2878 = vpop.f32.mrf.mxu0
      %v2879 = vadd.f32 %v1669, %v2878
      %v2880 = vpop.f32.mrf.mxu0
      %v2881 = vpop.f32.mrf.mxu0
      %v2882 = vpop.f32.mrf.mxu0
      %2883 = vdwg.mxu0
      %v2885 = vsel %vm326, %v1638, 0
      %2887 = vmatprep.subr.bf16.mxu0 0
      %2888 = vmatpush1.bf16.msra.mxu0 0
      %2889 = vmatprep.subr.bf16.mxu0 0
      %2890 = vmatpush1.bf16.msra.mxu0 0
      %2891 = vmatprep.subr.bf16.mxu0 0
      %2892 = vmatpush1.bf16.msra.mxu0 0
      %2893 = vmatprep.subr.bf16.mxu0 0
      %2894 = vmatpush1.bf16.msra.mxu0 0
      %2895 = vmatprep.subr.bf16.mxu0 0
      %2896 = vmatpush1.bf16.msra.mxu0 0
      %2897 = vmatprep.subr.bf16.mxu0 0
      %2898 = vmatpush1.bf16.msra.mxu0 0
      %2899 = vmatprep.subr.bf16.mxu0 0
      %2900 = vmatpush1.bf16.msra.mxu0 0
      %2901 = vmatprep.subr.bf16.mxu0 0
      %2902 = vmatpush1.bf16.msra.mxu0 %v1678
      %2903 = vmatprep.subr.bf16.mxu0 0
      %2904 = vmatpush2.bf16.msra.mxu0 0
      %2905 = vmatprep.subr.bf16.mxu0 0
      %2906 = vmatpush2.bf16.msra.mxu0 0
      %2907 = vmatprep.subr.bf16.mxu0 0
      %2908 = vmatpush2.bf16.msra.mxu0 0
      %2909 = vmatprep.subr.bf16.mxu0 0
      %2910 = vmatpush2.bf16.msra.mxu0 0
      %2911 = vmatprep.subr.bf16.mxu0 0
      %2912 = vmatpush2.bf16.msra.mxu0 0
      %2913 = vmatprep.subr.bf16.mxu0 0
      %2914 = vmatpush2.bf16.msra.mxu0 0
      %2915 = vmatprep.subr.bf16.mxu0 0
      %2916 = vmatpush2.bf16.msra.mxu0 0
      %2917 = vmatprep.subr.bf16.mxu0 0
      %2918 = vmatpush2.bf16.msra.mxu0 0
      %2919 = vmatprep.mubr.bf16.mxu0 0
      %2920 = vmatmul.mubr.bf16.gmra.mxu0 %v2885
      %v2921 = vpop.f32.mrf.mxu0
      %v2922 = vadd.f32 %v1670, %v2921
      %v2923 = vpop.f32.mrf.mxu0
      %v2924 = vpop.f32.mrf.mxu0
      %v2925 = vpop.f32.mrf.mxu0
      %2926 = vdwg.mxu0
      %v2928 = vsel %vm326, %v1639, 0
      %2930 = vmatprep.subr.bf16.mxu0 0
      %2931 = vmatpush1.bf16.msra.mxu0 0
      %2932 = vmatprep.subr.bf16.mxu0 0
      %2933 = vmatpush1.bf16.msra.mxu0 0
      %2934 = vmatprep.subr.bf16.mxu0 0
      %2935 = vmatpush1.bf16.msra.mxu0 0
      %2936 = vmatprep.subr.bf16.mxu0 0
      %2937 = vmatpush1.bf16.msra.mxu0 0
      %2938 = vmatprep.subr.bf16.mxu0 0
      %2939 = vmatpush1.bf16.msra.mxu0 0
      %2940 = vmatprep.subr.bf16.mxu0 0
      %2941 = vmatpush1.bf16.msra.mxu0 0
      %2942 = vmatprep.subr.bf16.mxu0 0
      %2943 = vmatpush1.bf16.msra.mxu0 0
      %2944 = vmatprep.subr.bf16.mxu0 0
      %2945 = vmatpush1.bf16.msra.mxu0 %v1678
      %2946 = vmatprep.subr.bf16.mxu0 0
      %2947 = vmatpush2.bf16.msra.mxu0 0
      %2948 = vmatprep.subr.bf16.mxu0 0
      %2949 = vmatpush2.bf16.msra.mxu0 0
      %2950 = vmatprep.subr.bf16.mxu0 0
      %2951 = vmatpush2.bf16.msra.mxu0 0
      %2952 = vmatprep.subr.bf16.mxu0 0
      %2953 = vmatpush2.bf16.msra.mxu0 0
      %2954 = vmatprep.subr.bf16.mxu0 0
      %2955 = vmatpush2.bf16.msra.mxu0 0
      %2956 = vmatprep.subr.bf16.mxu0 0
      %2957 = vmatpush2.bf16.msra.mxu0 0
      %2958 = vmatprep.subr.bf16.mxu0 0
      %2959 = vmatpush2.bf16.msra.mxu0 0
      %2960 = vmatprep.subr.bf16.mxu0 0
      %2961 = vmatpush2.bf16.msra.mxu0 0
      %2962 = vmatprep.mubr.bf16.mxu0 0
      %2963 = vmatmul.mubr.bf16.gmra.mxu0 %v2928
      %v2964 = vpop.f32.mrf.mxu0
      %v2965 = vadd.f32 %v1671, %v2964
      %v2966 = vpop.f32.mrf.mxu0
      %v2967 = vpop.f32.mrf.mxu0
      %v2968 = vpop.f32.mrf.mxu0
      %2969 = vdwg.mxu0
      %v2971 = vsel %vm326, %v1640, 0
      %2973 = vmatprep.subr.bf16.mxu0 0
      %2974 = vmatpush1.bf16.msra.mxu0 0
      %2975 = vmatprep.subr.bf16.mxu0 0
      %2976 = vmatpush1.bf16.msra.mxu0 0
      %2977 = vmatprep.subr.bf16.mxu0 0
      %2978 = vmatpush1.bf16.msra.mxu0 0
      %2979 = vmatprep.subr.bf16.mxu0 0
      %2980 = vmatpush1.bf16.msra.mxu0 0
      %2981 = vmatprep.subr.bf16.mxu0 0
      %2982 = vmatpush1.bf16.msra.mxu0 0
      %2983 = vmatprep.subr.bf16.mxu0 0
      %2984 = vmatpush1.bf16.msra.mxu0 0
      %2985 = vmatprep.subr.bf16.mxu0 0
      %2986 = vmatpush1.bf16.msra.mxu0 0
      %2987 = vmatprep.subr.bf16.mxu0 0
      %2988 = vmatpush1.bf16.msra.mxu0 %v1678
      %2989 = vmatprep.subr.bf16.mxu0 0
      %2990 = vmatpush2.bf16.msra.mxu0 0
      %2991 = vmatprep.subr.bf16.mxu0 0
      %2992 = vmatpush2.bf16.msra.mxu0 0
      %2993 = vmatprep.subr.bf16.mxu0 0
      %2994 = vmatpush2.bf16.msra.mxu0 0
      %2995 = vmatprep.subr.bf16.mxu0 0
      %2996 = vmatpush2.bf16.msra.mxu0 0
      %2997 = vmatprep.subr.bf16.mxu0 0
      %2998 = vmatpush2.bf16.msra.mxu0 0
      %2999 = vmatprep.subr.bf16.mxu0 0
      %3000 = vmatpush2.bf16.msra.mxu0 0
      %3001 = vmatprep.subr.bf16.mxu0 0
      %3002 = vmatpush2.bf16.msra.mxu0 0
      %3003 = vmatprep.subr.bf16.mxu0 0
      %3004 = vmatpush2.bf16.msra.mxu0 0
      %3005 = vmatprep.mubr.bf16.mxu0 0
      %3006 = vmatmul.mubr.bf16.gmra.mxu0 %v2971
      %v3007 = vpop.f32.mrf.mxu0
      %v3008 = vadd.f32 %v1672, %v3007
      %v3009 = vpop.f32.mrf.mxu0
      %v3010 = vpop.f32.mrf.mxu0
      %v3011 = vpop.f32.mrf.mxu0
      %3012 = vdwg.mxu0
      %v3014 = vsel %vm326, %v1641, 0
      %3016 = vmatprep.subr.bf16.mxu0 0
      %3017 = vmatpush1.bf16.msra.mxu0 0
      %3018 = vmatprep.subr.bf16.mxu0 0
      %3019 = vmatpush1.bf16.msra.mxu0 0
      %3020 = vmatprep.subr.bf16.mxu0 0
      %3021 = vmatpush1.bf16.msra.mxu0 0
      %3022 = vmatprep.subr.bf16.mxu0 0
      %3023 = vmatpush1.bf16.msra.mxu0 0
      %3024 = vmatprep.subr.bf16.mxu0 0
      %3025 = vmatpush1.bf16.msra.mxu0 0
      %3026 = vmatprep.subr.bf16.mxu0 0
      %3027 = vmatpush1.bf16.msra.mxu0 0
      %3028 = vmatprep.subr.bf16.mxu0 0
      %3029 = vmatpush1.bf16.msra.mxu0 0
      %3030 = vmatprep.subr.bf16.mxu0 0
      %3031 = vmatpush1.bf16.msra.mxu0 %v1678
      %3032 = vmatprep.subr.bf16.mxu0 0
      %3033 = vmatpush2.bf16.msra.mxu0 0
      %3034 = vmatprep.subr.bf16.mxu0 0
      %3035 = vmatpush2.bf16.msra.mxu0 0
      %3036 = vmatprep.subr.bf16.mxu0 0
      %3037 = vmatpush2.bf16.msra.mxu0 0
      %3038 = vmatprep.subr.bf16.mxu0 0
      %3039 = vmatpush2.bf16.msra.mxu0 0
      %3040 = vmatprep.subr.bf16.mxu0 0
      %3041 = vmatpush2.bf16.msra.mxu0 0
      %3042 = vmatprep.subr.bf16.mxu0 0
      %3043 = vmatpush2.bf16.msra.mxu0 0
      %3044 = vmatprep.subr.bf16.mxu0 0
      %3045 = vmatpush2.bf16.msra.mxu0 0
      %3046 = vmatprep.subr.bf16.mxu0 0
      %3047 = vmatpush2.bf16.msra.mxu0 0
      %3048 = vmatprep.mubr.bf16.mxu0 0
      %3049 = vmatmul.mubr.bf16.gmra.mxu0 %v3014
      %v3050 = vpop.f32.mrf.mxu0
      %v3051 = vadd.f32 %v1673, %v3050
      %v3052 = vpop.f32.mrf.mxu0
      %v3053 = vpop.f32.mrf.mxu0
      %v3054 = vpop.f32.mrf.mxu0
      %3055 = vdwg.mxu0
      %v3056 = vpack.c.bf16 %v1718, %v1718
      %v3057 = vpack.c.bf16 %v1761, %v1761
      %v3058 = vpack.c.bf16 %v1804, %v1804
      %v3059 = vpack.c.bf16 %v1847, %v1847
      %v3060 = vpack.c.bf16 %v1890, %v1890
      %v3061 = vpack.c.bf16 %v1933, %v1933
      %v3062 = vpack.c.bf16 %v1976, %v1976
      %v3063 = vpack.c.bf16 %v2019, %v2019
      %v3064 = vpack.c.bf16 %v2062, %v2062
      %v3065 = vpack.c.bf16 %v2105, %v2105
      %v3066 = vpack.c.bf16 %v2148, %v2148
      %v3067 = vpack.c.bf16 %v2191, %v2191
      %v3068 = vpack.c.bf16 %v2234, %v2234
      %v3069 = vpack.c.bf16 %v2277, %v2277
      %v3070 = vpack.c.bf16 %v2320, %v2320
      %v3071 = vpack.c.bf16 %v2363, %v2363
      %v3072 = vpack.c.bf16 %v2406, %v2406
      %v3073 = vpack.c.bf16 %v2449, %v2449
      %v3074 = vpack.c.bf16 %v2492, %v2492
      %v3075 = vpack.c.bf16 %v2535, %v2535
      %v3076 = vpack.c.bf16 %v2578, %v2578
      %v3077 = vpack.c.bf16 %v2621, %v2621
      %v3078 = vpack.c.bf16 %v2664, %v2664
      %v3079 = vpack.c.bf16 %v2707, %v2707
      %v3080 = vpack.c.bf16 %v2750, %v2750
      %v3081 = vpack.c.bf16 %v2793, %v2793
      %v3082 = vpack.c.bf16 %v2836, %v2836
      %v3083 = vpack.c.bf16 %v2879, %v2879
      %v3084 = vpack.c.bf16 %v2922, %v2922
      %v3085 = vpack.c.bf16 %v2965, %v2965
      %v3086 = vpack.c.bf16 %v3008, %v3008
      %v3087 = vpack.c.bf16 %v3051, %v3051
      %vm3088 = vcmask 60416
      %3089 = vst.msk [vmem:[%s224] sm:$0xf] %vm3088, %v3056
      %3090 = vst.msk [vmem:[%s224 + $0x4] sm:$0xf] %vm3088, %v3057
      %3091 = vst.msk [vmem:[%s224 + $0x8] sm:$0xf] %vm3088, %v3058
      %3092 = vst.msk [vmem:[%s224 + $0xc] sm:$0xf] %vm3088, %v3059
      %3093 = vst.msk [vmem:[%s224 + $0x10] sm:$0xf] %vm3088, %v3060
      %3094 = vst.msk [vmem:[%s224 + $0x14] sm:$0xf] %vm3088, %v3061
      %3095 = vst.msk [vmem:[%s224 + $0x18] sm:$0xf] %vm3088, %v3062
      %3096 = vst.msk [vmem:[%s224 + $0x1c] sm:$0xf] %vm3088, %v3063
      %3097 = vst.msk [vmem:[%s224 + $0x20] sm:$0xf] %vm3088, %v3064
      %3098 = vst.msk [vmem:[%s224 + $0x24] sm:$0xf] %vm3088, %v3065
      %3099 = vst.msk [vmem:[%s224 + $0x28] sm:$0xf] %vm3088, %v3066
      %3100 = vst.msk [vmem:[%s224 + $0x2c] sm:$0xf] %vm3088, %v3067
      %3101 = vst.msk [vmem:[%s224 + $0x30] sm:$0xf] %vm3088, %v3068
      %3102 = vst.msk [vmem:[%s224 + $0x34] sm:$0xf] %vm3088, %v3069
      %3103 = vst.msk [vmem:[%s224 + $0x38] sm:$0xf] %vm3088, %v3070
      %3104 = vst.msk [vmem:[%s224 + $0x3c] sm:$0xf] %vm3088, %v3071
      %3105 = vst.msk [vmem:[%s224 + $0x40] sm:$0xf] %vm3088, %v3072
      %3106 = vst.msk [vmem:[%s224 + $0x44] sm:$0xf] %vm3088, %v3073
      %3107 = vst.msk [vmem:[%s224 + $0x48] sm:$0xf] %vm3088, %v3074
      %3108 = vst.msk [vmem:[%s224 + $0x4c] sm:$0xf] %vm3088, %v3075
      %3109 = vst.msk [vmem:[%s224 + $0x50] sm:$0xf] %vm3088, %v3076
      %3110 = vst.msk [vmem:[%s224 + $0x54] sm:$0xf] %vm3088, %v3077
      %3111 = vst.msk [vmem:[%s224 + $0x58] sm:$0xf] %vm3088, %v3078
      %3112 = vst.msk [vmem:[%s224 + $0x5c] sm:$0xf] %vm3088, %v3079
      %3113 = vst.msk [vmem:[%s224 + $0x60] sm:$0xf] %vm3088, %v3080
      %3114 = vst.msk [vmem:[%s224 + $0x64] sm:$0xf] %vm3088, %v3081
      %3115 = vst.msk [vmem:[%s224 + $0x68] sm:$0xf] %vm3088, %v3082
      %3116 = vst.msk [vmem:[%s224 + $0x6c] sm:$0xf] %vm3088, %v3083
      %3117 = vst.msk [vmem:[%s224 + $0x70] sm:$0xf] %vm3088, %v3084
      %3118 = vst.msk [vmem:[%s224 + $0x74] sm:$0xf] %vm3088, %v3085
      %3119 = vst.msk [vmem:[%s224 + $0x78] sm:$0xf] %vm3088, %v3086
      %3120 = vst.msk [vmem:[%s224 + $0x7c] sm:$0xf] %vm3088, %v3087
      %s3121 = smul.u32 32, %s15
      %p3122 = scmp.lt.s32.totalorder %s3121, 63
      %s3123 = scalar_select %p3122, %s3121, 63
      %s3124 = smul.addr %s3123, 4
      %s3125 = scalar_lea.vmem %s4, %s3124
      // Predicated region
      $region37: #{mask_decoder_forward.5} parent=35 // pred_check
        %p3126 = pneg %p127
      $region38: #{mask_decoder_forward.5} parent=35 // pred_check_branch
        %3128 = sbr.rel (%p3126) target = $region40
      $region39: #{mask_decoder_forward.5} parent=35 // pred_region
        %s3129 = smul.u32 32, %s15
      $region40: #{mask_decoder_forward.5} parent=35 // pred_fallthru
        _
    $region36: #{mask_decoder_forward.5} parent=5 // pred_fallthru
      _
    %p3130 = scmp.le.s32.totalorder 2, %s10
    // Predicated region
    $region41: #{mask_decoder_forward.5} parent=5 // pred_check
      %p3131 = pneg %p3130
    $region42: #{mask_decoder_forward.5} parent=5 // pred_check_branch
      %3133 = sbr.rel (%p3131) target = $region44
    $region43: #{mask_decoder_forward.5} parent=5 // pred_region
      %s3134 = ssub.s32 %s10, 2
      // Predicated region
      $region45: #{mask_decoder_forward.5} parent=43 // pred_check
        %p3135 = pneg %p133
      $region46: #{mask_decoder_forward.5} parent=43 // pred_check_branch
        %3137 = sbr.rel (%p3135) target = $region48
      $region47: #{mask_decoder_forward.5} parent=43 // pred_region
        %s3138 = smul.u32 32, %s16
        %p3139 = scmp.lt.s32.totalorder %s3138, 63
        %s3140 = scalar_select %p3139, %s3138, 63
        %s3141 = smul.addr %s3140, 4
        %s3142 = scalar_lea.vmem %s4, %s3141
      $region48: #{mask_decoder_forward.5} parent=43 // pred_fallthru
        _
    $region44: #{mask_decoder_forward.5} parent=5 // pred_fallthru
      _
  $region6: #{mask_decoder_forward.5} parent=0 // loop_footer
    %s14 = sadd.s32 1, %s10
  $region7: #{mask_decoder_forward.5} parent=0 // loop_footer_branch
    %9 = sbr.rel target = $region3
  $region8: #{mask_decoder_forward.5} parent=0 // loop_exit
    _

// kernel: mask_decoder_forward.9
$region0: #{mask_decoder_forward.9}
  #allocation0 [shape = 'u32[]', space=smem, size = 0x4, offset = 0x4, fixed_abs, tag = 'smem constant byte address 0x4 - core index']
  #allocation1 [shape = 'u32[144,128]{1,0:T(1,128)}', space=vmem, size = 0x12000, scoped, tag = 'internal scratch']
  %s0 = inlined_call_operand.vmem [shape: bf16[2,4,4], index: 0, kind: input, shape index: {}]
  %s1 = inlined_call_operand.vmem [shape: bf16[2,1024,4], index: 1, kind: input, shape index: {}]
  %s2 = inlined_call_operand.vmem [shape: f32[2,4,1024], index: 2, kind: output, shape index: {}]
  %s3 = sld [smem:[#allocation0]]
  $region41: #{mask_decoder_forward.9} parent=0
    _
  %s5 = ssub.s32 1, %s3
  %s6 = scalar_select 0, %s5, %s3
  loop: start=0, step=1, limit=4
  $region2: #{mask_decoder_forward.9} parent=0 // loop_pre_header
    _
  $region3: #{mask_decoder_forward.9} parent=0 // loop_header
    %s8 = sphi 0, %s12
    %p9 = scmp.ge.s32.totalorder %s8, 4
    %s15 = sphi 0, %s27
    %s16 = sphi 0, %s23
    %s17 = sphi 0, %s15
    %s18 = sphi 0, %s16
    %s19 = sphi 0, %s17
    %s20 = sphi 0, %s18
    %s30 = sphi 0, %s32
    %s33 = sphi 0, %s30
    %s34 = sphi 0, %s33
    %s50 = sphi 0, %s34
    %s58 = sphi 0, %s60
    %s61 = sphi 0, %s58
    %s62 = sphi 0, %s61
    %s78 = sphi 0, %s62
    %s86 = sphi 0, %s88
    %s89 = sphi 0, %s86
    %s90 = sphi 0, %s89
    %s106 = sphi 0, %s90
  $region4: #{mask_decoder_forward.9} parent=0 // loop_header_branch
    %11 = sbr.rel (%p9) target = $region8
  $region5: #{mask_decoder_forward.9} parent=0 // loop_body
    %s13 = ssub.s32 %s8, 1
    %s14 = ssub.s32 %s8, 2
    %s21 = sadd.s32 1, %s16
    %p22 = scmp.ge.s32.totalorder %s21, 1
    %s23 = scalar_select %p22, 0, %s21
    %s24 = sadd.s32 1, %s15
    %s25 = scalar_select %p22, %s24, %s15
    %p26 = scmp.ge.s32.totalorder %s25, 2
    %s27 = scalar_select %p26, 0, %s25
    %s28 = ssub.s32 %s15, %s27
    %p29 = scmp.eq.s32.totalorder %s28, 0
    %s31 = sadd.s32 %s30, 1
    %s32 = scalar_select %p29, %s30, %s31
    %p35 = pneg %p29
    %p36 = scmp.eq.s32.totalorder %s8, 1
    %p37 = por %p35, %p36
    %p38 = scmp.ne.s32.totalorder %s30, %s33
    %p39 = scmp.eq.s32.totalorder %s8, 0
    %p40 = por %p38, %p39
    %p41 = scmp.ne.s32.totalorder %s30, %s33
    %p42 = scmp.eq.s32.totalorder %s13, 1
    %p43 = por %p41, %p42
    %p44 = scmp.ne.s32.totalorder %s33, %s34
    %p45 = scmp.eq.s32.totalorder %s13, 0
    %p46 = por %p44, %p45
    %p47 = scmp.ne.s32.totalorder %s33, %s34
    %p48 = scmp.eq.s32.totalorder %s14, 1
    %p49 = por %p47, %p48
    %p51 = scmp.ne.s32.totalorder %s34, %s50
    %p52 = scmp.eq.s32.totalorder %s14, 0
    %p53 = por %p51, %p52
    %s54 = ssub.s32 %s15, %s27
    %s55 = ssub.s32 %s16, %s23
    %s56 = sor.u32 %s54, %s55
    %p57 = scmp.eq.s32.totalorder %s56, 0
    %s59 = sadd.s32 %s58, 1
    %s60 = scalar_select %p57, %s58, %s59
    %p63 = pneg %p57
    %p64 = scmp.eq.s32.totalorder %s8, 1
    %p65 = por %p63, %p64
    %p66 = scmp.ne.s32.totalorder %s58, %s61
    %p67 = scmp.eq.s32.totalorder %s8, 0
    %p68 = por %p66, %p67
    %p69 = scmp.ne.s32.totalorder %s58, %s61
    %p70 = scmp.eq.s32.totalorder %s13, 1
    %p71 = por %p69, %p70
    %p72 = scmp.ne.s32.totalorder %s61, %s62
    %p73 = scmp.eq.s32.totalorder %s13, 0
    %p74 = por %p72, %p73
    %p75 = scmp.ne.s32.totalorder %s61, %s62
    %p76 = scmp.eq.s32.totalorder %s14, 1
    %p77 = por %p75, %p76
    %p79 = scmp.ne.s32.totalorder %s62, %s78
    %p80 = scmp.eq.s32.totalorder %s14, 0
    %p81 = por %p79, %p80
    %s82 = ssub.s32 %s15, %s27
    %s83 = ssub.s32 %s16, %s23
    %s84 = sor.u32 %s82, %s83
    %p85 = scmp.eq.s32.totalorder %s84, 0
    %s87 = sadd.s32 %s86, 1
    %s88 = scalar_select %p85, %s86, %s87
    %p91 = pneg %p85
    %p92 = scmp.eq.s32.totalorder %s8, 1
    %p93 = por %p91, %p92
    %p94 = scmp.ne.s32.totalorder %s86, %s89
    %p95 = scmp.eq.s32.totalorder %s8, 0
    %p96 = por %p94, %p95
    %p97 = scmp.ne.s32.totalorder %s86, %s89
    %p98 = scmp.eq.s32.totalorder %s13, 1
    %p99 = por %p97, %p98
    %p100 = scmp.ne.s32.totalorder %s89, %s90
    %p101 = scmp.eq.s32.totalorder %s13, 0
    %p102 = por %p100, %p101
    %p103 = scmp.ne.s32.totalorder %s89, %s90
    %p104 = scmp.eq.s32.totalorder %s14, 1
    %p105 = por %p103, %p104
    %p107 = scmp.ne.s32.totalorder %s90, %s106
    %p108 = scmp.eq.s32.totalorder %s14, 0
    %p109 = por %p107, %p108
    %p110 = scmp.le.s32.totalorder 1, %s8
    %p111 = scmp.lt.s32.totalorder %s8, 3
    %p112 = pnand %p110, %p111
    %p113 = pneg %p112
    // Predicated region
    $region9: #{mask_decoder_forward.9} parent=5 // pred_check
      _
    $region10: #{mask_decoder_forward.9} parent=5 // pred_check_branch
      %115 = sbr.rel (%p112) target = $region12
    $region11: #{mask_decoder_forward.9} parent=5 // pred_region
      %s116 = ssub.s32 %s8, 1
    $region12: #{mask_decoder_forward.9} parent=5 // pred_fallthru
      _
    %p117 = scmp.lt.s32.totalorder %s8, 2
    // Predicated region
    $region13: #{mask_decoder_forward.9} parent=5 // pred_check
      %p118 = pneg %p117
    $region14: #{mask_decoder_forward.9} parent=5 // pred_check_branch
      %120 = sbr.rel (%p118) target = $region16
    $region15: #{mask_decoder_forward.9} parent=5 // pred_region
      // Predicated region
      $region17: #{mask_decoder_forward.9} parent=15 // pred_check
        %p121 = pneg %p40
      $region18: #{mask_decoder_forward.9} parent=15 // pred_check_branch
        %123 = sbr.rel (%p121) target = $region20
      $region19: #{mask_decoder_forward.9} parent=15 // pred_region
        %p124 = scmp.lt.s32.totalorder %s15, 1
        %s125 = scalar_select %p124, %s15, 1
        %s126 = smul.addr %s125, 2
        %s127 = scalar_lea.vmem %s0, %s126
      $region20: #{mask_decoder_forward.9} parent=15 // pred_fallthru
        _
      // Predicated region
      $region21: #{mask_decoder_forward.9} parent=15 // pred_check
        %p128 = pneg %p68
      $region22: #{mask_decoder_forward.9} parent=15 // pred_check_branch
        %130 = sbr.rel (%p128) target = $region24
      $region23: #{mask_decoder_forward.9} parent=15 // pred_region
        %s131 = smul.u32 128, %s16
        %p132 = scmp.lt.s32.totalorder %s15, 1
        %s133 = scalar_select %p132, %s15, 1
        %p134 = scmp.lt.s32.totalorder %s131, 127
        %s135 = scalar_select %p134, %s131, 127
        %s136 = smul.addr %s133, 128
        %s137 = sadd.s32 %s135, %s136
        %s138 = smul.addr %s137, 4
        %s139 = scalar_lea.vmem %s1, %s138
        %s140 = smul.u32 128, %s16
      $region24: #{mask_decoder_forward.9} parent=15 // pred_fallthru
        _
    $region16: #{mask_decoder_forward.9} parent=5 // pred_fallthru
      _
    %p141 = scmp.le.s32.totalorder 1, %s8
    %p142 = scmp.lt.s32.totalorder %s8, 3
    %p143 = pnand %p141, %p142
    %p144 = pneg %p143
    // Predicated region
    $region25: #{mask_decoder_forward.9} parent=5 // pred_check
      _
    $region26: #{mask_decoder_forward.9} parent=5 // pred_check_branch
      %146 = sbr.rel (%p143) target = $region28
    $region27: #{mask_decoder_forward.9} parent=5 // pred_region
      %s147 = ssub.s32 %s8, 1
      %p148 = scmp.lt.s32.totalorder %s17, 1
      %s149 = scalar_select %p148, %s17, 1
      %s150 = smul.addr %s149, 2
      %s151 = scalar_lea.vmem %s0, %s150
      %p152 = pneg %p46
      %p153 = pneg %p43
      %s154 = smul.u32 128, %s18
      %p155 = scmp.lt.s32.totalorder %s17, 1
      %s156 = scalar_select %p155, %s17, 1
      %p157 = scmp.lt.s32.totalorder %s154, 127
      %s158 = scalar_select %p157, %s154, 127
      %s159 = smul.addr %s156, 128
      %s160 = sadd.s32 %s158, %s159
      %s161 = smul.addr %s160, 4
      %s162 = scalar_lea.vmem %s1, %s161
      %p163 = pneg %p74
      %p164 = pneg %p71
      %p165 = pneg %p102
      %p166 = pneg %p99
      %s167 = smul.u32 8, %s18
      %p168 = scmp.lt.s32.totalorder %s17, 1
      %s169 = scalar_select %p168, %s17, 1
      %p170 = scmp.lt.s32.totalorder %s167, 7
      %s171 = scalar_select %p170, %s167, 7
      %s172 = smul.addr %s169, 8
      %s173 = sadd.s32 %s171, %s172
      %s174 = smul.addr %s173, 4
      %s175 = scalar_lea.vmem %s2, %s174
      %p176 = scmp.lt.s32.totalorder %s17, 1
      %s177 = scalar_select %p176, %s17, 1
      %s178 = smul.addr %s177, 2
      %s179 = scalar_lea.vmem %s0, %s178
      %s180 = smul.u32 128, %s18
      %p181 = scmp.lt.s32.totalorder %s17, 1
      %s182 = scalar_select %p181, %s17, 1
      %p183 = scmp.lt.s32.totalorder %s180, 127
      %s184 = scalar_select %p183, %s180, 127
      %s185 = smul.addr %s182, 128
      %s186 = sadd.s32 %s184, %s185
      %s187 = smul.addr %s186, 4
      %s188 = scalar_lea.vmem %s1, %s187
      %s189 = smul.u32 128, %s18
      %s190 = smul.u32 8, %s18
      %p191 = scmp.lt.s32.totalorder %s17, 1
      %s192 = scalar_select %p191, %s17, 1
      %p193 = scmp.lt.s32.totalorder %s190, 7
      %s194 = scalar_select %p193, %s190, 7
      %s195 = smul.addr %s192, 8
      %s196 = sadd.s32 %s194, %s195
      %s197 = smul.addr %s196, 4
      %s198 = scalar_lea.vmem %s2, %s197
      %s199 = smul.u32 8, %s18
      %v201 = vld [vmem:[%s179] sm:$0x3]
      %v202 = vld [vmem:[%s188] sm:$0xf]
      %v203 = vld [vmem:[%s188 + $0x4] sm:$0xf]
      %v204 = vld [vmem:[%s188 + $0x8] sm:$0xf]
      %v205 = vld [vmem:[%s188 + $0xc] sm:$0xf]
      %v206 = vld [vmem:[%s188 + $0x10] sm:$0xf]
      %v207 = vld [vmem:[%s188 + $0x14] sm:$0xf]
      %v208 = vld [vmem:[%s188 + $0x18] sm:$0xf]
      %v209 = vld [vmem:[%s188 + $0x1c] sm:$0xf]
      %v210 = vld [vmem:[%s188 + $0x20] sm:$0xf]
      %v211 = vld [vmem:[%s188 + $0x24] sm:$0xf]
      %v212 = vld [vmem:[%s188 + $0x28] sm:$0xf]
      %v213 = vld [vmem:[%s188 + $0x2c] sm:$0xf]
      %v214 = vld [vmem:[%s188 + $0x30] sm:$0xf]
      %v215 = vld [vmem:[%s188 + $0x34] sm:$0xf]
      %v216 = vld [vmem:[%s188 + $0x38] sm:$0xf]
      %v217 = vld [vmem:[%s188 + $0x3c] sm:$0xf]
      %v218 = vld [vmem:[%s188 + $0x40] sm:$0xf]
      %v219 = vld [vmem:[%s188 + $0x44] sm:$0xf]
      %v220 = vld [vmem:[%s188 + $0x48] sm:$0xf]
      %v221 = vld [vmem:[%s188 + $0x4c] sm:$0xf]
      %v222 = vld [vmem:[%s188 + $0x50] sm:$0xf]
      %v223 = vld [vmem:[%s188 + $0x54] sm:$0xf]
      %v224 = vld [vmem:[%s188 + $0x58] sm:$0xf]
      %v225 = vld [vmem:[%s188 + $0x5c] sm:$0xf]
      %v226 = vld [vmem:[%s188 + $0x60] sm:$0xf]
      %v227 = vld [vmem:[%s188 + $0x64] sm:$0xf]
      %v228 = vld [vmem:[%s188 + $0x68] sm:$0xf]
      %v229 = vld [vmem:[%s188 + $0x6c] sm:$0xf]
      %v230 = vld [vmem:[%s188 + $0x70] sm:$0xf]
      %v231 = vld [vmem:[%s188 + $0x74] sm:$0xf]
      %v232 = vld [vmem:[%s188 + $0x78] sm:$0xf]
      %v233 = vld [vmem:[%s188 + $0x7c] sm:$0xf]
      %v234 = vld [vmem:[%s188 + $0x80] sm:$0xf]
      %v235 = vld [vmem:[%s188 + $0x84] sm:$0xf]
      %v236 = vld [vmem:[%s188 + $0x88] sm:$0xf]
      %v237 = vld [vmem:[%s188 + $0x8c] sm:$0xf]
      %v238 = vld [vmem:[%s188 + $0x90] sm:$0xf]
      %v239 = vld [vmem:[%s188 + $0x94] sm:$0xf]
      %v240 = vld [vmem:[%s188 + $0x98] sm:$0xf]
      %v241 = vld [vmem:[%s188 + $0x9c] sm:$0xf]
      %v242 = vld [vmem:[%s188 + $0xa0] sm:$0xf]
      %v243 = vld [vmem:[%s188 + $0xa4] sm:$0xf]
      %v244 = vld [vmem:[%s188 + $0xa8] sm:$0xf]
      %v245 = vld [vmem:[%s188 + $0xac] sm:$0xf]
      %v246 = vld [vmem:[%s188 + $0xb0] sm:$0xf]
      %v247 = vld [vmem:[%s188 + $0xb4] sm:$0xf]
      %v248 = vld [vmem:[%s188 + $0xb8] sm:$0xf]
      %v249 = vld [vmem:[%s188 + $0xbc] sm:$0xf]
      %v250 = vld [vmem:[%s188 + $0xc0] sm:$0xf]
      %v251 = vld [vmem:[%s188 + $0xc4] sm:$0xf]
      %v252 = vld [vmem:[%s188 + $0xc8] sm:$0xf]
      %v253 = vld [vmem:[%s188 + $0xcc] sm:$0xf]
      %v254 = vld [vmem:[%s188 + $0xd0] sm:$0xf]
      %v255 = vld [vmem:[%s188 + $0xd4] sm:$0xf]
      %v256 = vld [vmem:[%s188 + $0xd8] sm:$0xf]
      %v257 = vld [vmem:[%s188 + $0xdc] sm:$0xf]
      %v258 = vld [vmem:[%s188 + $0xe0] sm:$0xf]
      %v259 = vld [vmem:[%s188 + $0xe4] sm:$0xf]
      %v260 = vld [vmem:[%s188 + $0xe8] sm:$0xf]
      %v261 = vld [vmem:[%s188 + $0xec] sm:$0xf]
      %v262 = vld [vmem:[%s188 + $0xf0] sm:$0xf]
      %v263 = vld [vmem:[%s188 + $0xf4] sm:$0xf]
      %v264 = vld [vmem:[%s188 + $0xf8] sm:$0xf]
      %v265 = vld [vmem:[%s188 + $0xfc] sm:$0xf]
      %v266 = vld [vmem:[%s188 + $0x100] sm:$0xf]
      %v267 = vld [vmem:[%s188 + $0x104] sm:$0xf]
      %v268 = vld [vmem:[%s188 + $0x108] sm:$0xf]
      %v269 = vld [vmem:[%s188 + $0x10c] sm:$0xf]
      %v270 = vld [vmem:[%s188 + $0x110] sm:$0xf]
      %v271 = vld [vmem:[%s188 + $0x114] sm:$0xf]
      %v272 = vld [vmem:[%s188 + $0x118] sm:$0xf]
      %v273 = vld [vmem:[%s188 + $0x11c] sm:$0xf]
      %v274 = vld [vmem:[%s188 + $0x120] sm:$0xf]
      %v275 = vld [vmem:[%s188 + $0x124] sm:$0xf]
      %v276 = vld [vmem:[%s188 + $0x128] sm:$0xf]
      %v277 = vld [vmem:[%s188 + $0x12c] sm:$0xf]
      %v278 = vld [vmem:[%s188 + $0x130] sm:$0xf]
      %v279 = vld [vmem:[%s188 + $0x134] sm:$0xf]
      %v280 = vld [vmem:[%s188 + $0x138] sm:$0xf]
      %v281 = vld [vmem:[%s188 + $0x13c] sm:$0xf]
      %v282 = vld [vmem:[%s188 + $0x140] sm:$0xf]
      %v283 = vld [vmem:[%s188 + $0x144] sm:$0xf]
      %v284 = vld [vmem:[%s188 + $0x148] sm:$0xf]
      %v285 = vld [vmem:[%s188 + $0x14c] sm:$0xf]
      %v286 = vld [vmem:[%s188 + $0x150] sm:$0xf]
      %v287 = vld [vmem:[%s188 + $0x154] sm:$0xf]
      %v288 = vld [vmem:[%s188 + $0x158] sm:$0xf]
      %v289 = vld [vmem:[%s188 + $0x15c] sm:$0xf]
      %v290 = vld [vmem:[%s188 + $0x160] sm:$0xf]
      %v291 = vld [vmem:[%s188 + $0x164] sm:$0xf]
      %v292 = vld [vmem:[%s188 + $0x168] sm:$0xf]
      %v293 = vld [vmem:[%s188 + $0x16c] sm:$0xf]
      %v294 = vld [vmem:[%s188 + $0x170] sm:$0xf]
      %v295 = vld [vmem:[%s188 + $0x174] sm:$0xf]
      %v296 = vld [vmem:[%s188 + $0x178] sm:$0xf]
      %v297 = vld [vmem:[%s188 + $0x17c] sm:$0xf]
      %v298 = vld [vmem:[%s188 + $0x180] sm:$0xf]
      %v299 = vld [vmem:[%s188 + $0x184] sm:$0xf]
      %v300 = vld [vmem:[%s188 + $0x188] sm:$0xf]
      %v301 = vld [vmem:[%s188 + $0x18c] sm:$0xf]
      %v302 = vld [vmem:[%s188 + $0x190] sm:$0xf]
      %v303 = vld [vmem:[%s188 + $0x194] sm:$0xf]
      %v304 = vld [vmem:[%s188 + $0x198] sm:$0xf]
      %v305 = vld [vmem:[%s188 + $0x19c] sm:$0xf]
      %v306 = vld [vmem:[%s188 + $0x1a0] sm:$0xf]
      %v307 = vld [vmem:[%s188 + $0x1a4] sm:$0xf]
      %v308 = vld [vmem:[%s188 + $0x1a8] sm:$0xf]
      %v309 = vld [vmem:[%s188 + $0x1ac] sm:$0xf]
      %v310 = vld [vmem:[%s188 + $0x1b0] sm:$0xf]
      %v311 = vld [vmem:[%s188 + $0x1b4] sm:$0xf]
      %v312 = vld [vmem:[%s188 + $0x1b8] sm:$0xf]
      %v313 = vld [vmem:[%s188 + $0x1bc] sm:$0xf]
      %v314 = vld [vmem:[%s188 + $0x1c0] sm:$0xf]
      %v315 = vld [vmem:[%s188 + $0x1c4] sm:$0xf]
      %v316 = vld [vmem:[%s188 + $0x1c8] sm:$0xf]
      %v317 = vld [vmem:[%s188 + $0x1cc] sm:$0xf]
      %v318 = vld [vmem:[%s188 + $0x1d0] sm:$0xf]
      %v319 = vld [vmem:[%s188 + $0x1d4] sm:$0xf]
      %v320 = vld [vmem:[%s188 + $0x1d8] sm:$0xf]
      %v321 = vld [vmem:[%s188 + $0x1dc] sm:$0xf]
      %v322 = vld [vmem:[%s188 + $0x1e0] sm:$0xf]
      %v323 = vld [vmem:[%s188 + $0x1e4] sm:$0xf]
      %v324 = vld [vmem:[%s188 + $0x1e8] sm:$0xf]
      %v325 = vld [vmem:[%s188 + $0x1ec] sm:$0xf]
      %v326 = vld [vmem:[%s188 + $0x1f0] sm:$0xf]
      %v327 = vld [vmem:[%s188 + $0x1f4] sm:$0xf]
      %v328 = vld [vmem:[%s188 + $0x1f8] sm:$0xf]
      %v329 = vld [vmem:[%s188 + $0x1fc] sm:$0xf]
      %v458 = vunpack.c.l.b16 %v202
      %v459 = vunpack.c.l.b16 %v203
      %v460 = vunpack.c.l.b16 %v204
      %v461 = vunpack.c.l.b16 %v205
      %v462 = vunpack.c.l.b16 %v206
      %v463 = vunpack.c.l.b16 %v207
      %v464 = vunpack.c.l.b16 %v208
      %v465 = vunpack.c.l.b16 %v209
      %v466 = vunpack.c.l.b16 %v210
      %v467 = vunpack.c.l.b16 %v211
      %v468 = vunpack.c.l.b16 %v212
      %v469 = vunpack.c.l.b16 %v213
      %v470 = vunpack.c.l.b16 %v214
      %v471 = vunpack.c.l.b16 %v215
      %v472 = vunpack.c.l.b16 %v216
      %v473 = vunpack.c.l.b16 %v217
      %v474 = vunpack.c.l.b16 %v218
      %v475 = vunpack.c.l.b16 %v219
      %v476 = vunpack.c.l.b16 %v220
      %v477 = vunpack.c.l.b16 %v221
      %v478 = vunpack.c.l.b16 %v222
      %v479 = vunpack.c.l.b16 %v223
      %v480 = vunpack.c.l.b16 %v224
      %v481 = vunpack.c.l.b16 %v225
      %v482 = vunpack.c.l.b16 %v226
      %v483 = vunpack.c.l.b16 %v227
      %v484 = vunpack.c.l.b16 %v228
      %v485 = vunpack.c.l.b16 %v229
      %v486 = vunpack.c.l.b16 %v230
      %v487 = vunpack.c.l.b16 %v231
      %v488 = vunpack.c.l.b16 %v232
      %v489 = vunpack.c.l.b16 %v233
      %v490 = vunpack.c.l.b16 %v234
      %v491 = vunpack.c.l.b16 %v235
      %v492 = vunpack.c.l.b16 %v236
      %v493 = vunpack.c.l.b16 %v237
      %v494 = vunpack.c.l.b16 %v238
      %v495 = vunpack.c.l.b16 %v239
      %v496 = vunpack.c.l.b16 %v240
      %v497 = vunpack.c.l.b16 %v241
      %v498 = vunpack.c.l.b16 %v242
      %v499 = vunpack.c.l.b16 %v243
      %v500 = vunpack.c.l.b16 %v244
      %v501 = vunpack.c.l.b16 %v245
      %v502 = vunpack.c.l.b16 %v246
      %v503 = vunpack.c.l.b16 %v247
      %v504 = vunpack.c.l.b16 %v248
      %v505 = vunpack.c.l.b16 %v249
      %v506 = vunpack.c.l.b16 %v250
      %v507 = vunpack.c.l.b16 %v251
      %v508 = vunpack.c.l.b16 %v252
      %v509 = vunpack.c.l.b16 %v253
      %v510 = vunpack.c.l.b16 %v254
      %v511 = vunpack.c.l.b16 %v255
      %v512 = vunpack.c.l.b16 %v256
      %v513 = vunpack.c.l.b16 %v257
      %v514 = vunpack.c.l.b16 %v258
      %v515 = vunpack.c.l.b16 %v259
      %v516 = vunpack.c.l.b16 %v260
      %v517 = vunpack.c.l.b16 %v261
      %v518 = vunpack.c.l.b16 %v262
      %v519 = vunpack.c.l.b16 %v263
      %v520 = vunpack.c.l.b16 %v264
      %v521 = vunpack.c.l.b16 %v265
      %v522 = vunpack.c.l.b16 %v266
      %v523 = vunpack.c.l.b16 %v267
      %v524 = vunpack.c.l.b16 %v268
      %v525 = vunpack.c.l.b16 %v269
      %v526 = vunpack.c.l.b16 %v270
      %v527 = vunpack.c.l.b16 %v271
      %v528 = vunpack.c.l.b16 %v272
      %v529 = vunpack.c.l.b16 %v273
      %v530 = vunpack.c.l.b16 %v274
      %v531 = vunpack.c.l.b16 %v275
      %v532 = vunpack.c.l.b16 %v276
      %v533 = vunpack.c.l.b16 %v277
      %v534 = vunpack.c.l.b16 %v278
      %v535 = vunpack.c.l.b16 %v279
      %v536 = vunpack.c.l.b16 %v280
      %v537 = vunpack.c.l.b16 %v281
      %v538 = vunpack.c.l.b16 %v282
      %v539 = vunpack.c.l.b16 %v283
      %v540 = vunpack.c.l.b16 %v284
      %v541 = vunpack.c.l.b16 %v285
      %v542 = vunpack.c.l.b16 %v286
      %v543 = vunpack.c.l.b16 %v287
      %v544 = vunpack.c.l.b16 %v288
      %v545 = vunpack.c.l.b16 %v289
      %v546 = vunpack.c.l.b16 %v290
      %v547 = vunpack.c.l.b16 %v291
      %v548 = vunpack.c.l.b16 %v292
      %v549 = vunpack.c.l.b16 %v293
      %v550 = vunpack.c.l.b16 %v294
      %v551 = vunpack.c.l.b16 %v295
      %v552 = vunpack.c.l.b16 %v296
      %v553 = vunpack.c.l.b16 %v297
      %v554 = vunpack.c.l.b16 %v298
      %v555 = vunpack.c.l.b16 %v299
      %v556 = vunpack.c.l.b16 %v300
      %v557 = vunpack.c.l.b16 %v301
      %v558 = vunpack.c.l.b16 %v302
      %v559 = vunpack.c.l.b16 %v303
      %v560 = vunpack.c.l.b16 %v304
      %v561 = vunpack.c.l.b16 %v305
      %v562 = vunpack.c.l.b16 %v306
      %v563 = vunpack.c.l.b16 %v307
      %v564 = vunpack.c.l.b16 %v308
      %v565 = vunpack.c.l.b16 %v309
      %v566 = vunpack.c.l.b16 %v310
      %v567 = vunpack.c.l.b16 %v311
      %v568 = vunpack.c.l.b16 %v312
      %v569 = vunpack.c.l.b16 %v313
      %v570 = vunpack.c.l.b16 %v314
      %v571 = vunpack.c.l.b16 %v315
      %v572 = vunpack.c.l.b16 %v316
      %v573 = vunpack.c.l.b16 %v317
      %v574 = vunpack.c.l.b16 %v318
      %v575 = vunpack.c.l.b16 %v319
      %v576 = vunpack.c.l.b16 %v320
      %v577 = vunpack.c.l.b16 %v321
      %v578 = vunpack.c.l.b16 %v322
      %v579 = vunpack.c.l.b16 %v323
      %v580 = vunpack.c.l.b16 %v324
      %v581 = vunpack.c.l.b16 %v325
      %v582 = vunpack.c.l.b16 %v326
      %v583 = vunpack.c.l.b16 %v327
      %v584 = vunpack.c.l.b16 %v328
      %v585 = vunpack.c.l.b16 %v329
      %v586 = vpack.c.b16 %v459, %v458
      %v587 = vpack.c.b16 %v461, %v460
      %v588 = vpack.c.b16 %v463, %v462
      %v589 = vpack.c.b16 %v465, %v464
      %v590 = vpack.c.b16 %v467, %v466
      %v591 = vpack.c.b16 %v469, %v468
      %v592 = vpack.c.b16 %v471, %v470
      %v593 = vpack.c.b16 %v473, %v472
      %v594 = vpack.c.b16 %v475, %v474
      %v595 = vpack.c.b16 %v477, %v476
      %v596 = vpack.c.b16 %v479, %v478
      %v597 = vpack.c.b16 %v481, %v480
      %v598 = vpack.c.b16 %v483, %v482
      %v599 = vpack.c.b16 %v485, %v484
      %v600 = vpack.c.b16 %v487, %v486
      %v601 = vpack.c.b16 %v489, %v488
      %v602 = vpack.c.b16 %v491, %v490
      %v603 = vpack.c.b16 %v493, %v492
      %v604 = vpack.c.b16 %v495, %v494
      %v605 = vpack.c.b16 %v497, %v496
      %v606 = vpack.c.b16 %v499, %v498
      %v607 = vpack.c.b16 %v501, %v500
      %v608 = vpack.c.b16 %v503, %v502
      %v609 = vpack.c.b16 %v505, %v504
      %v610 = vpack.c.b16 %v507, %v506
      %v611 = vpack.c.b16 %v509, %v508
      %v612 = vpack.c.b16 %v511, %v510
      %v613 = vpack.c.b16 %v513, %v512
      %v614 = vpack.c.b16 %v515, %v514
      %v615 = vpack.c.b16 %v517, %v516
      %v616 = vpack.c.b16 %v519, %v518
      %v617 = vpack.c.b16 %v521, %v520
      %v618 = vpack.c.b16 %v523, %v522
      %v619 = vpack.c.b16 %v525, %v524
      %v620 = vpack.c.b16 %v527, %v526
      %v621 = vpack.c.b16 %v529, %v528
      %v622 = vpack.c.b16 %v531, %v530
      %v623 = vpack.c.b16 %v533, %v532
      %v624 = vpack.c.b16 %v535, %v534
      %v625 = vpack.c.b16 %v537, %v536
      %v626 = vpack.c.b16 %v539, %v538
      %v627 = vpack.c.b16 %v541, %v540
      %v628 = vpack.c.b16 %v543, %v542
      %v629 = vpack.c.b16 %v545, %v544
      %v630 = vpack.c.b16 %v547, %v546
      %v631 = vpack.c.b16 %v549, %v548
      %v632 = vpack.c.b16 %v551, %v550
      %v633 = vpack.c.b16 %v553, %v552
      %v634 = vpack.c.b16 %v555, %v554
      %v635 = vpack.c.b16 %v557, %v556
      %v636 = vpack.c.b16 %v559, %v558
      %v637 = vpack.c.b16 %v561, %v560
      %v638 = vpack.c.b16 %v563, %v562
      %v639 = vpack.c.b16 %v565, %v564
      %v640 = vpack.c.b16 %v567, %v566
      %v641 = vpack.c.b16 %v569, %v568
      %v642 = vpack.c.b16 %v571, %v570
      %v643 = vpack.c.b16 %v573, %v572
      %v644 = vpack.c.b16 %v575, %v574
      %v645 = vpack.c.b16 %v577, %v576
      %v646 = vpack.c.b16 %v579, %v578
      %v647 = vpack.c.b16 %v581, %v580
      %v648 = vpack.c.b16 %v583, %v582
      %v649 = vpack.c.b16 %v585, %v584
      %vm650 = vcmask 31744
      %v652 = vsel %vm650, %v201, 0
      %v655 = vsel %vm650, %v586, 0
      %v658 = vsel %vm650, %v587, 0
      %v661 = vsel %vm650, %v588, 0
      %v664 = vsel %vm650, %v589, 0
      %v667 = vsel %vm650, %v590, 0
      %v670 = vsel %vm650, %v591, 0
      %v673 = vsel %vm650, %v592, 0
      %v676 = vsel %vm650, %v593, 0
      %v679 = vsel %vm650, %v594, 0
      %v682 = vsel %vm650, %v595, 0
      %v685 = vsel %vm650, %v596, 0
      %v688 = vsel %vm650, %v597, 0
      %v691 = vsel %vm650, %v598, 0
      %v694 = vsel %vm650, %v599, 0
      %v697 = vsel %vm650, %v600, 0
      %v700 = vsel %vm650, %v601, 0
      %v703 = vsel %vm650, %v602, 0
      %v706 = vsel %vm650, %v603, 0
      %v709 = vsel %vm650, %v604, 0
      %v712 = vsel %vm650, %v605, 0
      %v715 = vsel %vm650, %v606, 0
      %v718 = vsel %vm650, %v607, 0
      %v721 = vsel %vm650, %v608, 0
      %v724 = vsel %vm650, %v609, 0
      %v727 = vsel %vm650, %v610, 0
      %v730 = vsel %vm650, %v611, 0
      %v733 = vsel %vm650, %v612, 0
      %v736 = vsel %vm650, %v613, 0
      %v739 = vsel %vm650, %v614, 0
      %v742 = vsel %vm650, %v615, 0
      %v745 = vsel %vm650, %v616, 0
      %v748 = vsel %vm650, %v617, 0
      %v751 = vsel %vm650, %v618, 0
      %v754 = vsel %vm650, %v619, 0
      %v757 = vsel %vm650, %v620, 0
      %v760 = vsel %vm650, %v621, 0
      %v763 = vsel %vm650, %v622, 0
      %v766 = vsel %vm650, %v623, 0
      %v769 = vsel %vm650, %v624, 0
      %v772 = vsel %vm650, %v625, 0
      %v775 = vsel %vm650, %v626, 0
      %v778 = vsel %vm650, %v627, 0
      %v781 = vsel %vm650, %v628, 0
      %v784 = vsel %vm650, %v629, 0
      %v787 = vsel %vm650, %v630, 0
      %v790 = vsel %vm650, %v631, 0
      %v793 = vsel %vm650, %v632, 0
      %v796 = vsel %vm650, %v633, 0
      %v799 = vsel %vm650, %v634, 0
      %v802 = vsel %vm650, %v635, 0
      %v805 = vsel %vm650, %v636, 0
      %v808 = vsel %vm650, %v637, 0
      %v811 = vsel %vm650, %v638, 0
      %v814 = vsel %vm650, %v639, 0
      %v817 = vsel %vm650, %v640, 0
      %v820 = vsel %vm650, %v641, 0
      %v823 = vsel %vm650, %v642, 0
      %v826 = vsel %vm650, %v643, 0
      %v829 = vsel %vm650, %v644, 0
      %v832 = vsel %vm650, %v645, 0
      %v835 = vsel %vm650, %v646, 0
      %v838 = vsel %vm650, %v647, 0
      %v841 = vsel %vm650, %v648, 0
      %v844 = vsel %vm650, %v649, 0
      %846 = vmatprep.subr.bf16.mxu0 0
      %847 = vmatpush1.bf16.xpose.msra.mxu0 %v676
      %848 = vmatprep.subr.bf16.mxu0 0
      %849 = vmatpush1.bf16.xpose.msra.mxu0 %v673
      %850 = vmatprep.subr.bf16.mxu0 0
      %851 = vmatpush1.bf16.xpose.msra.mxu0 %v670
      %852 = vmatprep.subr.bf16.mxu0 0
      %853 = vmatpush1.bf16.xpose.msra.mxu0 %v667
      %854 = vmatprep.subr.bf16.mxu0 0
      %855 = vmatpush1.bf16.xpose.msra.mxu0 %v664
      %856 = vmatprep.subr.bf16.mxu0 0
      %857 = vmatpush1.bf16.xpose.msra.mxu0 %v661
      %858 = vmatprep.subr.bf16.mxu0 0
      %859 = vmatpush1.bf16.xpose.msra.mxu0 %v658
      %860 = vmatprep.subr.bf16.mxu0 0
      %861 = vmatpush1.bf16.xpose.msra.mxu0 %v655
      %862 = vmatprep.subr.bf16.mxu0 0
      %863 = vmatpush2.bf16.xpose.msra.mxu0 %v700
      %864 = vmatprep.subr.bf16.mxu0 0
      %865 = vmatpush2.bf16.xpose.msra.mxu0 %v697
      %866 = vmatprep.subr.bf16.mxu0 0
      %867 = vmatpush2.bf16.xpose.msra.mxu0 %v694
      %868 = vmatprep.subr.bf16.mxu0 0
      %869 = vmatpush2.bf16.xpose.msra.mxu0 %v691
      %870 = vmatprep.subr.bf16.mxu0 0
      %871 = vmatpush2.bf16.xpose.msra.mxu0 %v688
      %872 = vmatprep.subr.bf16.mxu0 0
      %873 = vmatpush2.bf16.xpose.msra.mxu0 %v685
      %874 = vmatprep.subr.bf16.mxu0 0
      %875 = vmatpush2.bf16.xpose.msra.mxu0 %v682
      %876 = vmatprep.subr.bf16.mxu0 0
      %877 = vmatpush2.bf16.xpose.msra.mxu0 %v679
      %878 = vmatprep.mubr.bf16.mxu0 0
      %879 = vmatmul.mubr.bf16.gmra.mxu0 %v652
      %v880 = vpop.f32.mrf.mxu0
      %v881 = vadd.f32 0.0, %v880
      %v882 = vpop.f32.mrf.mxu0
      %v883 = vadd.f32 0.0, %v882
      %v884 = vpop.f32.mrf.mxu0
      %v885 = vpop.f32.mrf.mxu0
      %886 = vdwg.mxu0
      %887 = vmatprep.subr.bf16.mxu0 0
      %888 = vmatpush1.bf16.xpose.msra.mxu0 %v724
      %889 = vmatprep.subr.bf16.mxu0 0
      %890 = vmatpush1.bf16.xpose.msra.mxu0 %v721
      %891 = vmatprep.subr.bf16.mxu0 0
      %892 = vmatpush1.bf16.xpose.msra.mxu0 %v718
      %893 = vmatprep.subr.bf16.mxu0 0
      %894 = vmatpush1.bf16.xpose.msra.mxu0 %v715
      %895 = vmatprep.subr.bf16.mxu0 0
      %896 = vmatpush1.bf16.xpose.msra.mxu0 %v712
      %897 = vmatprep.subr.bf16.mxu0 0
      %898 = vmatpush1.bf16.xpose.msra.mxu0 %v709
      %899 = vmatprep.subr.bf16.mxu0 0
      %900 = vmatpush1.bf16.xpose.msra.mxu0 %v706
      %901 = vmatprep.subr.bf16.mxu0 0
      %902 = vmatpush1.bf16.xpose.msra.mxu0 %v703
      %903 = vmatprep.subr.bf16.mxu0 0
      %904 = vmatpush2.bf16.xpose.msra.mxu0 %v748
      %905 = vmatprep.subr.bf16.mxu0 0
      %906 = vmatpush2.bf16.xpose.msra.mxu0 %v745
      %907 = vmatprep.subr.bf16.mxu0 0
      %908 = vmatpush2.bf16.xpose.msra.mxu0 %v742
      %909 = vmatprep.subr.bf16.mxu0 0
      %910 = vmatpush2.bf16.xpose.msra.mxu0 %v739
      %911 = vmatprep.subr.bf16.mxu0 0
      %912 = vmatpush2.bf16.xpose.msra.mxu0 %v736
      %913 = vmatprep.subr.bf16.mxu0 0
      %914 = vmatpush2.bf16.xpose.msra.mxu0 %v733
      %915 = vmatprep.subr.bf16.mxu0 0
      %916 = vmatpush2.bf16.xpose.msra.mxu0 %v730
      %917 = vmatprep.subr.bf16.mxu0 0
      %918 = vmatpush2.bf16.xpose.msra.mxu0 %v727
      %919 = vmatprep.mubr.bf16.mxu0 0
      %920 = vmatmul.mubr.bf16.gmra.mxu0 %v652
      %v921 = vpop.f32.mrf.mxu0
      %v922 = vadd.f32 0.0, %v921
      %v923 = vpop.f32.mrf.mxu0
      %v924 = vadd.f32 0.0, %v923
      %v925 = vpop.f32.mrf.mxu0
      %v926 = vpop.f32.mrf.mxu0
      %927 = vdwg.mxu0
      %928 = vmatprep.subr.bf16.mxu0 0
      %929 = vmatpush1.bf16.xpose.msra.mxu0 %v772
      %930 = vmatprep.subr.bf16.mxu0 0
      %931 = vmatpush1.bf16.xpose.msra.mxu0 %v769
      %932 = vmatprep.subr.bf16.mxu0 0
      %933 = vmatpush1.bf16.xpose.msra.mxu0 %v766
      %934 = vmatprep.subr.bf16.mxu0 0
      %935 = vmatpush1.bf16.xpose.msra.mxu0 %v763
      %936 = vmatprep.subr.bf16.mxu0 0
      %937 = vmatpush1.bf16.xpose.msra.mxu0 %v760
      %938 = vmatprep.subr.bf16.mxu0 0
      %939 = vmatpush1.bf16.xpose.msra.mxu0 %v757
      %940 = vmatprep.subr.bf16.mxu0 0
      %941 = vmatpush1.bf16.xpose.msra.mxu0 %v754
      %942 = vmatprep.subr.bf16.mxu0 0
      %943 = vmatpush1.bf16.xpose.msra.mxu0 %v751
      %944 = vmatprep.subr.bf16.mxu0 0
      %945 = vmatpush2.bf16.xpose.msra.mxu0 %v796
      %946 = vmatprep.subr.bf16.mxu0 0
      %947 = vmatpush2.bf16.xpose.msra.mxu0 %v793
      %948 = vmatprep.subr.bf16.mxu0 0
      %949 = vmatpush2.bf16.xpose.msra.mxu0 %v790
      %950 = vmatprep.subr.bf16.mxu0 0
      %951 = vmatpush2.bf16.xpose.msra.mxu0 %v787
      %952 = vmatprep.subr.bf16.mxu0 0
      %953 = vmatpush2.bf16.xpose.msra.mxu0 %v784
      %954 = vmatprep.subr.bf16.mxu0 0
      %955 = vmatpush2.bf16.xpose.msra.mxu0 %v781
      %956 = vmatprep.subr.bf16.mxu0 0
      %957 = vmatpush2.bf16.xpose.msra.mxu0 %v778
      %958 = vmatprep.subr.bf16.mxu0 0
      %959 = vmatpush2.bf16.xpose.msra.mxu0 %v775
      %960 = vmatprep.mubr.bf16.mxu0 0
      %961 = vmatmul.mubr.bf16.gmra.mxu0 %v652
      %v962 = vpop.f32.mrf.mxu0
      %v963 = vadd.f32 0.0, %v962
      %v964 = vpop.f32.mrf.mxu0
      %v965 = vadd.f32 0.0, %v964
      %v966 = vpop.f32.mrf.mxu0
      %v967 = vpop.f32.mrf.mxu0
      %968 = vdwg.mxu0
      %969 = vmatprep.subr.bf16.mxu0 0
      %970 = vmatpush1.bf16.xpose.msra.mxu0 %v820
      %971 = vmatprep.subr.bf16.mxu0 0
      %972 = vmatpush1.bf16.xpose.msra.mxu0 %v817
      %973 = vmatprep.subr.bf16.mxu0 0
      %974 = vmatpush1.bf16.xpose.msra.mxu0 %v814
      %975 = vmatprep.subr.bf16.mxu0 0
      %976 = vmatpush1.bf16.xpose.msra.mxu0 %v811
      %977 = vmatprep.subr.bf16.mxu0 0
      %978 = vmatpush1.bf16.xpose.msra.mxu0 %v808
      %979 = vmatprep.subr.bf16.mxu0 0
      %980 = vmatpush1.bf16.xpose.msra.mxu0 %v805
      %981 = vmatprep.subr.bf16.mxu0 0
      %982 = vmatpush1.bf16.xpose.msra.mxu0 %v802
      %983 = vmatprep.subr.bf16.mxu0 0
      %984 = vmatpush1.bf16.xpose.msra.mxu0 %v799
      %985 = vmatprep.subr.bf16.mxu0 0
      %986 = vmatpush2.bf16.xpose.msra.mxu0 %v844
      %987 = vmatprep.subr.bf16.mxu0 0
      %988 = vmatpush2.bf16.xpose.msra.mxu0 %v841
      %989 = vmatprep.subr.bf16.mxu0 0
      %990 = vmatpush2.bf16.xpose.msra.mxu0 %v838
      %991 = vmatprep.subr.bf16.mxu0 0
      %992 = vmatpush2.bf16.xpose.msra.mxu0 %v835
      %993 = vmatprep.subr.bf16.mxu0 0
      %994 = vmatpush2.bf16.xpose.msra.mxu0 %v832
      %995 = vmatprep.subr.bf16.mxu0 0
      %996 = vmatpush2.bf16.xpose.msra.mxu0 %v829
      %997 = vmatprep.subr.bf16.mxu0 0
      %998 = vmatpush2.bf16.xpose.msra.mxu0 %v826
      %999 = vmatprep.subr.bf16.mxu0 0
      %1000 = vmatpush2.bf16.xpose.msra.mxu0 %v823
      %1001 = vmatprep.mubr.bf16.mxu0 0
      %1002 = vmatmul.mubr.bf16.gmra.mxu0 %v652
      %v1003 = vpop.f32.mrf.mxu0
      %v1004 = vadd.f32 0.0, %v1003
      %v1005 = vpop.f32.mrf.mxu0
      %v1006 = vadd.f32 0.0, %v1005
      %v1007 = vpop.f32.mrf.mxu0
      %v1008 = vpop.f32.mrf.mxu0
      %1009 = vdwg.mxu0
      %v1018 = vcombine.low %v881, %v883
      %v1019 = vcombine.low %v922, %v924
      %v1020 = vcombine.low %v963, %v965
      %v1021 = vcombine.low %v1004, %v1006
      %1026 = vst [vmem:[%s198] sm:$0xff] %v1018
      %1027 = vst [vmem:[%s198 + $0x8] sm:$0xff] %v1019
      %1028 = vst [vmem:[%s198 + $0x10] sm:$0xff] %v1020
      %1029 = vst [vmem:[%s198 + $0x18] sm:$0xff] %v1021
      %s1030 = smul.u32 8, %s18
      %p1031 = scmp.lt.s32.totalorder %s17, 1
      %s1032 = scalar_select %p1031, %s17, 1
      %p1033 = scmp.lt.s32.totalorder %s1030, 7
      %s1034 = scalar_select %p1033, %s1030, 7
      %s1035 = smul.addr %s1032, 8
      %s1036 = sadd.s32 %s1034, %s1035
      %s1037 = smul.addr %s1036, 4
      %s1038 = scalar_lea.vmem %s2, %s1037
      // Predicated region
      $region29: #{mask_decoder_forward.9} parent=27 // pred_check
        %p1039 = pneg %p99
      $region30: #{mask_decoder_forward.9} parent=27 // pred_check_branch
        %1041 = sbr.rel (%p1039) target = $region32
      $region31: #{mask_decoder_forward.9} parent=27 // pred_region
        %s1042 = smul.u32 8, %s18
      $region32: #{mask_decoder_forward.9} parent=27 // pred_fallthru
        _
    $region28: #{mask_decoder_forward.9} parent=5 // pred_fallthru
      _
    %p1043 = scmp.le.s32.totalorder 2, %s8
    // Predicated region
    $region33: #{mask_decoder_forward.9} parent=5 // pred_check
      %p1044 = pneg %p1043
    $region34: #{mask_decoder_forward.9} parent=5 // pred_check_branch
      %1046 = sbr.rel (%p1044) target = $region36
    $region35: #{mask_decoder_forward.9} parent=5 // pred_region
      %s1047 = ssub.s32 %s8, 2
      // Predicated region
      $region37: #{mask_decoder_forward.9} parent=35 // pred_check
        %p1048 = pneg %p105
      $region38: #{mask_decoder_forward.9} parent=35 // pred_check_branch
        %1050 = sbr.rel (%p1048) target = $region40
      $region39: #{mask_decoder_forward.9} parent=35 // pred_region
        %s1051 = smul.u32 8, %s20
        %p1052 = scmp.lt.s32.totalorder %s19, 1
        %s1053 = scalar_select %p1052, %s19, 1
        %p1054 = scmp.lt.s32.totalorder %s1051, 7
        %s1055 = scalar_select %p1054, %s1051, 7
        %s1056 = smul.addr %s1053, 8
        %s1057 = sadd.s32 %s1055, %s1056
        %s1058 = smul.addr %s1057, 4
        %s1059 = scalar_lea.vmem %s2, %s1058
      $region40: #{mask_decoder_forward.9} parent=35 // pred_fallthru
        _
    $region36: #{mask_decoder_forward.9} parent=5 // pred_fallthru
      _
  $region6: #{mask_decoder_forward.9} parent=0 // loop_footer
    %s12 = sadd.s32 1, %s8
  $region7: #{mask_decoder_forward.9} parent=0 // loop_footer_branch
    %7 = sbr.rel target = $region3
  $region8: #{mask_decoder_forward.9} parent=0 // loop_exit
    _

</llo_original>
